<compile_context>
chip_gen: v5e
topology: v5e:2x2
jax: 0.10.0
libtpu: 0.0.40
codegen_flags: <defaults>
</compile_context>

<pallas_src>
from functools import partial

import jax
import jax.numpy as jnp
from jax.experimental import pallas as pl
from jax.experimental.pallas import tpu as pltpu

BN_EPS = 1e-5
CP = 128          # padded channel width -> lane-dense activations, MXU-friendly K/N
NCLS_PAD = 128    # padded class dim for the FC head (masked in the loss)

_VMEM = pl.BlockSpec(memory_space=pltpu.MemorySpace.VMEM)
_SMEM = pl.BlockSpec(memory_space=pltpu.MemorySpace.SMEM)


# ------------------------------ fused kernels -------------------------------

def _conv_bn_act_core(xpad_ref, w_ref, g_ref, b_ref, res_ref, out_ref, *, H, W):
    """3x3 conv (stride 1, pad 1) + BatchNorm(train) [+ residual] + ReLU.

    xpad_ref : (B, H+2, W+2, CP) f32  NHWC, spatially + channel zero padded
    w_ref    : (9, CP, CP)       bf16 taps ordered dh*3+dw, layout (Cin, Cout)
    g_ref/b_ref : (1, CP)        f32  BN affine (zeros on padded channels)
    res_ref  : (B*H*W, CP) f32 or None  (added after BN, before ReLU)
    out_ref  : (B*H*W, CP)       f32
    """
    B = xpad_ref.shape[0]
    cin = xpad_ref.shape[3]
    cout = w_ref.shape[2]
    M = B * H * W

    # 9 shifted-window MXU dots: bf16 inputs, f32 accumulation. The shifted
    # views are read straight out of the VMEM-resident padded slab — no im2col.
    acc = jnp.zeros((M, cout), jnp.float32)
    for tap in range(9):
        dh, dw = divmod(tap, 3)
        cols = xpad_ref[:, dh:dh + H, dw:dw + W, :].reshape(M, cin)
        acc = acc + jnp.dot(cols.astype(jnp.bfloat16), w_ref[tap],
                            preferred_element_type=jnp.float32)

    # Training-mode BatchNorm: biased batch statistics over (N, H, W).
    mean = jnp.mean(acc, axis=0, keepdims=True)
    var = jnp.mean(jnp.square(acc - mean), axis=0, keepdims=True)
    y = (acc - mean) * jax.lax.rsqrt(var + BN_EPS) * g_ref[...] + b_ref[...]
    if res_ref is not None:
        y = y + res_ref[...]          # BasicBlock residual connection
    out_ref[...] = jnp.maximum(y, 0.0)


def _conv_bn_relu_kernel(xpad_ref, w_ref, g_ref, b_ref, out_ref, *, H, W):
    _conv_bn_act_core(xpad_ref, w_ref, g_ref, b_ref, None, out_ref, H=H, W=W)


def _conv_bn_res_relu_kernel(xpad_ref, w_ref, g_ref, b_ref, res_ref, out_ref,
                             *, H, W):
    _conv_bn_act_core(xpad_ref, w_ref, g_ref, b_ref, res_ref, out_ref, H=H, W=W)


def _head_kernel(feat_ref, fcw_ref, fcb_ref, y_ref, loss_ref, *, B, HW, n_cls):
    """Fused global-average-pool + FC + mean cross-entropy -> scalar loss.

    feat_ref : (B*HW, CP) f32   (rows are batch-major)
    fcw_ref  : (CP, NCLS_PAD) bf16 (zero rows/cols beyond real dims)
    fcb_ref  : (1, NCLS_PAD)  f32  (zeros beyond real classes)
    y_ref    : (B, 1) int32 labels
    loss_ref : (1,) f32 in SMEM
    """
    # Global average pool per batch item (static unrolled loop over B).
    feats = []
    for bb in range(B):
        xb = feat_ref[bb * HW:(bb + 1) * HW, :]
        feats.append(jnp.mean(xb, axis=0, keepdims=True))
    feat = jnp.concatenate(feats, axis=0)                       # (B, CP) f32

    logits = jnp.dot(feat.astype(jnp.bfloat16), fcw_ref[...],
                     preferred_element_type=jnp.float32) + fcb_ref[...]

    cls = jax.lax.broadcasted_iota(jnp.int32, logits.shape, 1)
    valid = cls < n_cls                       # mask the zero-padded class cols
    lm = jnp.where(valid, logits, -1e30)
    m = jnp.max(lm, axis=-1, keepdims=True)
    p = jnp.where(valid, jnp.exp(lm - m), 0.0)
    lse = m + jnp.log(jnp.sum(p, axis=-1, keepdims=True))
    onehot = (cls == y_ref[...]).astype(jnp.float32)            # in-kernel one-hot
    tgt = jnp.sum(onehot * logits, axis=-1, keepdims=True)
    loss_ref[0] = jnp.mean(lse - tgt)         # nn.CrossEntropyLoss mean reduction


# ------------------------------ kernel wrappers -----------------------------

def conv_bn_relu(xpad, w9, gamma, beta, *, H, W, residual=None):
    """Fused conv3x3 + BN + (residual) + ReLU.  Returns (B*H*W, CP) f32."""
    B = xpad.shape[0]
    cout = w9.shape[2]
    out_shape = jax.ShapeDtypeStruct((B * H * W, cout), jnp.float32)
    if residual is None:
        return pl.pallas_call(
            partial(_conv_bn_relu_kernel, H=H, W=W),
            in_specs=[_VMEM, _VMEM, _VMEM, _VMEM], out_specs=_VMEM,
            out_shape=out_shape)(xpad, w9, gamma, beta)
    return pl.pallas_call(
        partial(_conv_bn_res_relu_kernel, H=H, W=W),
        in_specs=[_VMEM, _VMEM, _VMEM, _VMEM, _VMEM], out_specs=_VMEM,
        out_shape=out_shape)(xpad, w9, gamma, beta, residual)


def head_loss(feat_flat, fc_w, fc_b, labels, *, B, HW, n_cls):
    """Fused GAP + FC + cross-entropy -> scalar."""
    loss = pl.pallas_call(
        partial(_head_kernel, B=B, HW=HW, n_cls=n_cls),
        in_specs=[_VMEM, _VMEM, _VMEM, _VMEM], out_specs=_SMEM,
        out_shape=jax.ShapeDtypeStruct((1,), jnp.float32),
    )(feat_flat, fc_w, fc_b, labels)
    return loss[0]


# ------------------------------ parameter prep ------------------------------

def _pad_axis(a, target, axis):
    pads = [(0, 0)] * a.ndim
    pads[axis] = (0, target - a.shape[axis])
    return jnp.pad(a, pads)


def _prep_conv_w(w_oihw):
    """(Cout, Cin, 3, 3) torch layout -> (9, CP, CP) bf16, taps = dh*3+dw."""
    w = jnp.transpose(w_oihw, (2, 3, 1, 0))           # (kh, kw, Cin, Cout)
    _, _, cin, cout = w.shape
    w = w.reshape(9, cin, cout)
    w = _pad_axis(_pad_axis(w, CP, 1), CP, 2)
    return w.astype(jnp.bfloat16)


def _prep_bn(v):
    return _pad_axis(v, CP, 0).reshape(1, CP).astype(jnp.float32)


def _spatial_pad(flat, B, H, W):
    """(B*H*W, CP) -> (B, H+2, W+2, CP) with a 1-pixel zero border."""
    return jnp.pad(flat.reshape(B, H, W, flat.shape[-1]),
                   ((0, 0), (1, 1), (1, 1), (0, 0)))


def init_params(key, c_stem=16, c_blk=16, num_classes=10):
    ks = jax.random.split(key, 4)
    return {
        "conv1_w": 0.1 * jax.random.normal(ks[0], (c_stem, 3, 3, 3), jnp.float32),
        "bn1_g": jnp.ones((c_stem,), jnp.float32),
        "bn1_b": jnp.zeros((c_stem,), jnp.float32),
        "conv2_w": 0.1 * jax.random.normal(ks[1], (c_blk, c_stem, 3, 3), jnp.float32),
        "bn2_g": jnp.ones((c_blk,), jnp.float32),
        "bn2_b": jnp.zeros((c_blk,), jnp.float32),
        "conv3_w": 0.1 * jax.random.normal(ks[2], (c_blk, c_blk, 3, 3), jnp.float32),
        "bn3_g": jnp.ones((c_blk,), jnp.float32),
        "bn3_b": jnp.zeros((c_blk,), jnp.float32),
        "fc_w": 0.1 * jax.random.normal(ks[3], (num_classes, c_blk), jnp.float32),
        "fc_b": jnp.zeros((num_classes,), jnp.float32),
    }


# --------------------------- ResNet-style forward ---------------------------

def trainer_forward(params, x_nchw, y):
    """TrainerModel.forward: out = model(x); loss = CrossEntropy(out, y)."""
    B, _, H, W = x_nchw.shape
    n_cls = params["fc_w"].shape[0]

    # NCHW -> NHWC, channel pad to 128 lanes, 1-pixel spatial zero pad.
    x = jnp.transpose(x_nchw, (0, 2, 3, 1)).astype(jnp.float32)
    xpad = jnp.pad(_pad_axis(x, CP, 3), ((0, 0), (1, 1), (1, 1), (0, 0)))

    w1, g1, b1 = _prep_conv_w(params["conv1_w"]), _prep_bn(params["bn1_g"]), _prep_bn(params["bn1_b"])
    w2, g2, b2 = _prep_conv_w(params["conv2_w"]), _prep_bn(params["bn2_g"]), _prep_bn(params["bn2_b"])
    w3, g3, b3 = _prep_conv_w(params["conv3_w"]), _prep_bn(params["bn3_g"]), _prep_bn(params["bn3_b"])

    # stem: conv -> BN -> ReLU (fused, one kernel)
    h1 = conv_bn_relu(xpad, w1, g1, b1, H=H, W=W)                 # (B*H*W, CP)

    # BasicBlock: conv -> BN -> ReLU -> conv -> BN -> (+identity) -> ReLU
    h2 = conv_bn_relu(_spatial_pad(h1, B, H, W), w2, g2, b2, H=H, W=W)
    h3 = conv_bn_relu(_spatial_pad(h2, B, H, W), w3, g3, b3, H=H, W=W,
                      residual=h1)                                # (B*H*W, CP)

    # fused GAP + FC + cross-entropy head
    fcw = _pad_axis(_pad_axis(params["fc_w"].T, CP, 0), NCLS_PAD, 1).astype(jnp.bfloat16)
    fcb = _pad_axis(params["fc_b"], NCLS_PAD, 0).reshape(1, NCLS_PAD).astype(jnp.float32)
    labels = y.astype(jnp.int32).reshape(B, 1)
    loss = head_loss(h3, fcw, fcb, labels, B=B, HW=H * W, n_cls=n_cls)

    # TODO(synk): ppe.reporting.report / loss.item() are host-side reporting
    # calls with no kernel equivalent; only the returned loss dict is modeled.
    return {"loss": loss}


if __name__ == "__main__":
    key = jax.random.PRNGKey(0)
    kx, ky, kp = jax.random.split(key, 3)
    # CIFAR-like input at a small shape: NCHW, 3 channels, 16x16 spatial.
    x = jax.random.normal(kx, (2, 3, 16, 16), jnp.float32)
    y = jax.random.randint(ky, (2,), 0, 10, jnp.int32)
    params = init_params(kp)

    out = jax.jit(trainer_forward)(params, x, y)
    loss = jax.block_until_ready(out["loss"])
    assert loss.shape == () and jnp.isfinite(loss)
    print("KERNEL_OK")
</pallas_src>

<mosaic_0001>
module attributes {stable_mosaic.version = 11 : i64} {
  func.func @_conv_bn_relu_kernel(%arg0: memref<2x18x18x128xf32, #tpu.memory_space<vmem>>, %arg1: memref<9x128x128xbf16, #tpu.memory_space<vmem>>, %arg2: memref<1x128xf32, #tpu.memory_space<vmem>>, %arg3: memref<1x128xf32, #tpu.memory_space<vmem>>, %arg4: memref<512x128xf32, #tpu.memory_space<vmem>>) attributes {dimension_semantics = [], scalar_prefetch = 0 : i64, scratch_operands = 0 : i64, tpu.core_type = #tpu.core_type<tc>} {
    %cst = arith.constant 0.000000e+00 : f32
    %0 = vector.broadcast %cst : f32 to vector<512x128xf32>
    %c0 = arith.constant 0 : index
    %c0_0 = arith.constant 0 : index
    %c0_1 = arith.constant 0 : index
    %c0_2 = arith.constant 0 : index
    %1 = vector.load %arg0[%c0, %c0_0, %c0_1, %c0_2] : memref<2x18x18x128xf32, #tpu.memory_space<vmem>>, vector<2x16x16x128xf32>
    %2 = vector.shape_cast %1 : vector<2x16x16x128xf32> to vector<512x128xf32>
    %3 = arith.truncf %2 : vector<512x128xf32> to vector<512x128xbf16>
    %c0_3 = arith.constant 0 : index
    %c0_4 = arith.constant 0 : index
    %c0_5 = arith.constant 0 : index
    %4 = vector.load %arg1[%c0_3, %c0_4, %c0_5] : memref<9x128x128xbf16, #tpu.memory_space<vmem>>, vector<1x128x128xbf16>
    %5 = vector.shape_cast %4 : vector<1x128x128xbf16> to vector<128x128xbf16>
    %cst_6 = arith.constant dense<0.000000e+00> : vector<512x128xf32>
    %6 = tpu.matmul %3, %5, %cst_6 {dimension_numbers = #tpu.dot_dimension_numbers<[1], [0], [0], [1], [0, 0, 1, 1], [], []>} : vector<512x128xbf16>, vector<128x128xbf16>, vector<512x128xf32> -> vector<512x128xf32>
    %7 = arith.addf %0, %6 : vector<512x128xf32>
    %c0_7 = arith.constant 0 : index
    %c0_8 = arith.constant 0 : index
    %c1 = arith.constant 1 : index
    %c0_9 = arith.constant 0 : index
    %8 = vector.load %arg0[%c0_7, %c0_8, %c1, %c0_9] : memref<2x18x18x128xf32, #tpu.memory_space<vmem>>, vector<2x16x16x128xf32>
    %9 = vector.shape_cast %8 : vector<2x16x16x128xf32> to vector<512x128xf32>
    %10 = arith.truncf %9 : vector<512x128xf32> to vector<512x128xbf16>
    %c1_10 = arith.constant 1 : index
    %c0_11 = arith.constant 0 : index
    %c0_12 = arith.constant 0 : index
    %11 = vector.load %arg1[%c1_10, %c0_11, %c0_12] : memref<9x128x128xbf16, #tpu.memory_space<vmem>>, vector<1x128x128xbf16>
    %12 = vector.shape_cast %11 : vector<1x128x128xbf16> to vector<128x128xbf16>
    %cst_13 = arith.constant dense<0.000000e+00> : vector<512x128xf32>
    %13 = tpu.matmul %10, %12, %cst_13 {dimension_numbers = #tpu.dot_dimension_numbers<[1], [0], [0], [1], [0, 0, 1, 1], [], []>} : vector<512x128xbf16>, vector<128x128xbf16>, vector<512x128xf32> -> vector<512x128xf32>
    %14 = arith.addf %7, %13 : vector<512x128xf32>
    %c0_14 = arith.constant 0 : index
    %c0_15 = arith.constant 0 : index
    %c2 = arith.constant 2 : index
    %c0_16 = arith.constant 0 : index
    %15 = vector.load %arg0[%c0_14, %c0_15, %c2, %c0_16] : memref<2x18x18x128xf32, #tpu.memory_space<vmem>>, vector<2x16x16x128xf32>
    %16 = vector.shape_cast %15 : vector<2x16x16x128xf32> to vector<512x128xf32>
    %17 = arith.truncf %16 : vector<512x128xf32> to vector<512x128xbf16>
    %c2_17 = arith.constant 2 : index
    %c0_18 = arith.constant 0 : index
    %c0_19 = arith.constant 0 : index
    %18 = vector.load %arg1[%c2_17, %c0_18, %c0_19] : memref<9x128x128xbf16, #tpu.memory_space<vmem>>, vector<1x128x128xbf16>
    %19 = vector.shape_cast %18 : vector<1x128x128xbf16> to vector<128x128xbf16>
    %cst_20 = arith.constant dense<0.000000e+00> : vector<512x128xf32>
    %20 = tpu.matmul %17, %19, %cst_20 {dimension_numbers = #tpu.dot_dimension_numbers<[1], [0], [0], [1], [0, 0, 1, 1], [], []>} : vector<512x128xbf16>, vector<128x128xbf16>, vector<512x128xf32> -> vector<512x128xf32>
    %21 = arith.addf %14, %20 : vector<512x128xf32>
    %c0_21 = arith.constant 0 : index
    %c1_22 = arith.constant 1 : index
    %c0_23 = arith.constant 0 : index
    %c0_24 = arith.constant 0 : index
    %22 = vector.load %arg0[%c0_21, %c1_22, %c0_23, %c0_24] : memref<2x18x18x128xf32, #tpu.memory_space<vmem>>, vector<2x16x16x128xf32>
    %23 = vector.shape_cast %22 : vector<2x16x16x128xf32> to vector<512x128xf32>
    %24 = arith.truncf %23 : vector<512x128xf32> to vector<512x128xbf16>
    %c3 = arith.constant 3 : index
    %c0_25 = arith.constant 0 : index
    %c0_26 = arith.constant 0 : index
    %25 = vector.load %arg1[%c3, %c0_25, %c0_26] : memref<9x128x128xbf16, #tpu.memory_space<vmem>>, vector<1x128x128xbf16>
    %26 = vector.shape_cast %25 : vector<1x128x128xbf16> to vector<128x128xbf16>
    %cst_27 = arith.constant dense<0.000000e+00> : vector<512x128xf32>
    %27 = tpu.matmul %24, %26, %cst_27 {dimension_numbers = #tpu.dot_dimension_numbers<[1], [0], [0], [1], [0, 0, 1, 1], [], []>} : vector<512x128xbf16>, vector<128x128xbf16>, vector<512x128xf32> -> vector<512x128xf32>
    %28 = arith.addf %21, %27 : vector<512x128xf32>
    %c0_28 = arith.constant 0 : index
    %c1_29 = arith.constant 1 : index
    %c1_30 = arith.constant 1 : index
    %c0_31 = arith.constant 0 : index
    %29 = vector.load %arg0[%c0_28, %c1_29, %c1_30, %c0_31] : memref<2x18x18x128xf32, #tpu.memory_space<vmem>>, vector<2x16x16x128xf32>
    %30 = vector.shape_cast %29 : vector<2x16x16x128xf32> to vector<512x128xf32>
    %31 = arith.truncf %30 : vector<512x128xf32> to vector<512x128xbf16>
    %c4 = arith.constant 4 : index
    %c0_32 = arith.constant 0 : index
    %c0_33 = arith.constant 0 : index
    %32 = vector.load %arg1[%c4, %c0_32, %c0_33] : memref<9x128x128xbf16, #tpu.memory_space<vmem>>, vector<1x128x128xbf16>
    %33 = vector.shape_cast %32 : vector<1x128x128xbf16> to vector<128x128xbf16>
    %cst_34 = arith.constant dense<0.000000e+00> : vector<512x128xf32>
    %34 = tpu.matmul %31, %33, %cst_34 {dimension_numbers = #tpu.dot_dimension_numbers<[1], [0], [0], [1], [0, 0, 1, 1], [], []>} : vector<512x128xbf16>, vector<128x128xbf16>, vector<512x128xf32> -> vector<512x128xf32>
    %35 = arith.addf %28, %34 : vector<512x128xf32>
    %c0_35 = arith.constant 0 : index
    %c1_36 = arith.constant 1 : index
    %c2_37 = arith.constant 2 : index
    %c0_38 = arith.constant 0 : index
    %36 = vector.load %arg0[%c0_35, %c1_36, %c2_37, %c0_38] : memref<2x18x18x128xf32, #tpu.memory_space<vmem>>, vector<2x16x16x128xf32>
    %37 = vector.shape_cast %36 : vector<2x16x16x128xf32> to vector<512x128xf32>
    %38 = arith.truncf %37 : vector<512x128xf32> to vector<512x128xbf16>
    %c5 = arith.constant 5 : index
    %c0_39 = arith.constant 0 : index
    %c0_40 = arith.constant 0 : index
    %39 = vector.load %arg1[%c5, %c0_39, %c0_40] : memref<9x128x128xbf16, #tpu.memory_space<vmem>>, vector<1x128x128xbf16>
    %40 = vector.shape_cast %39 : vector<1x128x128xbf16> to vector<128x128xbf16>
    %cst_41 = arith.constant dense<0.000000e+00> : vector<512x128xf32>
    %41 = tpu.matmul %38, %40, %cst_41 {dimension_numbers = #tpu.dot_dimension_numbers<[1], [0], [0], [1], [0, 0, 1, 1], [], []>} : vector<512x128xbf16>, vector<128x128xbf16>, vector<512x128xf32> -> vector<512x128xf32>
    %42 = arith.addf %35, %41 : vector<512x128xf32>
    %c0_42 = arith.constant 0 : index
    %c2_43 = arith.constant 2 : index
    %c0_44 = arith.constant 0 : index
    %c0_45 = arith.constant 0 : index
    %43 = vector.load %arg0[%c0_42, %c2_43, %c0_44, %c0_45] : memref<2x18x18x128xf32, #tpu.memory_space<vmem>>, vector<2x16x16x128xf32>
    %44 = vector.shape_cast %43 : vector<2x16x16x128xf32> to vector<512x128xf32>
    %45 = arith.truncf %44 : vector<512x128xf32> to vector<512x128xbf16>
    %c6 = arith.constant 6 : index
    %c0_46 = arith.constant 0 : index
    %c0_47 = arith.constant 0 : index
    %46 = vector.load %arg1[%c6, %c0_46, %c0_47] : memref<9x128x128xbf16, #tpu.memory_space<vmem>>, vector<1x128x128xbf16>
    %47 = vector.shape_cast %46 : vector<1x128x128xbf16> to vector<128x128xbf16>
    %cst_48 = arith.constant dense<0.000000e+00> : vector<512x128xf32>
    %48 = tpu.matmul %45, %47, %cst_48 {dimension_numbers = #tpu.dot_dimension_numbers<[1], [0], [0], [1], [0, 0, 1, 1], [], []>} : vector<512x128xbf16>, vector<128x128xbf16>, vector<512x128xf32> -> vector<512x128xf32>
    %49 = arith.addf %42, %48 : vector<512x128xf32>
    %c0_49 = arith.constant 0 : index
    %c2_50 = arith.constant 2 : index
    %c1_51 = arith.constant 1 : index
    %c0_52 = arith.constant 0 : index
    %50 = vector.load %arg0[%c0_49, %c2_50, %c1_51, %c0_52] : memref<2x18x18x128xf32, #tpu.memory_space<vmem>>, vector<2x16x16x128xf32>
    %51 = vector.shape_cast %50 : vector<2x16x16x128xf32> to vector<512x128xf32>
    %52 = arith.truncf %51 : vector<512x128xf32> to vector<512x128xbf16>
    %c7 = arith.constant 7 : index
    %c0_53 = arith.constant 0 : index
    %c0_54 = arith.constant 0 : index
    %53 = vector.load %arg1[%c7, %c0_53, %c0_54] : memref<9x128x128xbf16, #tpu.memory_space<vmem>>, vector<1x128x128xbf16>
    %54 = vector.shape_cast %53 : vector<1x128x128xbf16> to vector<128x128xbf16>
    %cst_55 = arith.constant dense<0.000000e+00> : vector<512x128xf32>
    %55 = tpu.matmul %52, %54, %cst_55 {dimension_numbers = #tpu.dot_dimension_numbers<[1], [0], [0], [1], [0, 0, 1, 1], [], []>} : vector<512x128xbf16>, vector<128x128xbf16>, vector<512x128xf32> -> vector<512x128xf32>
    %56 = arith.addf %49, %55 : vector<512x128xf32>
    %c0_56 = arith.constant 0 : index
    %c2_57 = arith.constant 2 : index
    %c2_58 = arith.constant 2 : index
    %c0_59 = arith.constant 0 : index
    %57 = vector.load %arg0[%c0_56, %c2_57, %c2_58, %c0_59] : memref<2x18x18x128xf32, #tpu.memory_space<vmem>>, vector<2x16x16x128xf32>
    %58 = vector.shape_cast %57 : vector<2x16x16x128xf32> to vector<512x128xf32>
    %59 = arith.truncf %58 : vector<512x128xf32> to vector<512x128xbf16>
    %c8 = arith.constant 8 : index
    %c0_60 = arith.constant 0 : index
    %c0_61 = arith.constant 0 : index
    %60 = vector.load %arg1[%c8, %c0_60, %c0_61] : memref<9x128x128xbf16, #tpu.memory_space<vmem>>, vector<1x128x128xbf16>
    %61 = vector.shape_cast %60 : vector<1x128x128xbf16> to vector<128x128xbf16>
    %cst_62 = arith.constant dense<0.000000e+00> : vector<512x128xf32>
    %62 = tpu.matmul %59, %61, %cst_62 {dimension_numbers = #tpu.dot_dimension_numbers<[1], [0], [0], [1], [0, 0, 1, 1], [], []>} : vector<512x128xbf16>, vector<128x128xbf16>, vector<512x128xf32> -> vector<512x128xf32>
    %63 = arith.addf %56, %62 : vector<512x128xf32>
    %cst_63 = arith.constant dense<0.000000e+00> : vector<128xf32>
    %64 = vector.multi_reduction <add>, %63, %cst_63 [0] : vector<512x128xf32> to vector<128xf32>
    %65 = vector.shape_cast %64 : vector<128xf32> to vector<1x128xf32>
    %cst_64 = arith.constant 5.120000e+02 : f32
    %66 = vector.broadcast %cst_64 : f32 to vector<1x128xf32>
    %67 = arith.divf %65, %66 : vector<1x128xf32>
    %68 = vector.broadcast %67 : vector<1x128xf32> to vector<512x128xf32>
    %69 = arith.subf %63, %68 : vector<512x128xf32>
    %70 = arith.mulf %69, %69 : vector<512x128xf32>
    %cst_65 = arith.constant dense<0.000000e+00> : vector<128xf32>
    %71 = vector.multi_reduction <add>, %70, %cst_65 [0] : vector<512x128xf32> to vector<128xf32>
    %72 = vector.shape_cast %71 : vector<128xf32> to vector<1x128xf32>
    %cst_66 = arith.constant 5.120000e+02 : f32
    %73 = vector.broadcast %cst_66 : f32 to vector<1x128xf32>
    %74 = arith.divf %72, %73 : vector<1x128xf32>
    %75 = vector.broadcast %67 : vector<1x128xf32> to vector<512x128xf32>
    %76 = arith.subf %63, %75 : vector<512x128xf32>
    %cst_67 = arith.constant 9.99999974E-6 : f32
    %77 = vector.broadcast %cst_67 : f32 to vector<1x128xf32>
    %78 = arith.addf %74, %77 : vector<1x128xf32>
    %79 = math.rsqrt %78 : vector<1x128xf32>
    %80 = vector.broadcast %79 : vector<1x128xf32> to vector<512x128xf32>
    %81 = arith.mulf %76, %80 : vector<512x128xf32>
    %c0_68 = arith.constant 0 : index
    %c0_69 = arith.constant 0 : index
    %82 = vector.load %arg2[%c0_68, %c0_69] : memref<1x128xf32, #tpu.memory_space<vmem>>, vector<1x128xf32>
    %83 = vector.broadcast %82 : vector<1x128xf32> to vector<512x128xf32>
    %84 = arith.mulf %81, %83 : vector<512x128xf32>
    %c0_70 = arith.constant 0 : index
    %c0_71 = arith.constant 0 : index
    %85 = vector.load %arg3[%c0_70, %c0_71] : memref<1x128xf32, #tpu.memory_space<vmem>>, vector<1x128xf32>
    %86 = vector.broadcast %85 : vector<1x128xf32> to vector<512x128xf32>
    %87 = arith.addf %84, %86 : vector<512x128xf32>
    %cst_72 = arith.constant 0.000000e+00 : f32
    %88 = vector.broadcast %cst_72 : f32 to vector<512x128xf32>
    %89 = arith.maximumf %87, %88 : vector<512x128xf32>
    %c0_73 = arith.constant 0 : index
    %c0_74 = arith.constant 0 : index
    %90 = vector.load %arg4[%c0_73, %c0_74] : memref<512x128xf32, #tpu.memory_space<vmem>>, vector<512x128xf32>
    tpu.vector_store %arg4[%c0_73, %c0_74], %89 {strides = array<i32>} : memref<512x128xf32, #tpu.memory_space<vmem>>, vector<512x128xf32>,
    return
  }
}

module attributes {stable_mosaic.version = 11 : i64} {
  func.func @_conv_bn_res_relu_kernel(%arg0: memref<2x18x18x128xf32, #tpu.memory_space<vmem>>, %arg1: memref<9x128x128xbf16, #tpu.memory_space<vmem>>, %arg2: memref<1x128xf32, #tpu.memory_space<vmem>>, %arg3: memref<1x128xf32, #tpu.memory_space<vmem>>, %arg4: memref<512x128xf32, #tpu.memory_space<vmem>>, %arg5: memref<512x128xf32, #tpu.memory_space<vmem>>) attributes {dimension_semantics = [], scalar_prefetch = 0 : i64, scratch_operands = 0 : i64, tpu.core_type = #tpu.core_type<tc>} {
    %cst = arith.constant 0.000000e+00 : f32
    %0 = vector.broadcast %cst : f32 to vector<512x128xf32>
    %c0 = arith.constant 0 : index
    %c0_0 = arith.constant 0 : index
    %c0_1 = arith.constant 0 : index
    %c0_2 = arith.constant 0 : index
    %1 = vector.load %arg0[%c0, %c0_0, %c0_1, %c0_2] : memref<2x18x18x128xf32, #tpu.memory_space<vmem>>, vector<2x16x16x128xf32>
    %2 = vector.shape_cast %1 : vector<2x16x16x128xf32> to vector<512x128xf32>
    %3 = arith.truncf %2 : vector<512x128xf32> to vector<512x128xbf16>
    %c0_3 = arith.constant 0 : index
    %c0_4 = arith.constant 0 : index
    %c0_5 = arith.constant 0 : index
    %4 = vector.load %arg1[%c0_3, %c0_4, %c0_5] : memref<9x128x128xbf16, #tpu.memory_space<vmem>>, vector<1x128x128xbf16>
    %5 = vector.shape_cast %4 : vector<1x128x128xbf16> to vector<128x128xbf16>
    %cst_6 = arith.constant dense<0.000000e+00> : vector<512x128xf32>
    %6 = tpu.matmul %3, %5, %cst_6 {dimension_numbers = #tpu.dot_dimension_numbers<[1], [0], [0], [1], [0, 0, 1, 1], [], []>} : vector<512x128xbf16>, vector<128x128xbf16>, vector<512x128xf32> -> vector<512x128xf32>
    %7 = arith.addf %0, %6 : vector<512x128xf32>
    %c0_7 = arith.constant 0 : index
    %c0_8 = arith.constant 0 : index
    %c1 = arith.constant 1 : index
    %c0_9 = arith.constant 0 : index
    %8 = vector.load %arg0[%c0_7, %c0_8, %c1, %c0_9] : memref<2x18x18x128xf32, #tpu.memory_space<vmem>>, vector<2x16x16x128xf32>
    %9 = vector.shape_cast %8 : vector<2x16x16x128xf32> to vector<512x128xf32>
    %10 = arith.truncf %9 : vector<512x128xf32> to vector<512x128xbf16>
    %c1_10 = arith.constant 1 : index
    %c0_11 = arith.constant 0 : index
    %c0_12 = arith.constant 0 : index
    %11 = vector.load %arg1[%c1_10, %c0_11, %c0_12] : memref<9x128x128xbf16, #tpu.memory_space<vmem>>, vector<1x128x128xbf16>
    %12 = vector.shape_cast %11 : vector<1x128x128xbf16> to vector<128x128xbf16>
    %cst_13 = arith.constant dense<0.000000e+00> : vector<512x128xf32>
    %13 = tpu.matmul %10, %12, %cst_13 {dimension_numbers = #tpu.dot_dimension_numbers<[1], [0], [0], [1], [0, 0, 1, 1], [], []>} : vector<512x128xbf16>, vector<128x128xbf16>, vector<512x128xf32> -> vector<512x128xf32>
    %14 = arith.addf %7, %13 : vector<512x128xf32>
    %c0_14 = arith.constant 0 : index
    %c0_15 = arith.constant 0 : index
    %c2 = arith.constant 2 : index
    %c0_16 = arith.constant 0 : index
    %15 = vector.load %arg0[%c0_14, %c0_15, %c2, %c0_16] : memref<2x18x18x128xf32, #tpu.memory_space<vmem>>, vector<2x16x16x128xf32>
    %16 = vector.shape_cast %15 : vector<2x16x16x128xf32> to vector<512x128xf32>
    %17 = arith.truncf %16 : vector<512x128xf32> to vector<512x128xbf16>
    %c2_17 = arith.constant 2 : index
    %c0_18 = arith.constant 0 : index
    %c0_19 = arith.constant 0 : index
    %18 = vector.load %arg1[%c2_17, %c0_18, %c0_19] : memref<9x128x128xbf16, #tpu.memory_space<vmem>>, vector<1x128x128xbf16>
    %19 = vector.shape_cast %18 : vector<1x128x128xbf16> to vector<128x128xbf16>
    %cst_20 = arith.constant dense<0.000000e+00> : vector<512x128xf32>
    %20 = tpu.matmul %17, %19, %cst_20 {dimension_numbers = #tpu.dot_dimension_numbers<[1], [0], [0], [1], [0, 0, 1, 1], [], []>} : vector<512x128xbf16>, vector<128x128xbf16>, vector<512x128xf32> -> vector<512x128xf32>
    %21 = arith.addf %14, %20 : vector<512x128xf32>
    %c0_21 = arith.constant 0 : index
    %c1_22 = arith.constant 1 : index
    %c0_23 = arith.constant 0 : index
    %c0_24 = arith.constant 0 : index
    %22 = vector.load %arg0[%c0_21, %c1_22, %c0_23, %c0_24] : memref<2x18x18x128xf32, #tpu.memory_space<vmem>>, vector<2x16x16x128xf32>
    %23 = vector.shape_cast %22 : vector<2x16x16x128xf32> to vector<512x128xf32>
    %24 = arith.truncf %23 : vector<512x128xf32> to vector<512x128xbf16>
    %c3 = arith.constant 3 : index
    %c0_25 = arith.constant 0 : index
    %c0_26 = arith.constant 0 : index
    %25 = vector.load %arg1[%c3, %c0_25, %c0_26] : memref<9x128x128xbf16, #tpu.memory_space<vmem>>, vector<1x128x128xbf16>
    %26 = vector.shape_cast %25 : vector<1x128x128xbf16> to vector<128x128xbf16>
    %cst_27 = arith.constant dense<0.000000e+00> : vector<512x128xf32>
    %27 = tpu.matmul %24, %26, %cst_27 {dimension_numbers = #tpu.dot_dimension_numbers<[1], [0], [0], [1], [0, 0, 1, 1], [], []>} : vector<512x128xbf16>, vector<128x128xbf16>, vector<512x128xf32> -> vector<512x128xf32>
    %28 = arith.addf %21, %27 : vector<512x128xf32>
    %c0_28 = arith.constant 0 : index
    %c1_29 = arith.constant 1 : index
    %c1_30 = arith.constant 1 : index
    %c0_31 = arith.constant 0 : index
    %29 = vector.load %arg0[%c0_28, %c1_29, %c1_30, %c0_31] : memref<2x18x18x128xf32, #tpu.memory_space<vmem>>, vector<2x16x16x128xf32>
    %30 = vector.shape_cast %29 : vector<2x16x16x128xf32> to vector<512x128xf32>
    %31 = arith.truncf %30 : vector<512x128xf32> to vector<512x128xbf16>
    %c4 = arith.constant 4 : index
    %c0_32 = arith.constant 0 : index
    %c0_33 = arith.constant 0 : index
    %32 = vector.load %arg1[%c4, %c0_32, %c0_33] : memref<9x128x128xbf16, #tpu.memory_space<vmem>>, vector<1x128x128xbf16>
    %33 = vector.shape_cast %32 : vector<1x128x128xbf16> to vector<128x128xbf16>
    %cst_34 = arith.constant dense<0.000000e+00> : vector<512x128xf32>
    %34 = tpu.matmul %31, %33, %cst_34 {dimension_numbers = #tpu.dot_dimension_numbers<[1], [0], [0], [1], [0, 0, 1, 1], [], []>} : vector<512x128xbf16>, vector<128x128xbf16>, vector<512x128xf32> -> vector<512x128xf32>
    %35 = arith.addf %28, %34 : vector<512x128xf32>
    %c0_35 = arith.constant 0 : index
    %c1_36 = arith.constant 1 : index
    %c2_37 = arith.constant 2 : index
    %c0_38 = arith.constant 0 : index
    %36 = vector.load %arg0[%c0_35, %c1_36, %c2_37, %c0_38] : memref<2x18x18x128xf32, #tpu.memory_space<vmem>>, vector<2x16x16x128xf32>
    %37 = vector.shape_cast %36 : vector<2x16x16x128xf32> to vector<512x128xf32>
    %38 = arith.truncf %37 : vector<512x128xf32> to vector<512x128xbf16>
    %c5 = arith.constant 5 : index
    %c0_39 = arith.constant 0 : index
    %c0_40 = arith.constant 0 : index
    %39 = vector.load %arg1[%c5, %c0_39, %c0_40] : memref<9x128x128xbf16, #tpu.memory_space<vmem>>, vector<1x128x128xbf16>
    %40 = vector.shape_cast %39 : vector<1x128x128xbf16> to vector<128x128xbf16>
    %cst_41 = arith.constant dense<0.000000e+00> : vector<512x128xf32>
    %41 = tpu.matmul %38, %40, %cst_41 {dimension_numbers = #tpu.dot_dimension_numbers<[1], [0], [0], [1], [0, 0, 1, 1], [], []>} : vector<512x128xbf16>, vector<128x128xbf16>, vector<512x128xf32> -> vector<512x128xf32>
    %42 = arith.addf %35, %41 : vector<512x128xf32>
    %c0_42 = arith.constant 0 : index
    %c2_43 = arith.constant 2 : index
    %c0_44 = arith.constant 0 : index
    %c0_45 = arith.constant 0 : index
    %43 = vector.load %arg0[%c0_42, %c2_43, %c0_44, %c0_45] : memref<2x18x18x128xf32, #tpu.memory_space<vmem>>, vector<2x16x16x128xf32>
    %44 = vector.shape_cast %43 : vector<2x16x16x128xf32> to vector<512x128xf32>
    %45 = arith.truncf %44 : vector<512x128xf32> to vector<512x128xbf16>
    %c6 = arith.constant 6 : index
    %c0_46 = arith.constant 0 : index
    %c0_47 = arith.constant 0 : index
    %46 = vector.load %arg1[%c6, %c0_46, %c0_47] : memref<9x128x128xbf16, #tpu.memory_space<vmem>>, vector<1x128x128xbf16>
    %47 = vector.shape_cast %46 : vector<1x128x128xbf16> to vector<128x128xbf16>
    %cst_48 = arith.constant dense<0.000000e+00> : vector<512x128xf32>
    %48 = tpu.matmul %45, %47, %cst_48 {dimension_numbers = #tpu.dot_dimension_numbers<[1], [0], [0], [1], [0, 0, 1, 1], [], []>} : vector<512x128xbf16>, vector<128x128xbf16>, vector<512x128xf32> -> vector<512x128xf32>
    %49 = arith.addf %42, %48 : vector<512x128xf32>
    %c0_49 = arith.constant 0 : index
    %c2_50 = arith.constant 2 : index
    %c1_51 = arith.constant 1 : index
    %c0_52 = arith.constant 0 : index
    %50 = vector.load %arg0[%c0_49, %c2_50, %c1_51, %c0_52] : memref<2x18x18x128xf32, #tpu.memory_space<vmem>>, vector<2x16x16x128xf32>
    %51 = vector.shape_cast %50 : vector<2x16x16x128xf32> to vector<512x128xf32>
    %52 = arith.truncf %51 : vector<512x128xf32> to vector<512x128xbf16>
    %c7 = arith.constant 7 : index
    %c0_53 = arith.constant 0 : index
    %c0_54 = arith.constant 0 : index
    %53 = vector.load %arg1[%c7, %c0_53, %c0_54] : memref<9x128x128xbf16, #tpu.memory_space<vmem>>, vector<1x128x128xbf16>
    %54 = vector.shape_cast %53 : vector<1x128x128xbf16> to vector<128x128xbf16>
    %cst_55 = arith.constant dense<0.000000e+00> : vector<512x128xf32>
    %55 = tpu.matmul %52, %54, %cst_55 {dimension_numbers = #tpu.dot_dimension_numbers<[1], [0], [0], [1], [0, 0, 1, 1], [], []>} : vector<512x128xbf16>, vector<128x128xbf16>, vector<512x128xf32> -> vector<512x128xf32>
    %56 = arith.addf %49, %55 : vector<512x128xf32>
    %c0_56 = arith.constant 0 : index
    %c2_57 = arith.constant 2 : index
    %c2_58 = arith.constant 2 : index
    %c0_59 = arith.constant 0 : index
    %57 = vector.load %arg0[%c0_56, %c2_57, %c2_58, %c0_59] : memref<2x18x18x128xf32, #tpu.memory_space<vmem>>, vector<2x16x16x128xf32>
    %58 = vector.shape_cast %57 : vector<2x16x16x128xf32> to vector<512x128xf32>
    %59 = arith.truncf %58 : vector<512x128xf32> to vector<512x128xbf16>
    %c8 = arith.constant 8 : index
    %c0_60 = arith.constant 0 : index
    %c0_61 = arith.constant 0 : index
    %60 = vector.load %arg1[%c8, %c0_60, %c0_61] : memref<9x128x128xbf16, #tpu.memory_space<vmem>>, vector<1x128x128xbf16>
    %61 = vector.shape_cast %60 : vector<1x128x128xbf16> to vector<128x128xbf16>
    %cst_62 = arith.constant dense<0.000000e+00> : vector<512x128xf32>
    %62 = tpu.matmul %59, %61, %cst_62 {dimension_numbers = #tpu.dot_dimension_numbers<[1], [0], [0], [1], [0, 0, 1, 1], [], []>} : vector<512x128xbf16>, vector<128x128xbf16>, vector<512x128xf32> -> vector<512x128xf32>
    %63 = arith.addf %56, %62 : vector<512x128xf32>
    %cst_63 = arith.constant dense<0.000000e+00> : vector<128xf32>
    %64 = vector.multi_reduction <add>, %63, %cst_63 [0] : vector<512x128xf32> to vector<128xf32>
    %65 = vector.shape_cast %64 : vector<128xf32> to vector<1x128xf32>
    %cst_64 = arith.constant 5.120000e+02 : f32
    %66 = vector.broadcast %cst_64 : f32 to vector<1x128xf32>
    %67 = arith.divf %65, %66 : vector<1x128xf32>
    %68 = vector.broadcast %67 : vector<1x128xf32> to vector<512x128xf32>
    %69 = arith.subf %63, %68 : vector<512x128xf32>
    %70 = arith.mulf %69, %69 : vector<512x128xf32>
    %cst_65 = arith.constant dense<0.000000e+00> : vector<128xf32>
    %71 = vector.multi_reduction <add>, %70, %cst_65 [0] : vector<512x128xf32> to vector<128xf32>
    %72 = vector.shape_cast %71 : vector<128xf32> to vector<1x128xf32>
    %cst_66 = arith.constant 5.120000e+02 : f32
    %73 = vector.broadcast %cst_66 : f32 to vector<1x128xf32>
    %74 = arith.divf %72, %73 : vector<1x128xf32>
    %75 = vector.broadcast %67 : vector<1x128xf32> to vector<512x128xf32>
    %76 = arith.subf %63, %75 : vector<512x128xf32>
    %cst_67 = arith.constant 9.99999974E-6 : f32
    %77 = vector.broadcast %cst_67 : f32 to vector<1x128xf32>
    %78 = arith.addf %74, %77 : vector<1x128xf32>
    %79 = math.rsqrt %78 : vector<1x128xf32>
    %80 = vector.broadcast %79 : vector<1x128xf32> to vector<512x128xf32>
    %81 = arith.mulf %76, %80 : vector<512x128xf32>
    %c0_68 = arith.constant 0 : index
    %c0_69 = arith.constant 0 : index
    %82 = vector.load %arg2[%c0_68, %c0_69] : memref<1x128xf32, #tpu.memory_space<vmem>>, vector<1x128xf32>
    %83 = vector.broadcast %82 : vector<1x128xf32> to vector<512x128xf32>
    %84 = arith.mulf %81, %83 : vector<512x128xf32>
    %c0_70 = arith.constant 0 : index
    %c0_71 = arith.constant 0 : index
    %85 = vector.load %arg3[%c0_70, %c0_71] : memref<1x128xf32, #tpu.memory_space<vmem>>, vector<1x128xf32>
    %86 = vector.broadcast %85 : vector<1x128xf32> to vector<512x128xf32>
    %87 = arith.addf %84, %86 : vector<512x128xf32>
    %c0_72 = arith.constant 0 : index
    %c0_73 = arith.constant 0 : index
    %88 = vector.load %arg4[%c0_72, %c0_73] : memref<512x128xf32, #tpu.memory_space<vmem>>, vector<512x128xf32>
    %89 = arith.addf %87, %88 : vector<512x128xf32>
    %cst_74 = arith.constant 0.000000e+00 : f32
    %90 = vector.broadcast %cst_74 : f32 to vector<512x128xf32>
    %91 = arith.maximumf %89, %90 : vector<512x128xf32>
    %c0_75 = arith.constant 0 : index
    %c0_76 = arith.constant 0 : index
    %92 = vector.load %arg5[%c0_75, %c0_76] : memref<512x128xf32, #tpu.memory_space<vmem>>, vector<512x128xf32>
    tpu.vector_store %arg5[%c0_75, %c0_76], %91 {strides = array<i32>} : memref<512x128xf32, #tpu.memory_space<vmem>>, vector<512x128xf32>,
    return
  }
}

module attributes {stable_mosaic.version = 11 : i64} {
  func.func @_head_kernel(%arg0: memref<512x128xf32, #tpu.memory_space<vmem>>, %arg1: memref<128x128xbf16, #tpu.memory_space<vmem>>, %arg2: memref<1x128xf32, #tpu.memory_space<vmem>>, %arg3: memref<2x1xi32, #tpu.memory_space<vmem>>, %arg4: memref<1xf32, #tpu.memory_space<smem>>) attributes {dimension_semantics = [], scalar_prefetch = 0 : i64, scratch_operands = 0 : i64, tpu.core_type = #tpu.core_type<tc>} {
    %c0 = arith.constant 0 : index
    %c0_0 = arith.constant 0 : index
    %0 = vector.load %arg0[%c0, %c0_0] : memref<512x128xf32, #tpu.memory_space<vmem>>, vector<256x128xf32>
    %cst = arith.constant dense<0.000000e+00> : vector<128xf32>
    %1 = vector.multi_reduction <add>, %0, %cst [0] : vector<256x128xf32> to vector<128xf32>
    %2 = vector.shape_cast %1 : vector<128xf32> to vector<1x128xf32>
    %cst_1 = arith.constant 2.560000e+02 : f32
    %3 = vector.broadcast %cst_1 : f32 to vector<1x128xf32>
    %4 = arith.divf %2, %3 : vector<1x128xf32>
    %c256 = arith.constant 256 : index
    %c0_2 = arith.constant 0 : index
    %5 = vector.load %arg0[%c256, %c0_2] : memref<512x128xf32, #tpu.memory_space<vmem>>, vector<256x128xf32>
    %cst_3 = arith.constant dense<0.000000e+00> : vector<128xf32>
    %6 = vector.multi_reduction <add>, %5, %cst_3 [0] : vector<256x128xf32> to vector<128xf32>
    %7 = vector.shape_cast %6 : vector<128xf32> to vector<1x128xf32>
    %cst_4 = arith.constant 2.560000e+02 : f32
    %8 = vector.broadcast %cst_4 : f32 to vector<1x128xf32>
    %9 = arith.divf %7, %8 : vector<1x128xf32>
    %10 = tpu.concatenate %4, %9 in 0 : vector<1x128xf32>, vector<1x128xf32> -> vector<2x128xf32>
    %11 = arith.truncf %10 : vector<2x128xf32> to vector<2x128xbf16>
    %c0_5 = arith.constant 0 : index
    %c0_6 = arith.constant 0 : index
    %12 = vector.load %arg1[%c0_5, %c0_6] : memref<128x128xbf16, #tpu.memory_space<vmem>>, vector<128x128xbf16>
    %cst_7 = arith.constant dense<0.000000e+00> : vector<2x128xf32>
    %13 = tpu.matmul %11, %12, %cst_7 {dimension_numbers = #tpu.dot_dimension_numbers<[1], [0], [0], [1], [0, 0, 1, 1], [], []>} : vector<2x128xbf16>, vector<128x128xbf16>, vector<2x128xf32> -> vector<2x128xf32>
    %c0_8 = arith.constant 0 : index
    %c0_9 = arith.constant 0 : index
    %14 = vector.load %arg2[%c0_8, %c0_9] : memref<1x128xf32, #tpu.memory_space<vmem>>, vector<1x128xf32>
    %15 = vector.broadcast %14 : vector<1x128xf32> to vector<2x128xf32>
    %16 = arith.addf %13, %15 : vector<2x128xf32>
    %17 = tpu.iota {dimensions = array<i32: 1>} : vector<2x128xi32>
    %c10_i32 = arith.constant 10 : i32
    %18 = vector.broadcast %c10_i32 : i32 to vector<2x128xi32>
    %19 = arith.cmpi slt, %17, %18 : vector<2x128xi32>
    %cst_10 = arith.constant -1.000000e+30 : f32
    %20 = vector.broadcast %cst_10 : f32 to vector<2x128xf32>
    %21 = arith.select %19, %16, %20 : vector<2x128xi1>, vector<2x128xf32>
    %cst_11 = arith.constant dense<0xFF800000> : vector<2xf32>
    %22 = vector.multi_reduction <maximumf>, %21, %cst_11 [1] : vector<2x128xf32> to vector<2xf32>
    %23 = vector.shape_cast %22 : vector<2xf32> to vector<2x1xf32>
    %24 = vector.broadcast %23 : vector<2x1xf32> to vector<2x128xf32>
    %25 = arith.subf %21, %24 : vector<2x128xf32>
    %26 = math.exp %25 : vector<2x128xf32>
    %cst_12 = arith.constant 0.000000e+00 : f32
    %27 = vector.broadcast %cst_12 : f32 to vector<2x128xf32>
    %28 = arith.select %19, %26, %27 : vector<2x128xi1>, vector<2x128xf32>
    %cst_13 = arith.constant dense<0.000000e+00> : vector<2xf32>
    %29 = vector.multi_reduction <add>, %28, %cst_13 [1] : vector<2x128xf32> to vector<2xf32>
    %30 = vector.shape_cast %29 : vector<2xf32> to vector<2x1xf32>
    %31 = math.log %30 : vector<2x1xf32>
    %32 = arith.addf %23, %31 : vector<2x1xf32>
    %c0_14 = arith.constant 0 : index
    %c0_15 = arith.constant 0 : index
    %33 = vector.load %arg3[%c0_14, %c0_15] : memref<2x1xi32, #tpu.memory_space<vmem>>, vector<2x1xi32>
    %34 = vector.broadcast %33 : vector<2x1xi32> to vector<2x128xi32>
    %35 = arith.cmpi eq, %17, %34 : vector<2x128xi32>
    %36 = arith.extui %35 : vector<2x128xi1> to vector<2x128xi32>
    %37 = arith.sitofp %36 : vector<2x128xi32> to vector<2x128xf32>
    %38 = arith.mulf %37, %16 : vector<2x128xf32>
    %cst_16 = arith.constant dense<0.000000e+00> : vector<2xf32>
    %39 = vector.multi_reduction <add>, %38, %cst_16 [1] : vector<2x128xf32> to vector<2xf32>
    %40 = vector.shape_cast %39 : vector<2xf32> to vector<2x1xf32>
    %41 = arith.subf %32, %40 : vector<2x1xf32>
    %42 = vector.shape_cast %41 : vector<2x1xf32> to vector<1x2x1xf32>
    %cst_17 = arith.constant dense<0.000000e+00> : vector<1xf32>
    %43 = vector.multi_reduction <add>, %42, %cst_17 [1, 2] : vector<1x2x1xf32> to vector<1xf32>
    %44 = vector.shape_cast %43 : vector<1xf32> to vector<1x1x1xf32>
    %45 = vector.extract %44[0, 0, 0] : f32 from vector<1x1x1xf32>
    %cst_18 = arith.constant 2.000000e+00 : f32
    %46 = arith.divf %45, %cst_18 : f32
    %c0_19 = arith.constant 0 : index
    %47 = memref.load %arg4[%c0_19] : memref<1xf32, #tpu.memory_space<smem>>
    memref.store %46, %arg4[%c0_19] : memref<1xf32, #tpu.memory_space<smem>>
    return
  }
}

</mosaic_0001>

<llo_original>
// kernel: trainer_forward.7
$region0: #{trainer_forward.7}
  #allocation0 [shape = 'u32[]', space=smem, size = 0x4, offset = 0x4, fixed_abs, tag = 'smem constant byte address 0x4 - core index']
  #allocation1 [shape = 'u32[72,128]{1,0:T(1,128)}', space=vmem, size = 0x9000, scoped, tag = 'internal scratch']
  %s0 = inlined_call_operand.vmem [shape: f32[512,128], index: 0, kind: input, shape index: {}]
  %s1 = inlined_call_operand.vmem [shape: bf16[128,128], index: 1, kind: input, shape index: {}]
  %s2 = inlined_call_operand.vmem [shape: f32[1,128], index: 2, kind: input, shape index: {}]
  %s3 = inlined_call_operand.vmem [shape: s32[2,1], index: 3, kind: input, shape index: {}]
  %s4 = inlined_call_operand.hbm [shape: f32[1], index: 4, kind: output, shape index: {}]
  %s5 = sld [smem:[#allocation0]]
  $region26: #{trainer_forward.7} parent=0
    _
  %s7 = ssub.s32 1, %s5
  %s8 = scalar_select 0, %s7, %s5
  $region1: #{trainer_forward.7} parent=0
    #allocation2 [shape = 'u8[512]{0}', space=smem, size = 0x200, scoped, tag = 'output window, operand 0, single buffered']
    #allocation3 [shape = 's32[1]{0}', space=sflag, size = 0x4, scoped, tag = 'scoped memory for trainer_forward.7']
    %9 = vsyncpa [#allocation3], 0
    // Predicated region
    $region2: #{trainer_forward.7} parent=1 // pred_check
      _
    $region3: #{trainer_forward.7} parent=1 // pred_check_branch
      %11 = sbr.rel (0) target = $region5
    $region4: #{trainer_forward.7} parent=1 // pred_region
      _
    $region5: #{trainer_forward.7} parent=1 // pred_fallthru
      _
    // Predicated region
    $region6: #{trainer_forward.7} parent=1 // pred_check
      _
    $region7: #{trainer_forward.7} parent=1 // pred_check_branch
      %13 = sbr.rel (0) target = $region9
    $region8: #{trainer_forward.7} parent=1 // pred_region
      _
    $region9: #{trainer_forward.7} parent=1 // pred_fallthru
      _
    // Predicated region
    $region10: #{trainer_forward.7} parent=1 // pred_check
      _
    $region11: #{trainer_forward.7} parent=1 // pred_check_branch
      %15 = sbr.rel (0) target = $region13
    $region12: #{trainer_forward.7} parent=1 // pred_region
      _
    $region13: #{trainer_forward.7} parent=1 // pred_fallthru
      _
    // Predicated region
    $region14: #{trainer_forward.7} parent=1 // pred_check
      _
    $region15: #{trainer_forward.7} parent=1 // pred_check_branch
      %17 = sbr.rel (0) target = $region17
    $region16: #{trainer_forward.7} parent=1 // pred_region
      _
    $region17: #{trainer_forward.7} parent=1 // pred_fallthru
      _
    %v18 = vld [vmem:[%s0] sm:$0xff]
    %v19 = vld [vmem:[%s0 + $0x8] sm:$0xff]
    %v20 = vld [vmem:[%s0 + $0x10] sm:$0xff]
    %v21 = vld [vmem:[%s0 + $0x18] sm:$0xff]
    %v22 = vld [vmem:[%s0 + $0x20] sm:$0xff]
    %v23 = vld [vmem:[%s0 + $0x28] sm:$0xff]
    %v24 = vld [vmem:[%s0 + $0x30] sm:$0xff]
    %v25 = vld [vmem:[%s0 + $0x38] sm:$0xff]
    %v26 = vld [vmem:[%s0 + $0x40] sm:$0xff]
    %v27 = vld [vmem:[%s0 + $0x48] sm:$0xff]
    %v28 = vld [vmem:[%s0 + $0x50] sm:$0xff]
    %v29 = vld [vmem:[%s0 + $0x58] sm:$0xff]
    %v30 = vld [vmem:[%s0 + $0x60] sm:$0xff]
    %v31 = vld [vmem:[%s0 + $0x68] sm:$0xff]
    %v32 = vld [vmem:[%s0 + $0x70] sm:$0xff]
    %v33 = vld [vmem:[%s0 + $0x78] sm:$0xff]
    %v34 = vld [vmem:[%s0 + $0x80] sm:$0xff]
    %v35 = vld [vmem:[%s0 + $0x88] sm:$0xff]
    %v36 = vld [vmem:[%s0 + $0x90] sm:$0xff]
    %v37 = vld [vmem:[%s0 + $0x98] sm:$0xff]
    %v38 = vld [vmem:[%s0 + $0xa0] sm:$0xff]
    %v39 = vld [vmem:[%s0 + $0xa8] sm:$0xff]
    %v40 = vld [vmem:[%s0 + $0xb0] sm:$0xff]
    %v41 = vld [vmem:[%s0 + $0xb8] sm:$0xff]
    %v42 = vld [vmem:[%s0 + $0xc0] sm:$0xff]
    %v43 = vld [vmem:[%s0 + $0xc8] sm:$0xff]
    %v44 = vld [vmem:[%s0 + $0xd0] sm:$0xff]
    %v45 = vld [vmem:[%s0 + $0xd8] sm:$0xff]
    %v46 = vld [vmem:[%s0 + $0xe0] sm:$0xff]
    %v47 = vld [vmem:[%s0 + $0xe8] sm:$0xff]
    %v48 = vld [vmem:[%s0 + $0xf0] sm:$0xff]
    %v49 = vld [vmem:[%s0 + $0xf8] sm:$0xff]
    %v50 = vadd.f32 %v18, %v19
    %v51 = vadd.f32 %v50, %v20
    %v52 = vadd.f32 %v51, %v21
    %v53 = vadd.f32 %v52, %v22
    %v54 = vadd.f32 %v53, %v23
    %v55 = vadd.f32 %v54, %v24
    %v56 = vadd.f32 %v55, %v25
    %v57 = vadd.f32 %v56, %v26
    %v58 = vadd.f32 %v57, %v27
    %v59 = vadd.f32 %v58, %v28
    %v60 = vadd.f32 %v59, %v29
    %v61 = vadd.f32 %v60, %v30
    %v62 = vadd.f32 %v61, %v31
    %v63 = vadd.f32 %v62, %v32
    %v64 = vadd.f32 %v63, %v33
    %v65 = vadd.f32 %v64, %v34
    %v66 = vadd.f32 %v65, %v35
    %v67 = vadd.f32 %v66, %v36
    %v68 = vadd.f32 %v67, %v37
    %v69 = vadd.f32 %v68, %v38
    %v70 = vadd.f32 %v69, %v39
    %v71 = vadd.f32 %v70, %v40
    %v72 = vadd.f32 %v71, %v41
    %v73 = vadd.f32 %v72, %v42
    %v74 = vadd.f32 %v73, %v43
    %v75 = vadd.f32 %v74, %v44
    %v76 = vadd.f32 %v75, %v45
    %v77 = vadd.f32 %v76, %v46
    %v78 = vadd.f32 %v77, %v47
    %v79 = vadd.f32 %v78, %v48
    %v80 = vadd.f32 %v79, %v49
    %v81 = vrot.slane %v80, 4
    %v82 = vadd.f32 %v80, %v81
    %v83 = vrot.slane %v82, 2
    %v84 = vadd.f32 %v82, %v83
    %v85 = vrot.slane %v84, 1
    %v86 = vadd.f32 %v84, %v85
    %v87 = vrcp.pop 256.0
    %v88 = vmul.f32 256.0, %v87
    %v89 = vsub.f32 1.0, %v88
    %v90 = vmul.f32 %v87, %v89
    %v91 = vadd.f32 %v87, %v90
    %vm92 = vweird.f32 %v87
    %v93 = vsel %vm92, %v87, %v91
    %v94 = vmul.f32 %v86, %v93
    %v95 = vld [vmem:[%s0 + $0x100] sm:$0xff]
    %v96 = vld [vmem:[%s0 + $0x108] sm:$0xff]
    %v97 = vld [vmem:[%s0 + $0x110] sm:$0xff]
    %v98 = vld [vmem:[%s0 + $0x118] sm:$0xff]
    %v99 = vld [vmem:[%s0 + $0x120] sm:$0xff]
    %v100 = vld [vmem:[%s0 + $0x128] sm:$0xff]
    %v101 = vld [vmem:[%s0 + $0x130] sm:$0xff]
    %v102 = vld [vmem:[%s0 + $0x138] sm:$0xff]
    %v103 = vld [vmem:[%s0 + $0x140] sm:$0xff]
    %v104 = vld [vmem:[%s0 + $0x148] sm:$0xff]
    %v105 = vld [vmem:[%s0 + $0x150] sm:$0xff]
    %v106 = vld [vmem:[%s0 + $0x158] sm:$0xff]
    %v107 = vld [vmem:[%s0 + $0x160] sm:$0xff]
    %v108 = vld [vmem:[%s0 + $0x168] sm:$0xff]
    %v109 = vld [vmem:[%s0 + $0x170] sm:$0xff]
    %v110 = vld [vmem:[%s0 + $0x178] sm:$0xff]
    %v111 = vld [vmem:[%s0 + $0x180] sm:$0xff]
    %v112 = vld [vmem:[%s0 + $0x188] sm:$0xff]
    %v113 = vld [vmem:[%s0 + $0x190] sm:$0xff]
    %v114 = vld [vmem:[%s0 + $0x198] sm:$0xff]
    %v115 = vld [vmem:[%s0 + $0x1a0] sm:$0xff]
    %v116 = vld [vmem:[%s0 + $0x1a8] sm:$0xff]
    %v117 = vld [vmem:[%s0 + $0x1b0] sm:$0xff]
    %v118 = vld [vmem:[%s0 + $0x1b8] sm:$0xff]
    %v119 = vld [vmem:[%s0 + $0x1c0] sm:$0xff]
    %v120 = vld [vmem:[%s0 + $0x1c8] sm:$0xff]
    %v121 = vld [vmem:[%s0 + $0x1d0] sm:$0xff]
    %v122 = vld [vmem:[%s0 + $0x1d8] sm:$0xff]
    %v123 = vld [vmem:[%s0 + $0x1e0] sm:$0xff]
    %v124 = vld [vmem:[%s0 + $0x1e8] sm:$0xff]
    %v125 = vld [vmem:[%s0 + $0x1f0] sm:$0xff]
    %v126 = vld [vmem:[%s0 + $0x1f8] sm:$0xff]
    %v127 = vadd.f32 %v95, %v96
    %v128 = vadd.f32 %v127, %v97
    %v129 = vadd.f32 %v128, %v98
    %v130 = vadd.f32 %v129, %v99
    %v131 = vadd.f32 %v130, %v100
    %v132 = vadd.f32 %v131, %v101
    %v133 = vadd.f32 %v132, %v102
    %v134 = vadd.f32 %v133, %v103
    %v135 = vadd.f32 %v134, %v104
    %v136 = vadd.f32 %v135, %v105
    %v137 = vadd.f32 %v136, %v106
    %v138 = vadd.f32 %v137, %v107
    %v139 = vadd.f32 %v138, %v108
    %v140 = vadd.f32 %v139, %v109
    %v141 = vadd.f32 %v140, %v110
    %v142 = vadd.f32 %v141, %v111
    %v143 = vadd.f32 %v142, %v112
    %v144 = vadd.f32 %v143, %v113
    %v145 = vadd.f32 %v144, %v114
    %v146 = vadd.f32 %v145, %v115
    %v147 = vadd.f32 %v146, %v116
    %v148 = vadd.f32 %v147, %v117
    %v149 = vadd.f32 %v148, %v118
    %v150 = vadd.f32 %v149, %v119
    %v151 = vadd.f32 %v150, %v120
    %v152 = vadd.f32 %v151, %v121
    %v153 = vadd.f32 %v152, %v122
    %v154 = vadd.f32 %v153, %v123
    %v155 = vadd.f32 %v154, %v124
    %v156 = vadd.f32 %v155, %v125
    %v157 = vadd.f32 %v156, %v126
    %v158 = vrot.slane %v157, 4
    %v159 = vadd.f32 %v157, %v158
    %v160 = vrot.slane %v159, 2
    %v161 = vadd.f32 %v159, %v160
    %v162 = vrot.slane %v161, 1
    %v163 = vadd.f32 %v161, %v162
    %v164 = vmul.f32 %v163, %v93
    %vm165 = vcmask 1040384
    %v166 = vsel %vm165, %v94, %v164
    %v167 = vpack.c.bf16 %v166, %v166
    %v168 = vld [vmem:[%s1] sm:$0xf]
    %v169 = vld [vmem:[%s1 + $0x4] sm:$0xf]
    %v170 = vld [vmem:[%s1 + $0x8] sm:$0xf]
    %v171 = vld [vmem:[%s1 + $0xc] sm:$0xf]
    %v172 = vld [vmem:[%s1 + $0x10] sm:$0xf]
    %v173 = vld [vmem:[%s1 + $0x14] sm:$0xf]
    %v174 = vld [vmem:[%s1 + $0x18] sm:$0xf]
    %v175 = vld [vmem:[%s1 + $0x1c] sm:$0xf]
    %v176 = vld [vmem:[%s1 + $0x20] sm:$0xf]
    %v177 = vld [vmem:[%s1 + $0x24] sm:$0xf]
    %v178 = vld [vmem:[%s1 + $0x28] sm:$0xf]
    %v179 = vld [vmem:[%s1 + $0x2c] sm:$0xf]
    %v180 = vld [vmem:[%s1 + $0x30] sm:$0xf]
    %v181 = vld [vmem:[%s1 + $0x34] sm:$0xf]
    %v182 = vld [vmem:[%s1 + $0x38] sm:$0xf]
    %v183 = vld [vmem:[%s1 + $0x3c] sm:$0xf]
    %v184 = vld [vmem:[%s2] sm:$0x1]
    %v186 = vperm.slane %v184, 0
    %v204 = vunpack.c.l.b16 %v168
    %v205 = vunpack.c.l.b16 %v169
    %v206 = vunpack.c.l.b16 %v170
    %v207 = vunpack.c.l.b16 %v171
    %v208 = vunpack.c.l.b16 %v172
    %v209 = vunpack.c.l.b16 %v173
    %v210 = vunpack.c.l.b16 %v174
    %v211 = vunpack.c.l.b16 %v175
    %v212 = vunpack.c.l.b16 %v176
    %v213 = vunpack.c.l.b16 %v177
    %v214 = vunpack.c.l.b16 %v178
    %v215 = vunpack.c.l.b16 %v179
    %v216 = vunpack.c.l.b16 %v180
    %v217 = vunpack.c.l.b16 %v181
    %v218 = vunpack.c.l.b16 %v182
    %v219 = vunpack.c.l.b16 %v183
    %v220 = vpack.c.b16 %v205, %v204
    %v221 = vpack.c.b16 %v207, %v206
    %v222 = vpack.c.b16 %v209, %v208
    %v223 = vpack.c.b16 %v211, %v210
    %v224 = vpack.c.b16 %v213, %v212
    %v225 = vpack.c.b16 %v215, %v214
    %v226 = vpack.c.b16 %v217, %v216
    %v227 = vpack.c.b16 %v219, %v218
    %236 = vmatpush.bf16.msra.mxu0 %v227
    %237 = vmatpush.bf16.msra.mxu0 %v226
    %238 = vmatpush.bf16.msra.mxu0 %v225
    %239 = vmatpush.bf16.msra.mxu0 %v224
    %240 = vmatpush.bf16.msra.mxu0 %v223
    %241 = vmatpush.bf16.msra.mxu0 %v222
    %242 = vmatpush.bf16.msra.mxu0 %v221
    %243 = vmatpush.bf16.msra.mxu0 %v220
    %244 = vmatmul.bf16.gmra.mxu0 %v167
    %v245 = vpop.f32.mrf.mxu0
    %v246 = vadd.f32 %v186, %v245
    %v247 = vpop.f32.mrf.mxu0
    %248 = vdwg.mxu0
    %v249 = vlaneseq
    %v250 = vand.u32 %v249, 127
    %vm251 = vcmp.lt.s32.totalorder %v250, 10
    %v252 = vsel %vm251, %v246, -1e+30
    %vm253 = vcmask 1041408
    %v254 = vsel %vm253, %v252, -inf
    %255 = vmax.xlane.f32.xlu0 %v254
    %v256 = vpop.xlane.xlu0 %255
    %v257 = vsub.f32 %v252, %v256
    %v258 = vmul.f32 %v257, 1.442695
    %v259 = vpow.pop %v258
    %v260 = vsel %vm251, %v259, 0.0
    %v261 = vsel %vm253, %v260, 0.0
    %262 = vadd.xlane.f32.xlu0 %v261
    %v263 = vpop.xlane.xlu0 %262
    %v264 = vlog2.pop %v263
    %v265 = vmul.f32 %v264, 0.6931472
    %v266 = vadd.f32 %v256, %v265
    %v267 = vld [vmem:[%s3] sm:$0x3]
    %268 = vset.pattern.permute.xlu0 0
    %269 = vperm.xlu0 %268, %v267
    %v270 = vpop.permute.xlu0 %269
    %vm271 = vcmp.eq.s32.totalorder %v250, %v270
    %v272 = vsel %vm271, 1, 0
    %v273 = vcvt.s32.f32 %v272
    %v274 = vmul.f32 %v273, %v246
    %v275 = vsel %vm253, %v274, 0.0
    %276 = vadd.xlane.f32.xlu0 %v275
    %v277 = vpop.xlane.xlu0 %276
    %v278 = vsub.f32 %v266, %v277
    %vm279 = vcmask 1024
    %v280 = vsel %vm279, %v278, 0.0
    %281 = vadd.xlane.f32.xlu0 %v280
    %v282 = vpop.xlane.xlu0 %281
    %v283 = vrot.slane %v282, 4
    %v284 = vadd.f32 %v282, %v283
    %v285 = vrot.slane %v284, 2
    %v286 = vadd.f32 %v284, %v285
    %v287 = vrot.slane %v286, 1
    %v288 = vadd.f32 %v286, %v287
    %s289 = vtos %v288
    %v290 = vrcp.pop 2.0
    %v291 = vmul.f32 2.0, %v290
    %v292 = vsub.f32 1.0, %v291
    %v293 = vmul.f32 %v290, %v292
    %v294 = vadd.f32 %v290, %v293
    %vm295 = vweird.f32 %v290
    %v296 = vsel %vm295, %v290, %v294
    %s297 = vtos %v296
    %s298 = smul.f32 %s289, %s297
    %s299 = scalar_lea.smem [#allocation2], 0
    %300 = sst [smem:[%s299]] %s298
    // Predicated region
    $region18: #{trainer_forward.7} parent=1 // pred_check
      _
    $region19: #{trainer_forward.7} parent=1 // pred_check_branch
      %302 = sbr.rel (0) target = $region21
    $region20: #{trainer_forward.7} parent=1 // pred_region
      %304 = vsyncadd [#allocation3], 0
      %s306 = sshll.u32 %s4, 4
      %s307 = int_to_ptr.hbm [resolvable:$true] %s306
      %309 = dma.smem_to_hbm [#allocation2], 16, %s307, [#allocation3]
    $region21: #{trainer_forward.7} parent=1 // pred_fallthru
      _
    // Predicated region
    $region22: #{trainer_forward.7} parent=1 // pred_check
      _
    $region23: #{trainer_forward.7} parent=1 // pred_check_branch
      %311 = sbr.rel (0) target = $region25
    $region24: #{trainer_forward.7} parent=1 // pred_region
      %313 = dma.done [#allocation3], 16
    $region25: #{trainer_forward.7} parent=1 // pred_fallthru
      _
    %314 = sfence
    %315 = vsyncpa [#allocation3], 1

// kernel: trainer_forward.4
$region0: #{trainer_forward.4}
  #allocation0 [shape = 'u32[]', space=smem, size = 0x4, offset = 0x4, fixed_abs, tag = 'smem constant byte address 0x4 - core index']
  #allocation1 [shape = 'u32[72,128]{1,0:T(1,128)}', space=vmem, size = 0x9000, scoped, tag = 'internal scratch']
  %s0 = inlined_call_operand.vmem [shape: f32[2,18,18,128], index: 0, kind: input, shape index: {}]
  %s1 = inlined_call_operand.vmem [shape: bf16[9,128,128], index: 1, kind: input, shape index: {}]
  %s2 = inlined_call_operand.vmem [shape: f32[1,128], index: 2, kind: input, shape index: {}]
  %s3 = inlined_call_operand.vmem [shape: f32[1,128], index: 3, kind: input, shape index: {}]
  %s4 = inlined_call_operand.vmem [shape: f32[512,128], index: 4, kind: output, shape index: {}]
  %s5 = sld [smem:[#allocation0]]
  $region26: #{trainer_forward.4} parent=0
    _
  %s7 = ssub.s32 1, %s5
  %s8 = scalar_select 0, %s7, %s5
  // Predicated region
  $region2: #{trainer_forward.4} parent=0 // pred_check
    _
  $region3: #{trainer_forward.4} parent=0 // pred_check_branch
    %10 = sbr.rel (0) target = $region5
  $region4: #{trainer_forward.4} parent=0 // pred_region
    _
  $region5: #{trainer_forward.4} parent=0 // pred_fallthru
    _
  // Predicated region
  $region6: #{trainer_forward.4} parent=0 // pred_check
    _
  $region7: #{trainer_forward.4} parent=0 // pred_check_branch
    %12 = sbr.rel (0) target = $region9
  $region8: #{trainer_forward.4} parent=0 // pred_region
    _
  $region9: #{trainer_forward.4} parent=0 // pred_fallthru
    _
  // Predicated region
  $region10: #{trainer_forward.4} parent=0 // pred_check
    _
  $region11: #{trainer_forward.4} parent=0 // pred_check_branch
    %14 = sbr.rel (0) target = $region13
  $region12: #{trainer_forward.4} parent=0 // pred_region
    _
  $region13: #{trainer_forward.4} parent=0 // pred_fallthru
    _
  // Predicated region
  $region14: #{trainer_forward.4} parent=0 // pred_check
    _
  $region15: #{trainer_forward.4} parent=0 // pred_check_branch
    %16 = sbr.rel (0) target = $region17
  $region16: #{trainer_forward.4} parent=0 // pred_region
    _
  $region17: #{trainer_forward.4} parent=0 // pred_fallthru
    _
  %v17 = vld [vmem:[%s0] sm:$0xff]
  %v18 = vld [vmem:[%s0 + $0x8] sm:$0xff]
  %v19 = vld [vmem:[%s0 + $0x18] sm:$0xff]
  %v20 = vld [vmem:[%s0 + $0x20] sm:$0xff]
  %v21 = vld [vmem:[%s0 + $0x30] sm:$0xff]
  %v22 = vld [vmem:[%s0 + $0x38] sm:$0xff]
  %v23 = vld [vmem:[%s0 + $0x48] sm:$0xff]
  %v24 = vld [vmem:[%s0 + $0x50] sm:$0xff]
  %v25 = vld [vmem:[%s0 + $0x60] sm:$0xff]
  %v26 = vld [vmem:[%s0 + $0x68] sm:$0xff]
  %v27 = vld [vmem:[%s0 + $0x78] sm:$0xff]
  %v28 = vld [vmem:[%s0 + $0x80] sm:$0xff]
  %v29 = vld [vmem:[%s0 + $0x90] sm:$0xff]
  %v30 = vld [vmem:[%s0 + $0x98] sm:$0xff]
  %v31 = vld [vmem:[%s0 + $0xa8] sm:$0xff]
  %v32 = vld [vmem:[%s0 + $0xb0] sm:$0xff]
  %v33 = vld [vmem:[%s0 + $0xc0] sm:$0xff]
  %v34 = vld [vmem:[%s0 + $0xc8] sm:$0xff]
  %v35 = vld [vmem:[%s0 + $0xd8] sm:$0xff]
  %v36 = vld [vmem:[%s0 + $0xe0] sm:$0xff]
  %v37 = vld [vmem:[%s0 + $0xf0] sm:$0xff]
  %v38 = vld [vmem:[%s0 + $0xf8] sm:$0xff]
  %v39 = vld [vmem:[%s0 + $0x108] sm:$0xff]
  %v40 = vld [vmem:[%s0 + $0x110] sm:$0xff]
  %v41 = vld [vmem:[%s0 + $0x120] sm:$0xff]
  %v42 = vld [vmem:[%s0 + $0x128] sm:$0xff]
  %v43 = vld [vmem:[%s0 + $0x138] sm:$0xff]
  %v44 = vld [vmem:[%s0 + $0x140] sm:$0xff]
  %v45 = vld [vmem:[%s0 + $0x150] sm:$0xff]
  %v46 = vld [vmem:[%s0 + $0x158] sm:$0xff]
  %v47 = vld [vmem:[%s0 + $0x168] sm:$0xff]
  %v48 = vld [vmem:[%s0 + $0x170] sm:$0xff]
  %v49 = vld [vmem:[%s0 + $0x1b0] sm:$0xff]
  %v50 = vld [vmem:[%s0 + $0x1b8] sm:$0xff]
  %v51 = vld [vmem:[%s0 + $0x1c8] sm:$0xff]
  %v52 = vld [vmem:[%s0 + $0x1d0] sm:$0xff]
  %v53 = vld [vmem:[%s0 + $0x1e0] sm:$0xff]
  %v54 = vld [vmem:[%s0 + $0x1e8] sm:$0xff]
  %v55 = vld [vmem:[%s0 + $0x1f8] sm:$0xff]
  %v56 = vld [vmem:[%s0 + $0x200] sm:$0xff]
  %v57 = vld [vmem:[%s0 + $0x210] sm:$0xff]
  %v58 = vld [vmem:[%s0 + $0x218] sm:$0xff]
  %v59 = vld [vmem:[%s0 + $0x228] sm:$0xff]
  %v60 = vld [vmem:[%s0 + $0x230] sm:$0xff]
  %v61 = vld [vmem:[%s0 + $0x240] sm:$0xff]
  %v62 = vld [vmem:[%s0 + $0x248] sm:$0xff]
  %v63 = vld [vmem:[%s0 + $0x258] sm:$0xff]
  %v64 = vld [vmem:[%s0 + $0x260] sm:$0xff]
  %v65 = vld [vmem:[%s0 + $0x270] sm:$0xff]
  %v66 = vld [vmem:[%s0 + $0x278] sm:$0xff]
  %v67 = vld [vmem:[%s0 + $0x288] sm:$0xff]
  %v68 = vld [vmem:[%s0 + $0x290] sm:$0xff]
  %v69 = vld [vmem:[%s0 + $0x2a0] sm:$0xff]
  %v70 = vld [vmem:[%s0 + $0x2a8] sm:$0xff]
  %v71 = vld [vmem:[%s0 + $0x2b8] sm:$0xff]
  %v72 = vld [vmem:[%s0 + $0x2c0] sm:$0xff]
  %v73 = vld [vmem:[%s0 + $0x2d0] sm:$0xff]
  %v74 = vld [vmem:[%s0 + $0x2d8] sm:$0xff]
  %v75 = vld [vmem:[%s0 + $0x2e8] sm:$0xff]
  %v76 = vld [vmem:[%s0 + $0x2f0] sm:$0xff]
  %v77 = vld [vmem:[%s0 + $0x300] sm:$0xff]
  %v78 = vld [vmem:[%s0 + $0x308] sm:$0xff]
  %v79 = vld [vmem:[%s0 + $0x318] sm:$0xff]
  %v80 = vld [vmem:[%s0 + $0x320] sm:$0xff]
  %v81 = vpack.c.bf16 %v18, %v17
  %v82 = vpack.c.bf16 %v20, %v19
  %v83 = vpack.c.bf16 %v22, %v21
  %v84 = vpack.c.bf16 %v24, %v23
  %v85 = vpack.c.bf16 %v26, %v25
  %v86 = vpack.c.bf16 %v28, %v27
  %v87 = vpack.c.bf16 %v30, %v29
  %v88 = vpack.c.bf16 %v32, %v31
  %v89 = vpack.c.bf16 %v34, %v33
  %v90 = vpack.c.bf16 %v36, %v35
  %v91 = vpack.c.bf16 %v38, %v37
  %v92 = vpack.c.bf16 %v40, %v39
  %v93 = vpack.c.bf16 %v42, %v41
  %v94 = vpack.c.bf16 %v44, %v43
  %v95 = vpack.c.bf16 %v46, %v45
  %v96 = vpack.c.bf16 %v48, %v47
  %v97 = vpack.c.bf16 %v50, %v49
  %v98 = vpack.c.bf16 %v52, %v51
  %v99 = vpack.c.bf16 %v54, %v53
  %v100 = vpack.c.bf16 %v56, %v55
  %v101 = vpack.c.bf16 %v58, %v57
  %v102 = vpack.c.bf16 %v60, %v59
  %v103 = vpack.c.bf16 %v62, %v61
  %v104 = vpack.c.bf16 %v64, %v63
  %v105 = vpack.c.bf16 %v66, %v65
  %v106 = vpack.c.bf16 %v68, %v67
  %v107 = vpack.c.bf16 %v70, %v69
  %v108 = vpack.c.bf16 %v72, %v71
  %v109 = vpack.c.bf16 %v74, %v73
  %v110 = vpack.c.bf16 %v76, %v75
  %v111 = vpack.c.bf16 %v78, %v77
  %v112 = vpack.c.bf16 %v80, %v79
  %v113 = vld [vmem:[%s1] sm:$0xf]
  %v114 = vld [vmem:[%s1 + $0x4] sm:$0xf]
  %v115 = vld [vmem:[%s1 + $0x8] sm:$0xf]
  %v116 = vld [vmem:[%s1 + $0xc] sm:$0xf]
  %v117 = vld [vmem:[%s1 + $0x10] sm:$0xf]
  %v118 = vld [vmem:[%s1 + $0x14] sm:$0xf]
  %v119 = vld [vmem:[%s1 + $0x18] sm:$0xf]
  %v120 = vld [vmem:[%s1 + $0x1c] sm:$0xf]
  %v121 = vld [vmem:[%s1 + $0x20] sm:$0xf]
  %v122 = vld [vmem:[%s1 + $0x24] sm:$0xf]
  %v123 = vld [vmem:[%s1 + $0x28] sm:$0xf]
  %v124 = vld [vmem:[%s1 + $0x2c] sm:$0xf]
  %v125 = vld [vmem:[%s1 + $0x30] sm:$0xf]
  %v126 = vld [vmem:[%s1 + $0x34] sm:$0xf]
  %v127 = vld [vmem:[%s1 + $0x38] sm:$0xf]
  %v128 = vld [vmem:[%s1 + $0x3c] sm:$0xf]
  %v129 = vld [vmem:[%s0 + $0x1] sm:$0xff]
  %v130 = vld [vmem:[%s0 + $0x9] sm:$0xff]
  %v131 = vld [vmem:[%s0 + $0x19] sm:$0xff]
  %v132 = vld [vmem:[%s0 + $0x21] sm:$0xff]
  %v133 = vld [vmem:[%s0 + $0x31] sm:$0xff]
  %v134 = vld [vmem:[%s0 + $0x39] sm:$0xff]
  %v135 = vld [vmem:[%s0 + $0x49] sm:$0xff]
  %v136 = vld [vmem:[%s0 + $0x51] sm:$0xff]
  %v137 = vld [vmem:[%s0 + $0x61] sm:$0xff]
  %v138 = vld [vmem:[%s0 + $0x69] sm:$0xff]
  %v139 = vld [vmem:[%s0 + $0x79] sm:$0xff]
  %v140 = vld [vmem:[%s0 + $0x81] sm:$0xff]
  %v141 = vld [vmem:[%s0 + $0x91] sm:$0xff]
  %v142 = vld [vmem:[%s0 + $0x99] sm:$0xff]
  %v143 = vld [vmem:[%s0 + $0xa9] sm:$0xff]
  %v144 = vld [vmem:[%s0 + $0xb1] sm:$0xff]
  %v145 = vld [vmem:[%s0 + $0xc1] sm:$0xff]
  %v146 = vld [vmem:[%s0 + $0xc9] sm:$0xff]
  %v147 = vld [vmem:[%s0 + $0xd9] sm:$0xff]
  %v148 = vld [vmem:[%s0 + $0xe1] sm:$0xff]
  %v149 = vld [vmem:[%s0 + $0xf1] sm:$0xff]
  %v150 = vld [vmem:[%s0 + $0xf9] sm:$0xff]
  %v151 = vld [vmem:[%s0 + $0x109] sm:$0xff]
  %v152 = vld [vmem:[%s0 + $0x111] sm:$0xff]
  %v153 = vld [vmem:[%s0 + $0x121] sm:$0xff]
  %v154 = vld [vmem:[%s0 + $0x129] sm:$0xff]
  %v155 = vld [vmem:[%s0 + $0x139] sm:$0xff]
  %v156 = vld [vmem:[%s0 + $0x141] sm:$0xff]
  %v157 = vld [vmem:[%s0 + $0x151] sm:$0xff]
  %v158 = vld [vmem:[%s0 + $0x159] sm:$0xff]
  %v159 = vld [vmem:[%s0 + $0x169] sm:$0xff]
  %v160 = vld [vmem:[%s0 + $0x171] sm:$0xff]
  %v161 = vld [vmem:[%s0 + $0x1b1] sm:$0xff]
  %v162 = vld [vmem:[%s0 + $0x1b9] sm:$0xff]
  %v163 = vld [vmem:[%s0 + $0x1c9] sm:$0xff]
  %v164 = vld [vmem:[%s0 + $0x1d1] sm:$0xff]
  %v165 = vld [vmem:[%s0 + $0x1e1] sm:$0xff]
  %v166 = vld [vmem:[%s0 + $0x1e9] sm:$0xff]
  %v167 = vld [vmem:[%s0 + $0x1f9] sm:$0xff]
  %v168 = vld [vmem:[%s0 + $0x201] sm:$0xff]
  %v169 = vld [vmem:[%s0 + $0x211] sm:$0xff]
  %v170 = vld [vmem:[%s0 + $0x219] sm:$0xff]
  %v171 = vld [vmem:[%s0 + $0x229] sm:$0xff]
  %v172 = vld [vmem:[%s0 + $0x231] sm:$0xff]
  %v173 = vld [vmem:[%s0 + $0x241] sm:$0xff]
  %v174 = vld [vmem:[%s0 + $0x249] sm:$0xff]
  %v175 = vld [vmem:[%s0 + $0x259] sm:$0xff]
  %v176 = vld [vmem:[%s0 + $0x261] sm:$0xff]
  %v177 = vld [vmem:[%s0 + $0x271] sm:$0xff]
  %v178 = vld [vmem:[%s0 + $0x279] sm:$0xff]
  %v179 = vld [vmem:[%s0 + $0x289] sm:$0xff]
  %v180 = vld [vmem:[%s0 + $0x291] sm:$0xff]
  %v181 = vld [vmem:[%s0 + $0x2a1] sm:$0xff]
  %v182 = vld [vmem:[%s0 + $0x2a9] sm:$0xff]
  %v183 = vld [vmem:[%s0 + $0x2b9] sm:$0xff]
  %v184 = vld [vmem:[%s0 + $0x2c1] sm:$0xff]
  %v185 = vld [vmem:[%s0 + $0x2d1] sm:$0xff]
  %v186 = vld [vmem:[%s0 + $0x2d9] sm:$0xff]
  %v187 = vld [vmem:[%s0 + $0x2e9] sm:$0xff]
  %v188 = vld [vmem:[%s0 + $0x2f1] sm:$0xff]
  %v189 = vld [vmem:[%s0 + $0x301] sm:$0xff]
  %v190 = vld [vmem:[%s0 + $0x309] sm:$0xff]
  %v191 = vld [vmem:[%s0 + $0x319] sm:$0xff]
  %v192 = vld [vmem:[%s0 + $0x321] sm:$0xff]
  %v193 = vpack.c.bf16 %v130, %v129
  %v194 = vpack.c.bf16 %v132, %v131
  %v195 = vpack.c.bf16 %v134, %v133
  %v196 = vpack.c.bf16 %v136, %v135
  %v197 = vpack.c.bf16 %v138, %v137
  %v198 = vpack.c.bf16 %v140, %v139
  %v199 = vpack.c.bf16 %v142, %v141
  %v200 = vpack.c.bf16 %v144, %v143
  %v201 = vpack.c.bf16 %v146, %v145
  %v202 = vpack.c.bf16 %v148, %v147
  %v203 = vpack.c.bf16 %v150, %v149
  %v204 = vpack.c.bf16 %v152, %v151
  %v205 = vpack.c.bf16 %v154, %v153
  %v206 = vpack.c.bf16 %v156, %v155
  %v207 = vpack.c.bf16 %v158, %v157
  %v208 = vpack.c.bf16 %v160, %v159
  %v209 = vpack.c.bf16 %v162, %v161
  %v210 = vpack.c.bf16 %v164, %v163
  %v211 = vpack.c.bf16 %v166, %v165
  %v212 = vpack.c.bf16 %v168, %v167
  %v213 = vpack.c.bf16 %v170, %v169
  %v214 = vpack.c.bf16 %v172, %v171
  %v215 = vpack.c.bf16 %v174, %v173
  %v216 = vpack.c.bf16 %v176, %v175
  %v217 = vpack.c.bf16 %v178, %v177
  %v218 = vpack.c.bf16 %v180, %v179
  %v219 = vpack.c.bf16 %v182, %v181
  %v220 = vpack.c.bf16 %v184, %v183
  %v221 = vpack.c.bf16 %v186, %v185
  %v222 = vpack.c.bf16 %v188, %v187
  %v223 = vpack.c.bf16 %v190, %v189
  %v224 = vpack.c.bf16 %v192, %v191
  %s225 = scalar_lea.vmem %s1, 64
  %v226 = vld [vmem:[%s225] sm:$0xf]
  %v227 = vld [vmem:[%s225 + $0x4] sm:$0xf]
  %v228 = vld [vmem:[%s225 + $0x8] sm:$0xf]
  %v229 = vld [vmem:[%s225 + $0xc] sm:$0xf]
  %v230 = vld [vmem:[%s225 + $0x10] sm:$0xf]
  %v231 = vld [vmem:[%s225 + $0x14] sm:$0xf]
  %v232 = vld [vmem:[%s225 + $0x18] sm:$0xf]
  %v233 = vld [vmem:[%s225 + $0x1c] sm:$0xf]
  %v234 = vld [vmem:[%s225 + $0x20] sm:$0xf]
  %v235 = vld [vmem:[%s225 + $0x24] sm:$0xf]
  %v236 = vld [vmem:[%s225 + $0x28] sm:$0xf]
  %v237 = vld [vmem:[%s225 + $0x2c] sm:$0xf]
  %v238 = vld [vmem:[%s225 + $0x30] sm:$0xf]
  %v239 = vld [vmem:[%s225 + $0x34] sm:$0xf]
  %v240 = vld [vmem:[%s225 + $0x38] sm:$0xf]
  %v241 = vld [vmem:[%s225 + $0x3c] sm:$0xf]
  %v258 = vunpack.c.l.b16 %v226
  %v259 = vunpack.c.l.b16 %v227
  %v260 = vunpack.c.l.b16 %v228
  %v261 = vunpack.c.l.b16 %v229
  %v262 = vunpack.c.l.b16 %v230
  %v263 = vunpack.c.l.b16 %v231
  %v264 = vunpack.c.l.b16 %v232
  %v265 = vunpack.c.l.b16 %v233
  %v266 = vunpack.c.l.b16 %v234
  %v267 = vunpack.c.l.b16 %v235
  %v268 = vunpack.c.l.b16 %v236
  %v269 = vunpack.c.l.b16 %v237
  %v270 = vunpack.c.l.b16 %v238
  %v271 = vunpack.c.l.b16 %v239
  %v272 = vunpack.c.l.b16 %v240
  %v273 = vunpack.c.l.b16 %v241
  %v274 = vpack.c.b16 %v259, %v258
  %v275 = vpack.c.b16 %v261, %v260
  %v276 = vpack.c.b16 %v263, %v262
  %v277 = vpack.c.b16 %v265, %v264
  %v278 = vpack.c.b16 %v267, %v266
  %v279 = vpack.c.b16 %v269, %v268
  %v280 = vpack.c.b16 %v271, %v270
  %v281 = vpack.c.b16 %v273, %v272
  %290 = vmatpush.bf16.msra.mxu0 %v281
  %291 = vmatpush.bf16.msra.mxu0 %v280
  %292 = vmatpush.bf16.msra.mxu0 %v279
  %293 = vmatpush.bf16.msra.mxu0 %v278
  %294 = vmatpush.bf16.msra.mxu0 %v277
  %295 = vmatpush.bf16.msra.mxu0 %v276
  %296 = vmatpush.bf16.msra.mxu0 %v275
  %297 = vmatpush.bf16.msra.mxu0 %v274
  %298 = vmatmul.bf16.gmra.mxu0 %v193
  %v299 = vpop.f32.mrf.mxu0
  %v300 = vadd.f32 0.0, %v299
  %v301 = vpop.f32.mrf.mxu0
  %v302 = vadd.f32 0.0, %v301
  %303 = vmatmul.bf16.gmra.mxu0 %v194
  %v304 = vpop.f32.mrf.mxu0
  %v305 = vadd.f32 0.0, %v304
  %v306 = vpop.f32.mrf.mxu0
  %v307 = vadd.f32 0.0, %v306
  %308 = vmatmul.bf16.gmra.mxu0 %v195
  %v309 = vpop.f32.mrf.mxu0
  %v310 = vadd.f32 0.0, %v309
  %v311 = vpop.f32.mrf.mxu0
  %v312 = vadd.f32 0.0, %v311
  %313 = vmatmul.bf16.gmra.mxu0 %v196
  %v314 = vpop.f32.mrf.mxu0
  %v315 = vadd.f32 0.0, %v314
  %v316 = vpop.f32.mrf.mxu0
  %v317 = vadd.f32 0.0, %v316
  %318 = vmatmul.bf16.gmra.mxu0 %v197
  %v319 = vpop.f32.mrf.mxu0
  %v320 = vadd.f32 0.0, %v319
  %v321 = vpop.f32.mrf.mxu0
  %v322 = vadd.f32 0.0, %v321
  %323 = vmatmul.bf16.gmra.mxu0 %v198
  %v324 = vpop.f32.mrf.mxu0
  %v325 = vadd.f32 0.0, %v324
  %v326 = vpop.f32.mrf.mxu0
  %v327 = vadd.f32 0.0, %v326
  %328 = vmatmul.bf16.gmra.mxu0 %v199
  %v329 = vpop.f32.mrf.mxu0
  %v330 = vadd.f32 0.0, %v329
  %v331 = vpop.f32.mrf.mxu0
  %v332 = vadd.f32 0.0, %v331
  %333 = vmatmul.bf16.gmra.mxu0 %v200
  %v334 = vpop.f32.mrf.mxu0
  %v335 = vadd.f32 0.0, %v334
  %v336 = vpop.f32.mrf.mxu0
  %v337 = vadd.f32 0.0, %v336
  %338 = vmatmul.bf16.gmra.mxu0 %v201
  %v339 = vpop.f32.mrf.mxu0
  %v340 = vadd.f32 0.0, %v339
  %v341 = vpop.f32.mrf.mxu0
  %v342 = vadd.f32 0.0, %v341
  %343 = vmatmul.bf16.gmra.mxu0 %v202
  %v344 = vpop.f32.mrf.mxu0
  %v345 = vadd.f32 0.0, %v344
  %v346 = vpop.f32.mrf.mxu0
  %v347 = vadd.f32 0.0, %v346
  %348 = vmatmul.bf16.gmra.mxu0 %v203
  %v349 = vpop.f32.mrf.mxu0
  %v350 = vadd.f32 0.0, %v349
  %v351 = vpop.f32.mrf.mxu0
  %v352 = vadd.f32 0.0, %v351
  %353 = vmatmul.bf16.gmra.mxu0 %v204
  %v354 = vpop.f32.mrf.mxu0
  %v355 = vadd.f32 0.0, %v354
  %v356 = vpop.f32.mrf.mxu0
  %v357 = vadd.f32 0.0, %v356
  %358 = vmatmul.bf16.gmra.mxu0 %v205
  %v359 = vpop.f32.mrf.mxu0
  %v360 = vadd.f32 0.0, %v359
  %v361 = vpop.f32.mrf.mxu0
  %v362 = vadd.f32 0.0, %v361
  %363 = vmatmul.bf16.gmra.mxu0 %v206
  %v364 = vpop.f32.mrf.mxu0
  %v365 = vadd.f32 0.0, %v364
  %v366 = vpop.f32.mrf.mxu0
  %v367 = vadd.f32 0.0, %v366
  %368 = vmatmul.bf16.gmra.mxu0 %v207
  %v369 = vpop.f32.mrf.mxu0
  %v370 = vadd.f32 0.0, %v369
  %v371 = vpop.f32.mrf.mxu0
  %v372 = vadd.f32 0.0, %v371
  %373 = vmatmul.bf16.gmra.mxu0 %v208
  %v374 = vpop.f32.mrf.mxu0
  %v375 = vadd.f32 0.0, %v374
  %v376 = vpop.f32.mrf.mxu0
  %v377 = vadd.f32 0.0, %v376
  %378 = vmatmul.bf16.gmra.mxu0 %v209
  %v379 = vpop.f32.mrf.mxu0
  %v380 = vadd.f32 0.0, %v379
  %v381 = vpop.f32.mrf.mxu0
  %v382 = vadd.f32 0.0, %v381
  %383 = vmatmul.bf16.gmra.mxu0 %v210
  %v384 = vpop.f32.mrf.mxu0
  %v385 = vadd.f32 0.0, %v384
  %v386 = vpop.f32.mrf.mxu0
  %v387 = vadd.f32 0.0, %v386
  %388 = vmatmul.bf16.gmra.mxu0 %v211
  %v389 = vpop.f32.mrf.mxu0
  %v390 = vadd.f32 0.0, %v389
  %v391 = vpop.f32.mrf.mxu0
  %v392 = vadd.f32 0.0, %v391
  %393 = vmatmul.bf16.gmra.mxu0 %v212
  %v394 = vpop.f32.mrf.mxu0
  %v395 = vadd.f32 0.0, %v394
  %v396 = vpop.f32.mrf.mxu0
  %v397 = vadd.f32 0.0, %v396
  %398 = vmatmul.bf16.gmra.mxu0 %v213
  %v399 = vpop.f32.mrf.mxu0
  %v400 = vadd.f32 0.0, %v399
  %v401 = vpop.f32.mrf.mxu0
  %v402 = vadd.f32 0.0, %v401
  %403 = vmatmul.bf16.gmra.mxu0 %v214
  %v404 = vpop.f32.mrf.mxu0
  %v405 = vadd.f32 0.0, %v404
  %v406 = vpop.f32.mrf.mxu0
  %v407 = vadd.f32 0.0, %v406
  %408 = vmatmul.bf16.gmra.mxu0 %v215
  %v409 = vpop.f32.mrf.mxu0
  %v410 = vadd.f32 0.0, %v409
  %v411 = vpop.f32.mrf.mxu0
  %v412 = vadd.f32 0.0, %v411
  %413 = vmatmul.bf16.gmra.mxu0 %v216
  %v414 = vpop.f32.mrf.mxu0
  %v415 = vadd.f32 0.0, %v414
  %v416 = vpop.f32.mrf.mxu0
  %v417 = vadd.f32 0.0, %v416
  %418 = vmatmul.bf16.gmra.mxu0 %v217
  %v419 = vpop.f32.mrf.mxu0
  %v420 = vadd.f32 0.0, %v419
  %v421 = vpop.f32.mrf.mxu0
  %v422 = vadd.f32 0.0, %v421
  %423 = vmatmul.bf16.gmra.mxu0 %v218
  %v424 = vpop.f32.mrf.mxu0
  %v425 = vadd.f32 0.0, %v424
  %v426 = vpop.f32.mrf.mxu0
  %v427 = vadd.f32 0.0, %v426
  %428 = vmatmul.bf16.gmra.mxu0 %v219
  %v429 = vpop.f32.mrf.mxu0
  %v430 = vadd.f32 0.0, %v429
  %v431 = vpop.f32.mrf.mxu0
  %v432 = vadd.f32 0.0, %v431
  %433 = vmatmul.bf16.gmra.mxu0 %v220
  %v434 = vpop.f32.mrf.mxu0
  %v435 = vadd.f32 0.0, %v434
  %v436 = vpop.f32.mrf.mxu0
  %v437 = vadd.f32 0.0, %v436
  %438 = vmatmul.bf16.gmra.mxu0 %v221
  %v439 = vpop.f32.mrf.mxu0
  %v440 = vadd.f32 0.0, %v439
  %v441 = vpop.f32.mrf.mxu0
  %v442 = vadd.f32 0.0, %v441
  %443 = vmatmul.bf16.gmra.mxu0 %v222
  %v444 = vpop.f32.mrf.mxu0
  %v445 = vadd.f32 0.0, %v444
  %v446 = vpop.f32.mrf.mxu0
  %v447 = vadd.f32 0.0, %v446
  %448 = vmatmul.bf16.gmra.mxu0 %v223
  %v449 = vpop.f32.mrf.mxu0
  %v450 = vadd.f32 0.0, %v449
  %v451 = vpop.f32.mrf.mxu0
  %v452 = vadd.f32 0.0, %v451
  %453 = vmatmul.bf16.gmra.mxu0 %v224
  %v454 = vpop.f32.mrf.mxu0
  %v455 = vadd.f32 0.0, %v454
  %v456 = vpop.f32.mrf.mxu0
  %v457 = vadd.f32 0.0, %v456
  %458 = vdwg.mxu0
  %v475 = vunpack.c.l.b16 %v113
  %v476 = vunpack.c.l.b16 %v114
  %v477 = vunpack.c.l.b16 %v115
  %v478 = vunpack.c.l.b16 %v116
  %v479 = vunpack.c.l.b16 %v117
  %v480 = vunpack.c.l.b16 %v118
  %v481 = vunpack.c.l.b16 %v119
  %v482 = vunpack.c.l.b16 %v120
  %v483 = vunpack.c.l.b16 %v121
  %v484 = vunpack.c.l.b16 %v122
  %v485 = vunpack.c.l.b16 %v123
  %v486 = vunpack.c.l.b16 %v124
  %v487 = vunpack.c.l.b16 %v125
  %v488 = vunpack.c.l.b16 %v126
  %v489 = vunpack.c.l.b16 %v127
  %v490 = vunpack.c.l.b16 %v128
  %v491 = vpack.c.b16 %v476, %v475
  %v492 = vpack.c.b16 %v478, %v477
  %v493 = vpack.c.b16 %v480, %v479
  %v494 = vpack.c.b16 %v482, %v481
  %v495 = vpack.c.b16 %v484, %v483
  %v496 = vpack.c.b16 %v486, %v485
  %v497 = vpack.c.b16 %v488, %v487
  %v498 = vpack.c.b16 %v490, %v489
  %507 = vmatpush.bf16.msra.mxu0 %v498
  %508 = vmatpush.bf16.msra.mxu0 %v497
  %509 = vmatpush.bf16.msra.mxu0 %v496
  %510 = vmatpush.bf16.msra.mxu0 %v495
  %511 = vmatpush.bf16.msra.mxu0 %v494
  %512 = vmatpush.bf16.msra.mxu0 %v493
  %513 = vmatpush.bf16.msra.mxu0 %v492
  %514 = vmatpush.bf16.msra.mxu0 %v491
  %515 = vmatmul.bf16.gmra.mxu0 %v81
  %v516 = vpop.f32.mrf.mxu0
  %v517 = vadd.f32 %v300, %v516
  %v518 = vpop.f32.mrf.mxu0
  %v519 = vadd.f32 %v302, %v518
  %520 = vmatmul.bf16.gmra.mxu0 %v82
  %v521 = vpop.f32.mrf.mxu0
  %v522 = vadd.f32 %v305, %v521
  %v523 = vpop.f32.mrf.mxu0
  %v524 = vadd.f32 %v307, %v523
  %525 = vmatmul.bf16.gmra.mxu0 %v83
  %v526 = vpop.f32.mrf.mxu0
  %v527 = vadd.f32 %v310, %v526
  %v528 = vpop.f32.mrf.mxu0
  %v529 = vadd.f32 %v312, %v528
  %530 = vmatmul.bf16.gmra.mxu0 %v84
  %v531 = vpop.f32.mrf.mxu0
  %v532 = vadd.f32 %v315, %v531
  %v533 = vpop.f32.mrf.mxu0
  %v534 = vadd.f32 %v317, %v533
  %535 = vmatmul.bf16.gmra.mxu0 %v85
  %v536 = vpop.f32.mrf.mxu0
  %v537 = vadd.f32 %v320, %v536
  %v538 = vpop.f32.mrf.mxu0
  %v539 = vadd.f32 %v322, %v538
  %540 = vmatmul.bf16.gmra.mxu0 %v86
  %v541 = vpop.f32.mrf.mxu0
  %v542 = vadd.f32 %v325, %v541
  %v543 = vpop.f32.mrf.mxu0
  %v544 = vadd.f32 %v327, %v543
  %545 = vmatmul.bf16.gmra.mxu0 %v87
  %v546 = vpop.f32.mrf.mxu0
  %v547 = vadd.f32 %v330, %v546
  %v548 = vpop.f32.mrf.mxu0
  %v549 = vadd.f32 %v332, %v548
  %550 = vmatmul.bf16.gmra.mxu0 %v88
  %v551 = vpop.f32.mrf.mxu0
  %v552 = vadd.f32 %v335, %v551
  %v553 = vpop.f32.mrf.mxu0
  %v554 = vadd.f32 %v337, %v553
  %555 = vmatmul.bf16.gmra.mxu0 %v89
  %v556 = vpop.f32.mrf.mxu0
  %v557 = vadd.f32 %v340, %v556
  %v558 = vpop.f32.mrf.mxu0
  %v559 = vadd.f32 %v342, %v558
  %560 = vmatmul.bf16.gmra.mxu0 %v90
  %v561 = vpop.f32.mrf.mxu0
  %v562 = vadd.f32 %v345, %v561
  %v563 = vpop.f32.mrf.mxu0
  %v564 = vadd.f32 %v347, %v563
  %565 = vmatmul.bf16.gmra.mxu0 %v91
  %v566 = vpop.f32.mrf.mxu0
  %v567 = vadd.f32 %v350, %v566
  %v568 = vpop.f32.mrf.mxu0
  %v569 = vadd.f32 %v352, %v568
  %570 = vmatmul.bf16.gmra.mxu0 %v92
  %v571 = vpop.f32.mrf.mxu0
  %v572 = vadd.f32 %v355, %v571
  %v573 = vpop.f32.mrf.mxu0
  %v574 = vadd.f32 %v357, %v573
  %575 = vmatmul.bf16.gmra.mxu0 %v93
  %v576 = vpop.f32.mrf.mxu0
  %v577 = vadd.f32 %v360, %v576
  %v578 = vpop.f32.mrf.mxu0
  %v579 = vadd.f32 %v362, %v578
  %580 = vmatmul.bf16.gmra.mxu0 %v94
  %v581 = vpop.f32.mrf.mxu0
  %v582 = vadd.f32 %v365, %v581
  %v583 = vpop.f32.mrf.mxu0
  %v584 = vadd.f32 %v367, %v583
  %585 = vmatmul.bf16.gmra.mxu0 %v95
  %v586 = vpop.f32.mrf.mxu0
  %v587 = vadd.f32 %v370, %v586
  %v588 = vpop.f32.mrf.mxu0
  %v589 = vadd.f32 %v372, %v588
  %590 = vmatmul.bf16.gmra.mxu0 %v96
  %v591 = vpop.f32.mrf.mxu0
  %v592 = vadd.f32 %v375, %v591
  %v593 = vpop.f32.mrf.mxu0
  %v594 = vadd.f32 %v377, %v593
  %595 = vmatmul.bf16.gmra.mxu0 %v97
  %v596 = vpop.f32.mrf.mxu0
  %v597 = vadd.f32 %v380, %v596
  %v598 = vpop.f32.mrf.mxu0
  %v599 = vadd.f32 %v382, %v598
  %600 = vmatmul.bf16.gmra.mxu0 %v98
  %v601 = vpop.f32.mrf.mxu0
  %v602 = vadd.f32 %v385, %v601
  %v603 = vpop.f32.mrf.mxu0
  %v604 = vadd.f32 %v387, %v603
  %605 = vmatmul.bf16.gmra.mxu0 %v99
  %v606 = vpop.f32.mrf.mxu0
  %v607 = vadd.f32 %v390, %v606
  %v608 = vpop.f32.mrf.mxu0
  %v609 = vadd.f32 %v392, %v608
  %610 = vmatmul.bf16.gmra.mxu0 %v100
  %v611 = vpop.f32.mrf.mxu0
  %v612 = vadd.f32 %v395, %v611
  %v613 = vpop.f32.mrf.mxu0
  %v614 = vadd.f32 %v397, %v613
  %615 = vmatmul.bf16.gmra.mxu0 %v101
  %v616 = vpop.f32.mrf.mxu0
  %v617 = vadd.f32 %v400, %v616
  %v618 = vpop.f32.mrf.mxu0
  %v619 = vadd.f32 %v402, %v618
  %620 = vmatmul.bf16.gmra.mxu0 %v102
  %v621 = vpop.f32.mrf.mxu0
  %v622 = vadd.f32 %v405, %v621
  %v623 = vpop.f32.mrf.mxu0
  %v624 = vadd.f32 %v407, %v623
  %625 = vmatmul.bf16.gmra.mxu0 %v103
  %v626 = vpop.f32.mrf.mxu0
  %v627 = vadd.f32 %v410, %v626
  %v628 = vpop.f32.mrf.mxu0
  %v629 = vadd.f32 %v412, %v628
  %630 = vmatmul.bf16.gmra.mxu0 %v104
  %v631 = vpop.f32.mrf.mxu0
  %v632 = vadd.f32 %v415, %v631
  %v633 = vpop.f32.mrf.mxu0
  %v634 = vadd.f32 %v417, %v633
  %635 = vmatmul.bf16.gmra.mxu0 %v105
  %v636 = vpop.f32.mrf.mxu0
  %v637 = vadd.f32 %v420, %v636
  %v638 = vpop.f32.mrf.mxu0
  %v639 = vadd.f32 %v422, %v638
  %640 = vmatmul.bf16.gmra.mxu0 %v106
  %v641 = vpop.f32.mrf.mxu0
  %v642 = vadd.f32 %v425, %v641
  %v643 = vpop.f32.mrf.mxu0
  %v644 = vadd.f32 %v427, %v643
  %645 = vmatmul.bf16.gmra.mxu0 %v107
  %v646 = vpop.f32.mrf.mxu0
  %v647 = vadd.f32 %v430, %v646
  %v648 = vpop.f32.mrf.mxu0
  %v649 = vadd.f32 %v432, %v648
  %650 = vmatmul.bf16.gmra.mxu0 %v108
  %v651 = vpop.f32.mrf.mxu0
  %v652 = vadd.f32 %v435, %v651
  %v653 = vpop.f32.mrf.mxu0
  %v654 = vadd.f32 %v437, %v653
  %655 = vmatmul.bf16.gmra.mxu0 %v109
  %v656 = vpop.f32.mrf.mxu0
  %v657 = vadd.f32 %v440, %v656
  %v658 = vpop.f32.mrf.mxu0
  %v659 = vadd.f32 %v442, %v658
  %660 = vmatmul.bf16.gmra.mxu0 %v110
  %v661 = vpop.f32.mrf.mxu0
  %v662 = vadd.f32 %v445, %v661
  %v663 = vpop.f32.mrf.mxu0
  %v664 = vadd.f32 %v447, %v663
  %665 = vmatmul.bf16.gmra.mxu0 %v111
  %v666 = vpop.f32.mrf.mxu0
  %v667 = vadd.f32 %v450, %v666
  %v668 = vpop.f32.mrf.mxu0
  %v669 = vadd.f32 %v452, %v668
  %670 = vmatmul.bf16.gmra.mxu0 %v112
  %v671 = vpop.f32.mrf.mxu0
  %v672 = vadd.f32 %v455, %v671
  %v673 = vpop.f32.mrf.mxu0
  %v674 = vadd.f32 %v457, %v673
  %675 = vdwg.mxu0
  %v676 = vld [vmem:[%s0 + $0x2] sm:$0xff]
  %v677 = vld [vmem:[%s0 + $0xa] sm:$0xff]
  %v678 = vld [vmem:[%s0 + $0x1a] sm:$0xff]
  %v679 = vld [vmem:[%s0 + $0x22] sm:$0xff]
  %v680 = vld [vmem:[%s0 + $0x32] sm:$0xff]
  %v681 = vld [vmem:[%s0 + $0x3a] sm:$0xff]
  %v682 = vld [vmem:[%s0 + $0x4a] sm:$0xff]
  %v683 = vld [vmem:[%s0 + $0x52] sm:$0xff]
  %v684 = vld [vmem:[%s0 + $0x62] sm:$0xff]
  %v685 = vld [vmem:[%s0 + $0x6a] sm:$0xff]
  %v686 = vld [vmem:[%s0 + $0x7a] sm:$0xff]
  %v687 = vld [vmem:[%s0 + $0x82] sm:$0xff]
  %v688 = vld [vmem:[%s0 + $0x92] sm:$0xff]
  %v689 = vld [vmem:[%s0 + $0x9a] sm:$0xff]
  %v690 = vld [vmem:[%s0 + $0xaa] sm:$0xff]
  %v691 = vld [vmem:[%s0 + $0xb2] sm:$0xff]
  %v692 = vld [vmem:[%s0 + $0xc2] sm:$0xff]
  %v693 = vld [vmem:[%s0 + $0xca] sm:$0xff]
  %v694 = vld [vmem:[%s0 + $0xda] sm:$0xff]
  %v695 = vld [vmem:[%s0 + $0xe2] sm:$0xff]
  %v696 = vld [vmem:[%s0 + $0xf2] sm:$0xff]
  %v697 = vld [vmem:[%s0 + $0xfa] sm:$0xff]
  %v698 = vld [vmem:[%s0 + $0x10a] sm:$0xff]
  %v699 = vld [vmem:[%s0 + $0x112] sm:$0xff]
  %v700 = vld [vmem:[%s0 + $0x122] sm:$0xff]
  %v701 = vld [vmem:[%s0 + $0x12a] sm:$0xff]
  %v702 = vld [vmem:[%s0 + $0x13a] sm:$0xff]
  %v703 = vld [vmem:[%s0 + $0x142] sm:$0xff]
  %v704 = vld [vmem:[%s0 + $0x152] sm:$0xff]
  %v705 = vld [vmem:[%s0 + $0x15a] sm:$0xff]
  %v706 = vld [vmem:[%s0 + $0x16a] sm:$0xff]
  %v707 = vld [vmem:[%s0 + $0x172] sm:$0xff]
  %v708 = vld [vmem:[%s0 + $0x1b2] sm:$0xff]
  %v709 = vld [vmem:[%s0 + $0x1ba] sm:$0xff]
  %v710 = vld [vmem:[%s0 + $0x1ca] sm:$0xff]
  %v711 = vld [vmem:[%s0 + $0x1d2] sm:$0xff]
  %v712 = vld [vmem:[%s0 + $0x1e2] sm:$0xff]
  %v713 = vld [vmem:[%s0 + $0x1ea] sm:$0xff]
  %v714 = vld [vmem:[%s0 + $0x1fa] sm:$0xff]
  %v715 = vld [vmem:[%s0 + $0x202] sm:$0xff]
  %v716 = vld [vmem:[%s0 + $0x212] sm:$0xff]
  %v717 = vld [vmem:[%s0 + $0x21a] sm:$0xff]
  %v718 = vld [vmem:[%s0 + $0x22a] sm:$0xff]
  %v719 = vld [vmem:[%s0 + $0x232] sm:$0xff]
  %v720 = vld [vmem:[%s0 + $0x242] sm:$0xff]
  %v721 = vld [vmem:[%s0 + $0x24a] sm:$0xff]
  %v722 = vld [vmem:[%s0 + $0x25a] sm:$0xff]
  %v723 = vld [vmem:[%s0 + $0x262] sm:$0xff]
  %v724 = vld [vmem:[%s0 + $0x272] sm:$0xff]
  %v725 = vld [vmem:[%s0 + $0x27a] sm:$0xff]
  %v726 = vld [vmem:[%s0 + $0x28a] sm:$0xff]
  %v727 = vld [vmem:[%s0 + $0x292] sm:$0xff]
  %v728 = vld [vmem:[%s0 + $0x2a2] sm:$0xff]
  %v729 = vld [vmem:[%s0 + $0x2aa] sm:$0xff]
  %v730 = vld [vmem:[%s0 + $0x2ba] sm:$0xff]
  %v731 = vld [vmem:[%s0 + $0x2c2] sm:$0xff]
  %v732 = vld [vmem:[%s0 + $0x2d2] sm:$0xff]
  %v733 = vld [vmem:[%s0 + $0x2da] sm:$0xff]
  %v734 = vld [vmem:[%s0 + $0x2ea] sm:$0xff]
  %v735 = vld [vmem:[%s0 + $0x2f2] sm:$0xff]
  %v736 = vld [vmem:[%s0 + $0x302] sm:$0xff]
  %v737 = vld [vmem:[%s0 + $0x30a] sm:$0xff]
  %v738 = vld [vmem:[%s0 + $0x31a] sm:$0xff]
  %v739 = vld [vmem:[%s0 + $0x322] sm:$0xff]
  %v740 = vpack.c.bf16 %v677, %v676
  %v741 = vpack.c.bf16 %v679, %v678
  %v742 = vpack.c.bf16 %v681, %v680
  %v743 = vpack.c.bf16 %v683, %v682
  %v744 = vpack.c.bf16 %v685, %v684
  %v745 = vpack.c.bf16 %v687, %v686
  %v746 = vpack.c.bf16 %v689, %v688
  %v747 = vpack.c.bf16 %v691, %v690
  %v748 = vpack.c.bf16 %v693, %v692
  %v749 = vpack.c.bf16 %v695, %v694
  %v750 = vpack.c.bf16 %v697, %v696
  %v751 = vpack.c.bf16 %v699, %v698
  %v752 = vpack.c.bf16 %v701, %v700
  %v753 = vpack.c.bf16 %v703, %v702
  %v754 = vpack.c.bf16 %v705, %v704
  %v755 = vpack.c.bf16 %v707, %v706
  %v756 = vpack.c.bf16 %v709, %v708
  %v757 = vpack.c.bf16 %v711, %v710
  %v758 = vpack.c.bf16 %v713, %v712
  %v759 = vpack.c.bf16 %v715, %v714
  %v760 = vpack.c.bf16 %v717, %v716
  %v761 = vpack.c.bf16 %v719, %v718
  %v762 = vpack.c.bf16 %v721, %v720
  %v763 = vpack.c.bf16 %v723, %v722
  %v764 = vpack.c.bf16 %v725, %v724
  %v765 = vpack.c.bf16 %v727, %v726
  %v766 = vpack.c.bf16 %v729, %v728
  %v767 = vpack.c.bf16 %v731, %v730
  %v768 = vpack.c.bf16 %v733, %v732
  %v769 = vpack.c.bf16 %v735, %v734
  %v770 = vpack.c.bf16 %v737, %v736
  %v771 = vpack.c.bf16 %v739, %v738
  %s772 = scalar_lea.vmem %s1, 128
  %v773 = vld [vmem:[%s772] sm:$0xf]
  %v774 = vld [vmem:[%s772 + $0x4] sm:$0xf]
  %v775 = vld [vmem:[%s772 + $0x8] sm:$0xf]
  %v776 = vld [vmem:[%s772 + $0xc] sm:$0xf]
  %v777 = vld [vmem:[%s772 + $0x10] sm:$0xf]
  %v778 = vld [vmem:[%s772 + $0x14] sm:$0xf]
  %v779 = vld [vmem:[%s772 + $0x18] sm:$0xf]
  %v780 = vld [vmem:[%s772 + $0x1c] sm:$0xf]
  %v781 = vld [vmem:[%s772 + $0x20] sm:$0xf]
  %v782 = vld [vmem:[%s772 + $0x24] sm:$0xf]
  %v783 = vld [vmem:[%s772 + $0x28] sm:$0xf]
  %v784 = vld [vmem:[%s772 + $0x2c] sm:$0xf]
  %v785 = vld [vmem:[%s772 + $0x30] sm:$0xf]
  %v786 = vld [vmem:[%s772 + $0x34] sm:$0xf]
  %v787 = vld [vmem:[%s772 + $0x38] sm:$0xf]
  %v788 = vld [vmem:[%s772 + $0x3c] sm:$0xf]
  %v805 = vunpack.c.l.b16 %v773
  %v806 = vunpack.c.l.b16 %v774
  %v807 = vunpack.c.l.b16 %v775
  %v808 = vunpack.c.l.b16 %v776
  %v809 = vunpack.c.l.b16 %v777
  %v810 = vunpack.c.l.b16 %v778
  %v811 = vunpack.c.l.b16 %v779
  %v812 = vunpack.c.l.b16 %v780
  %v813 = vunpack.c.l.b16 %v781
  %v814 = vunpack.c.l.b16 %v782
  %v815 = vunpack.c.l.b16 %v783
  %v816 = vunpack.c.l.b16 %v784
  %v817 = vunpack.c.l.b16 %v785
  %v818 = vunpack.c.l.b16 %v786
  %v819 = vunpack.c.l.b16 %v787
  %v820 = vunpack.c.l.b16 %v788
  %v821 = vpack.c.b16 %v806, %v805
  %v822 = vpack.c.b16 %v808, %v807
  %v823 = vpack.c.b16 %v810, %v809
  %v824 = vpack.c.b16 %v812, %v811
  %v825 = vpack.c.b16 %v814, %v813
  %v826 = vpack.c.b16 %v816, %v815
  %v827 = vpack.c.b16 %v818, %v817
  %v828 = vpack.c.b16 %v820, %v819
  %837 = vmatpush.bf16.msra.mxu0 %v828
  %838 = vmatpush.bf16.msra.mxu0 %v827
  %839 = vmatpush.bf16.msra.mxu0 %v826
  %840 = vmatpush.bf16.msra.mxu0 %v825
  %841 = vmatpush.bf16.msra.mxu0 %v824
  %842 = vmatpush.bf16.msra.mxu0 %v823
  %843 = vmatpush.bf16.msra.mxu0 %v822
  %844 = vmatpush.bf16.msra.mxu0 %v821
  %845 = vmatmul.bf16.gmra.mxu0 %v740
  %v846 = vpop.f32.mrf.mxu0
  %v847 = vadd.f32 0.0, %v846
  %v848 = vpop.f32.mrf.mxu0
  %v849 = vadd.f32 0.0, %v848
  %850 = vmatmul.bf16.gmra.mxu0 %v741
  %v851 = vpop.f32.mrf.mxu0
  %v852 = vadd.f32 0.0, %v851
  %v853 = vpop.f32.mrf.mxu0
  %v854 = vadd.f32 0.0, %v853
  %855 = vmatmul.bf16.gmra.mxu0 %v742
  %v856 = vpop.f32.mrf.mxu0
  %v857 = vadd.f32 0.0, %v856
  %v858 = vpop.f32.mrf.mxu0
  %v859 = vadd.f32 0.0, %v858
  %860 = vmatmul.bf16.gmra.mxu0 %v743
  %v861 = vpop.f32.mrf.mxu0
  %v862 = vadd.f32 0.0, %v861
  %v863 = vpop.f32.mrf.mxu0
  %v864 = vadd.f32 0.0, %v863
  %865 = vmatmul.bf16.gmra.mxu0 %v744
  %v866 = vpop.f32.mrf.mxu0
  %v867 = vadd.f32 0.0, %v866
  %v868 = vpop.f32.mrf.mxu0
  %v869 = vadd.f32 0.0, %v868
  %870 = vmatmul.bf16.gmra.mxu0 %v745
  %v871 = vpop.f32.mrf.mxu0
  %v872 = vadd.f32 0.0, %v871
  %v873 = vpop.f32.mrf.mxu0
  %v874 = vadd.f32 0.0, %v873
  %875 = vmatmul.bf16.gmra.mxu0 %v746
  %v876 = vpop.f32.mrf.mxu0
  %v877 = vadd.f32 0.0, %v876
  %v878 = vpop.f32.mrf.mxu0
  %v879 = vadd.f32 0.0, %v878
  %880 = vmatmul.bf16.gmra.mxu0 %v747
  %v881 = vpop.f32.mrf.mxu0
  %v882 = vadd.f32 0.0, %v881
  %v883 = vpop.f32.mrf.mxu0
  %v884 = vadd.f32 0.0, %v883
  %885 = vmatmul.bf16.gmra.mxu0 %v748
  %v886 = vpop.f32.mrf.mxu0
  %v887 = vadd.f32 0.0, %v886
  %v888 = vpop.f32.mrf.mxu0
  %v889 = vadd.f32 0.0, %v888
  %890 = vmatmul.bf16.gmra.mxu0 %v749
  %v891 = vpop.f32.mrf.mxu0
  %v892 = vadd.f32 0.0, %v891
  %v893 = vpop.f32.mrf.mxu0
  %v894 = vadd.f32 0.0, %v893
  %895 = vmatmul.bf16.gmra.mxu0 %v750
  %v896 = vpop.f32.mrf.mxu0
  %v897 = vadd.f32 0.0, %v896
  %v898 = vpop.f32.mrf.mxu0
  %v899 = vadd.f32 0.0, %v898
  %900 = vmatmul.bf16.gmra.mxu0 %v751
  %v901 = vpop.f32.mrf.mxu0
  %v902 = vadd.f32 0.0, %v901
  %v903 = vpop.f32.mrf.mxu0
  %v904 = vadd.f32 0.0, %v903
  %905 = vmatmul.bf16.gmra.mxu0 %v752
  %v906 = vpop.f32.mrf.mxu0
  %v907 = vadd.f32 0.0, %v906
  %v908 = vpop.f32.mrf.mxu0
  %v909 = vadd.f32 0.0, %v908
  %910 = vmatmul.bf16.gmra.mxu0 %v753
  %v911 = vpop.f32.mrf.mxu0
  %v912 = vadd.f32 0.0, %v911
  %v913 = vpop.f32.mrf.mxu0
  %v914 = vadd.f32 0.0, %v913
  %915 = vmatmul.bf16.gmra.mxu0 %v754
  %v916 = vpop.f32.mrf.mxu0
  %v917 = vadd.f32 0.0, %v916
  %v918 = vpop.f32.mrf.mxu0
  %v919 = vadd.f32 0.0, %v918
  %920 = vmatmul.bf16.gmra.mxu0 %v755
  %v921 = vpop.f32.mrf.mxu0
  %v922 = vadd.f32 0.0, %v921
  %v923 = vpop.f32.mrf.mxu0
  %v924 = vadd.f32 0.0, %v923
  %925 = vmatmul.bf16.gmra.mxu0 %v756
  %v926 = vpop.f32.mrf.mxu0
  %v927 = vadd.f32 0.0, %v926
  %v928 = vpop.f32.mrf.mxu0
  %v929 = vadd.f32 0.0, %v928
  %930 = vmatmul.bf16.gmra.mxu0 %v757
  %v931 = vpop.f32.mrf.mxu0
  %v932 = vadd.f32 0.0, %v931
  %v933 = vpop.f32.mrf.mxu0
  %v934 = vadd.f32 0.0, %v933
  %935 = vmatmul.bf16.gmra.mxu0 %v758
  %v936 = vpop.f32.mrf.mxu0
  %v937 = vadd.f32 0.0, %v936
  %v938 = vpop.f32.mrf.mxu0
  %v939 = vadd.f32 0.0, %v938
  %940 = vmatmul.bf16.gmra.mxu0 %v759
  %v941 = vpop.f32.mrf.mxu0
  %v942 = vadd.f32 0.0, %v941
  %v943 = vpop.f32.mrf.mxu0
  %v944 = vadd.f32 0.0, %v943
  %945 = vmatmul.bf16.gmra.mxu0 %v760
  %v946 = vpop.f32.mrf.mxu0
  %v947 = vadd.f32 0.0, %v946
  %v948 = vpop.f32.mrf.mxu0
  %v949 = vadd.f32 0.0, %v948
  %950 = vmatmul.bf16.gmra.mxu0 %v761
  %v951 = vpop.f32.mrf.mxu0
  %v952 = vadd.f32 0.0, %v951
  %v953 = vpop.f32.mrf.mxu0
  %v954 = vadd.f32 0.0, %v953
  %955 = vmatmul.bf16.gmra.mxu0 %v762
  %v956 = vpop.f32.mrf.mxu0
  %v957 = vadd.f32 0.0, %v956
  %v958 = vpop.f32.mrf.mxu0
  %v959 = vadd.f32 0.0, %v958
  %960 = vmatmul.bf16.gmra.mxu0 %v763
  %v961 = vpop.f32.mrf.mxu0
  %v962 = vadd.f32 0.0, %v961
  %v963 = vpop.f32.mrf.mxu0
  %v964 = vadd.f32 0.0, %v963
  %965 = vmatmul.bf16.gmra.mxu0 %v764
  %v966 = vpop.f32.mrf.mxu0
  %v967 = vadd.f32 0.0, %v966
  %v968 = vpop.f32.mrf.mxu0
  %v969 = vadd.f32 0.0, %v968
  %970 = vmatmul.bf16.gmra.mxu0 %v765
  %v971 = vpop.f32.mrf.mxu0
  %v972 = vadd.f32 0.0, %v971
  %v973 = vpop.f32.mrf.mxu0
  %v974 = vadd.f32 0.0, %v973
  %975 = vmatmul.bf16.gmra.mxu0 %v766
  %v976 = vpop.f32.mrf.mxu0
  %v977 = vadd.f32 0.0, %v976
  %v978 = vpop.f32.mrf.mxu0
  %v979 = vadd.f32 0.0, %v978
  %980 = vmatmul.bf16.gmra.mxu0 %v767
  %v981 = vpop.f32.mrf.mxu0
  %v982 = vadd.f32 0.0, %v981
  %v983 = vpop.f32.mrf.mxu0
  %v984 = vadd.f32 0.0, %v983
  %985 = vmatmul.bf16.gmra.mxu0 %v768
  %v986 = vpop.f32.mrf.mxu0
  %v987 = vadd.f32 0.0, %v986
  %v988 = vpop.f32.mrf.mxu0
  %v989 = vadd.f32 0.0, %v988
  %990 = vmatmul.bf16.gmra.mxu0 %v769
  %v991 = vpop.f32.mrf.mxu0
  %v992 = vadd.f32 0.0, %v991
  %v993 = vpop.f32.mrf.mxu0
  %v994 = vadd.f32 0.0, %v993
  %995 = vmatmul.bf16.gmra.mxu0 %v770
  %v996 = vpop.f32.mrf.mxu0
  %v997 = vadd.f32 0.0, %v996
  %v998 = vpop.f32.mrf.mxu0
  %v999 = vadd.f32 0.0, %v998
  %1000 = vmatmul.bf16.gmra.mxu0 %v771
  %v1001 = vpop.f32.mrf.mxu0
  %v1002 = vadd.f32 0.0, %v1001
  %v1003 = vpop.f32.mrf.mxu0
  %v1004 = vadd.f32 0.0, %v1003
  %1005 = vdwg.mxu0
  %v1006 = vadd.f32 %v517, %v847
  %v1007 = vadd.f32 %v519, %v849
  %v1008 = vadd.f32 %v522, %v852
  %v1009 = vadd.f32 %v524, %v854
  %v1010 = vadd.f32 %v527, %v857
  %v1011 = vadd.f32 %v529, %v859
  %v1012 = vadd.f32 %v532, %v862
  %v1013 = vadd.f32 %v534, %v864
  %v1014 = vadd.f32 %v537, %v867
  %v1015 = vadd.f32 %v539, %v869
  %v1016 = vadd.f32 %v542, %v872
  %v1017 = vadd.f32 %v544, %v874
  %v1018 = vadd.f32 %v547, %v877
  %v1019 = vadd.f32 %v549, %v879
  %v1020 = vadd.f32 %v552, %v882
  %v1021 = vadd.f32 %v554, %v884
  %v1022 = vadd.f32 %v557, %v887
  %v1023 = vadd.f32 %v559, %v889
  %v1024 = vadd.f32 %v562, %v892
  %v1025 = vadd.f32 %v564, %v894
  %v1026 = vadd.f32 %v567, %v897
  %v1027 = vadd.f32 %v569, %v899
  %v1028 = vadd.f32 %v572, %v902
  %v1029 = vadd.f32 %v574, %v904
  %v1030 = vadd.f32 %v577, %v907
  %v1031 = vadd.f32 %v579, %v909
  %v1032 = vadd.f32 %v582, %v912
  %v1033 = vadd.f32 %v584, %v914
  %v1034 = vadd.f32 %v587, %v917
  %v1035 = vadd.f32 %v589, %v919
  %v1036 = vadd.f32 %v592, %v922
  %v1037 = vadd.f32 %v594, %v924
  %v1038 = vadd.f32 %v597, %v927
  %v1039 = vadd.f32 %v599, %v929
  %v1040 = vadd.f32 %v602, %v932
  %v1041 = vadd.f32 %v604, %v934
  %v1042 = vadd.f32 %v607, %v937
  %v1043 = vadd.f32 %v609, %v939
  %v1044 = vadd.f32 %v612, %v942
  %v1045 = vadd.f32 %v614, %v944
  %v1046 = vadd.f32 %v617, %v947
  %v1047 = vadd.f32 %v619, %v949
  %v1048 = vadd.f32 %v622, %v952
  %v1049 = vadd.f32 %v624, %v954
  %v1050 = vadd.f32 %v627, %v957
  %v1051 = vadd.f32 %v629, %v959
  %v1052 = vadd.f32 %v632, %v962
  %v1053 = vadd.f32 %v634, %v964
  %v1054 = vadd.f32 %v637, %v967
  %v1055 = vadd.f32 %v639, %v969
  %v1056 = vadd.f32 %v642, %v972
  %v1057 = vadd.f32 %v644, %v974
  %v1058 = vadd.f32 %v647, %v977
  %v1059 = vadd.f32 %v649, %v979
  %v1060 = vadd.f32 %v652, %v982
  %v1061 = vadd.f32 %v654, %v984
  %v1062 = vadd.f32 %v657, %v987
  %v1063 = vadd.f32 %v659, %v989
  %v1064 = vadd.f32 %v662, %v992
  %v1065 = vadd.f32 %v664, %v994
  %v1066 = vadd.f32 %v667, %v997
  %v1067 = vadd.f32 %v669, %v999
  %v1068 = vadd.f32 %v672, %v1002
  %v1069 = vadd.f32 %v674, %v1004
  %s1070 = scalar_lea.vmem %s0, 24
  %v1071 = vld [vmem:[%s1070] sm:$0xff]
  %v1072 = vld [vmem:[%s1070 + $0x8] sm:$0xff]
  %v1073 = vld [vmem:[%s1070 + $0x18] sm:$0xff]
  %v1074 = vld [vmem:[%s1070 + $0x20] sm:$0xff]
  %v1075 = vld [vmem:[%s1070 + $0x30] sm:$0xff]
  %v1076 = vld [vmem:[%s1070 + $0x38] sm:$0xff]
  %v1077 = vld [vmem:[%s1070 + $0x48] sm:$0xff]
  %v1078 = vld [vmem:[%s1070 + $0x50] sm:$0xff]
  %v1079 = vld [vmem:[%s1070 + $0x60] sm:$0xff]
  %v1080 = vld [vmem:[%s1070 + $0x68] sm:$0xff]
  %v1081 = vld [vmem:[%s1070 + $0x78] sm:$0xff]
  %v1082 = vld [vmem:[%s1070 + $0x80] sm:$0xff]
  %v1083 = vld [vmem:[%s1070 + $0x90] sm:$0xff]
  %v1084 = vld [vmem:[%s1070 + $0x98] sm:$0xff]
  %v1085 = vld [vmem:[%s1070 + $0xa8] sm:$0xff]
  %v1086 = vld [vmem:[%s1070 + $0xb0] sm:$0xff]
  %v1087 = vld [vmem:[%s1070 + $0xc0] sm:$0xff]
  %v1088 = vld [vmem:[%s1070 + $0xc8] sm:$0xff]
  %v1089 = vld [vmem:[%s1070 + $0xd8] sm:$0xff]
  %v1090 = vld [vmem:[%s1070 + $0xe0] sm:$0xff]
  %v1091 = vld [vmem:[%s1070 + $0xf0] sm:$0xff]
  %v1092 = vld [vmem:[%s1070 + $0xf8] sm:$0xff]
  %v1093 = vld [vmem:[%s1070 + $0x108] sm:$0xff]
  %v1094 = vld [vmem:[%s1070 + $0x110] sm:$0xff]
  %v1095 = vld [vmem:[%s1070 + $0x120] sm:$0xff]
  %v1096 = vld [vmem:[%s1070 + $0x128] sm:$0xff]
  %v1097 = vld [vmem:[%s1070 + $0x138] sm:$0xff]
  %v1098 = vld [vmem:[%s1070 + $0x140] sm:$0xff]
  %v1099 = vld [vmem:[%s1070 + $0x150] sm:$0xff]
  %v1100 = vld [vmem:[%s1070 + $0x158] sm:$0xff]
  %v1101 = vld [vmem:[%s1070 + $0x168] sm:$0xff]
  %v1102 = vld [vmem:[%s1070 + $0x170] sm:$0xff]
  %v1103 = vld [vmem:[%s1070 + $0x1b0] sm:$0xff]
  %v1104 = vld [vmem:[%s1070 + $0x1b8] sm:$0xff]
  %v1105 = vld [vmem:[%s1070 + $0x1c8] sm:$0xff]
  %v1106 = vld [vmem:[%s1070 + $0x1d0] sm:$0xff]
  %v1107 = vld [vmem:[%s1070 + $0x1e0] sm:$0xff]
  %v1108 = vld [vmem:[%s1070 + $0x1e8] sm:$0xff]
  %v1109 = vld [vmem:[%s1070 + $0x1f8] sm:$0xff]
  %v1110 = vld [vmem:[%s1070 + $0x200] sm:$0xff]
  %v1111 = vld [vmem:[%s1070 + $0x210] sm:$0xff]
  %v1112 = vld [vmem:[%s1070 + $0x218] sm:$0xff]
  %v1113 = vld [vmem:[%s1070 + $0x228] sm:$0xff]
  %v1114 = vld [vmem:[%s1070 + $0x230] sm:$0xff]
  %v1115 = vld [vmem:[%s1070 + $0x240] sm:$0xff]
  %v1116 = vld [vmem:[%s1070 + $0x248] sm:$0xff]
  %v1117 = vld [vmem:[%s1070 + $0x258] sm:$0xff]
  %v1118 = vld [vmem:[%s1070 + $0x260] sm:$0xff]
  %v1119 = vld [vmem:[%s1070 + $0x270] sm:$0xff]
  %v1120 = vld [vmem:[%s1070 + $0x278] sm:$0xff]
  %v1121 = vld [vmem:[%s1070 + $0x288] sm:$0xff]
  %v1122 = vld [vmem:[%s1070 + $0x290] sm:$0xff]
  %v1123 = vld [vmem:[%s1070 + $0x2a0] sm:$0xff]
  %v1124 = vld [vmem:[%s1070 + $0x2a8] sm:$0xff]
  %v1125 = vld [vmem:[%s1070 + $0x2b8] sm:$0xff]
  %v1126 = vld [vmem:[%s1070 + $0x2c0] sm:$0xff]
  %v1127 = vld [vmem:[%s1070 + $0x2d0] sm:$0xff]
  %v1128 = vld [vmem:[%s1070 + $0x2d8] sm:$0xff]
  %v1129 = vld [vmem:[%s1070 + $0x2e8] sm:$0xff]
  %v1130 = vld [vmem:[%s1070 + $0x2f0] sm:$0xff]
  %v1131 = vld [vmem:[%s1070 + $0x300] sm:$0xff]
  %v1132 = vld [vmem:[%s1070 + $0x308] sm:$0xff]
  %v1133 = vld [vmem:[%s1070 + $0x318] sm:$0xff]
  %v1134 = vld [vmem:[%s1070 + $0x320] sm:$0xff]
  %v1135 = vpack.c.bf16 %v1072, %v1071
  %v1136 = vpack.c.bf16 %v1074, %v1073
  %v1137 = vpack.c.bf16 %v1076, %v1075
  %v1138 = vpack.c.bf16 %v1078, %v1077
  %v1139 = vpack.c.bf16 %v1080, %v1079
  %v1140 = vpack.c.bf16 %v1082, %v1081
  %v1141 = vpack.c.bf16 %v1084, %v1083
  %v1142 = vpack.c.bf16 %v1086, %v1085
  %v1143 = vpack.c.bf16 %v1088, %v1087
  %v1144 = vpack.c.bf16 %v1090, %v1089
  %v1145 = vpack.c.bf16 %v1092, %v1091
  %v1146 = vpack.c.bf16 %v1094, %v1093
  %v1147 = vpack.c.bf16 %v1096, %v1095
  %v1148 = vpack.c.bf16 %v1098, %v1097
  %v1149 = vpack.c.bf16 %v1100, %v1099
  %v1150 = vpack.c.bf16 %v1102, %v1101
  %v1151 = vpack.c.bf16 %v1104, %v1103
  %v1152 = vpack.c.bf16 %v1106, %v1105
  %v1153 = vpack.c.bf16 %v1108, %v1107
  %v1154 = vpack.c.bf16 %v1110, %v1109
  %v1155 = vpack.c.bf16 %v1112, %v1111
  %v1156 = vpack.c.bf16 %v1114, %v1113
  %v1157 = vpack.c.bf16 %v1116, %v1115
  %v1158 = vpack.c.bf16 %v1118, %v1117
  %v1159 = vpack.c.bf16 %v1120, %v1119
  %v1160 = vpack.c.bf16 %v1122, %v1121
  %v1161 = vpack.c.bf16 %v1124, %v1123
  %v1162 = vpack.c.bf16 %v1126, %v1125
  %v1163 = vpack.c.bf16 %v1128, %v1127
  %v1164 = vpack.c.bf16 %v1130, %v1129
  %v1165 = vpack.c.bf16 %v1132, %v1131
  %v1166 = vpack.c.bf16 %v1134, %v1133
  %s1167 = scalar_lea.vmem %s1, 192
  %v1168 = vld [vmem:[%s1167] sm:$0xf]
  %v1169 = vld [vmem:[%s1167 + $0x4] sm:$0xf]
  %v1170 = vld [vmem:[%s1167 + $0x8] sm:$0xf]
  %v1171 = vld [vmem:[%s1167 + $0xc] sm:$0xf]
  %v1172 = vld [vmem:[%s1167 + $0x10] sm:$0xf]
  %v1173 = vld [vmem:[%s1167 + $0x14] sm:$0xf]
  %v1174 = vld [vmem:[%s1167 + $0x18] sm:$0xf]
  %v1175 = vld [vmem:[%s1167 + $0x1c] sm:$0xf]
  %v1176 = vld [vmem:[%s1167 + $0x20] sm:$0xf]
  %v1177 = vld [vmem:[%s1167 + $0x24] sm:$0xf]
  %v1178 = vld [vmem:[%s1167 + $0x28] sm:$0xf]
  %v1179 = vld [vmem:[%s1167 + $0x2c] sm:$0xf]
  %v1180 = vld [vmem:[%s1167 + $0x30] sm:$0xf]
  %v1181 = vld [vmem:[%s1167 + $0x34] sm:$0xf]
  %v1182 = vld [vmem:[%s1167 + $0x38] sm:$0xf]
  %v1183 = vld [vmem:[%s1167 + $0x3c] sm:$0xf]
  %v1200 = vunpack.c.l.b16 %v1168
  %v1201 = vunpack.c.l.b16 %v1169
  %v1202 = vunpack.c.l.b16 %v1170
  %v1203 = vunpack.c.l.b16 %v1171
  %v1204 = vunpack.c.l.b16 %v1172
  %v1205 = vunpack.c.l.b16 %v1173
  %v1206 = vunpack.c.l.b16 %v1174
  %v1207 = vunpack.c.l.b16 %v1175
  %v1208 = vunpack.c.l.b16 %v1176
  %v1209 = vunpack.c.l.b16 %v1177
  %v1210 = vunpack.c.l.b16 %v1178
  %v1211 = vunpack.c.l.b16 %v1179
  %v1212 = vunpack.c.l.b16 %v1180
  %v1213 = vunpack.c.l.b16 %v1181
  %v1214 = vunpack.c.l.b16 %v1182
  %v1215 = vunpack.c.l.b16 %v1183
  %v1216 = vpack.c.b16 %v1201, %v1200
  %v1217 = vpack.c.b16 %v1203, %v1202
  %v1218 = vpack.c.b16 %v1205, %v1204
  %v1219 = vpack.c.b16 %v1207, %v1206
  %v1220 = vpack.c.b16 %v1209, %v1208
  %v1221 = vpack.c.b16 %v1211, %v1210
  %v1222 = vpack.c.b16 %v1213, %v1212
  %v1223 = vpack.c.b16 %v1215, %v1214
  %1232 = vmatpush.bf16.msra.mxu0 %v1223
  %1233 = vmatpush.bf16.msra.mxu0 %v1222
  %1234 = vmatpush.bf16.msra.mxu0 %v1221
  %1235 = vmatpush.bf16.msra.mxu0 %v1220
  %1236 = vmatpush.bf16.msra.mxu0 %v1219
  %1237 = vmatpush.bf16.msra.mxu0 %v1218
  %1238 = vmatpush.bf16.msra.mxu0 %v1217
  %1239 = vmatpush.bf16.msra.mxu0 %v1216
  %1240 = vmatmul.bf16.gmra.mxu0 %v1135
  %v1241 = vpop.f32.mrf.mxu0
  %v1242 = vadd.f32 0.0, %v1241
  %v1243 = vpop.f32.mrf.mxu0
  %v1244 = vadd.f32 0.0, %v1243
  %1245 = vmatmul.bf16.gmra.mxu0 %v1136
  %v1246 = vpop.f32.mrf.mxu0
  %v1247 = vadd.f32 0.0, %v1246
  %v1248 = vpop.f32.mrf.mxu0
  %v1249 = vadd.f32 0.0, %v1248
  %1250 = vmatmul.bf16.gmra.mxu0 %v1137
  %v1251 = vpop.f32.mrf.mxu0
  %v1252 = vadd.f32 0.0, %v1251
  %v1253 = vpop.f32.mrf.mxu0
  %v1254 = vadd.f32 0.0, %v1253
  %1255 = vmatmul.bf16.gmra.mxu0 %v1138
  %v1256 = vpop.f32.mrf.mxu0
  %v1257 = vadd.f32 0.0, %v1256
  %v1258 = vpop.f32.mrf.mxu0
  %v1259 = vadd.f32 0.0, %v1258
  %1260 = vmatmul.bf16.gmra.mxu0 %v1139
  %v1261 = vpop.f32.mrf.mxu0
  %v1262 = vadd.f32 0.0, %v1261
  %v1263 = vpop.f32.mrf.mxu0
  %v1264 = vadd.f32 0.0, %v1263
  %1265 = vmatmul.bf16.gmra.mxu0 %v1140
  %v1266 = vpop.f32.mrf.mxu0
  %v1267 = vadd.f32 0.0, %v1266
  %v1268 = vpop.f32.mrf.mxu0
  %v1269 = vadd.f32 0.0, %v1268
  %1270 = vmatmul.bf16.gmra.mxu0 %v1141
  %v1271 = vpop.f32.mrf.mxu0
  %v1272 = vadd.f32 0.0, %v1271
  %v1273 = vpop.f32.mrf.mxu0
  %v1274 = vadd.f32 0.0, %v1273
  %1275 = vmatmul.bf16.gmra.mxu0 %v1142
  %v1276 = vpop.f32.mrf.mxu0
  %v1277 = vadd.f32 0.0, %v1276
  %v1278 = vpop.f32.mrf.mxu0
  %v1279 = vadd.f32 0.0, %v1278
  %1280 = vmatmul.bf16.gmra.mxu0 %v1143
  %v1281 = vpop.f32.mrf.mxu0
  %v1282 = vadd.f32 0.0, %v1281
  %v1283 = vpop.f32.mrf.mxu0
  %v1284 = vadd.f32 0.0, %v1283
  %1285 = vmatmul.bf16.gmra.mxu0 %v1144
  %v1286 = vpop.f32.mrf.mxu0
  %v1287 = vadd.f32 0.0, %v1286
  %v1288 = vpop.f32.mrf.mxu0
  %v1289 = vadd.f32 0.0, %v1288
  %1290 = vmatmul.bf16.gmra.mxu0 %v1145
  %v1291 = vpop.f32.mrf.mxu0
  %v1292 = vadd.f32 0.0, %v1291
  %v1293 = vpop.f32.mrf.mxu0
  %v1294 = vadd.f32 0.0, %v1293
  %1295 = vmatmul.bf16.gmra.mxu0 %v1146
  %v1296 = vpop.f32.mrf.mxu0
  %v1297 = vadd.f32 0.0, %v1296
  %v1298 = vpop.f32.mrf.mxu0
  %v1299 = vadd.f32 0.0, %v1298
  %1300 = vmatmul.bf16.gmra.mxu0 %v1147
  %v1301 = vpop.f32.mrf.mxu0
  %v1302 = vadd.f32 0.0, %v1301
  %v1303 = vpop.f32.mrf.mxu0
  %v1304 = vadd.f32 0.0, %v1303
  %1305 = vmatmul.bf16.gmra.mxu0 %v1148
  %v1306 = vpop.f32.mrf.mxu0
  %v1307 = vadd.f32 0.0, %v1306
  %v1308 = vpop.f32.mrf.mxu0
  %v1309 = vadd.f32 0.0, %v1308
  %1310 = vmatmul.bf16.gmra.mxu0 %v1149
  %v1311 = vpop.f32.mrf.mxu0
  %v1312 = vadd.f32 0.0, %v1311
  %v1313 = vpop.f32.mrf.mxu0
  %v1314 = vadd.f32 0.0, %v1313
  %1315 = vmatmul.bf16.gmra.mxu0 %v1150
  %v1316 = vpop.f32.mrf.mxu0
  %v1317 = vadd.f32 0.0, %v1316
  %v1318 = vpop.f32.mrf.mxu0
  %v1319 = vadd.f32 0.0, %v1318
  %1320 = vmatmul.bf16.gmra.mxu0 %v1151
  %v1321 = vpop.f32.mrf.mxu0
  %v1322 = vadd.f32 0.0, %v1321
  %v1323 = vpop.f32.mrf.mxu0
  %v1324 = vadd.f32 0.0, %v1323
  %1325 = vmatmul.bf16.gmra.mxu0 %v1152
  %v1326 = vpop.f32.mrf.mxu0
  %v1327 = vadd.f32 0.0, %v1326
  %v1328 = vpop.f32.mrf.mxu0
  %v1329 = vadd.f32 0.0, %v1328
  %1330 = vmatmul.bf16.gmra.mxu0 %v1153
  %v1331 = vpop.f32.mrf.mxu0
  %v1332 = vadd.f32 0.0, %v1331
  %v1333 = vpop.f32.mrf.mxu0
  %v1334 = vadd.f32 0.0, %v1333
  %1335 = vmatmul.bf16.gmra.mxu0 %v1154
  %v1336 = vpop.f32.mrf.mxu0
  %v1337 = vadd.f32 0.0, %v1336
  %v1338 = vpop.f32.mrf.mxu0
  %v1339 = vadd.f32 0.0, %v1338
  %1340 = vmatmul.bf16.gmra.mxu0 %v1155
  %v1341 = vpop.f32.mrf.mxu0
  %v1342 = vadd.f32 0.0, %v1341
  %v1343 = vpop.f32.mrf.mxu0
  %v1344 = vadd.f32 0.0, %v1343
  %1345 = vmatmul.bf16.gmra.mxu0 %v1156
  %v1346 = vpop.f32.mrf.mxu0
  %v1347 = vadd.f32 0.0, %v1346
  %v1348 = vpop.f32.mrf.mxu0
  %v1349 = vadd.f32 0.0, %v1348
  %1350 = vmatmul.bf16.gmra.mxu0 %v1157
  %v1351 = vpop.f32.mrf.mxu0
  %v1352 = vadd.f32 0.0, %v1351
  %v1353 = vpop.f32.mrf.mxu0
  %v1354 = vadd.f32 0.0, %v1353
  %1355 = vmatmul.bf16.gmra.mxu0 %v1158
  %v1356 = vpop.f32.mrf.mxu0
  %v1357 = vadd.f32 0.0, %v1356
  %v1358 = vpop.f32.mrf.mxu0
  %v1359 = vadd.f32 0.0, %v1358
  %1360 = vmatmul.bf16.gmra.mxu0 %v1159
  %v1361 = vpop.f32.mrf.mxu0
  %v1362 = vadd.f32 0.0, %v1361
  %v1363 = vpop.f32.mrf.mxu0
  %v1364 = vadd.f32 0.0, %v1363
  %1365 = vmatmul.bf16.gmra.mxu0 %v1160
  %v1366 = vpop.f32.mrf.mxu0
  %v1367 = vadd.f32 0.0, %v1366
  %v1368 = vpop.f32.mrf.mxu0
  %v1369 = vadd.f32 0.0, %v1368
  %1370 = vmatmul.bf16.gmra.mxu0 %v1161
  %v1371 = vpop.f32.mrf.mxu0
  %v1372 = vadd.f32 0.0, %v1371
  %v1373 = vpop.f32.mrf.mxu0
  %v1374 = vadd.f32 0.0, %v1373
  %1375 = vmatmul.bf16.gmra.mxu0 %v1162
  %v1376 = vpop.f32.mrf.mxu0
  %v1377 = vadd.f32 0.0, %v1376
  %v1378 = vpop.f32.mrf.mxu0
  %v1379 = vadd.f32 0.0, %v1378
  %1380 = vmatmul.bf16.gmra.mxu0 %v1163
  %v1381 = vpop.f32.mrf.mxu0
  %v1382 = vadd.f32 0.0, %v1381
  %v1383 = vpop.f32.mrf.mxu0
  %v1384 = vadd.f32 0.0, %v1383
  %1385 = vmatmul.bf16.gmra.mxu0 %v1164
  %v1386 = vpop.f32.mrf.mxu0
  %v1387 = vadd.f32 0.0, %v1386
  %v1388 = vpop.f32.mrf.mxu0
  %v1389 = vadd.f32 0.0, %v1388
  %1390 = vmatmul.bf16.gmra.mxu0 %v1165
  %v1391 = vpop.f32.mrf.mxu0
  %v1392 = vadd.f32 0.0, %v1391
  %v1393 = vpop.f32.mrf.mxu0
  %v1394 = vadd.f32 0.0, %v1393
  %1395 = vmatmul.bf16.gmra.mxu0 %v1166
  %v1396 = vpop.f32.mrf.mxu0
  %v1397 = vadd.f32 0.0, %v1396
  %v1398 = vpop.f32.mrf.mxu0
  %v1399 = vadd.f32 0.0, %v1398
  %1400 = vdwg.mxu0
  %v1401 = vadd.f32 %v1006, %v1242
  %v1402 = vadd.f32 %v1007, %v1244
  %v1403 = vadd.f32 %v1008, %v1247
  %v1404 = vadd.f32 %v1009, %v1249
  %v1405 = vadd.f32 %v1010, %v1252
  %v1406 = vadd.f32 %v1011, %v1254
  %v1407 = vadd.f32 %v1012, %v1257
  %v1408 = vadd.f32 %v1013, %v1259
  %v1409 = vadd.f32 %v1014, %v1262
  %v1410 = vadd.f32 %v1015, %v1264
  %v1411 = vadd.f32 %v1016, %v1267
  %v1412 = vadd.f32 %v1017, %v1269
  %v1413 = vadd.f32 %v1018, %v1272
  %v1414 = vadd.f32 %v1019, %v1274
  %v1415 = vadd.f32 %v1020, %v1277
  %v1416 = vadd.f32 %v1021, %v1279
  %v1417 = vadd.f32 %v1022, %v1282
  %v1418 = vadd.f32 %v1023, %v1284
  %v1419 = vadd.f32 %v1024, %v1287
  %v1420 = vadd.f32 %v1025, %v1289
  %v1421 = vadd.f32 %v1026, %v1292
  %v1422 = vadd.f32 %v1027, %v1294
  %v1423 = vadd.f32 %v1028, %v1297
  %v1424 = vadd.f32 %v1029, %v1299
  %v1425 = vadd.f32 %v1030, %v1302
  %v1426 = vadd.f32 %v1031, %v1304
  %v1427 = vadd.f32 %v1032, %v1307
  %v1428 = vadd.f32 %v1033, %v1309
  %v1429 = vadd.f32 %v1034, %v1312
  %v1430 = vadd.f32 %v1035, %v1314
  %v1431 = vadd.f32 %v1036, %v1317
  %v1432 = vadd.f32 %v1037, %v1319
  %v1433 = vadd.f32 %v1038, %v1322
  %v1434 = vadd.f32 %v1039, %v1324
  %v1435 = vadd.f32 %v1040, %v1327
  %v1436 = vadd.f32 %v1041, %v1329
  %v1437 = vadd.f32 %v1042, %v1332
  %v1438 = vadd.f32 %v1043, %v1334
  %v1439 = vadd.f32 %v1044, %v1337
  %v1440 = vadd.f32 %v1045, %v1339
  %v1441 = vadd.f32 %v1046, %v1342
  %v1442 = vadd.f32 %v1047, %v1344
  %v1443 = vadd.f32 %v1048, %v1347
  %v1444 = vadd.f32 %v1049, %v1349
  %v1445 = vadd.f32 %v1050, %v1352
  %v1446 = vadd.f32 %v1051, %v1354
  %v1447 = vadd.f32 %v1052, %v1357
  %v1448 = vadd.f32 %v1053, %v1359
  %v1449 = vadd.f32 %v1054, %v1362
  %v1450 = vadd.f32 %v1055, %v1364
  %v1451 = vadd.f32 %v1056, %v1367
  %v1452 = vadd.f32 %v1057, %v1369
  %v1453 = vadd.f32 %v1058, %v1372
  %v1454 = vadd.f32 %v1059, %v1374
  %v1455 = vadd.f32 %v1060, %v1377
  %v1456 = vadd.f32 %v1061, %v1379
  %v1457 = vadd.f32 %v1062, %v1382
  %v1458 = vadd.f32 %v1063, %v1384
  %v1459 = vadd.f32 %v1064, %v1387
  %v1460 = vadd.f32 %v1065, %v1389
  %v1461 = vadd.f32 %v1066, %v1392
  %v1462 = vadd.f32 %v1067, %v1394
  %v1463 = vadd.f32 %v1068, %v1397
  %v1464 = vadd.f32 %v1069, %v1399
  %v1465 = vld [vmem:[%s1070 + $0x1] sm:$0xff]
  %v1466 = vld [vmem:[%s1070 + $0x9] sm:$0xff]
  %v1467 = vld [vmem:[%s1070 + $0x19] sm:$0xff]
  %v1468 = vld [vmem:[%s1070 + $0x21] sm:$0xff]
  %v1469 = vld [vmem:[%s1070 + $0x31] sm:$0xff]
  %v1470 = vld [vmem:[%s1070 + $0x39] sm:$0xff]
  %v1471 = vld [vmem:[%s1070 + $0x49] sm:$0xff]
  %v1472 = vld [vmem:[%s1070 + $0x51] sm:$0xff]
  %v1473 = vld [vmem:[%s1070 + $0x61] sm:$0xff]
  %v1474 = vld [vmem:[%s1070 + $0x69] sm:$0xff]
  %v1475 = vld [vmem:[%s1070 + $0x79] sm:$0xff]
  %v1476 = vld [vmem:[%s1070 + $0x81] sm:$0xff]
  %v1477 = vld [vmem:[%s1070 + $0x91] sm:$0xff]
  %v1478 = vld [vmem:[%s1070 + $0x99] sm:$0xff]
  %v1479 = vld [vmem:[%s1070 + $0xa9] sm:$0xff]
  %v1480 = vld [vmem:[%s1070 + $0xb1] sm:$0xff]
  %v1481 = vld [vmem:[%s1070 + $0xc1] sm:$0xff]
  %v1482 = vld [vmem:[%s1070 + $0xc9] sm:$0xff]
  %v1483 = vld [vmem:[%s1070 + $0xd9] sm:$0xff]
  %v1484 = vld [vmem:[%s1070 + $0xe1] sm:$0xff]
  %v1485 = vld [vmem:[%s1070 + $0xf1] sm:$0xff]
  %v1486 = vld [vmem:[%s1070 + $0xf9] sm:$0xff]
  %v1487 = vld [vmem:[%s1070 + $0x109] sm:$0xff]
  %v1488 = vld [vmem:[%s1070 + $0x111] sm:$0xff]
  %v1489 = vld [vmem:[%s1070 + $0x121] sm:$0xff]
  %v1490 = vld [vmem:[%s1070 + $0x129] sm:$0xff]
  %v1491 = vld [vmem:[%s1070 + $0x139] sm:$0xff]
  %v1492 = vld [vmem:[%s1070 + $0x141] sm:$0xff]
  %v1493 = vld [vmem:[%s1070 + $0x151] sm:$0xff]
  %v1494 = vld [vmem:[%s1070 + $0x159] sm:$0xff]
  %v1495 = vld [vmem:[%s1070 + $0x169] sm:$0xff]
  %v1496 = vld [vmem:[%s1070 + $0x171] sm:$0xff]
  %v1497 = vld [vmem:[%s1070 + $0x1b1] sm:$0xff]
  %v1498 = vld [vmem:[%s1070 + $0x1b9] sm:$0xff]
  %v1499 = vld [vmem:[%s1070 + $0x1c9] sm:$0xff]
  %v1500 = vld [vmem:[%s1070 + $0x1d1] sm:$0xff]
  %v1501 = vld [vmem:[%s1070 + $0x1e1] sm:$0xff]
  %v1502 = vld [vmem:[%s1070 + $0x1e9] sm:$0xff]
  %v1503 = vld [vmem:[%s1070 + $0x1f9] sm:$0xff]
  %v1504 = vld [vmem:[%s1070 + $0x201] sm:$0xff]
  %v1505 = vld [vmem:[%s1070 + $0x211] sm:$0xff]
  %v1506 = vld [vmem:[%s1070 + $0x219] sm:$0xff]
  %v1507 = vld [vmem:[%s1070 + $0x229] sm:$0xff]
  %v1508 = vld [vmem:[%s1070 + $0x231] sm:$0xff]
  %v1509 = vld [vmem:[%s1070 + $0x241] sm:$0xff]
  %v1510 = vld [vmem:[%s1070 + $0x249] sm:$0xff]
  %v1511 = vld [vmem:[%s1070 + $0x259] sm:$0xff]
  %v1512 = vld [vmem:[%s1070 + $0x261] sm:$0xff]
  %v1513 = vld [vmem:[%s1070 + $0x271] sm:$0xff]
  %v1514 = vld [vmem:[%s1070 + $0x279] sm:$0xff]
  %v1515 = vld [vmem:[%s1070 + $0x289] sm:$0xff]
  %v1516 = vld [vmem:[%s1070 + $0x291] sm:$0xff]
  %v1517 = vld [vmem:[%s1070 + $0x2a1] sm:$0xff]
  %v1518 = vld [vmem:[%s1070 + $0x2a9] sm:$0xff]
  %v1519 = vld [vmem:[%s1070 + $0x2b9] sm:$0xff]
  %v1520 = vld [vmem:[%s1070 + $0x2c1] sm:$0xff]
  %v1521 = vld [vmem:[%s1070 + $0x2d1] sm:$0xff]
  %v1522 = vld [vmem:[%s1070 + $0x2d9] sm:$0xff]
  %v1523 = vld [vmem:[%s1070 + $0x2e9] sm:$0xff]
  %v1524 = vld [vmem:[%s1070 + $0x2f1] sm:$0xff]
  %v1525 = vld [vmem:[%s1070 + $0x301] sm:$0xff]
  %v1526 = vld [vmem:[%s1070 + $0x309] sm:$0xff]
  %v1527 = vld [vmem:[%s1070 + $0x319] sm:$0xff]
  %v1528 = vld [vmem:[%s1070 + $0x321] sm:$0xff]
  %v1529 = vpack.c.bf16 %v1466, %v1465
  %v1530 = vpack.c.bf16 %v1468, %v1467
  %v1531 = vpack.c.bf16 %v1470, %v1469
  %v1532 = vpack.c.bf16 %v1472, %v1471
  %v1533 = vpack.c.bf16 %v1474, %v1473
  %v1534 = vpack.c.bf16 %v1476, %v1475
  %v1535 = vpack.c.bf16 %v1478, %v1477
  %v1536 = vpack.c.bf16 %v1480, %v1479
  %v1537 = vpack.c.bf16 %v1482, %v1481
  %v1538 = vpack.c.bf16 %v1484, %v1483
  %v1539 = vpack.c.bf16 %v1486, %v1485
  %v1540 = vpack.c.bf16 %v1488, %v1487
  %v1541 = vpack.c.bf16 %v1490, %v1489
  %v1542 = vpack.c.bf16 %v1492, %v1491
  %v1543 = vpack.c.bf16 %v1494, %v1493
  %v1544 = vpack.c.bf16 %v1496, %v1495
  %v1545 = vpack.c.bf16 %v1498, %v1497
  %v1546 = vpack.c.bf16 %v1500, %v1499
  %v1547 = vpack.c.bf16 %v1502, %v1501
  %v1548 = vpack.c.bf16 %v1504, %v1503
  %v1549 = vpack.c.bf16 %v1506, %v1505
  %v1550 = vpack.c.bf16 %v1508, %v1507
  %v1551 = vpack.c.bf16 %v1510, %v1509
  %v1552 = vpack.c.bf16 %v1512, %v1511
  %v1553 = vpack.c.bf16 %v1514, %v1513
  %v1554 = vpack.c.bf16 %v1516, %v1515
  %v1555 = vpack.c.bf16 %v1518, %v1517
  %v1556 = vpack.c.bf16 %v1520, %v1519
  %v1557 = vpack.c.bf16 %v1522, %v1521
  %v1558 = vpack.c.bf16 %v1524, %v1523
  %v1559 = vpack.c.bf16 %v1526, %v1525
  %v1560 = vpack.c.bf16 %v1528, %v1527
  %s1561 = scalar_lea.vmem %s1, 256
  %v1562 = vld [vmem:[%s1561] sm:$0xf]
  %v1563 = vld [vmem:[%s1561 + $0x4] sm:$0xf]
  %v1564 = vld [vmem:[%s1561 + $0x8] sm:$0xf]
  %v1565 = vld [vmem:[%s1561 + $0xc] sm:$0xf]
  %v1566 = vld [vmem:[%s1561 + $0x10] sm:$0xf]
  %v1567 = vld [vmem:[%s1561 + $0x14] sm:$0xf]
  %v1568 = vld [vmem:[%s1561 + $0x18] sm:$0xf]
  %v1569 = vld [vmem:[%s1561 + $0x1c] sm:$0xf]
  %v1570 = vld [vmem:[%s1561 + $0x20] sm:$0xf]
  %v1571 = vld [vmem:[%s1561 + $0x24] sm:$0xf]
  %v1572 = vld [vmem:[%s1561 + $0x28] sm:$0xf]
  %v1573 = vld [vmem:[%s1561 + $0x2c] sm:$0xf]
  %v1574 = vld [vmem:[%s1561 + $0x30] sm:$0xf]
  %v1575 = vld [vmem:[%s1561 + $0x34] sm:$0xf]
  %v1576 = vld [vmem:[%s1561 + $0x38] sm:$0xf]
  %v1577 = vld [vmem:[%s1561 + $0x3c] sm:$0xf]
  %v1594 = vunpack.c.l.b16 %v1562
  %v1595 = vunpack.c.l.b16 %v1563
  %v1596 = vunpack.c.l.b16 %v1564
  %v1597 = vunpack.c.l.b16 %v1565
  %v1598 = vunpack.c.l.b16 %v1566
  %v1599 = vunpack.c.l.b16 %v1567
  %v1600 = vunpack.c.l.b16 %v1568
  %v1601 = vunpack.c.l.b16 %v1569
  %v1602 = vunpack.c.l.b16 %v1570
  %v1603 = vunpack.c.l.b16 %v1571
  %v1604 = vunpack.c.l.b16 %v1572
  %v1605 = vunpack.c.l.b16 %v1573
  %v1606 = vunpack.c.l.b16 %v1574
  %v1607 = vunpack.c.l.b16 %v1575
  %v1608 = vunpack.c.l.b16 %v1576
  %v1609 = vunpack.c.l.b16 %v1577
  %v1610 = vpack.c.b16 %v1595, %v1594
  %v1611 = vpack.c.b16 %v1597, %v1596
  %v1612 = vpack.c.b16 %v1599, %v1598
  %v1613 = vpack.c.b16 %v1601, %v1600
  %v1614 = vpack.c.b16 %v1603, %v1602
  %v1615 = vpack.c.b16 %v1605, %v1604
  %v1616 = vpack.c.b16 %v1607, %v1606
  %v1617 = vpack.c.b16 %v1609, %v1608
  %1626 = vmatpush.bf16.msra.mxu0 %v1617
  %1627 = vmatpush.bf16.msra.mxu0 %v1616
  %1628 = vmatpush.bf16.msra.mxu0 %v1615
  %1629 = vmatpush.bf16.msra.mxu0 %v1614
  %1630 = vmatpush.bf16.msra.mxu0 %v1613
  %1631 = vmatpush.bf16.msra.mxu0 %v1612
  %1632 = vmatpush.bf16.msra.mxu0 %v1611
  %1633 = vmatpush.bf16.msra.mxu0 %v1610
  %1634 = vmatmul.bf16.gmra.mxu0 %v1529
  %v1635 = vpop.f32.mrf.mxu0
  %v1636 = vadd.f32 0.0, %v1635
  %v1637 = vpop.f32.mrf.mxu0
  %v1638 = vadd.f32 0.0, %v1637
  %1639 = vmatmul.bf16.gmra.mxu0 %v1530
  %v1640 = vpop.f32.mrf.mxu0
  %v1641 = vadd.f32 0.0, %v1640
  %v1642 = vpop.f32.mrf.mxu0
  %v1643 = vadd.f32 0.0, %v1642
  %1644 = vmatmul.bf16.gmra.mxu0 %v1531
  %v1645 = vpop.f32.mrf.mxu0
  %v1646 = vadd.f32 0.0, %v1645
  %v1647 = vpop.f32.mrf.mxu0
  %v1648 = vadd.f32 0.0, %v1647
  %1649 = vmatmul.bf16.gmra.mxu0 %v1532
  %v1650 = vpop.f32.mrf.mxu0
  %v1651 = vadd.f32 0.0, %v1650
  %v1652 = vpop.f32.mrf.mxu0
  %v1653 = vadd.f32 0.0, %v1652
  %1654 = vmatmul.bf16.gmra.mxu0 %v1533
  %v1655 = vpop.f32.mrf.mxu0
  %v1656 = vadd.f32 0.0, %v1655
  %v1657 = vpop.f32.mrf.mxu0
  %v1658 = vadd.f32 0.0, %v1657
  %1659 = vmatmul.bf16.gmra.mxu0 %v1534
  %v1660 = vpop.f32.mrf.mxu0
  %v1661 = vadd.f32 0.0, %v1660
  %v1662 = vpop.f32.mrf.mxu0
  %v1663 = vadd.f32 0.0, %v1662
  %1664 = vmatmul.bf16.gmra.mxu0 %v1535
  %v1665 = vpop.f32.mrf.mxu0
  %v1666 = vadd.f32 0.0, %v1665
  %v1667 = vpop.f32.mrf.mxu0
  %v1668 = vadd.f32 0.0, %v1667
  %1669 = vmatmul.bf16.gmra.mxu0 %v1536
  %v1670 = vpop.f32.mrf.mxu0
  %v1671 = vadd.f32 0.0, %v1670
  %v1672 = vpop.f32.mrf.mxu0
  %v1673 = vadd.f32 0.0, %v1672
  %1674 = vmatmul.bf16.gmra.mxu0 %v1537
  %v1675 = vpop.f32.mrf.mxu0
  %v1676 = vadd.f32 0.0, %v1675
  %v1677 = vpop.f32.mrf.mxu0
  %v1678 = vadd.f32 0.0, %v1677
  %1679 = vmatmul.bf16.gmra.mxu0 %v1538
  %v1680 = vpop.f32.mrf.mxu0
  %v1681 = vadd.f32 0.0, %v1680
  %v1682 = vpop.f32.mrf.mxu0
  %v1683 = vadd.f32 0.0, %v1682
  %1684 = vmatmul.bf16.gmra.mxu0 %v1539
  %v1685 = vpop.f32.mrf.mxu0
  %v1686 = vadd.f32 0.0, %v1685
  %v1687 = vpop.f32.mrf.mxu0
  %v1688 = vadd.f32 0.0, %v1687
  %1689 = vmatmul.bf16.gmra.mxu0 %v1540
  %v1690 = vpop.f32.mrf.mxu0
  %v1691 = vadd.f32 0.0, %v1690
  %v1692 = vpop.f32.mrf.mxu0
  %v1693 = vadd.f32 0.0, %v1692
  %1694 = vmatmul.bf16.gmra.mxu0 %v1541
  %v1695 = vpop.f32.mrf.mxu0
  %v1696 = vadd.f32 0.0, %v1695
  %v1697 = vpop.f32.mrf.mxu0
  %v1698 = vadd.f32 0.0, %v1697
  %1699 = vmatmul.bf16.gmra.mxu0 %v1542
  %v1700 = vpop.f32.mrf.mxu0
  %v1701 = vadd.f32 0.0, %v1700
  %v1702 = vpop.f32.mrf.mxu0
  %v1703 = vadd.f32 0.0, %v1702
  %1704 = vmatmul.bf16.gmra.mxu0 %v1543
  %v1705 = vpop.f32.mrf.mxu0
  %v1706 = vadd.f32 0.0, %v1705
  %v1707 = vpop.f32.mrf.mxu0
  %v1708 = vadd.f32 0.0, %v1707
  %1709 = vmatmul.bf16.gmra.mxu0 %v1544
  %v1710 = vpop.f32.mrf.mxu0
  %v1711 = vadd.f32 0.0, %v1710
  %v1712 = vpop.f32.mrf.mxu0
  %v1713 = vadd.f32 0.0, %v1712
  %1714 = vmatmul.bf16.gmra.mxu0 %v1545
  %v1715 = vpop.f32.mrf.mxu0
  %v1716 = vadd.f32 0.0, %v1715
  %v1717 = vpop.f32.mrf.mxu0
  %v1718 = vadd.f32 0.0, %v1717
  %1719 = vmatmul.bf16.gmra.mxu0 %v1546
  %v1720 = vpop.f32.mrf.mxu0
  %v1721 = vadd.f32 0.0, %v1720
  %v1722 = vpop.f32.mrf.mxu0
  %v1723 = vadd.f32 0.0, %v1722
  %1724 = vmatmul.bf16.gmra.mxu0 %v1547
  %v1725 = vpop.f32.mrf.mxu0
  %v1726 = vadd.f32 0.0, %v1725
  %v1727 = vpop.f32.mrf.mxu0
  %v1728 = vadd.f32 0.0, %v1727
  %1729 = vmatmul.bf16.gmra.mxu0 %v1548
  %v1730 = vpop.f32.mrf.mxu0
  %v1731 = vadd.f32 0.0, %v1730
  %v1732 = vpop.f32.mrf.mxu0
  %v1733 = vadd.f32 0.0, %v1732
  %1734 = vmatmul.bf16.gmra.mxu0 %v1549
  %v1735 = vpop.f32.mrf.mxu0
  %v1736 = vadd.f32 0.0, %v1735
  %v1737 = vpop.f32.mrf.mxu0
  %v1738 = vadd.f32 0.0, %v1737
  %1739 = vmatmul.bf16.gmra.mxu0 %v1550
  %v1740 = vpop.f32.mrf.mxu0
  %v1741 = vadd.f32 0.0, %v1740
  %v1742 = vpop.f32.mrf.mxu0
  %v1743 = vadd.f32 0.0, %v1742
  %1744 = vmatmul.bf16.gmra.mxu0 %v1551
  %v1745 = vpop.f32.mrf.mxu0
  %v1746 = vadd.f32 0.0, %v1745
  %v1747 = vpop.f32.mrf.mxu0
  %v1748 = vadd.f32 0.0, %v1747
  %1749 = vmatmul.bf16.gmra.mxu0 %v1552
  %v1750 = vpop.f32.mrf.mxu0
  %v1751 = vadd.f32 0.0, %v1750
  %v1752 = vpop.f32.mrf.mxu0
  %v1753 = vadd.f32 0.0, %v1752
  %1754 = vmatmul.bf16.gmra.mxu0 %v1553
  %v1755 = vpop.f32.mrf.mxu0
  %v1756 = vadd.f32 0.0, %v1755
  %v1757 = vpop.f32.mrf.mxu0
  %v1758 = vadd.f32 0.0, %v1757
  %1759 = vmatmul.bf16.gmra.mxu0 %v1554
  %v1760 = vpop.f32.mrf.mxu0
  %v1761 = vadd.f32 0.0, %v1760
  %v1762 = vpop.f32.mrf.mxu0
  %v1763 = vadd.f32 0.0, %v1762
  %1764 = vmatmul.bf16.gmra.mxu0 %v1555
  %v1765 = vpop.f32.mrf.mxu0
  %v1766 = vadd.f32 0.0, %v1765
  %v1767 = vpop.f32.mrf.mxu0
  %v1768 = vadd.f32 0.0, %v1767
  %1769 = vmatmul.bf16.gmra.mxu0 %v1556
  %v1770 = vpop.f32.mrf.mxu0
  %v1771 = vadd.f32 0.0, %v1770
  %v1772 = vpop.f32.mrf.mxu0
  %v1773 = vadd.f32 0.0, %v1772
  %1774 = vmatmul.bf16.gmra.mxu0 %v1557
  %v1775 = vpop.f32.mrf.mxu0
  %v1776 = vadd.f32 0.0, %v1775
  %v1777 = vpop.f32.mrf.mxu0
  %v1778 = vadd.f32 0.0, %v1777
  %1779 = vmatmul.bf16.gmra.mxu0 %v1558
  %v1780 = vpop.f32.mrf.mxu0
  %v1781 = vadd.f32 0.0, %v1780
  %v1782 = vpop.f32.mrf.mxu0
  %v1783 = vadd.f32 0.0, %v1782
  %1784 = vmatmul.bf16.gmra.mxu0 %v1559
  %v1785 = vpop.f32.mrf.mxu0
  %v1786 = vadd.f32 0.0, %v1785
  %v1787 = vpop.f32.mrf.mxu0
  %v1788 = vadd.f32 0.0, %v1787
  %1789 = vmatmul.bf16.gmra.mxu0 %v1560
  %v1790 = vpop.f32.mrf.mxu0
  %v1791 = vadd.f32 0.0, %v1790
  %v1792 = vpop.f32.mrf.mxu0
  %v1793 = vadd.f32 0.0, %v1792
  %1794 = vdwg.mxu0
  %v1795 = vadd.f32 %v1401, %v1636
  %v1796 = vadd.f32 %v1402, %v1638
  %v1797 = vadd.f32 %v1403, %v1641
  %v1798 = vadd.f32 %v1404, %v1643
  %v1799 = vadd.f32 %v1405, %v1646
  %v1800 = vadd.f32 %v1406, %v1648
  %v1801 = vadd.f32 %v1407, %v1651
  %v1802 = vadd.f32 %v1408, %v1653
  %v1803 = vadd.f32 %v1409, %v1656
  %v1804 = vadd.f32 %v1410, %v1658
  %v1805 = vadd.f32 %v1411, %v1661
  %v1806 = vadd.f32 %v1412, %v1663
  %v1807 = vadd.f32 %v1413, %v1666
  %v1808 = vadd.f32 %v1414, %v1668
  %v1809 = vadd.f32 %v1415, %v1671
  %v1810 = vadd.f32 %v1416, %v1673
  %v1811 = vadd.f32 %v1417, %v1676
  %v1812 = vadd.f32 %v1418, %v1678
  %v1813 = vadd.f32 %v1419, %v1681
  %v1814 = vadd.f32 %v1420, %v1683
  %v1815 = vadd.f32 %v1421, %v1686
  %v1816 = vadd.f32 %v1422, %v1688
  %v1817 = vadd.f32 %v1423, %v1691
  %v1818 = vadd.f32 %v1424, %v1693
  %v1819 = vadd.f32 %v1425, %v1696
  %v1820 = vadd.f32 %v1426, %v1698
  %v1821 = vadd.f32 %v1427, %v1701
  %v1822 = vadd.f32 %v1428, %v1703
  %v1823 = vadd.f32 %v1429, %v1706
  %v1824 = vadd.f32 %v1430, %v1708
  %v1825 = vadd.f32 %v1431, %v1711
  %v1826 = vadd.f32 %v1432, %v1713
  %v1827 = vadd.f32 %v1433, %v1716
  %v1828 = vadd.f32 %v1434, %v1718
  %v1829 = vadd.f32 %v1435, %v1721
  %v1830 = vadd.f32 %v1436, %v1723
  %v1831 = vadd.f32 %v1437, %v1726
  %v1832 = vadd.f32 %v1438, %v1728
  %v1833 = vadd.f32 %v1439, %v1731
  %v1834 = vadd.f32 %v1440, %v1733
  %v1835 = vadd.f32 %v1441, %v1736
  %v1836 = vadd.f32 %v1442, %v1738
  %v1837 = vadd.f32 %v1443, %v1741
  %v1838 = vadd.f32 %v1444, %v1743
  %v1839 = vadd.f32 %v1445, %v1746
  %v1840 = vadd.f32 %v1446, %v1748
  %v1841 = vadd.f32 %v1447, %v1751
  %v1842 = vadd.f32 %v1448, %v1753
  %v1843 = vadd.f32 %v1449, %v1756
  %v1844 = vadd.f32 %v1450, %v1758
  %v1845 = vadd.f32 %v1451, %v1761
  %v1846 = vadd.f32 %v1452, %v1763
  %v1847 = vadd.f32 %v1453, %v1766
  %v1848 = vadd.f32 %v1454, %v1768
  %v1849 = vadd.f32 %v1455, %v1771
  %v1850 = vadd.f32 %v1456, %v1773
  %v1851 = vadd.f32 %v1457, %v1776
  %v1852 = vadd.f32 %v1458, %v1778
  %v1853 = vadd.f32 %v1459, %v1781
  %v1854 = vadd.f32 %v1460, %v1783
  %v1855 = vadd.f32 %v1461, %v1786
  %v1856 = vadd.f32 %v1462, %v1788
  %v1857 = vadd.f32 %v1463, %v1791
  %v1858 = vadd.f32 %v1464, %v1793
  %v1859 = vld [vmem:[%s1070 + $0x2] sm:$0xff]
  %v1860 = vld [vmem:[%s1070 + $0xa] sm:$0xff]
  %v1861 = vld [vmem:[%s1070 + $0x1a] sm:$0xff]
  %v1862 = vld [vmem:[%s1070 + $0x22] sm:$0xff]
  %v1863 = vld [vmem:[%s1070 + $0x32] sm:$0xff]
  %v1864 = vld [vmem:[%s1070 + $0x3a] sm:$0xff]
  %v1865 = vld [vmem:[%s1070 + $0x4a] sm:$0xff]
  %v1866 = vld [vmem:[%s1070 + $0x52] sm:$0xff]
  %v1867 = vld [vmem:[%s1070 + $0x62] sm:$0xff]
  %v1868 = vld [vmem:[%s1070 + $0x6a] sm:$0xff]
  %v1869 = vld [vmem:[%s1070 + $0x7a] sm:$0xff]
  %v1870 = vld [vmem:[%s1070 + $0x82] sm:$0xff]
  %v1871 = vld [vmem:[%s1070 + $0x92] sm:$0xff]
  %v1872 = vld [vmem:[%s1070 + $0x9a] sm:$0xff]
  %v1873 = vld [vmem:[%s1070 + $0xaa] sm:$0xff]
  %v1874 = vld [vmem:[%s1070 + $0xb2] sm:$0xff]
  %v1875 = vld [vmem:[%s1070 + $0xc2] sm:$0xff]
  %v1876 = vld [vmem:[%s1070 + $0xca] sm:$0xff]
  %v1877 = vld [vmem:[%s1070 + $0xda] sm:$0xff]
  %v1878 = vld [vmem:[%s1070 + $0xe2] sm:$0xff]
  %v1879 = vld [vmem:[%s1070 + $0xf2] sm:$0xff]
  %v1880 = vld [vmem:[%s1070 + $0xfa] sm:$0xff]
  %v1881 = vld [vmem:[%s1070 + $0x10a] sm:$0xff]
  %v1882 = vld [vmem:[%s1070 + $0x112] sm:$0xff]
  %v1883 = vld [vmem:[%s1070 + $0x122] sm:$0xff]
  %v1884 = vld [vmem:[%s1070 + $0x12a] sm:$0xff]
  %v1885 = vld [vmem:[%s1070 + $0x13a] sm:$0xff]
  %v1886 = vld [vmem:[%s1070 + $0x142] sm:$0xff]
  %v1887 = vld [vmem:[%s1070 + $0x152] sm:$0xff]
  %v1888 = vld [vmem:[%s1070 + $0x15a] sm:$0xff]
  %v1889 = vld [vmem:[%s1070 + $0x16a] sm:$0xff]
  %v1890 = vld [vmem:[%s1070 + $0x172] sm:$0xff]
  %v1891 = vld [vmem:[%s1070 + $0x1b2] sm:$0xff]
  %v1892 = vld [vmem:[%s1070 + $0x1ba] sm:$0xff]
  %v1893 = vld [vmem:[%s1070 + $0x1ca] sm:$0xff]
  %v1894 = vld [vmem:[%s1070 + $0x1d2] sm:$0xff]
  %v1895 = vld [vmem:[%s1070 + $0x1e2] sm:$0xff]
  %v1896 = vld [vmem:[%s1070 + $0x1ea] sm:$0xff]
  %v1897 = vld [vmem:[%s1070 + $0x1fa] sm:$0xff]
  %v1898 = vld [vmem:[%s1070 + $0x202] sm:$0xff]
  %v1899 = vld [vmem:[%s1070 + $0x212] sm:$0xff]
  %v1900 = vld [vmem:[%s1070 + $0x21a] sm:$0xff]
  %v1901 = vld [vmem:[%s1070 + $0x22a] sm:$0xff]
  %v1902 = vld [vmem:[%s1070 + $0x232] sm:$0xff]
  %v1903 = vld [vmem:[%s1070 + $0x242] sm:$0xff]
  %v1904 = vld [vmem:[%s1070 + $0x24a] sm:$0xff]
  %v1905 = vld [vmem:[%s1070 + $0x25a] sm:$0xff]
  %v1906 = vld [vmem:[%s1070 + $0x262] sm:$0xff]
  %v1907 = vld [vmem:[%s1070 + $0x272] sm:$0xff]
  %v1908 = vld [vmem:[%s1070 + $0x27a] sm:$0xff]
  %v1909 = vld [vmem:[%s1070 + $0x28a] sm:$0xff]
  %v1910 = vld [vmem:[%s1070 + $0x292] sm:$0xff]
  %v1911 = vld [vmem:[%s1070 + $0x2a2] sm:$0xff]
  %v1912 = vld [vmem:[%s1070 + $0x2aa] sm:$0xff]
  %v1913 = vld [vmem:[%s1070 + $0x2ba] sm:$0xff]
  %v1914 = vld [vmem:[%s1070 + $0x2c2] sm:$0xff]
  %v1915 = vld [vmem:[%s1070 + $0x2d2] sm:$0xff]
  %v1916 = vld [vmem:[%s1070 + $0x2da] sm:$0xff]
  %v1917 = vld [vmem:[%s1070 + $0x2ea] sm:$0xff]
  %v1918 = vld [vmem:[%s1070 + $0x2f2] sm:$0xff]
  %v1919 = vld [vmem:[%s1070 + $0x302] sm:$0xff]
  %v1920 = vld [vmem:[%s1070 + $0x30a] sm:$0xff]
  %v1921 = vld [vmem:[%s1070 + $0x31a] sm:$0xff]
  %v1922 = vld [vmem:[%s1070 + $0x322] sm:$0xff]
  %v1923 = vpack.c.bf16 %v1860, %v1859
  %v1924 = vpack.c.bf16 %v1862, %v1861
  %v1925 = vpack.c.bf16 %v1864, %v1863
  %v1926 = vpack.c.bf16 %v1866, %v1865
  %v1927 = vpack.c.bf16 %v1868, %v1867
  %v1928 = vpack.c.bf16 %v1870, %v1869
  %v1929 = vpack.c.bf16 %v1872, %v1871
  %v1930 = vpack.c.bf16 %v1874, %v1873
  %v1931 = vpack.c.bf16 %v1876, %v1875
  %v1932 = vpack.c.bf16 %v1878, %v1877
  %v1933 = vpack.c.bf16 %v1880, %v1879
  %v1934 = vpack.c.bf16 %v1882, %v1881
  %v1935 = vpack.c.bf16 %v1884, %v1883
  %v1936 = vpack.c.bf16 %v1886, %v1885
  %v1937 = vpack.c.bf16 %v1888, %v1887
  %v1938 = vpack.c.bf16 %v1890, %v1889
  %v1939 = vpack.c.bf16 %v1892, %v1891
  %v1940 = vpack.c.bf16 %v1894, %v1893
  %v1941 = vpack.c.bf16 %v1896, %v1895
  %v1942 = vpack.c.bf16 %v1898, %v1897
  %v1943 = vpack.c.bf16 %v1900, %v1899
  %v1944 = vpack.c.bf16 %v1902, %v1901
  %v1945 = vpack.c.bf16 %v1904, %v1903
  %v1946 = vpack.c.bf16 %v1906, %v1905
  %v1947 = vpack.c.bf16 %v1908, %v1907
  %v1948 = vpack.c.bf16 %v1910, %v1909
  %v1949 = vpack.c.bf16 %v1912, %v1911
  %v1950 = vpack.c.bf16 %v1914, %v1913
  %v1951 = vpack.c.bf16 %v1916, %v1915
  %v1952 = vpack.c.bf16 %v1918, %v1917
  %v1953 = vpack.c.bf16 %v1920, %v1919
  %v1954 = vpack.c.bf16 %v1922, %v1921
  %s1955 = scalar_lea.vmem %s1, 320
  %v1956 = vld [vmem:[%s1955] sm:$0xf]
  %v1957 = vld [vmem:[%s1955 + $0x4] sm:$0xf]
  %v1958 = vld [vmem:[%s1955 + $0x8] sm:$0xf]
  %v1959 = vld [vmem:[%s1955 + $0xc] sm:$0xf]
  %v1960 = vld [vmem:[%s1955 + $0x10] sm:$0xf]
  %v1961 = vld [vmem:[%s1955 + $0x14] sm:$0xf]
  %v1962 = vld [vmem:[%s1955 + $0x18] sm:$0xf]
  %v1963 = vld [vmem:[%s1955 + $0x1c] sm:$0xf]
  %v1964 = vld [vmem:[%s1955 + $0x20] sm:$0xf]
  %v1965 = vld [vmem:[%s1955 + $0x24] sm:$0xf]
  %v1966 = vld [vmem:[%s1955 + $0x28] sm:$0xf]
  %v1967 = vld [vmem:[%s1955 + $0x2c] sm:$0xf]
  %v1968 = vld [vmem:[%s1955 + $0x30] sm:$0xf]
  %v1969 = vld [vmem:[%s1955 + $0x34] sm:$0xf]
  %v1970 = vld [vmem:[%s1955 + $0x38] sm:$0xf]
  %v1971 = vld [vmem:[%s1955 + $0x3c] sm:$0xf]
  %v1988 = vunpack.c.l.b16 %v1956
  %v1989 = vunpack.c.l.b16 %v1957
  %v1990 = vunpack.c.l.b16 %v1958
  %v1991 = vunpack.c.l.b16 %v1959
  %v1992 = vunpack.c.l.b16 %v1960
  %v1993 = vunpack.c.l.b16 %v1961
  %v1994 = vunpack.c.l.b16 %v1962
  %v1995 = vunpack.c.l.b16 %v1963
  %v1996 = vunpack.c.l.b16 %v1964
  %v1997 = vunpack.c.l.b16 %v1965
  %v1998 = vunpack.c.l.b16 %v1966
  %v1999 = vunpack.c.l.b16 %v1967
  %v2000 = vunpack.c.l.b16 %v1968
  %v2001 = vunpack.c.l.b16 %v1969
  %v2002 = vunpack.c.l.b16 %v1970
  %v2003 = vunpack.c.l.b16 %v1971
  %v2004 = vpack.c.b16 %v1989, %v1988
  %v2005 = vpack.c.b16 %v1991, %v1990
  %v2006 = vpack.c.b16 %v1993, %v1992
  %v2007 = vpack.c.b16 %v1995, %v1994
  %v2008 = vpack.c.b16 %v1997, %v1996
  %v2009 = vpack.c.b16 %v1999, %v1998
  %v2010 = vpack.c.b16 %v2001, %v2000
  %v2011 = vpack.c.b16 %v2003, %v2002
  %2020 = vmatpush.bf16.msra.mxu0 %v2011
  %2021 = vmatpush.bf16.msra.mxu0 %v2010
  %2022 = vmatpush.bf16.msra.mxu0 %v2009
  %2023 = vmatpush.bf16.msra.mxu0 %v2008
  %2024 = vmatpush.bf16.msra.mxu0 %v2007
  %2025 = vmatpush.bf16.msra.mxu0 %v2006
  %2026 = vmatpush.bf16.msra.mxu0 %v2005
  %2027 = vmatpush.bf16.msra.mxu0 %v2004
  %2028 = vmatmul.bf16.gmra.mxu0 %v1923
  %v2029 = vpop.f32.mrf.mxu0
  %v2030 = vadd.f32 0.0, %v2029
  %v2031 = vpop.f32.mrf.mxu0
  %v2032 = vadd.f32 0.0, %v2031
  %2033 = vmatmul.bf16.gmra.mxu0 %v1924
  %v2034 = vpop.f32.mrf.mxu0
  %v2035 = vadd.f32 0.0, %v2034
  %v2036 = vpop.f32.mrf.mxu0
  %v2037 = vadd.f32 0.0, %v2036
  %2038 = vmatmul.bf16.gmra.mxu0 %v1925
  %v2039 = vpop.f32.mrf.mxu0
  %v2040 = vadd.f32 0.0, %v2039
  %v2041 = vpop.f32.mrf.mxu0
  %v2042 = vadd.f32 0.0, %v2041
  %2043 = vmatmul.bf16.gmra.mxu0 %v1926
  %v2044 = vpop.f32.mrf.mxu0
  %v2045 = vadd.f32 0.0, %v2044
  %v2046 = vpop.f32.mrf.mxu0
  %v2047 = vadd.f32 0.0, %v2046
  %2048 = vmatmul.bf16.gmra.mxu0 %v1927
  %v2049 = vpop.f32.mrf.mxu0
  %v2050 = vadd.f32 0.0, %v2049
  %v2051 = vpop.f32.mrf.mxu0
  %v2052 = vadd.f32 0.0, %v2051
  %2053 = vmatmul.bf16.gmra.mxu0 %v1928
  %v2054 = vpop.f32.mrf.mxu0
  %v2055 = vadd.f32 0.0, %v2054
  %v2056 = vpop.f32.mrf.mxu0
  %v2057 = vadd.f32 0.0, %v2056
  %2058 = vmatmul.bf16.gmra.mxu0 %v1929
  %v2059 = vpop.f32.mrf.mxu0
  %v2060 = vadd.f32 0.0, %v2059
  %v2061 = vpop.f32.mrf.mxu0
  %v2062 = vadd.f32 0.0, %v2061
  %2063 = vmatmul.bf16.gmra.mxu0 %v1930
  %v2064 = vpop.f32.mrf.mxu0
  %v2065 = vadd.f32 0.0, %v2064
  %v2066 = vpop.f32.mrf.mxu0
  %v2067 = vadd.f32 0.0, %v2066
  %2068 = vmatmul.bf16.gmra.mxu0 %v1931
  %v2069 = vpop.f32.mrf.mxu0
  %v2070 = vadd.f32 0.0, %v2069
  %v2071 = vpop.f32.mrf.mxu0
  %v2072 = vadd.f32 0.0, %v2071
  %2073 = vmatmul.bf16.gmra.mxu0 %v1932
  %v2074 = vpop.f32.mrf.mxu0
  %v2075 = vadd.f32 0.0, %v2074
  %v2076 = vpop.f32.mrf.mxu0
  %v2077 = vadd.f32 0.0, %v2076
  %2078 = vmatmul.bf16.gmra.mxu0 %v1933
  %v2079 = vpop.f32.mrf.mxu0
  %v2080 = vadd.f32 0.0, %v2079
  %v2081 = vpop.f32.mrf.mxu0
  %v2082 = vadd.f32 0.0, %v2081
  %2083 = vmatmul.bf16.gmra.mxu0 %v1934
  %v2084 = vpop.f32.mrf.mxu0
  %v2085 = vadd.f32 0.0, %v2084
  %v2086 = vpop.f32.mrf.mxu0
  %v2087 = vadd.f32 0.0, %v2086
  %2088 = vmatmul.bf16.gmra.mxu0 %v1935
  %v2089 = vpop.f32.mrf.mxu0
  %v2090 = vadd.f32 0.0, %v2089
  %v2091 = vpop.f32.mrf.mxu0
  %v2092 = vadd.f32 0.0, %v2091
  %2093 = vmatmul.bf16.gmra.mxu0 %v1936
  %v2094 = vpop.f32.mrf.mxu0
  %v2095 = vadd.f32 0.0, %v2094
  %v2096 = vpop.f32.mrf.mxu0
  %v2097 = vadd.f32 0.0, %v2096
  %2098 = vmatmul.bf16.gmra.mxu0 %v1937
  %v2099 = vpop.f32.mrf.mxu0
  %v2100 = vadd.f32 0.0, %v2099
  %v2101 = vpop.f32.mrf.mxu0
  %v2102 = vadd.f32 0.0, %v2101
  %2103 = vmatmul.bf16.gmra.mxu0 %v1938
  %v2104 = vpop.f32.mrf.mxu0
  %v2105 = vadd.f32 0.0, %v2104
  %v2106 = vpop.f32.mrf.mxu0
  %v2107 = vadd.f32 0.0, %v2106
  %2108 = vmatmul.bf16.gmra.mxu0 %v1939
  %v2109 = vpop.f32.mrf.mxu0
  %v2110 = vadd.f32 0.0, %v2109
  %v2111 = vpop.f32.mrf.mxu0
  %v2112 = vadd.f32 0.0, %v2111
  %2113 = vmatmul.bf16.gmra.mxu0 %v1940
  %v2114 = vpop.f32.mrf.mxu0
  %v2115 = vadd.f32 0.0, %v2114
  %v2116 = vpop.f32.mrf.mxu0
  %v2117 = vadd.f32 0.0, %v2116
  %2118 = vmatmul.bf16.gmra.mxu0 %v1941
  %v2119 = vpop.f32.mrf.mxu0
  %v2120 = vadd.f32 0.0, %v2119
  %v2121 = vpop.f32.mrf.mxu0
  %v2122 = vadd.f32 0.0, %v2121
  %2123 = vmatmul.bf16.gmra.mxu0 %v1942
  %v2124 = vpop.f32.mrf.mxu0
  %v2125 = vadd.f32 0.0, %v2124
  %v2126 = vpop.f32.mrf.mxu0
  %v2127 = vadd.f32 0.0, %v2126
  %2128 = vmatmul.bf16.gmra.mxu0 %v1943
  %v2129 = vpop.f32.mrf.mxu0
  %v2130 = vadd.f32 0.0, %v2129
  %v2131 = vpop.f32.mrf.mxu0
  %v2132 = vadd.f32 0.0, %v2131
  %2133 = vmatmul.bf16.gmra.mxu0 %v1944
  %v2134 = vpop.f32.mrf.mxu0
  %v2135 = vadd.f32 0.0, %v2134
  %v2136 = vpop.f32.mrf.mxu0
  %v2137 = vadd.f32 0.0, %v2136
  %2138 = vmatmul.bf16.gmra.mxu0 %v1945
  %v2139 = vpop.f32.mrf.mxu0
  %v2140 = vadd.f32 0.0, %v2139
  %v2141 = vpop.f32.mrf.mxu0
  %v2142 = vadd.f32 0.0, %v2141
  %2143 = vmatmul.bf16.gmra.mxu0 %v1946
  %v2144 = vpop.f32.mrf.mxu0
  %v2145 = vadd.f32 0.0, %v2144
  %v2146 = vpop.f32.mrf.mxu0
  %v2147 = vadd.f32 0.0, %v2146
  %2148 = vmatmul.bf16.gmra.mxu0 %v1947
  %v2149 = vpop.f32.mrf.mxu0
  %v2150 = vadd.f32 0.0, %v2149
  %v2151 = vpop.f32.mrf.mxu0
  %v2152 = vadd.f32 0.0, %v2151
  %2153 = vmatmul.bf16.gmra.mxu0 %v1948
  %v2154 = vpop.f32.mrf.mxu0
  %v2155 = vadd.f32 0.0, %v2154
  %v2156 = vpop.f32.mrf.mxu0
  %v2157 = vadd.f32 0.0, %v2156
  %2158 = vmatmul.bf16.gmra.mxu0 %v1949
  %v2159 = vpop.f32.mrf.mxu0
  %v2160 = vadd.f32 0.0, %v2159
  %v2161 = vpop.f32.mrf.mxu0
  %v2162 = vadd.f32 0.0, %v2161
  %2163 = vmatmul.bf16.gmra.mxu0 %v1950
  %v2164 = vpop.f32.mrf.mxu0
  %v2165 = vadd.f32 0.0, %v2164
  %v2166 = vpop.f32.mrf.mxu0
  %v2167 = vadd.f32 0.0, %v2166
  %2168 = vmatmul.bf16.gmra.mxu0 %v1951
  %v2169 = vpop.f32.mrf.mxu0
  %v2170 = vadd.f32 0.0, %v2169
  %v2171 = vpop.f32.mrf.mxu0
  %v2172 = vadd.f32 0.0, %v2171
  %2173 = vmatmul.bf16.gmra.mxu0 %v1952
  %v2174 = vpop.f32.mrf.mxu0
  %v2175 = vadd.f32 0.0, %v2174
  %v2176 = vpop.f32.mrf.mxu0
  %v2177 = vadd.f32 0.0, %v2176
  %2178 = vmatmul.bf16.gmra.mxu0 %v1953
  %v2179 = vpop.f32.mrf.mxu0
  %v2180 = vadd.f32 0.0, %v2179
  %v2181 = vpop.f32.mrf.mxu0
  %v2182 = vadd.f32 0.0, %v2181
  %2183 = vmatmul.bf16.gmra.mxu0 %v1954
  %v2184 = vpop.f32.mrf.mxu0
  %v2185 = vadd.f32 0.0, %v2184
  %v2186 = vpop.f32.mrf.mxu0
  %v2187 = vadd.f32 0.0, %v2186
  %2188 = vdwg.mxu0
  %v2189 = vadd.f32 %v1795, %v2030
  %v2190 = vadd.f32 %v1796, %v2032
  %v2191 = vadd.f32 %v1797, %v2035
  %v2192 = vadd.f32 %v1798, %v2037
  %v2193 = vadd.f32 %v1799, %v2040
  %v2194 = vadd.f32 %v1800, %v2042
  %v2195 = vadd.f32 %v1801, %v2045
  %v2196 = vadd.f32 %v1802, %v2047
  %v2197 = vadd.f32 %v1803, %v2050
  %v2198 = vadd.f32 %v1804, %v2052
  %v2199 = vadd.f32 %v1805, %v2055
  %v2200 = vadd.f32 %v1806, %v2057
  %v2201 = vadd.f32 %v1807, %v2060
  %v2202 = vadd.f32 %v1808, %v2062
  %v2203 = vadd.f32 %v1809, %v2065
  %v2204 = vadd.f32 %v1810, %v2067
  %v2205 = vadd.f32 %v1811, %v2070
  %v2206 = vadd.f32 %v1812, %v2072
  %v2207 = vadd.f32 %v1813, %v2075
  %v2208 = vadd.f32 %v1814, %v2077
  %v2209 = vadd.f32 %v1815, %v2080
  %v2210 = vadd.f32 %v1816, %v2082
  %v2211 = vadd.f32 %v1817, %v2085
  %v2212 = vadd.f32 %v1818, %v2087
  %v2213 = vadd.f32 %v1819, %v2090
  %v2214 = vadd.f32 %v1820, %v2092
  %v2215 = vadd.f32 %v1821, %v2095
  %v2216 = vadd.f32 %v1822, %v2097
  %v2217 = vadd.f32 %v1823, %v2100
  %v2218 = vadd.f32 %v1824, %v2102
  %v2219 = vadd.f32 %v1825, %v2105
  %v2220 = vadd.f32 %v1826, %v2107
  %v2221 = vadd.f32 %v1827, %v2110
  %v2222 = vadd.f32 %v1828, %v2112
  %v2223 = vadd.f32 %v1829, %v2115
  %v2224 = vadd.f32 %v1830, %v2117
  %v2225 = vadd.f32 %v1831, %v2120
  %v2226 = vadd.f32 %v1832, %v2122
  %v2227 = vadd.f32 %v1833, %v2125
  %v2228 = vadd.f32 %v1834, %v2127
  %v2229 = vadd.f32 %v1835, %v2130
  %v2230 = vadd.f32 %v1836, %v2132
  %v2231 = vadd.f32 %v1837, %v2135
  %v2232 = vadd.f32 %v1838, %v2137
  %v2233 = vadd.f32 %v1839, %v2140
  %v2234 = vadd.f32 %v1840, %v2142
  %v2235 = vadd.f32 %v1841, %v2145
  %v2236 = vadd.f32 %v1842, %v2147
  %v2237 = vadd.f32 %v1843, %v2150
  %v2238 = vadd.f32 %v1844, %v2152
  %v2239 = vadd.f32 %v1845, %v2155
  %v2240 = vadd.f32 %v1846, %v2157
  %v2241 = vadd.f32 %v1847, %v2160
  %v2242 = vadd.f32 %v1848, %v2162
  %v2243 = vadd.f32 %v1849, %v2165
  %v2244 = vadd.f32 %v1850, %v2167
  %v2245 = vadd.f32 %v1851, %v2170
  %v2246 = vadd.f32 %v1852, %v2172
  %v2247 = vadd.f32 %v1853, %v2175
  %v2248 = vadd.f32 %v1854, %v2177
  %v2249 = vadd.f32 %v1855, %v2180
  %v2250 = vadd.f32 %v1856, %v2182
  %v2251 = vadd.f32 %v1857, %v2185
  %v2252 = vadd.f32 %v1858, %v2187
  %s2253 = scalar_lea.vmem %s0, 48
  %v2254 = vld [vmem:[%s2253] sm:$0xff]
  %v2255 = vld [vmem:[%s2253 + $0x8] sm:$0xff]
  %v2256 = vld [vmem:[%s2253 + $0x18] sm:$0xff]
  %v2257 = vld [vmem:[%s2253 + $0x20] sm:$0xff]
  %v2258 = vld [vmem:[%s2253 + $0x30] sm:$0xff]
  %v2259 = vld [vmem:[%s2253 + $0x38] sm:$0xff]
  %v2260 = vld [vmem:[%s2253 + $0x48] sm:$0xff]
  %v2261 = vld [vmem:[%s2253 + $0x50] sm:$0xff]
  %v2262 = vld [vmem:[%s2253 + $0x60] sm:$0xff]
  %v2263 = vld [vmem:[%s2253 + $0x68] sm:$0xff]
  %v2264 = vld [vmem:[%s2253 + $0x78] sm:$0xff]
  %v2265 = vld [vmem:[%s2253 + $0x80] sm:$0xff]
  %v2266 = vld [vmem:[%s2253 + $0x90] sm:$0xff]
  %v2267 = vld [vmem:[%s2253 + $0x98] sm:$0xff]
  %v2268 = vld [vmem:[%s2253 + $0xa8] sm:$0xff]
  %v2269 = vld [vmem:[%s2253 + $0xb0] sm:$0xff]
  %v2270 = vld [vmem:[%s2253 + $0xc0] sm:$0xff]
  %v2271 = vld [vmem:[%s2253 + $0xc8] sm:$0xff]
  %v2272 = vld [vmem:[%s2253 + $0xd8] sm:$0xff]
  %v2273 = vld [vmem:[%s2253 + $0xe0] sm:$0xff]
  %v2274 = vld [vmem:[%s2253 + $0xf0] sm:$0xff]
  %v2275 = vld [vmem:[%s2253 + $0xf8] sm:$0xff]
  %v2276 = vld [vmem:[%s2253 + $0x108] sm:$0xff]
  %v2277 = vld [vmem:[%s2253 + $0x110] sm:$0xff]
  %v2278 = vld [vmem:[%s2253 + $0x120] sm:$0xff]
  %v2279 = vld [vmem:[%s2253 + $0x128] sm:$0xff]
  %v2280 = vld [vmem:[%s2253 + $0x138] sm:$0xff]
  %v2281 = vld [vmem:[%s2253 + $0x140] sm:$0xff]
  %v2282 = vld [vmem:[%s2253 + $0x150] sm:$0xff]
  %v2283 = vld [vmem:[%s2253 + $0x158] sm:$0xff]
  %v2284 = vld [vmem:[%s2253 + $0x168] sm:$0xff]
  %v2285 = vld [vmem:[%s2253 + $0x170] sm:$0xff]
  %v2286 = vld [vmem:[%s2253 + $0x1b0] sm:$0xff]
  %v2287 = vld [vmem:[%s2253 + $0x1b8] sm:$0xff]
  %v2288 = vld [vmem:[%s2253 + $0x1c8] sm:$0xff]
  %v2289 = vld [vmem:[%s2253 + $0x1d0] sm:$0xff]
  %v2290 = vld [vmem:[%s2253 + $0x1e0] sm:$0xff]
  %v2291 = vld [vmem:[%s2253 + $0x1e8] sm:$0xff]
  %v2292 = vld [vmem:[%s2253 + $0x1f8] sm:$0xff]
  %v2293 = vld [vmem:[%s2253 + $0x200] sm:$0xff]
  %v2294 = vld [vmem:[%s2253 + $0x210] sm:$0xff]
  %v2295 = vld [vmem:[%s2253 + $0x218] sm:$0xff]
  %v2296 = vld [vmem:[%s2253 + $0x228] sm:$0xff]
  %v2297 = vld [vmem:[%s2253 + $0x230] sm:$0xff]
  %v2298 = vld [vmem:[%s2253 + $0x240] sm:$0xff]
  %v2299 = vld [vmem:[%s2253 + $0x248] sm:$0xff]
  %v2300 = vld [vmem:[%s2253 + $0x258] sm:$0xff]
  %v2301 = vld [vmem:[%s2253 + $0x260] sm:$0xff]
  %v2302 = vld [vmem:[%s2253 + $0x270] sm:$0xff]
  %v2303 = vld [vmem:[%s2253 + $0x278] sm:$0xff]
  %v2304 = vld [vmem:[%s2253 + $0x288] sm:$0xff]
  %v2305 = vld [vmem:[%s2253 + $0x290] sm:$0xff]
  %v2306 = vld [vmem:[%s2253 + $0x2a0] sm:$0xff]
  %v2307 = vld [vmem:[%s2253 + $0x2a8] sm:$0xff]
  %v2308 = vld [vmem:[%s2253 + $0x2b8] sm:$0xff]
  %v2309 = vld [vmem:[%s2253 + $0x2c0] sm:$0xff]
  %v2310 = vld [vmem:[%s2253 + $0x2d0] sm:$0xff]
  %v2311 = vld [vmem:[%s2253 + $0x2d8] sm:$0xff]
  %v2312 = vld [vmem:[%s2253 + $0x2e8] sm:$0xff]
  %v2313 = vld [vmem:[%s2253 + $0x2f0] sm:$0xff]
  %v2314 = vld [vmem:[%s2253 + $0x300] sm:$0xff]
  %v2315 = vld [vmem:[%s2253 + $0x308] sm:$0xff]
  %v2316 = vld [vmem:[%s2253 + $0x318] sm:$0xff]
  %v2317 = vld [vmem:[%s2253 + $0x320] sm:$0xff]
  %v2318 = vpack.c.bf16 %v2255, %v2254
  %v2319 = vpack.c.bf16 %v2257, %v2256
  %v2320 = vpack.c.bf16 %v2259, %v2258
  %v2321 = vpack.c.bf16 %v2261, %v2260
  %v2322 = vpack.c.bf16 %v2263, %v2262
  %v2323 = vpack.c.bf16 %v2265, %v2264
  %v2324 = vpack.c.bf16 %v2267, %v2266
  %v2325 = vpack.c.bf16 %v2269, %v2268
  %v2326 = vpack.c.bf16 %v2271, %v2270
  %v2327 = vpack.c.bf16 %v2273, %v2272
  %v2328 = vpack.c.bf16 %v2275, %v2274
  %v2329 = vpack.c.bf16 %v2277, %v2276
  %v2330 = vpack.c.bf16 %v2279, %v2278
  %v2331 = vpack.c.bf16 %v2281, %v2280
  %v2332 = vpack.c.bf16 %v2283, %v2282
  %v2333 = vpack.c.bf16 %v2285, %v2284
  %v2334 = vpack.c.bf16 %v2287, %v2286
  %v2335 = vpack.c.bf16 %v2289, %v2288
  %v2336 = vpack.c.bf16 %v2291, %v2290
  %v2337 = vpack.c.bf16 %v2293, %v2292
  %v2338 = vpack.c.bf16 %v2295, %v2294
  %v2339 = vpack.c.bf16 %v2297, %v2296
  %v2340 = vpack.c.bf16 %v2299, %v2298
  %v2341 = vpack.c.bf16 %v2301, %v2300
  %v2342 = vpack.c.bf16 %v2303, %v2302
  %v2343 = vpack.c.bf16 %v2305, %v2304
  %v2344 = vpack.c.bf16 %v2307, %v2306
  %v2345 = vpack.c.bf16 %v2309, %v2308
  %v2346 = vpack.c.bf16 %v2311, %v2310
  %v2347 = vpack.c.bf16 %v2313, %v2312
  %v2348 = vpack.c.bf16 %v2315, %v2314
  %v2349 = vpack.c.bf16 %v2317, %v2316
  %s2350 = scalar_lea.vmem %s1, 384
  %v2351 = vld [vmem:[%s2350] sm:$0xf]
  %v2352 = vld [vmem:[%s2350 + $0x4] sm:$0xf]
  %v2353 = vld [vmem:[%s2350 + $0x8] sm:$0xf]
  %v2354 = vld [vmem:[%s2350 + $0xc] sm:$0xf]
  %v2355 = vld [vmem:[%s2350 + $0x10] sm:$0xf]
  %v2356 = vld [vmem:[%s2350 + $0x14] sm:$0xf]
  %v2357 = vld [vmem:[%s2350 + $0x18] sm:$0xf]
  %v2358 = vld [vmem:[%s2350 + $0x1c] sm:$0xf]
  %v2359 = vld [vmem:[%s2350 + $0x20] sm:$0xf]
  %v2360 = vld [vmem:[%s2350 + $0x24] sm:$0xf]
  %v2361 = vld [vmem:[%s2350 + $0x28] sm:$0xf]
  %v2362 = vld [vmem:[%s2350 + $0x2c] sm:$0xf]
  %v2363 = vld [vmem:[%s2350 + $0x30] sm:$0xf]
  %v2364 = vld [vmem:[%s2350 + $0x34] sm:$0xf]
  %v2365 = vld [vmem:[%s2350 + $0x38] sm:$0xf]
  %v2366 = vld [vmem:[%s2350 + $0x3c] sm:$0xf]
  %v2383 = vunpack.c.l.b16 %v2351
  %v2384 = vunpack.c.l.b16 %v2352
  %v2385 = vunpack.c.l.b16 %v2353
  %v2386 = vunpack.c.l.b16 %v2354
  %v2387 = vunpack.c.l.b16 %v2355
  %v2388 = vunpack.c.l.b16 %v2356
  %v2389 = vunpack.c.l.b16 %v2357
  %v2390 = vunpack.c.l.b16 %v2358
  %v2391 = vunpack.c.l.b16 %v2359
  %v2392 = vunpack.c.l.b16 %v2360
  %v2393 = vunpack.c.l.b16 %v2361
  %v2394 = vunpack.c.l.b16 %v2362
  %v2395 = vunpack.c.l.b16 %v2363
  %v2396 = vunpack.c.l.b16 %v2364
  %v2397 = vunpack.c.l.b16 %v2365
  %v2398 = vunpack.c.l.b16 %v2366
  %v2399 = vpack.c.b16 %v2384, %v2383
  %v2400 = vpack.c.b16 %v2386, %v2385
  %v2401 = vpack.c.b16 %v2388, %v2387
  %v2402 = vpack.c.b16 %v2390, %v2389
  %v2403 = vpack.c.b16 %v2392, %v2391
  %v2404 = vpack.c.b16 %v2394, %v2393
  %v2405 = vpack.c.b16 %v2396, %v2395
  %v2406 = vpack.c.b16 %v2398, %v2397
  %2415 = vmatpush.bf16.msra.mxu0 %v2406
  %2416 = vmatpush.bf16.msra.mxu0 %v2405
  %2417 = vmatpush.bf16.msra.mxu0 %v2404
  %2418 = vmatpush.bf16.msra.mxu0 %v2403
  %2419 = vmatpush.bf16.msra.mxu0 %v2402
  %2420 = vmatpush.bf16.msra.mxu0 %v2401
  %2421 = vmatpush.bf16.msra.mxu0 %v2400
  %2422 = vmatpush.bf16.msra.mxu0 %v2399
  %2423 = vmatmul.bf16.gmra.mxu0 %v2318
  %v2424 = vpop.f32.mrf.mxu0
  %v2425 = vadd.f32 0.0, %v2424
  %v2426 = vpop.f32.mrf.mxu0
  %v2427 = vadd.f32 0.0, %v2426
  %2428 = vmatmul.bf16.gmra.mxu0 %v2319
  %v2429 = vpop.f32.mrf.mxu0
  %v2430 = vadd.f32 0.0, %v2429
  %v2431 = vpop.f32.mrf.mxu0
  %v2432 = vadd.f32 0.0, %v2431
  %2433 = vmatmul.bf16.gmra.mxu0 %v2320
  %v2434 = vpop.f32.mrf.mxu0
  %v2435 = vadd.f32 0.0, %v2434
  %v2436 = vpop.f32.mrf.mxu0
  %v2437 = vadd.f32 0.0, %v2436
  %2438 = vmatmul.bf16.gmra.mxu0 %v2321
  %v2439 = vpop.f32.mrf.mxu0
  %v2440 = vadd.f32 0.0, %v2439
  %v2441 = vpop.f32.mrf.mxu0
  %v2442 = vadd.f32 0.0, %v2441
  %2443 = vmatmul.bf16.gmra.mxu0 %v2322
  %v2444 = vpop.f32.mrf.mxu0
  %v2445 = vadd.f32 0.0, %v2444
  %v2446 = vpop.f32.mrf.mxu0
  %v2447 = vadd.f32 0.0, %v2446
  %2448 = vmatmul.bf16.gmra.mxu0 %v2323
  %v2449 = vpop.f32.mrf.mxu0
  %v2450 = vadd.f32 0.0, %v2449
  %v2451 = vpop.f32.mrf.mxu0
  %v2452 = vadd.f32 0.0, %v2451
  %2453 = vmatmul.bf16.gmra.mxu0 %v2324
  %v2454 = vpop.f32.mrf.mxu0
  %v2455 = vadd.f32 0.0, %v2454
  %v2456 = vpop.f32.mrf.mxu0
  %v2457 = vadd.f32 0.0, %v2456
  %2458 = vmatmul.bf16.gmra.mxu0 %v2325
  %v2459 = vpop.f32.mrf.mxu0
  %v2460 = vadd.f32 0.0, %v2459
  %v2461 = vpop.f32.mrf.mxu0
  %v2462 = vadd.f32 0.0, %v2461
  %2463 = vmatmul.bf16.gmra.mxu0 %v2326
  %v2464 = vpop.f32.mrf.mxu0
  %v2465 = vadd.f32 0.0, %v2464
  %v2466 = vpop.f32.mrf.mxu0
  %v2467 = vadd.f32 0.0, %v2466
  %2468 = vmatmul.bf16.gmra.mxu0 %v2327
  %v2469 = vpop.f32.mrf.mxu0
  %v2470 = vadd.f32 0.0, %v2469
  %v2471 = vpop.f32.mrf.mxu0
  %v2472 = vadd.f32 0.0, %v2471
  %2473 = vmatmul.bf16.gmra.mxu0 %v2328
  %v2474 = vpop.f32.mrf.mxu0
  %v2475 = vadd.f32 0.0, %v2474
  %v2476 = vpop.f32.mrf.mxu0
  %v2477 = vadd.f32 0.0, %v2476
  %2478 = vmatmul.bf16.gmra.mxu0 %v2329
  %v2479 = vpop.f32.mrf.mxu0
  %v2480 = vadd.f32 0.0, %v2479
  %v2481 = vpop.f32.mrf.mxu0
  %v2482 = vadd.f32 0.0, %v2481
  %2483 = vmatmul.bf16.gmra.mxu0 %v2330
  %v2484 = vpop.f32.mrf.mxu0
  %v2485 = vadd.f32 0.0, %v2484
  %v2486 = vpop.f32.mrf.mxu0
  %v2487 = vadd.f32 0.0, %v2486
  %2488 = vmatmul.bf16.gmra.mxu0 %v2331
  %v2489 = vpop.f32.mrf.mxu0
  %v2490 = vadd.f32 0.0, %v2489
  %v2491 = vpop.f32.mrf.mxu0
  %v2492 = vadd.f32 0.0, %v2491
  %2493 = vmatmul.bf16.gmra.mxu0 %v2332
  %v2494 = vpop.f32.mrf.mxu0
  %v2495 = vadd.f32 0.0, %v2494
  %v2496 = vpop.f32.mrf.mxu0
  %v2497 = vadd.f32 0.0, %v2496
  %2498 = vmatmul.bf16.gmra.mxu0 %v2333
  %v2499 = vpop.f32.mrf.mxu0
  %v2500 = vadd.f32 0.0, %v2499
  %v2501 = vpop.f32.mrf.mxu0
  %v2502 = vadd.f32 0.0, %v2501
  %2503 = vmatmul.bf16.gmra.mxu0 %v2334
  %v2504 = vpop.f32.mrf.mxu0
  %v2505 = vadd.f32 0.0, %v2504
  %v2506 = vpop.f32.mrf.mxu0
  %v2507 = vadd.f32 0.0, %v2506
  %2508 = vmatmul.bf16.gmra.mxu0 %v2335
  %v2509 = vpop.f32.mrf.mxu0
  %v2510 = vadd.f32 0.0, %v2509
  %v2511 = vpop.f32.mrf.mxu0
  %v2512 = vadd.f32 0.0, %v2511
  %2513 = vmatmul.bf16.gmra.mxu0 %v2336
  %v2514 = vpop.f32.mrf.mxu0
  %v2515 = vadd.f32 0.0, %v2514
  %v2516 = vpop.f32.mrf.mxu0
  %v2517 = vadd.f32 0.0, %v2516
  %2518 = vmatmul.bf16.gmra.mxu0 %v2337
  %v2519 = vpop.f32.mrf.mxu0
  %v2520 = vadd.f32 0.0, %v2519
  %v2521 = vpop.f32.mrf.mxu0
  %v2522 = vadd.f32 0.0, %v2521
  %2523 = vmatmul.bf16.gmra.mxu0 %v2338
  %v2524 = vpop.f32.mrf.mxu0
  %v2525 = vadd.f32 0.0, %v2524
  %v2526 = vpop.f32.mrf.mxu0
  %v2527 = vadd.f32 0.0, %v2526
  %2528 = vmatmul.bf16.gmra.mxu0 %v2339
  %v2529 = vpop.f32.mrf.mxu0
  %v2530 = vadd.f32 0.0, %v2529
  %v2531 = vpop.f32.mrf.mxu0
  %v2532 = vadd.f32 0.0, %v2531
  %2533 = vmatmul.bf16.gmra.mxu0 %v2340
  %v2534 = vpop.f32.mrf.mxu0
  %v2535 = vadd.f32 0.0, %v2534
  %v2536 = vpop.f32.mrf.mxu0
  %v2537 = vadd.f32 0.0, %v2536
  %2538 = vmatmul.bf16.gmra.mxu0 %v2341
  %v2539 = vpop.f32.mrf.mxu0
  %v2540 = vadd.f32 0.0, %v2539
  %v2541 = vpop.f32.mrf.mxu0
  %v2542 = vadd.f32 0.0, %v2541
  %2543 = vmatmul.bf16.gmra.mxu0 %v2342
  %v2544 = vpop.f32.mrf.mxu0
  %v2545 = vadd.f32 0.0, %v2544
  %v2546 = vpop.f32.mrf.mxu0
  %v2547 = vadd.f32 0.0, %v2546
  %2548 = vmatmul.bf16.gmra.mxu0 %v2343
  %v2549 = vpop.f32.mrf.mxu0
  %v2550 = vadd.f32 0.0, %v2549
  %v2551 = vpop.f32.mrf.mxu0
  %v2552 = vadd.f32 0.0, %v2551
  %2553 = vmatmul.bf16.gmra.mxu0 %v2344
  %v2554 = vpop.f32.mrf.mxu0
  %v2555 = vadd.f32 0.0, %v2554
  %v2556 = vpop.f32.mrf.mxu0
  %v2557 = vadd.f32 0.0, %v2556
  %2558 = vmatmul.bf16.gmra.mxu0 %v2345
  %v2559 = vpop.f32.mrf.mxu0
  %v2560 = vadd.f32 0.0, %v2559
  %v2561 = vpop.f32.mrf.mxu0
  %v2562 = vadd.f32 0.0, %v2561
  %2563 = vmatmul.bf16.gmra.mxu0 %v2346
  %v2564 = vpop.f32.mrf.mxu0
  %v2565 = vadd.f32 0.0, %v2564
  %v2566 = vpop.f32.mrf.mxu0
  %v2567 = vadd.f32 0.0, %v2566
  %2568 = vmatmul.bf16.gmra.mxu0 %v2347
  %v2569 = vpop.f32.mrf.mxu0
  %v2570 = vadd.f32 0.0, %v2569
  %v2571 = vpop.f32.mrf.mxu0
  %v2572 = vadd.f32 0.0, %v2571
  %2573 = vmatmul.bf16.gmra.mxu0 %v2348
  %v2574 = vpop.f32.mrf.mxu0
  %v2575 = vadd.f32 0.0, %v2574
  %v2576 = vpop.f32.mrf.mxu0
  %v2577 = vadd.f32 0.0, %v2576
  %2578 = vmatmul.bf16.gmra.mxu0 %v2349
  %v2579 = vpop.f32.mrf.mxu0
  %v2580 = vadd.f32 0.0, %v2579
  %v2581 = vpop.f32.mrf.mxu0
  %v2582 = vadd.f32 0.0, %v2581
  %2583 = vdwg.mxu0
  %v2584 = vadd.f32 %v2189, %v2425
  %v2585 = vadd.f32 %v2190, %v2427
  %v2586 = vadd.f32 %v2191, %v2430
  %v2587 = vadd.f32 %v2192, %v2432
  %v2588 = vadd.f32 %v2193, %v2435
  %v2589 = vadd.f32 %v2194, %v2437
  %v2590 = vadd.f32 %v2195, %v2440
  %v2591 = vadd.f32 %v2196, %v2442
  %v2592 = vadd.f32 %v2197, %v2445
  %v2593 = vadd.f32 %v2198, %v2447
  %v2594 = vadd.f32 %v2199, %v2450
  %v2595 = vadd.f32 %v2200, %v2452
  %v2596 = vadd.f32 %v2201, %v2455
  %v2597 = vadd.f32 %v2202, %v2457
  %v2598 = vadd.f32 %v2203, %v2460
  %v2599 = vadd.f32 %v2204, %v2462
  %v2600 = vadd.f32 %v2205, %v2465
  %v2601 = vadd.f32 %v2206, %v2467
  %v2602 = vadd.f32 %v2207, %v2470
  %v2603 = vadd.f32 %v2208, %v2472
  %v2604 = vadd.f32 %v2209, %v2475
  %v2605 = vadd.f32 %v2210, %v2477
  %v2606 = vadd.f32 %v2211, %v2480
  %v2607 = vadd.f32 %v2212, %v2482
  %v2608 = vadd.f32 %v2213, %v2485
  %v2609 = vadd.f32 %v2214, %v2487
  %v2610 = vadd.f32 %v2215, %v2490
  %v2611 = vadd.f32 %v2216, %v2492
  %v2612 = vadd.f32 %v2217, %v2495
  %v2613 = vadd.f32 %v2218, %v2497
  %v2614 = vadd.f32 %v2219, %v2500
  %v2615 = vadd.f32 %v2220, %v2502
  %v2616 = vadd.f32 %v2221, %v2505
  %v2617 = vadd.f32 %v2222, %v2507
  %v2618 = vadd.f32 %v2223, %v2510
  %v2619 = vadd.f32 %v2224, %v2512
  %v2620 = vadd.f32 %v2225, %v2515
  %v2621 = vadd.f32 %v2226, %v2517
  %v2622 = vadd.f32 %v2227, %v2520
  %v2623 = vadd.f32 %v2228, %v2522
  %v2624 = vadd.f32 %v2229, %v2525
  %v2625 = vadd.f32 %v2230, %v2527
  %v2626 = vadd.f32 %v2231, %v2530
  %v2627 = vadd.f32 %v2232, %v2532
  %v2628 = vadd.f32 %v2233, %v2535
  %v2629 = vadd.f32 %v2234, %v2537
  %v2630 = vadd.f32 %v2235, %v2540
  %v2631 = vadd.f32 %v2236, %v2542
  %v2632 = vadd.f32 %v2237, %v2545
  %v2633 = vadd.f32 %v2238, %v2547
  %v2634 = vadd.f32 %v2239, %v2550
  %v2635 = vadd.f32 %v2240, %v2552
  %v2636 = vadd.f32 %v2241, %v2555
  %v2637 = vadd.f32 %v2242, %v2557
  %v2638 = vadd.f32 %v2243, %v2560
  %v2639 = vadd.f32 %v2244, %v2562
  %v2640 = vadd.f32 %v2245, %v2565
  %v2641 = vadd.f32 %v2246, %v2567
  %v2642 = vadd.f32 %v2247, %v2570
  %v2643 = vadd.f32 %v2248, %v2572
  %v2644 = vadd.f32 %v2249, %v2575
  %v2645 = vadd.f32 %v2250, %v2577
  %v2646 = vadd.f32 %v2251, %v2580
  %v2647 = vadd.f32 %v2252, %v2582
  %v2648 = vld [vmem:[%s2253 + $0x1] sm:$0xff]
  %v2649 = vld [vmem:[%s2253 + $0x9] sm:$0xff]
  %v2650 = vld [vmem:[%s2253 + $0x19] sm:$0xff]
  %v2651 = vld [vmem:[%s2253 + $0x21] sm:$0xff]
  %v2652 = vld [vmem:[%s2253 + $0x31] sm:$0xff]
  %v2653 = vld [vmem:[%s2253 + $0x39] sm:$0xff]
  %v2654 = vld [vmem:[%s2253 + $0x49] sm:$0xff]
  %v2655 = vld [vmem:[%s2253 + $0x51] sm:$0xff]
  %v2656 = vld [vmem:[%s2253 + $0x61] sm:$0xff]
  %v2657 = vld [vmem:[%s2253 + $0x69] sm:$0xff]
  %v2658 = vld [vmem:[%s2253 + $0x79] sm:$0xff]
  %v2659 = vld [vmem:[%s2253 + $0x81] sm:$0xff]
  %v2660 = vld [vmem:[%s2253 + $0x91] sm:$0xff]
  %v2661 = vld [vmem:[%s2253 + $0x99] sm:$0xff]
  %v2662 = vld [vmem:[%s2253 + $0xa9] sm:$0xff]
  %v2663 = vld [vmem:[%s2253 + $0xb1] sm:$0xff]
  %v2664 = vld [vmem:[%s2253 + $0xc1] sm:$0xff]
  %v2665 = vld [vmem:[%s2253 + $0xc9] sm:$0xff]
  %v2666 = vld [vmem:[%s2253 + $0xd9] sm:$0xff]
  %v2667 = vld [vmem:[%s2253 + $0xe1] sm:$0xff]
  %v2668 = vld [vmem:[%s2253 + $0xf1] sm:$0xff]
  %v2669 = vld [vmem:[%s2253 + $0xf9] sm:$0xff]
  %v2670 = vld [vmem:[%s2253 + $0x109] sm:$0xff]
  %v2671 = vld [vmem:[%s2253 + $0x111] sm:$0xff]
  %v2672 = vld [vmem:[%s2253 + $0x121] sm:$0xff]
  %v2673 = vld [vmem:[%s2253 + $0x129] sm:$0xff]
  %v2674 = vld [vmem:[%s2253 + $0x139] sm:$0xff]
  %v2675 = vld [vmem:[%s2253 + $0x141] sm:$0xff]
  %v2676 = vld [vmem:[%s2253 + $0x151] sm:$0xff]
  %v2677 = vld [vmem:[%s2253 + $0x159] sm:$0xff]
  %v2678 = vld [vmem:[%s2253 + $0x169] sm:$0xff]
  %v2679 = vld [vmem:[%s2253 + $0x171] sm:$0xff]
  %v2680 = vld [vmem:[%s2253 + $0x1b1] sm:$0xff]
  %v2681 = vld [vmem:[%s2253 + $0x1b9] sm:$0xff]
  %v2682 = vld [vmem:[%s2253 + $0x1c9] sm:$0xff]
  %v2683 = vld [vmem:[%s2253 + $0x1d1] sm:$0xff]
  %v2684 = vld [vmem:[%s2253 + $0x1e1] sm:$0xff]
  %v2685 = vld [vmem:[%s2253 + $0x1e9] sm:$0xff]
  %v2686 = vld [vmem:[%s2253 + $0x1f9] sm:$0xff]
  %v2687 = vld [vmem:[%s2253 + $0x201] sm:$0xff]
  %v2688 = vld [vmem:[%s2253 + $0x211] sm:$0xff]
  %v2689 = vld [vmem:[%s2253 + $0x219] sm:$0xff]
  %v2690 = vld [vmem:[%s2253 + $0x229] sm:$0xff]
  %v2691 = vld [vmem:[%s2253 + $0x231] sm:$0xff]
  %v2692 = vld [vmem:[%s2253 + $0x241] sm:$0xff]
  %v2693 = vld [vmem:[%s2253 + $0x249] sm:$0xff]
  %v2694 = vld [vmem:[%s2253 + $0x259] sm:$0xff]
  %v2695 = vld [vmem:[%s2253 + $0x261] sm:$0xff]
  %v2696 = vld [vmem:[%s2253 + $0x271] sm:$0xff]
  %v2697 = vld [vmem:[%s2253 + $0x279] sm:$0xff]
  %v2698 = vld [vmem:[%s2253 + $0x289] sm:$0xff]
  %v2699 = vld [vmem:[%s2253 + $0x291] sm:$0xff]
  %v2700 = vld [vmem:[%s2253 + $0x2a1] sm:$0xff]
  %v2701 = vld [vmem:[%s2253 + $0x2a9] sm:$0xff]
  %v2702 = vld [vmem:[%s2253 + $0x2b9] sm:$0xff]
  %v2703 = vld [vmem:[%s2253 + $0x2c1] sm:$0xff]
  %v2704 = vld [vmem:[%s2253 + $0x2d1] sm:$0xff]
  %v2705 = vld [vmem:[%s2253 + $0x2d9] sm:$0xff]
  %v2706 = vld [vmem:[%s2253 + $0x2e9] sm:$0xff]
  %v2707 = vld [vmem:[%s2253 + $0x2f1] sm:$0xff]
  %v2708 = vld [vmem:[%s2253 + $0x301] sm:$0xff]
  %v2709 = vld [vmem:[%s2253 + $0x309] sm:$0xff]
  %v2710 = vld [vmem:[%s2253 + $0x319] sm:$0xff]
  %v2711 = vld [vmem:[%s2253 + $0x321] sm:$0xff]
  %v2712 = vpack.c.bf16 %v2649, %v2648
  %v2713 = vpack.c.bf16 %v2651, %v2650
  %v2714 = vpack.c.bf16 %v2653, %v2652
  %v2715 = vpack.c.bf16 %v2655, %v2654
  %v2716 = vpack.c.bf16 %v2657, %v2656
  %v2717 = vpack.c.bf16 %v2659, %v2658
  %v2718 = vpack.c.bf16 %v2661, %v2660
  %v2719 = vpack.c.bf16 %v2663, %v2662
  %v2720 = vpack.c.bf16 %v2665, %v2664
  %v2721 = vpack.c.bf16 %v2667, %v2666
  %v2722 = vpack.c.bf16 %v2669, %v2668
  %v2723 = vpack.c.bf16 %v2671, %v2670
  %v2724 = vpack.c.bf16 %v2673, %v2672
  %v2725 = vpack.c.bf16 %v2675, %v2674
  %v2726 = vpack.c.bf16 %v2677, %v2676
  %v2727 = vpack.c.bf16 %v2679, %v2678
  %v2728 = vpack.c.bf16 %v2681, %v2680
  %v2729 = vpack.c.bf16 %v2683, %v2682
  %v2730 = vpack.c.bf16 %v2685, %v2684
  %v2731 = vpack.c.bf16 %v2687, %v2686
  %v2732 = vpack.c.bf16 %v2689, %v2688
  %v2733 = vpack.c.bf16 %v2691, %v2690
  %v2734 = vpack.c.bf16 %v2693, %v2692
  %v2735 = vpack.c.bf16 %v2695, %v2694
  %v2736 = vpack.c.bf16 %v2697, %v2696
  %v2737 = vpack.c.bf16 %v2699, %v2698
  %v2738 = vpack.c.bf16 %v2701, %v2700
  %v2739 = vpack.c.bf16 %v2703, %v2702
  %v2740 = vpack.c.bf16 %v2705, %v2704
  %v2741 = vpack.c.bf16 %v2707, %v2706
  %v2742 = vpack.c.bf16 %v2709, %v2708
  %v2743 = vpack.c.bf16 %v2711, %v2710
  %s2744 = scalar_lea.vmem %s1, 448
  %v2745 = vld [vmem:[%s2744] sm:$0xf]
  %v2746 = vld [vmem:[%s2744 + $0x4] sm:$0xf]
  %v2747 = vld [vmem:[%s2744 + $0x8] sm:$0xf]
  %v2748 = vld [vmem:[%s2744 + $0xc] sm:$0xf]
  %v2749 = vld [vmem:[%s2744 + $0x10] sm:$0xf]
  %v2750 = vld [vmem:[%s2744 + $0x14] sm:$0xf]
  %v2751 = vld [vmem:[%s2744 + $0x18] sm:$0xf]
  %v2752 = vld [vmem:[%s2744 + $0x1c] sm:$0xf]
  %v2753 = vld [vmem:[%s2744 + $0x20] sm:$0xf]
  %v2754 = vld [vmem:[%s2744 + $0x24] sm:$0xf]
  %v2755 = vld [vmem:[%s2744 + $0x28] sm:$0xf]
  %v2756 = vld [vmem:[%s2744 + $0x2c] sm:$0xf]
  %v2757 = vld [vmem:[%s2744 + $0x30] sm:$0xf]
  %v2758 = vld [vmem:[%s2744 + $0x34] sm:$0xf]
  %v2759 = vld [vmem:[%s2744 + $0x38] sm:$0xf]
  %v2760 = vld [vmem:[%s2744 + $0x3c] sm:$0xf]
  %v2777 = vunpack.c.l.b16 %v2745
  %v2778 = vunpack.c.l.b16 %v2746
  %v2779 = vunpack.c.l.b16 %v2747
  %v2780 = vunpack.c.l.b16 %v2748
  %v2781 = vunpack.c.l.b16 %v2749
  %v2782 = vunpack.c.l.b16 %v2750
  %v2783 = vunpack.c.l.b16 %v2751
  %v2784 = vunpack.c.l.b16 %v2752
  %v2785 = vunpack.c.l.b16 %v2753
  %v2786 = vunpack.c.l.b16 %v2754
  %v2787 = vunpack.c.l.b16 %v2755
  %v2788 = vunpack.c.l.b16 %v2756
  %v2789 = vunpack.c.l.b16 %v2757
  %v2790 = vunpack.c.l.b16 %v2758
  %v2791 = vunpack.c.l.b16 %v2759
  %v2792 = vunpack.c.l.b16 %v2760
  %v2793 = vpack.c.b16 %v2778, %v2777
  %v2794 = vpack.c.b16 %v2780, %v2779
  %v2795 = vpack.c.b16 %v2782, %v2781
  %v2796 = vpack.c.b16 %v2784, %v2783
  %v2797 = vpack.c.b16 %v2786, %v2785
  %v2798 = vpack.c.b16 %v2788, %v2787
  %v2799 = vpack.c.b16 %v2790, %v2789
  %v2800 = vpack.c.b16 %v2792, %v2791
  %2809 = vmatpush.bf16.msra.mxu0 %v2800
  %2810 = vmatpush.bf16.msra.mxu0 %v2799
  %2811 = vmatpush.bf16.msra.mxu0 %v2798
  %2812 = vmatpush.bf16.msra.mxu0 %v2797
  %2813 = vmatpush.bf16.msra.mxu0 %v2796
  %2814 = vmatpush.bf16.msra.mxu0 %v2795
  %2815 = vmatpush.bf16.msra.mxu0 %v2794
  %2816 = vmatpush.bf16.msra.mxu0 %v2793
  %2817 = vmatmul.bf16.gmra.mxu0 %v2712
  %v2818 = vpop.f32.mrf.mxu0
  %v2819 = vadd.f32 0.0, %v2818
  %v2820 = vpop.f32.mrf.mxu0
  %v2821 = vadd.f32 0.0, %v2820
  %2822 = vmatmul.bf16.gmra.mxu0 %v2713
  %v2823 = vpop.f32.mrf.mxu0
  %v2824 = vadd.f32 0.0, %v2823
  %v2825 = vpop.f32.mrf.mxu0
  %v2826 = vadd.f32 0.0, %v2825
  %2827 = vmatmul.bf16.gmra.mxu0 %v2714
  %v2828 = vpop.f32.mrf.mxu0
  %v2829 = vadd.f32 0.0, %v2828
  %v2830 = vpop.f32.mrf.mxu0
  %v2831 = vadd.f32 0.0, %v2830
  %2832 = vmatmul.bf16.gmra.mxu0 %v2715
  %v2833 = vpop.f32.mrf.mxu0
  %v2834 = vadd.f32 0.0, %v2833
  %v2835 = vpop.f32.mrf.mxu0
  %v2836 = vadd.f32 0.0, %v2835
  %2837 = vmatmul.bf16.gmra.mxu0 %v2716
  %v2838 = vpop.f32.mrf.mxu0
  %v2839 = vadd.f32 0.0, %v2838
  %v2840 = vpop.f32.mrf.mxu0
  %v2841 = vadd.f32 0.0, %v2840
  %2842 = vmatmul.bf16.gmra.mxu0 %v2717
  %v2843 = vpop.f32.mrf.mxu0
  %v2844 = vadd.f32 0.0, %v2843
  %v2845 = vpop.f32.mrf.mxu0
  %v2846 = vadd.f32 0.0, %v2845
  %2847 = vmatmul.bf16.gmra.mxu0 %v2718
  %v2848 = vpop.f32.mrf.mxu0
  %v2849 = vadd.f32 0.0, %v2848
  %v2850 = vpop.f32.mrf.mxu0
  %v2851 = vadd.f32 0.0, %v2850
  %2852 = vmatmul.bf16.gmra.mxu0 %v2719
  %v2853 = vpop.f32.mrf.mxu0
  %v2854 = vadd.f32 0.0, %v2853
  %v2855 = vpop.f32.mrf.mxu0
  %v2856 = vadd.f32 0.0, %v2855
  %2857 = vmatmul.bf16.gmra.mxu0 %v2720
  %v2858 = vpop.f32.mrf.mxu0
  %v2859 = vadd.f32 0.0, %v2858
  %v2860 = vpop.f32.mrf.mxu0
  %v2861 = vadd.f32 0.0, %v2860
  %2862 = vmatmul.bf16.gmra.mxu0 %v2721
  %v2863 = vpop.f32.mrf.mxu0
  %v2864 = vadd.f32 0.0, %v2863
  %v2865 = vpop.f32.mrf.mxu0
  %v2866 = vadd.f32 0.0, %v2865
  %2867 = vmatmul.bf16.gmra.mxu0 %v2722
  %v2868 = vpop.f32.mrf.mxu0
  %v2869 = vadd.f32 0.0, %v2868
  %v2870 = vpop.f32.mrf.mxu0
  %v2871 = vadd.f32 0.0, %v2870
  %2872 = vmatmul.bf16.gmra.mxu0 %v2723
  %v2873 = vpop.f32.mrf.mxu0
  %v2874 = vadd.f32 0.0, %v2873
  %v2875 = vpop.f32.mrf.mxu0
  %v2876 = vadd.f32 0.0, %v2875
  %2877 = vmatmul.bf16.gmra.mxu0 %v2724
  %v2878 = vpop.f32.mrf.mxu0
  %v2879 = vadd.f32 0.0, %v2878
  %v2880 = vpop.f32.mrf.mxu0
  %v2881 = vadd.f32 0.0, %v2880
  %2882 = vmatmul.bf16.gmra.mxu0 %v2725
  %v2883 = vpop.f32.mrf.mxu0
  %v2884 = vadd.f32 0.0, %v2883
  %v2885 = vpop.f32.mrf.mxu0
  %v2886 = vadd.f32 0.0, %v2885
  %2887 = vmatmul.bf16.gmra.mxu0 %v2726
  %v2888 = vpop.f32.mrf.mxu0
  %v2889 = vadd.f32 0.0, %v2888
  %v2890 = vpop.f32.mrf.mxu0
  %v2891 = vadd.f32 0.0, %v2890
  %2892 = vmatmul.bf16.gmra.mxu0 %v2727
  %v2893 = vpop.f32.mrf.mxu0
  %v2894 = vadd.f32 0.0, %v2893
  %v2895 = vpop.f32.mrf.mxu0
  %v2896 = vadd.f32 0.0, %v2895
  %2897 = vmatmul.bf16.gmra.mxu0 %v2728
  %v2898 = vpop.f32.mrf.mxu0
  %v2899 = vadd.f32 0.0, %v2898
  %v2900 = vpop.f32.mrf.mxu0
  %v2901 = vadd.f32 0.0, %v2900
  %2902 = vmatmul.bf16.gmra.mxu0 %v2729
  %v2903 = vpop.f32.mrf.mxu0
  %v2904 = vadd.f32 0.0, %v2903
  %v2905 = vpop.f32.mrf.mxu0
  %v2906 = vadd.f32 0.0, %v2905
  %2907 = vmatmul.bf16.gmra.mxu0 %v2730
  %v2908 = vpop.f32.mrf.mxu0
  %v2909 = vadd.f32 0.0, %v2908
  %v2910 = vpop.f32.mrf.mxu0
  %v2911 = vadd.f32 0.0, %v2910
  %2912 = vmatmul.bf16.gmra.mxu0 %v2731
  %v2913 = vpop.f32.mrf.mxu0
  %v2914 = vadd.f32 0.0, %v2913
  %v2915 = vpop.f32.mrf.mxu0
  %v2916 = vadd.f32 0.0, %v2915
  %2917 = vmatmul.bf16.gmra.mxu0 %v2732
  %v2918 = vpop.f32.mrf.mxu0
  %v2919 = vadd.f32 0.0, %v2918
  %v2920 = vpop.f32.mrf.mxu0
  %v2921 = vadd.f32 0.0, %v2920
  %2922 = vmatmul.bf16.gmra.mxu0 %v2733
  %v2923 = vpop.f32.mrf.mxu0
  %v2924 = vadd.f32 0.0, %v2923
  %v2925 = vpop.f32.mrf.mxu0
  %v2926 = vadd.f32 0.0, %v2925
  %2927 = vmatmul.bf16.gmra.mxu0 %v2734
  %v2928 = vpop.f32.mrf.mxu0
  %v2929 = vadd.f32 0.0, %v2928
  %v2930 = vpop.f32.mrf.mxu0
  %v2931 = vadd.f32 0.0, %v2930
  %2932 = vmatmul.bf16.gmra.mxu0 %v2735
  %v2933 = vpop.f32.mrf.mxu0
  %v2934 = vadd.f32 0.0, %v2933
  %v2935 = vpop.f32.mrf.mxu0
  %v2936 = vadd.f32 0.0, %v2935
  %2937 = vmatmul.bf16.gmra.mxu0 %v2736
  %v2938 = vpop.f32.mrf.mxu0
  %v2939 = vadd.f32 0.0, %v2938
  %v2940 = vpop.f32.mrf.mxu0
  %v2941 = vadd.f32 0.0, %v2940
  %2942 = vmatmul.bf16.gmra.mxu0 %v2737
  %v2943 = vpop.f32.mrf.mxu0
  %v2944 = vadd.f32 0.0, %v2943
  %v2945 = vpop.f32.mrf.mxu0
  %v2946 = vadd.f32 0.0, %v2945
  %2947 = vmatmul.bf16.gmra.mxu0 %v2738
  %v2948 = vpop.f32.mrf.mxu0
  %v2949 = vadd.f32 0.0, %v2948
  %v2950 = vpop.f32.mrf.mxu0
  %v2951 = vadd.f32 0.0, %v2950
  %2952 = vmatmul.bf16.gmra.mxu0 %v2739
  %v2953 = vpop.f32.mrf.mxu0
  %v2954 = vadd.f32 0.0, %v2953
  %v2955 = vpop.f32.mrf.mxu0
  %v2956 = vadd.f32 0.0, %v2955
  %2957 = vmatmul.bf16.gmra.mxu0 %v2740
  %v2958 = vpop.f32.mrf.mxu0
  %v2959 = vadd.f32 0.0, %v2958
  %v2960 = vpop.f32.mrf.mxu0
  %v2961 = vadd.f32 0.0, %v2960
  %2962 = vmatmul.bf16.gmra.mxu0 %v2741
  %v2963 = vpop.f32.mrf.mxu0
  %v2964 = vadd.f32 0.0, %v2963
  %v2965 = vpop.f32.mrf.mxu0
  %v2966 = vadd.f32 0.0, %v2965
  %2967 = vmatmul.bf16.gmra.mxu0 %v2742
  %v2968 = vpop.f32.mrf.mxu0
  %v2969 = vadd.f32 0.0, %v2968
  %v2970 = vpop.f32.mrf.mxu0
  %v2971 = vadd.f32 0.0, %v2970
  %2972 = vmatmul.bf16.gmra.mxu0 %v2743
  %v2973 = vpop.f32.mrf.mxu0
  %v2974 = vadd.f32 0.0, %v2973
  %v2975 = vpop.f32.mrf.mxu0
  %v2976 = vadd.f32 0.0, %v2975
  %2977 = vdwg.mxu0
  %v2978 = vadd.f32 %v2584, %v2819
  %v2979 = vadd.f32 %v2585, %v2821
  %v2980 = vadd.f32 %v2586, %v2824
  %v2981 = vadd.f32 %v2587, %v2826
  %v2982 = vadd.f32 %v2588, %v2829
  %v2983 = vadd.f32 %v2589, %v2831
  %v2984 = vadd.f32 %v2590, %v2834
  %v2985 = vadd.f32 %v2591, %v2836
  %v2986 = vadd.f32 %v2592, %v2839
  %v2987 = vadd.f32 %v2593, %v2841
  %v2988 = vadd.f32 %v2594, %v2844
  %v2989 = vadd.f32 %v2595, %v2846
  %v2990 = vadd.f32 %v2596, %v2849
  %v2991 = vadd.f32 %v2597, %v2851
  %v2992 = vadd.f32 %v2598, %v2854
  %v2993 = vadd.f32 %v2599, %v2856
  %v2994 = vadd.f32 %v2600, %v2859
  %v2995 = vadd.f32 %v2601, %v2861
  %v2996 = vadd.f32 %v2602, %v2864
  %v2997 = vadd.f32 %v2603, %v2866
  %v2998 = vadd.f32 %v2604, %v2869
  %v2999 = vadd.f32 %v2605, %v2871
  %v3000 = vadd.f32 %v2606, %v2874
  %v3001 = vadd.f32 %v2607, %v2876
  %v3002 = vadd.f32 %v2608, %v2879
  %v3003 = vadd.f32 %v2609, %v2881
  %v3004 = vadd.f32 %v2610, %v2884
  %v3005 = vadd.f32 %v2611, %v2886
  %v3006 = vadd.f32 %v2612, %v2889
  %v3007 = vadd.f32 %v2613, %v2891
  %v3008 = vadd.f32 %v2614, %v2894
  %v3009 = vadd.f32 %v2615, %v2896
  %v3010 = vadd.f32 %v2616, %v2899
  %v3011 = vadd.f32 %v2617, %v2901
  %v3012 = vadd.f32 %v2618, %v2904
  %v3013 = vadd.f32 %v2619, %v2906
  %v3014 = vadd.f32 %v2620, %v2909
  %v3015 = vadd.f32 %v2621, %v2911
  %v3016 = vadd.f32 %v2622, %v2914
  %v3017 = vadd.f32 %v2623, %v2916
  %v3018 = vadd.f32 %v2624, %v2919
  %v3019 = vadd.f32 %v2625, %v2921
  %v3020 = vadd.f32 %v2626, %v2924
  %v3021 = vadd.f32 %v2627, %v2926
  %v3022 = vadd.f32 %v2628, %v2929
  %v3023 = vadd.f32 %v2629, %v2931
  %v3024 = vadd.f32 %v2630, %v2934
  %v3025 = vadd.f32 %v2631, %v2936
  %v3026 = vadd.f32 %v2632, %v2939
  %v3027 = vadd.f32 %v2633, %v2941
  %v3028 = vadd.f32 %v2634, %v2944
  %v3029 = vadd.f32 %v2635, %v2946
  %v3030 = vadd.f32 %v2636, %v2949
  %v3031 = vadd.f32 %v2637, %v2951
  %v3032 = vadd.f32 %v2638, %v2954
  %v3033 = vadd.f32 %v2639, %v2956
  %v3034 = vadd.f32 %v2640, %v2959
  %v3035 = vadd.f32 %v2641, %v2961
  %v3036 = vadd.f32 %v2642, %v2964
  %v3037 = vadd.f32 %v2643, %v2966
  %v3038 = vadd.f32 %v2644, %v2969
  %v3039 = vadd.f32 %v2645, %v2971
  %v3040 = vadd.f32 %v2646, %v2974
  %v3041 = vadd.f32 %v2647, %v2976
  %v3042 = vld [vmem:[%s2253 + $0x2] sm:$0xff]
  %v3043 = vld [vmem:[%s2253 + $0xa] sm:$0xff]
  %v3044 = vld [vmem:[%s2253 + $0x1a] sm:$0xff]
  %v3045 = vld [vmem:[%s2253 + $0x22] sm:$0xff]
  %v3046 = vld [vmem:[%s2253 + $0x32] sm:$0xff]
  %v3047 = vld [vmem:[%s2253 + $0x3a] sm:$0xff]
  %v3048 = vld [vmem:[%s2253 + $0x4a] sm:$0xff]
  %v3049 = vld [vmem:[%s2253 + $0x52] sm:$0xff]
  %v3050 = vld [vmem:[%s2253 + $0x62] sm:$0xff]
  %v3051 = vld [vmem:[%s2253 + $0x6a] sm:$0xff]
  %v3052 = vld [vmem:[%s2253 + $0x7a] sm:$0xff]
  %v3053 = vld [vmem:[%s2253 + $0x82] sm:$0xff]
  %v3054 = vld [vmem:[%s2253 + $0x92] sm:$0xff]
  %v3055 = vld [vmem:[%s2253 + $0x9a] sm:$0xff]
  %v3056 = vld [vmem:[%s2253 + $0xaa] sm:$0xff]
  %v3057 = vld [vmem:[%s2253 + $0xb2] sm:$0xff]
  %v3058 = vld [vmem:[%s2253 + $0xc2] sm:$0xff]
  %v3059 = vld [vmem:[%s2253 + $0xca] sm:$0xff]
  %v3060 = vld [vmem:[%s2253 + $0xda] sm:$0xff]
  %v3061 = vld [vmem:[%s2253 + $0xe2] sm:$0xff]
  %v3062 = vld [vmem:[%s2253 + $0xf2] sm:$0xff]
  %v3063 = vld [vmem:[%s2253 + $0xfa] sm:$0xff]
  %v3064 = vld [vmem:[%s2253 + $0x10a] sm:$0xff]
  %v3065 = vld [vmem:[%s2253 + $0x112] sm:$0xff]
  %v3066 = vld [vmem:[%s2253 + $0x122] sm:$0xff]
  %v3067 = vld [vmem:[%s2253 + $0x12a] sm:$0xff]
  %v3068 = vld [vmem:[%s2253 + $0x13a] sm:$0xff]
  %v3069 = vld [vmem:[%s2253 + $0x142] sm:$0xff]
  %v3070 = vld [vmem:[%s2253 + $0x152] sm:$0xff]
  %v3071 = vld [vmem:[%s2253 + $0x15a] sm:$0xff]
  %v3072 = vld [vmem:[%s2253 + $0x16a] sm:$0xff]
  %v3073 = vld [vmem:[%s2253 + $0x172] sm:$0xff]
  %v3074 = vld [vmem:[%s2253 + $0x1b2] sm:$0xff]
  %v3075 = vld [vmem:[%s2253 + $0x1ba] sm:$0xff]
  %v3076 = vld [vmem:[%s2253 + $0x1ca] sm:$0xff]
  %v3077 = vld [vmem:[%s2253 + $0x1d2] sm:$0xff]
  %v3078 = vld [vmem:[%s2253 + $0x1e2] sm:$0xff]
  %v3079 = vld [vmem:[%s2253 + $0x1ea] sm:$0xff]
  %v3080 = vld [vmem:[%s2253 + $0x1fa] sm:$0xff]
  %v3081 = vld [vmem:[%s2253 + $0x202] sm:$0xff]
  %v3082 = vld [vmem:[%s2253 + $0x212] sm:$0xff]
  %v3083 = vld [vmem:[%s2253 + $0x21a] sm:$0xff]
  %v3084 = vld [vmem:[%s2253 + $0x22a] sm:$0xff]
  %v3085 = vld [vmem:[%s2253 + $0x232] sm:$0xff]
  %v3086 = vld [vmem:[%s2253 + $0x242] sm:$0xff]
  %v3087 = vld [vmem:[%s2253 + $0x24a] sm:$0xff]
  %v3088 = vld [vmem:[%s2253 + $0x25a] sm:$0xff]
  %v3089 = vld [vmem:[%s2253 + $0x262] sm:$0xff]
  %v3090 = vld [vmem:[%s2253 + $0x272] sm:$0xff]
  %v3091 = vld [vmem:[%s2253 + $0x27a] sm:$0xff]
  %v3092 = vld [vmem:[%s2253 + $0x28a] sm:$0xff]
  %v3093 = vld [vmem:[%s2253 + $0x292] sm:$0xff]
  %v3094 = vld [vmem:[%s2253 + $0x2a2] sm:$0xff]
  %v3095 = vld [vmem:[%s2253 + $0x2aa] sm:$0xff]
  %v3096 = vld [vmem:[%s2253 + $0x2ba] sm:$0xff]
  %v3097 = vld [vmem:[%s2253 + $0x2c2] sm:$0xff]
  %v3098 = vld [vmem:[%s2253 + $0x2d2] sm:$0xff]
  %v3099 = vld [vmem:[%s2253 + $0x2da] sm:$0xff]
  %v3100 = vld [vmem:[%s2253 + $0x2ea] sm:$0xff]
  %v3101 = vld [vmem:[%s2253 + $0x2f2] sm:$0xff]
  %v3102 = vld [vmem:[%s2253 + $0x302] sm:$0xff]
  %v3103 = vld [vmem:[%s2253 + $0x30a] sm:$0xff]
  %v3104 = vld [vmem:[%s2253 + $0x31a] sm:$0xff]
  %v3105 = vld [vmem:[%s2253 + $0x322] sm:$0xff]
  %v3106 = vpack.c.bf16 %v3043, %v3042
  %v3107 = vpack.c.bf16 %v3045, %v3044
  %v3108 = vpack.c.bf16 %v3047, %v3046
  %v3109 = vpack.c.bf16 %v3049, %v3048
  %v3110 = vpack.c.bf16 %v3051, %v3050
  %v3111 = vpack.c.bf16 %v3053, %v3052
  %v3112 = vpack.c.bf16 %v3055, %v3054
  %v3113 = vpack.c.bf16 %v3057, %v3056
  %v3114 = vpack.c.bf16 %v3059, %v3058
  %v3115 = vpack.c.bf16 %v3061, %v3060
  %v3116 = vpack.c.bf16 %v3063, %v3062
  %v3117 = vpack.c.bf16 %v3065, %v3064
  %v3118 = vpack.c.bf16 %v3067, %v3066
  %v3119 = vpack.c.bf16 %v3069, %v3068
  %v3120 = vpack.c.bf16 %v3071, %v3070
  %v3121 = vpack.c.bf16 %v3073, %v3072
  %v3122 = vpack.c.bf16 %v3075, %v3074
  %v3123 = vpack.c.bf16 %v3077, %v3076
  %v3124 = vpack.c.bf16 %v3079, %v3078
  %v3125 = vpack.c.bf16 %v3081, %v3080
  %v3126 = vpack.c.bf16 %v3083, %v3082
  %v3127 = vpack.c.bf16 %v3085, %v3084
  %v3128 = vpack.c.bf16 %v3087, %v3086
  %v3129 = vpack.c.bf16 %v3089, %v3088
  %v3130 = vpack.c.bf16 %v3091, %v3090
  %v3131 = vpack.c.bf16 %v3093, %v3092
  %v3132 = vpack.c.bf16 %v3095, %v3094
  %v3133 = vpack.c.bf16 %v3097, %v3096
  %v3134 = vpack.c.bf16 %v3099, %v3098
  %v3135 = vpack.c.bf16 %v3101, %v3100
  %v3136 = vpack.c.bf16 %v3103, %v3102
  %v3137 = vpack.c.bf16 %v3105, %v3104
  %s3138 = scalar_lea.vmem %s1, 512
  %v3139 = vld [vmem:[%s3138] sm:$0xf]
  %v3140 = vld [vmem:[%s3138 + $0x4] sm:$0xf]
  %v3141 = vld [vmem:[%s3138 + $0x8] sm:$0xf]
  %v3142 = vld [vmem:[%s3138 + $0xc] sm:$0xf]
  %v3143 = vld [vmem:[%s3138 + $0x10] sm:$0xf]
  %v3144 = vld [vmem:[%s3138 + $0x14] sm:$0xf]
  %v3145 = vld [vmem:[%s3138 + $0x18] sm:$0xf]
  %v3146 = vld [vmem:[%s3138 + $0x1c] sm:$0xf]
  %v3147 = vld [vmem:[%s3138 + $0x20] sm:$0xf]
  %v3148 = vld [vmem:[%s3138 + $0x24] sm:$0xf]
  %v3149 = vld [vmem:[%s3138 + $0x28] sm:$0xf]
  %v3150 = vld [vmem:[%s3138 + $0x2c] sm:$0xf]
  %v3151 = vld [vmem:[%s3138 + $0x30] sm:$0xf]
  %v3152 = vld [vmem:[%s3138 + $0x34] sm:$0xf]
  %v3153 = vld [vmem:[%s3138 + $0x38] sm:$0xf]
  %v3154 = vld [vmem:[%s3138 + $0x3c] sm:$0xf]
  %v3171 = vunpack.c.l.b16 %v3139
  %v3172 = vunpack.c.l.b16 %v3140
  %v3173 = vunpack.c.l.b16 %v3141
  %v3174 = vunpack.c.l.b16 %v3142
  %v3175 = vunpack.c.l.b16 %v3143
  %v3176 = vunpack.c.l.b16 %v3144
  %v3177 = vunpack.c.l.b16 %v3145
  %v3178 = vunpack.c.l.b16 %v3146
  %v3179 = vunpack.c.l.b16 %v3147
  %v3180 = vunpack.c.l.b16 %v3148
  %v3181 = vunpack.c.l.b16 %v3149
  %v3182 = vunpack.c.l.b16 %v3150
  %v3183 = vunpack.c.l.b16 %v3151
  %v3184 = vunpack.c.l.b16 %v3152
  %v3185 = vunpack.c.l.b16 %v3153
  %v3186 = vunpack.c.l.b16 %v3154
  %v3187 = vpack.c.b16 %v3172, %v3171
  %v3188 = vpack.c.b16 %v3174, %v3173
  %v3189 = vpack.c.b16 %v3176, %v3175
  %v3190 = vpack.c.b16 %v3178, %v3177
  %v3191 = vpack.c.b16 %v3180, %v3179
  %v3192 = vpack.c.b16 %v3182, %v3181
  %v3193 = vpack.c.b16 %v3184, %v3183
  %v3194 = vpack.c.b16 %v3186, %v3185
  %3203 = vmatpush.bf16.msra.mxu0 %v3194
  %3204 = vmatpush.bf16.msra.mxu0 %v3193
  %3205 = vmatpush.bf16.msra.mxu0 %v3192
  %3206 = vmatpush.bf16.msra.mxu0 %v3191
  %3207 = vmatpush.bf16.msra.mxu0 %v3190
  %3208 = vmatpush.bf16.msra.mxu0 %v3189
  %3209 = vmatpush.bf16.msra.mxu0 %v3188
  %3210 = vmatpush.bf16.msra.mxu0 %v3187
  %3211 = vmatmul.bf16.gmra.mxu0 %v3106
  %v3212 = vpop.f32.mrf.mxu0
  %v3213 = vadd.f32 0.0, %v3212
  %v3214 = vpop.f32.mrf.mxu0
  %v3215 = vadd.f32 0.0, %v3214
  %3216 = vmatmul.bf16.gmra.mxu0 %v3107
  %v3217 = vpop.f32.mrf.mxu0
  %v3218 = vadd.f32 0.0, %v3217
  %v3219 = vpop.f32.mrf.mxu0
  %v3220 = vadd.f32 0.0, %v3219
  %3221 = vmatmul.bf16.gmra.mxu0 %v3108
  %v3222 = vpop.f32.mrf.mxu0
  %v3223 = vadd.f32 0.0, %v3222
  %v3224 = vpop.f32.mrf.mxu0
  %v3225 = vadd.f32 0.0, %v3224
  %3226 = vmatmul.bf16.gmra.mxu0 %v3109
  %v3227 = vpop.f32.mrf.mxu0
  %v3228 = vadd.f32 0.0, %v3227
  %v3229 = vpop.f32.mrf.mxu0
  %v3230 = vadd.f32 0.0, %v3229
  %3231 = vmatmul.bf16.gmra.mxu0 %v3110
  %v3232 = vpop.f32.mrf.mxu0
  %v3233 = vadd.f32 0.0, %v3232
  %v3234 = vpop.f32.mrf.mxu0
  %v3235 = vadd.f32 0.0, %v3234
  %3236 = vmatmul.bf16.gmra.mxu0 %v3111
  %v3237 = vpop.f32.mrf.mxu0
  %v3238 = vadd.f32 0.0, %v3237
  %v3239 = vpop.f32.mrf.mxu0
  %v3240 = vadd.f32 0.0, %v3239
  %3241 = vmatmul.bf16.gmra.mxu0 %v3112
  %v3242 = vpop.f32.mrf.mxu0
  %v3243 = vadd.f32 0.0, %v3242
  %v3244 = vpop.f32.mrf.mxu0
  %v3245 = vadd.f32 0.0, %v3244
  %3246 = vmatmul.bf16.gmra.mxu0 %v3113
  %v3247 = vpop.f32.mrf.mxu0
  %v3248 = vadd.f32 0.0, %v3247
  %v3249 = vpop.f32.mrf.mxu0
  %v3250 = vadd.f32 0.0, %v3249
  %3251 = vmatmul.bf16.gmra.mxu0 %v3114
  %v3252 = vpop.f32.mrf.mxu0
  %v3253 = vadd.f32 0.0, %v3252
  %v3254 = vpop.f32.mrf.mxu0
  %v3255 = vadd.f32 0.0, %v3254
  %3256 = vmatmul.bf16.gmra.mxu0 %v3115
  %v3257 = vpop.f32.mrf.mxu0
  %v3258 = vadd.f32 0.0, %v3257
  %v3259 = vpop.f32.mrf.mxu0
  %v3260 = vadd.f32 0.0, %v3259
  %3261 = vmatmul.bf16.gmra.mxu0 %v3116
  %v3262 = vpop.f32.mrf.mxu0
  %v3263 = vadd.f32 0.0, %v3262
  %v3264 = vpop.f32.mrf.mxu0
  %v3265 = vadd.f32 0.0, %v3264
  %3266 = vmatmul.bf16.gmra.mxu0 %v3117
  %v3267 = vpop.f32.mrf.mxu0
  %v3268 = vadd.f32 0.0, %v3267
  %v3269 = vpop.f32.mrf.mxu0
  %v3270 = vadd.f32 0.0, %v3269
  %3271 = vmatmul.bf16.gmra.mxu0 %v3118
  %v3272 = vpop.f32.mrf.mxu0
  %v3273 = vadd.f32 0.0, %v3272
  %v3274 = vpop.f32.mrf.mxu0
  %v3275 = vadd.f32 0.0, %v3274
  %3276 = vmatmul.bf16.gmra.mxu0 %v3119
  %v3277 = vpop.f32.mrf.mxu0
  %v3278 = vadd.f32 0.0, %v3277
  %v3279 = vpop.f32.mrf.mxu0
  %v3280 = vadd.f32 0.0, %v3279
  %3281 = vmatmul.bf16.gmra.mxu0 %v3120
  %v3282 = vpop.f32.mrf.mxu0
  %v3283 = vadd.f32 0.0, %v3282
  %v3284 = vpop.f32.mrf.mxu0
  %v3285 = vadd.f32 0.0, %v3284
  %3286 = vmatmul.bf16.gmra.mxu0 %v3121
  %v3287 = vpop.f32.mrf.mxu0
  %v3288 = vadd.f32 0.0, %v3287
  %v3289 = vpop.f32.mrf.mxu0
  %v3290 = vadd.f32 0.0, %v3289
  %3291 = vmatmul.bf16.gmra.mxu0 %v3122
  %v3292 = vpop.f32.mrf.mxu0
  %v3293 = vadd.f32 0.0, %v3292
  %v3294 = vpop.f32.mrf.mxu0
  %v3295 = vadd.f32 0.0, %v3294
  %3296 = vmatmul.bf16.gmra.mxu0 %v3123
  %v3297 = vpop.f32.mrf.mxu0
  %v3298 = vadd.f32 0.0, %v3297
  %v3299 = vpop.f32.mrf.mxu0
  %v3300 = vadd.f32 0.0, %v3299
  %3301 = vmatmul.bf16.gmra.mxu0 %v3124
  %v3302 = vpop.f32.mrf.mxu0
  %v3303 = vadd.f32 0.0, %v3302
  %v3304 = vpop.f32.mrf.mxu0
  %v3305 = vadd.f32 0.0, %v3304
  %3306 = vmatmul.bf16.gmra.mxu0 %v3125
  %v3307 = vpop.f32.mrf.mxu0
  %v3308 = vadd.f32 0.0, %v3307
  %v3309 = vpop.f32.mrf.mxu0
  %v3310 = vadd.f32 0.0, %v3309
  %3311 = vmatmul.bf16.gmra.mxu0 %v3126
  %v3312 = vpop.f32.mrf.mxu0
  %v3313 = vadd.f32 0.0, %v3312
  %v3314 = vpop.f32.mrf.mxu0
  %v3315 = vadd.f32 0.0, %v3314
  %3316 = vmatmul.bf16.gmra.mxu0 %v3127
  %v3317 = vpop.f32.mrf.mxu0
  %v3318 = vadd.f32 0.0, %v3317
  %v3319 = vpop.f32.mrf.mxu0
  %v3320 = vadd.f32 0.0, %v3319
  %3321 = vmatmul.bf16.gmra.mxu0 %v3128
  %v3322 = vpop.f32.mrf.mxu0
  %v3323 = vadd.f32 0.0, %v3322
  %v3324 = vpop.f32.mrf.mxu0
  %v3325 = vadd.f32 0.0, %v3324
  %3326 = vmatmul.bf16.gmra.mxu0 %v3129
  %v3327 = vpop.f32.mrf.mxu0
  %v3328 = vadd.f32 0.0, %v3327
  %v3329 = vpop.f32.mrf.mxu0
  %v3330 = vadd.f32 0.0, %v3329
  %3331 = vmatmul.bf16.gmra.mxu0 %v3130
  %v3332 = vpop.f32.mrf.mxu0
  %v3333 = vadd.f32 0.0, %v3332
  %v3334 = vpop.f32.mrf.mxu0
  %v3335 = vadd.f32 0.0, %v3334
  %3336 = vmatmul.bf16.gmra.mxu0 %v3131
  %v3337 = vpop.f32.mrf.mxu0
  %v3338 = vadd.f32 0.0, %v3337
  %v3339 = vpop.f32.mrf.mxu0
  %v3340 = vadd.f32 0.0, %v3339
  %3341 = vmatmul.bf16.gmra.mxu0 %v3132
  %v3342 = vpop.f32.mrf.mxu0
  %v3343 = vadd.f32 0.0, %v3342
  %v3344 = vpop.f32.mrf.mxu0
  %v3345 = vadd.f32 0.0, %v3344
  %3346 = vmatmul.bf16.gmra.mxu0 %v3133
  %v3347 = vpop.f32.mrf.mxu0
  %v3348 = vadd.f32 0.0, %v3347
  %v3349 = vpop.f32.mrf.mxu0
  %v3350 = vadd.f32 0.0, %v3349
  %3351 = vmatmul.bf16.gmra.mxu0 %v3134
  %v3352 = vpop.f32.mrf.mxu0
  %v3353 = vadd.f32 0.0, %v3352
  %v3354 = vpop.f32.mrf.mxu0
  %v3355 = vadd.f32 0.0, %v3354
  %3356 = vmatmul.bf16.gmra.mxu0 %v3135
  %v3357 = vpop.f32.mrf.mxu0
  %v3358 = vadd.f32 0.0, %v3357
  %v3359 = vpop.f32.mrf.mxu0
  %v3360 = vadd.f32 0.0, %v3359
  %3361 = vmatmul.bf16.gmra.mxu0 %v3136
  %v3362 = vpop.f32.mrf.mxu0
  %v3363 = vadd.f32 0.0, %v3362
  %v3364 = vpop.f32.mrf.mxu0
  %v3365 = vadd.f32 0.0, %v3364
  %3366 = vmatmul.bf16.gmra.mxu0 %v3137
  %v3367 = vpop.f32.mrf.mxu0
  %v3368 = vadd.f32 0.0, %v3367
  %v3369 = vpop.f32.mrf.mxu0
  %v3370 = vadd.f32 0.0, %v3369
  %3371 = vdwg.mxu0
  %v3372 = vadd.f32 %v2978, %v3213
  %v3373 = vadd.f32 %v2979, %v3215
  %v3374 = vadd.f32 %v2980, %v3218
  %v3375 = vadd.f32 %v2981, %v3220
  %v3376 = vadd.f32 %v2982, %v3223
  %v3377 = vadd.f32 %v2983, %v3225
  %v3378 = vadd.f32 %v2984, %v3228
  %v3379 = vadd.f32 %v2985, %v3230
  %v3380 = vadd.f32 %v2986, %v3233
  %v3381 = vadd.f32 %v2987, %v3235
  %v3382 = vadd.f32 %v2988, %v3238
  %v3383 = vadd.f32 %v2989, %v3240
  %v3384 = vadd.f32 %v2990, %v3243
  %v3385 = vadd.f32 %v2991, %v3245
  %v3386 = vadd.f32 %v2992, %v3248
  %v3387 = vadd.f32 %v2993, %v3250
  %v3388 = vadd.f32 %v2994, %v3253
  %v3389 = vadd.f32 %v2995, %v3255
  %v3390 = vadd.f32 %v2996, %v3258
  %v3391 = vadd.f32 %v2997, %v3260
  %v3392 = vadd.f32 %v2998, %v3263
  %v3393 = vadd.f32 %v2999, %v3265
  %v3394 = vadd.f32 %v3000, %v3268
  %v3395 = vadd.f32 %v3001, %v3270
  %v3396 = vadd.f32 %v3002, %v3273
  %v3397 = vadd.f32 %v3003, %v3275
  %v3398 = vadd.f32 %v3004, %v3278
  %v3399 = vadd.f32 %v3005, %v3280
  %v3400 = vadd.f32 %v3006, %v3283
  %v3401 = vadd.f32 %v3007, %v3285
  %v3402 = vadd.f32 %v3008, %v3288
  %v3403 = vadd.f32 %v3009, %v3290
  %v3404 = vadd.f32 %v3010, %v3293
  %v3405 = vadd.f32 %v3011, %v3295
  %v3406 = vadd.f32 %v3012, %v3298
  %v3407 = vadd.f32 %v3013, %v3300
  %v3408 = vadd.f32 %v3014, %v3303
  %v3409 = vadd.f32 %v3015, %v3305
  %v3410 = vadd.f32 %v3016, %v3308
  %v3411 = vadd.f32 %v3017, %v3310
  %v3412 = vadd.f32 %v3018, %v3313
  %v3413 = vadd.f32 %v3019, %v3315
  %v3414 = vadd.f32 %v3020, %v3318
  %v3415 = vadd.f32 %v3021, %v3320
  %v3416 = vadd.f32 %v3022, %v3323
  %v3417 = vadd.f32 %v3023, %v3325
  %v3418 = vadd.f32 %v3024, %v3328
  %v3419 = vadd.f32 %v3025, %v3330
  %v3420 = vadd.f32 %v3026, %v3333
  %v3421 = vadd.f32 %v3027, %v3335
  %v3422 = vadd.f32 %v3028, %v3338
  %v3423 = vadd.f32 %v3029, %v3340
  %v3424 = vadd.f32 %v3030, %v3343
  %v3425 = vadd.f32 %v3031, %v3345
  %v3426 = vadd.f32 %v3032, %v3348
  %v3427 = vadd.f32 %v3033, %v3350
  %v3428 = vadd.f32 %v3034, %v3353
  %v3429 = vadd.f32 %v3035, %v3355
  %v3430 = vadd.f32 %v3036, %v3358
  %v3431 = vadd.f32 %v3037, %v3360
  %v3432 = vadd.f32 %v3038, %v3363
  %v3433 = vadd.f32 %v3039, %v3365
  %v3434 = vadd.f32 %v3040, %v3368
  %v3435 = vadd.f32 %v3041, %v3370
  %v3436 = vadd.f32 %v3372, %v3373
  %v3437 = vadd.f32 %v3436, %v3374
  %v3438 = vadd.f32 %v3437, %v3375
  %v3439 = vadd.f32 %v3438, %v3376
  %v3440 = vadd.f32 %v3439, %v3377
  %v3441 = vadd.f32 %v3440, %v3378
  %v3442 = vadd.f32 %v3441, %v3379
  %v3443 = vadd.f32 %v3442, %v3380
  %v3444 = vadd.f32 %v3443, %v3381
  %v3445 = vadd.f32 %v3444, %v3382
  %v3446 = vadd.f32 %v3445, %v3383
  %v3447 = vadd.f32 %v3446, %v3384
  %v3448 = vadd.f32 %v3447, %v3385
  %v3449 = vadd.f32 %v3448, %v3386
  %v3450 = vadd.f32 %v3449, %v3387
  %v3451 = vadd.f32 %v3450, %v3388
  %v3452 = vadd.f32 %v3451, %v3389
  %v3453 = vadd.f32 %v3452, %v3390
  %v3454 = vadd.f32 %v3453, %v3391
  %v3455 = vadd.f32 %v3454, %v3392
  %v3456 = vadd.f32 %v3455, %v3393
  %v3457 = vadd.f32 %v3456, %v3394
  %v3458 = vadd.f32 %v3457, %v3395
  %v3459 = vadd.f32 %v3458, %v3396
  %v3460 = vadd.f32 %v3459, %v3397
  %v3461 = vadd.f32 %v3460, %v3398
  %v3462 = vadd.f32 %v3461, %v3399
  %v3463 = vadd.f32 %v3462, %v3400
  %v3464 = vadd.f32 %v3463, %v3401
  %v3465 = vadd.f32 %v3464, %v3402
  %v3466 = vadd.f32 %v3465, %v3403
  %v3467 = vadd.f32 %v3466, %v3404
  %v3468 = vadd.f32 %v3467, %v3405
  %v3469 = vadd.f32 %v3468, %v3406
  %v3470 = vadd.f32 %v3469, %v3407
  %v3471 = vadd.f32 %v3470, %v3408
  %v3472 = vadd.f32 %v3471, %v3409
  %v3473 = vadd.f32 %v3472, %v3410
  %v3474 = vadd.f32 %v3473, %v3411
  %v3475 = vadd.f32 %v3474, %v3412
  %v3476 = vadd.f32 %v3475, %v3413
  %v3477 = vadd.f32 %v3476, %v3414
  %v3478 = vadd.f32 %v3477, %v3415
  %v3479 = vadd.f32 %v3478, %v3416
  %v3480 = vadd.f32 %v3479, %v3417
  %v3481 = vadd.f32 %v3480, %v3418
  %v3482 = vadd.f32 %v3481, %v3419
  %v3483 = vadd.f32 %v3482, %v3420
  %v3484 = vadd.f32 %v3483, %v3421
  %v3485 = vadd.f32 %v3484, %v3422
  %v3486 = vadd.f32 %v3485, %v3423
  %v3487 = vadd.f32 %v3486, %v3424
  %v3488 = vadd.f32 %v3487, %v3425
  %v3489 = vadd.f32 %v3488, %v3426
  %v3490 = vadd.f32 %v3489, %v3427
  %v3491 = vadd.f32 %v3490, %v3428
  %v3492 = vadd.f32 %v3491, %v3429
  %v3493 = vadd.f32 %v3492, %v3430
  %v3494 = vadd.f32 %v3493, %v3431
  %v3495 = vadd.f32 %v3494, %v3432
  %v3496 = vadd.f32 %v3495, %v3433
  %v3497 = vadd.f32 %v3496, %v3434
  %v3498 = vadd.f32 %v3497, %v3435
  %v3499 = vrot.slane %v3498, 4
  %v3500 = vadd.f32 %v3498, %v3499
  %v3501 = vrot.slane %v3500, 2
  %v3502 = vadd.f32 %v3500, %v3501
  %v3503 = vrot.slane %v3502, 1
  %v3504 = vadd.f32 %v3502, %v3503
  %v3505 = vrcp.pop 512.0
  %v3506 = vmul.f32 512.0, %v3505
  %v3507 = vsub.f32 1.0, %v3506
  %v3508 = vmul.f32 %v3505, %v3507
  %v3509 = vadd.f32 %v3505, %v3508
  %vm3510 = vweird.f32 %v3505
  %v3511 = vsel %vm3510, %v3505, %v3509
  %v3512 = vmul.f32 %v3504, %v3511
  %v3513 = vsub.f32 %v3372, %v3512
  %v3514 = vsub.f32 %v3373, %v3512
  %v3515 = vsub.f32 %v3374, %v3512
  %v3516 = vsub.f32 %v3375, %v3512
  %v3517 = vsub.f32 %v3376, %v3512
  %v3518 = vsub.f32 %v3377, %v3512
  %v3519 = vsub.f32 %v3378, %v3512
  %v3520 = vsub.f32 %v3379, %v3512
  %v3521 = vsub.f32 %v3380, %v3512
  %v3522 = vsub.f32 %v3381, %v3512
  %v3523 = vsub.f32 %v3382, %v3512
  %v3524 = vsub.f32 %v3383, %v3512
  %v3525 = vsub.f32 %v3384, %v3512
  %v3526 = vsub.f32 %v3385, %v3512
  %v3527 = vsub.f32 %v3386, %v3512
  %v3528 = vsub.f32 %v3387, %v3512
  %v3529 = vsub.f32 %v3388, %v3512
  %v3530 = vsub.f32 %v3389, %v3512
  %v3531 = vsub.f32 %v3390, %v3512
  %v3532 = vsub.f32 %v3391, %v3512
  %v3533 = vsub.f32 %v3392, %v3512
  %v3534 = vsub.f32 %v3393, %v3512
  %v3535 = vsub.f32 %v3394, %v3512
  %v3536 = vsub.f32 %v3395, %v3512
  %v3537 = vsub.f32 %v3396, %v3512
  %v3538 = vsub.f32 %v3397, %v3512
  %v3539 = vsub.f32 %v3398, %v3512
  %v3540 = vsub.f32 %v3399, %v3512
  %v3541 = vsub.f32 %v3400, %v3512
  %v3542 = vsub.f32 %v3401, %v3512
  %v3543 = vsub.f32 %v3402, %v3512
  %v3544 = vsub.f32 %v3403, %v3512
  %v3545 = vsub.f32 %v3404, %v3512
  %v3546 = vsub.f32 %v3405, %v3512
  %v3547 = vsub.f32 %v3406, %v3512
  %v3548 = vsub.f32 %v3407, %v3512
  %v3549 = vsub.f32 %v3408, %v3512
  %v3550 = vsub.f32 %v3409, %v3512
  %v3551 = vsub.f32 %v3410, %v3512
  %v3552 = vsub.f32 %v3411, %v3512
  %v3553 = vsub.f32 %v3412, %v3512
  %v3554 = vsub.f32 %v3413, %v3512
  %v3555 = vsub.f32 %v3414, %v3512
  %v3556 = vsub.f32 %v3415, %v3512
  %v3557 = vsub.f32 %v3416, %v3512
  %v3558 = vsub.f32 %v3417, %v3512
  %v3559 = vsub.f32 %v3418, %v3512
  %v3560 = vsub.f32 %v3419, %v3512
  %v3561 = vsub.f32 %v3420, %v3512
  %v3562 = vsub.f32 %v3421, %v3512
  %v3563 = vsub.f32 %v3422, %v3512
  %v3564 = vsub.f32 %v3423, %v3512
  %v3565 = vsub.f32 %v3424, %v3512
  %v3566 = vsub.f32 %v3425, %v3512
  %v3567 = vsub.f32 %v3426, %v3512
  %v3568 = vsub.f32 %v3427, %v3512
  %v3569 = vsub.f32 %v3428, %v3512
  %v3570 = vsub.f32 %v3429, %v3512
  %v3571 = vsub.f32 %v3430, %v3512
  %v3572 = vsub.f32 %v3431, %v3512
  %v3573 = vsub.f32 %v3432, %v3512
  %v3574 = vsub.f32 %v3433, %v3512
  %v3575 = vsub.f32 %v3434, %v3512
  %v3576 = vsub.f32 %v3435, %v3512
  %v3577 = vmul.f32 %v3513, %v3513
  %v3578 = vmul.f32 %v3514, %v3514
  %v3579 = vmul.f32 %v3515, %v3515
  %v3580 = vmul.f32 %v3516, %v3516
  %v3581 = vmul.f32 %v3517, %v3517
  %v3582 = vmul.f32 %v3518, %v3518
  %v3583 = vmul.f32 %v3519, %v3519
  %v3584 = vmul.f32 %v3520, %v3520
  %v3585 = vmul.f32 %v3521, %v3521
  %v3586 = vmul.f32 %v3522, %v3522
  %v3587 = vmul.f32 %v3523, %v3523
  %v3588 = vmul.f32 %v3524, %v3524
  %v3589 = vmul.f32 %v3525, %v3525
  %v3590 = vmul.f32 %v3526, %v3526
  %v3591 = vmul.f32 %v3527, %v3527
  %v3592 = vmul.f32 %v3528, %v3528
  %v3593 = vmul.f32 %v3529, %v3529
  %v3594 = vmul.f32 %v3530, %v3530
  %v3595 = vmul.f32 %v3531, %v3531
  %v3596 = vmul.f32 %v3532, %v3532
  %v3597 = vmul.f32 %v3533, %v3533
  %v3598 = vmul.f32 %v3534, %v3534
  %v3599 = vmul.f32 %v3535, %v3535
  %v3600 = vmul.f32 %v3536, %v3536
  %v3601 = vmul.f32 %v3537, %v3537
  %v3602 = vmul.f32 %v3538, %v3538
  %v3603 = vmul.f32 %v3539, %v3539
  %v3604 = vmul.f32 %v3540, %v3540
  %v3605 = vmul.f32 %v3541, %v3541
  %v3606 = vmul.f32 %v3542, %v3542
  %v3607 = vmul.f32 %v3543, %v3543
  %v3608 = vmul.f32 %v3544, %v3544
  %v3609 = vmul.f32 %v3545, %v3545
  %v3610 = vmul.f32 %v3546, %v3546
  %v3611 = vmul.f32 %v3547, %v3547
  %v3612 = vmul.f32 %v3548, %v3548
  %v3613 = vmul.f32 %v3549, %v3549
  %v3614 = vmul.f32 %v3550, %v3550
  %v3615 = vmul.f32 %v3551, %v3551
  %v3616 = vmul.f32 %v3552, %v3552
  %v3617 = vmul.f32 %v3553, %v3553
  %v3618 = vmul.f32 %v3554, %v3554
  %v3619 = vmul.f32 %v3555, %v3555
  %v3620 = vmul.f32 %v3556, %v3556
  %v3621 = vmul.f32 %v3557, %v3557
  %v3622 = vmul.f32 %v3558, %v3558
  %v3623 = vmul.f32 %v3559, %v3559
  %v3624 = vmul.f32 %v3560, %v3560
  %v3625 = vmul.f32 %v3561, %v3561
  %v3626 = vmul.f32 %v3562, %v3562
  %v3627 = vmul.f32 %v3563, %v3563
  %v3628 = vmul.f32 %v3564, %v3564
  %v3629 = vmul.f32 %v3565, %v3565
  %v3630 = vmul.f32 %v3566, %v3566
  %v3631 = vmul.f32 %v3567, %v3567
  %v3632 = vmul.f32 %v3568, %v3568
  %v3633 = vmul.f32 %v3569, %v3569
  %v3634 = vmul.f32 %v3570, %v3570
  %v3635 = vmul.f32 %v3571, %v3571
  %v3636 = vmul.f32 %v3572, %v3572
  %v3637 = vmul.f32 %v3573, %v3573
  %v3638 = vmul.f32 %v3574, %v3574
  %v3639 = vmul.f32 %v3575, %v3575
  %v3640 = vmul.f32 %v3576, %v3576
  %v3641 = vadd.f32 %v3577, %v3578
  %v3642 = vadd.f32 %v3641, %v3579
  %v3643 = vadd.f32 %v3642, %v3580
  %v3644 = vadd.f32 %v3643, %v3581
  %v3645 = vadd.f32 %v3644, %v3582
  %v3646 = vadd.f32 %v3645, %v3583
  %v3647 = vadd.f32 %v3646, %v3584
  %v3648 = vadd.f32 %v3647, %v3585
  %v3649 = vadd.f32 %v3648, %v3586
  %v3650 = vadd.f32 %v3649, %v3587
  %v3651 = vadd.f32 %v3650, %v3588
  %v3652 = vadd.f32 %v3651, %v3589
  %v3653 = vadd.f32 %v3652, %v3590
  %v3654 = vadd.f32 %v3653, %v3591
  %v3655 = vadd.f32 %v3654, %v3592
  %v3656 = vadd.f32 %v3655, %v3593
  %v3657 = vadd.f32 %v3656, %v3594
  %v3658 = vadd.f32 %v3657, %v3595
  %v3659 = vadd.f32 %v3658, %v3596
  %v3660 = vadd.f32 %v3659, %v3597
  %v3661 = vadd.f32 %v3660, %v3598
  %v3662 = vadd.f32 %v3661, %v3599
  %v3663 = vadd.f32 %v3662, %v3600
  %v3664 = vadd.f32 %v3663, %v3601
  %v3665 = vadd.f32 %v3664, %v3602
  %v3666 = vadd.f32 %v3665, %v3603
  %v3667 = vadd.f32 %v3666, %v3604
  %v3668 = vadd.f32 %v3667, %v3605
  %v3669 = vadd.f32 %v3668, %v3606
  %v3670 = vadd.f32 %v3669, %v3607
  %v3671 = vadd.f32 %v3670, %v3608
  %v3672 = vadd.f32 %v3671, %v3609
  %v3673 = vadd.f32 %v3672, %v3610
  %v3674 = vadd.f32 %v3673, %v3611
  %v3675 = vadd.f32 %v3674, %v3612
  %v3676 = vadd.f32 %v3675, %v3613
  %v3677 = vadd.f32 %v3676, %v3614
  %v3678 = vadd.f32 %v3677, %v3615
  %v3679 = vadd.f32 %v3678, %v3616
  %v3680 = vadd.f32 %v3679, %v3617
  %v3681 = vadd.f32 %v3680, %v3618
  %v3682 = vadd.f32 %v3681, %v3619
  %v3683 = vadd.f32 %v3682, %v3620
  %v3684 = vadd.f32 %v3683, %v3621
  %v3685 = vadd.f32 %v3684, %v3622
  %v3686 = vadd.f32 %v3685, %v3623
  %v3687 = vadd.f32 %v3686, %v3624
  %v3688 = vadd.f32 %v3687, %v3625
  %v3689 = vadd.f32 %v3688, %v3626
  %v3690 = vadd.f32 %v3689, %v3627
  %v3691 = vadd.f32 %v3690, %v3628
  %v3692 = vadd.f32 %v3691, %v3629
  %v3693 = vadd.f32 %v3692, %v3630
  %v3694 = vadd.f32 %v3693, %v3631
  %v3695 = vadd.f32 %v3694, %v3632
  %v3696 = vadd.f32 %v3695, %v3633
  %v3697 = vadd.f32 %v3696, %v3634
  %v3698 = vadd.f32 %v3697, %v3635
  %v3699 = vadd.f32 %v3698, %v3636
  %v3700 = vadd.f32 %v3699, %v3637
  %v3701 = vadd.f32 %v3700, %v3638
  %v3702 = vadd.f32 %v3701, %v3639
  %v3703 = vadd.f32 %v3702, %v3640
  %v3704 = vrot.slane %v3703, 4
  %v3705 = vadd.f32 %v3703, %v3704
  %v3706 = vrot.slane %v3705, 2
  %v3707 = vadd.f32 %v3705, %v3706
  %v3708 = vrot.slane %v3707, 1
  %v3709 = vadd.f32 %v3707, %v3708
  %v3710 = vmul.f32 %v3709, %v3511
  %v3711 = vadd.f32 %v3710, 1e-05
  %v3712 = vrsqrt.pop %v3711
  %v3713 = vmul.f32 %v3712, %v3711
  %v3714 = vmul.f32 %v3713, %v3712
  %v3715 = vmul.f32 0.5, %v3714
  %v3716 = vsub.f32 1.5, %v3715
  %v3717 = vmul.f32 %v3712, %v3716
  %vm3718 = vweird.f32 %v3711
  %vm3719 = vweird.f32 %v3712
  %vm3720 = vmor %vm3718, %vm3719
  %v3721 = vsel %vm3720, %v3712, %v3717
  %v3722 = vmul.f32 %v3513, %v3721
  %v3723 = vmul.f32 %v3514, %v3721
  %v3724 = vmul.f32 %v3515, %v3721
  %v3725 = vmul.f32 %v3516, %v3721
  %v3726 = vmul.f32 %v3517, %v3721
  %v3727 = vmul.f32 %v3518, %v3721
  %v3728 = vmul.f32 %v3519, %v3721
  %v3729 = vmul.f32 %v3520, %v3721
  %v3730 = vmul.f32 %v3521, %v3721
  %v3731 = vmul.f32 %v3522, %v3721
  %v3732 = vmul.f32 %v3523, %v3721
  %v3733 = vmul.f32 %v3524, %v3721
  %v3734 = vmul.f32 %v3525, %v3721
  %v3735 = vmul.f32 %v3526, %v3721
  %v3736 = vmul.f32 %v3527, %v3721
  %v3737 = vmul.f32 %v3528, %v3721
  %v3738 = vmul.f32 %v3529, %v3721
  %v3739 = vmul.f32 %v3530, %v3721
  %v3740 = vmul.f32 %v3531, %v3721
  %v3741 = vmul.f32 %v3532, %v3721
  %v3742 = vmul.f32 %v3533, %v3721
  %v3743 = vmul.f32 %v3534, %v3721
  %v3744 = vmul.f32 %v3535, %v3721
  %v3745 = vmul.f32 %v3536, %v3721
  %v3746 = vmul.f32 %v3537, %v3721
  %v3747 = vmul.f32 %v3538, %v3721
  %v3748 = vmul.f32 %v3539, %v3721
  %v3749 = vmul.f32 %v3540, %v3721
  %v3750 = vmul.f32 %v3541, %v3721
  %v3751 = vmul.f32 %v3542, %v3721
  %v3752 = vmul.f32 %v3543, %v3721
  %v3753 = vmul.f32 %v3544, %v3721
  %v3754 = vmul.f32 %v3545, %v3721
  %v3755 = vmul.f32 %v3546, %v3721
  %v3756 = vmul.f32 %v3547, %v3721
  %v3757 = vmul.f32 %v3548, %v3721
  %v3758 = vmul.f32 %v3549, %v3721
  %v3759 = vmul.f32 %v3550, %v3721
  %v3760 = vmul.f32 %v3551, %v3721
  %v3761 = vmul.f32 %v3552, %v3721
  %v3762 = vmul.f32 %v3553, %v3721
  %v3763 = vmul.f32 %v3554, %v3721
  %v3764 = vmul.f32 %v3555, %v3721
  %v3765 = vmul.f32 %v3556, %v3721
  %v3766 = vmul.f32 %v3557, %v3721
  %v3767 = vmul.f32 %v3558, %v3721
  %v3768 = vmul.f32 %v3559, %v3721
  %v3769 = vmul.f32 %v3560, %v3721
  %v3770 = vmul.f32 %v3561, %v3721
  %v3771 = vmul.f32 %v3562, %v3721
  %v3772 = vmul.f32 %v3563, %v3721
  %v3773 = vmul.f32 %v3564, %v3721
  %v3774 = vmul.f32 %v3565, %v3721
  %v3775 = vmul.f32 %v3566, %v3721
  %v3776 = vmul.f32 %v3567, %v3721
  %v3777 = vmul.f32 %v3568, %v3721
  %v3778 = vmul.f32 %v3569, %v3721
  %v3779 = vmul.f32 %v3570, %v3721
  %v3780 = vmul.f32 %v3571, %v3721
  %v3781 = vmul.f32 %v3572, %v3721
  %v3782 = vmul.f32 %v3573, %v3721
  %v3783 = vmul.f32 %v3574, %v3721
  %v3784 = vmul.f32 %v3575, %v3721
  %v3785 = vmul.f32 %v3576, %v3721
  %v3786 = vld [vmem:[%s2] sm:$0x1]
  %v3788 = vperm.slane %v3786, 0
  %v3790 = vmul.f32 %v3722, %v3788
  %v3791 = vmul.f32 %v3723, %v3788
  %v3792 = vmul.f32 %v3724, %v3788
  %v3793 = vmul.f32 %v3725, %v3788
  %v3794 = vmul.f32 %v3726, %v3788
  %v3795 = vmul.f32 %v3727, %v3788
  %v3796 = vmul.f32 %v3728, %v3788
  %v3797 = vmul.f32 %v3729, %v3788
  %v3798 = vmul.f32 %v3730, %v3788
  %v3799 = vmul.f32 %v3731, %v3788
  %v3800 = vmul.f32 %v3732, %v3788
  %v3801 = vmul.f32 %v3733, %v3788
  %v3802 = vmul.f32 %v3734, %v3788
  %v3803 = vmul.f32 %v3735, %v3788
  %v3804 = vmul.f32 %v3736, %v3788
  %v3805 = vmul.f32 %v3737, %v3788
  %v3806 = vmul.f32 %v3738, %v3788
  %v3807 = vmul.f32 %v3739, %v3788
  %v3808 = vmul.f32 %v3740, %v3788
  %v3809 = vmul.f32 %v3741, %v3788
  %v3810 = vmul.f32 %v3742, %v3788
  %v3811 = vmul.f32 %v3743, %v3788
  %v3812 = vmul.f32 %v3744, %v3788
  %v3813 = vmul.f32 %v3745, %v3788
  %v3814 = vmul.f32 %v3746, %v3788
  %v3815 = vmul.f32 %v3747, %v3788
  %v3816 = vmul.f32 %v3748, %v3788
  %v3817 = vmul.f32 %v3749, %v3788
  %v3818 = vmul.f32 %v3750, %v3788
  %v3819 = vmul.f32 %v3751, %v3788
  %v3820 = vmul.f32 %v3752, %v3788
  %v3821 = vmul.f32 %v3753, %v3788
  %v3822 = vmul.f32 %v3754, %v3788
  %v3823 = vmul.f32 %v3755, %v3788
  %v3824 = vmul.f32 %v3756, %v3788
  %v3825 = vmul.f32 %v3757, %v3788
  %v3826 = vmul.f32 %v3758, %v3788
  %v3827 = vmul.f32 %v3759, %v3788
  %v3828 = vmul.f32 %v3760, %v3788
  %v3829 = vmul.f32 %v3761, %v3788
  %v3830 = vmul.f32 %v3762, %v3788
  %v3831 = vmul.f32 %v3763, %v3788
  %v3832 = vmul.f32 %v3764, %v3788
  %v3833 = vmul.f32 %v3765, %v3788
  %v3834 = vmul.f32 %v3766, %v3788
  %v3835 = vmul.f32 %v3767, %v3788
  %v3836 = vmul.f32 %v3768, %v3788
  %v3837 = vmul.f32 %v3769, %v3788
  %v3838 = vmul.f32 %v3770, %v3788
  %v3839 = vmul.f32 %v3771, %v3788
  %v3840 = vmul.f32 %v3772, %v3788
  %v3841 = vmul.f32 %v3773, %v3788
  %v3842 = vmul.f32 %v3774, %v3788
  %v3843 = vmul.f32 %v3775, %v3788
  %v3844 = vmul.f32 %v3776, %v3788
  %v3845 = vmul.f32 %v3777, %v3788
  %v3846 = vmul.f32 %v3778, %v3788
  %v3847 = vmul.f32 %v3779, %v3788
  %v3848 = vmul.f32 %v3780, %v3788
  %v3849 = vmul.f32 %v3781, %v3788
  %v3850 = vmul.f32 %v3782, %v3788
  %v3851 = vmul.f32 %v3783, %v3788
  %v3852 = vmul.f32 %v3784, %v3788
  %v3853 = vmul.f32 %v3785, %v3788
  %v3854 = vld [vmem:[%s3] sm:$0x1]
  %v3856 = vperm.slane %v3854, 0
  %v3858 = vadd.f32 %v3790, %v3856
  %v3859 = vadd.f32 %v3791, %v3856
  %v3860 = vadd.f32 %v3792, %v3856
  %v3861 = vadd.f32 %v3793, %v3856
  %v3862 = vadd.f32 %v3794, %v3856
  %v3863 = vadd.f32 %v3795, %v3856
  %v3864 = vadd.f32 %v3796, %v3856
  %v3865 = vadd.f32 %v3797, %v3856
  %v3866 = vadd.f32 %v3798, %v3856
  %v3867 = vadd.f32 %v3799, %v3856
  %v3868 = vadd.f32 %v3800, %v3856
  %v3869 = vadd.f32 %v3801, %v3856
  %v3870 = vadd.f32 %v3802, %v3856
  %v3871 = vadd.f32 %v3803, %v3856
  %v3872 = vadd.f32 %v3804, %v3856
  %v3873 = vadd.f32 %v3805, %v3856
  %v3874 = vadd.f32 %v3806, %v3856
  %v3875 = vadd.f32 %v3807, %v3856
  %v3876 = vadd.f32 %v3808, %v3856
  %v3877 = vadd.f32 %v3809, %v3856
  %v3878 = vadd.f32 %v3810, %v3856
  %v3879 = vadd.f32 %v3811, %v3856
  %v3880 = vadd.f32 %v3812, %v3856
  %v3881 = vadd.f32 %v3813, %v3856
  %v3882 = vadd.f32 %v3814, %v3856
  %v3883 = vadd.f32 %v3815, %v3856
  %v3884 = vadd.f32 %v3816, %v3856
  %v3885 = vadd.f32 %v3817, %v3856
  %v3886 = vadd.f32 %v3818, %v3856
  %v3887 = vadd.f32 %v3819, %v3856
  %v3888 = vadd.f32 %v3820, %v3856
  %v3889 = vadd.f32 %v3821, %v3856
  %v3890 = vadd.f32 %v3822, %v3856
  %v3891 = vadd.f32 %v3823, %v3856
  %v3892 = vadd.f32 %v3824, %v3856
  %v3893 = vadd.f32 %v3825, %v3856
  %v3894 = vadd.f32 %v3826, %v3856
  %v3895 = vadd.f32 %v3827, %v3856
  %v3896 = vadd.f32 %v3828, %v3856
  %v3897 = vadd.f32 %v3829, %v3856
  %v3898 = vadd.f32 %v3830, %v3856
  %v3899 = vadd.f32 %v3831, %v3856
  %v3900 = vadd.f32 %v3832, %v3856
  %v3901 = vadd.f32 %v3833, %v3856
  %v3902 = vadd.f32 %v3834, %v3856
  %v3903 = vadd.f32 %v3835, %v3856
  %v3904 = vadd.f32 %v3836, %v3856
  %v3905 = vadd.f32 %v3837, %v3856
  %v3906 = vadd.f32 %v3838, %v3856
  %v3907 = vadd.f32 %v3839, %v3856
  %v3908 = vadd.f32 %v3840, %v3856
  %v3909 = vadd.f32 %v3841, %v3856
  %v3910 = vadd.f32 %v3842, %v3856
  %v3911 = vadd.f32 %v3843, %v3856
  %v3912 = vadd.f32 %v3844, %v3856
  %v3913 = vadd.f32 %v3845, %v3856
  %v3914 = vadd.f32 %v3846, %v3856
  %v3915 = vadd.f32 %v3847, %v3856
  %v3916 = vadd.f32 %v3848, %v3856
  %v3917 = vadd.f32 %v3849, %v3856
  %v3918 = vadd.f32 %v3850, %v3856
  %v3919 = vadd.f32 %v3851, %v3856
  %v3920 = vadd.f32 %v3852, %v3856
  %v3921 = vadd.f32 %v3853, %v3856
  %v3922 = vmax.f32 %v3858, 0.0
  %v3923 = vmax.f32 %v3859, 0.0
  %v3924 = vmax.f32 %v3860, 0.0
  %v3925 = vmax.f32 %v3861, 0.0
  %v3926 = vmax.f32 %v3862, 0.0
  %v3927 = vmax.f32 %v3863, 0.0
  %v3928 = vmax.f32 %v3864, 0.0
  %v3929 = vmax.f32 %v3865, 0.0
  %v3930 = vmax.f32 %v3866, 0.0
  %v3931 = vmax.f32 %v3867, 0.0
  %v3932 = vmax.f32 %v3868, 0.0
  %v3933 = vmax.f32 %v3869, 0.0
  %v3934 = vmax.f32 %v3870, 0.0
  %v3935 = vmax.f32 %v3871, 0.0
  %v3936 = vmax.f32 %v3872, 0.0
  %v3937 = vmax.f32 %v3873, 0.0
  %v3938 = vmax.f32 %v3874, 0.0
  %v3939 = vmax.f32 %v3875, 0.0
  %v3940 = vmax.f32 %v3876, 0.0
  %v3941 = vmax.f32 %v3877, 0.0
  %v3942 = vmax.f32 %v3878, 0.0
  %v3943 = vmax.f32 %v3879, 0.0
  %v3944 = vmax.f32 %v3880, 0.0
  %v3945 = vmax.f32 %v3881, 0.0
  %v3946 = vmax.f32 %v3882, 0.0
  %v3947 = vmax.f32 %v3883, 0.0
  %v3948 = vmax.f32 %v3884, 0.0
  %v3949 = vmax.f32 %v3885, 0.0
  %v3950 = vmax.f32 %v3886, 0.0
  %v3951 = vmax.f32 %v3887, 0.0
  %v3952 = vmax.f32 %v3888, 0.0
  %v3953 = vmax.f32 %v3889, 0.0
  %v3954 = vmax.f32 %v3890, 0.0
  %v3955 = vmax.f32 %v3891, 0.0
  %v3956 = vmax.f32 %v3892, 0.0
  %v3957 = vmax.f32 %v3893, 0.0
  %v3958 = vmax.f32 %v3894, 0.0
  %v3959 = vmax.f32 %v3895, 0.0
  %v3960 = vmax.f32 %v3896, 0.0
  %v3961 = vmax.f32 %v3897, 0.0
  %v3962 = vmax.f32 %v3898, 0.0
  %v3963 = vmax.f32 %v3899, 0.0
  %v3964 = vmax.f32 %v3900, 0.0
  %v3965 = vmax.f32 %v3901, 0.0
  %v3966 = vmax.f32 %v3902, 0.0
  %v3967 = vmax.f32 %v3903, 0.0
  %v3968 = vmax.f32 %v3904, 0.0
  %v3969 = vmax.f32 %v3905, 0.0
  %v3970 = vmax.f32 %v3906, 0.0
  %v3971 = vmax.f32 %v3907, 0.0
  %v3972 = vmax.f32 %v3908, 0.0
  %v3973 = vmax.f32 %v3909, 0.0
  %v3974 = vmax.f32 %v3910, 0.0
  %v3975 = vmax.f32 %v3911, 0.0
  %v3976 = vmax.f32 %v3912, 0.0
  %v3977 = vmax.f32 %v3913, 0.0
  %v3978 = vmax.f32 %v3914, 0.0
  %v3979 = vmax.f32 %v3915, 0.0
  %v3980 = vmax.f32 %v3916, 0.0
  %v3981 = vmax.f32 %v3917, 0.0
  %v3982 = vmax.f32 %v3918, 0.0
  %v3983 = vmax.f32 %v3919, 0.0
  %v3984 = vmax.f32 %v3920, 0.0
  %v3985 = vmax.f32 %v3921, 0.0
  %3986 = vst [vmem:[%s4] sm:$0xff] %v3922
  %3987 = vst [vmem:[%s4 + $0x8] sm:$0xff] %v3923
  %3988 = vst [vmem:[%s4 + $0x10] sm:$0xff] %v3924
  %3989 = vst [vmem:[%s4 + $0x18] sm:$0xff] %v3925
  %3990 = vst [vmem:[%s4 + $0x20] sm:$0xff] %v3926
  %3991 = vst [vmem:[%s4 + $0x28] sm:$0xff] %v3927
  %3992 = vst [vmem:[%s4 + $0x30] sm:$0xff] %v3928
  %3993 = vst [vmem:[%s4 + $0x38] sm:$0xff] %v3929
  %3994 = vst [vmem:[%s4 + $0x40] sm:$0xff] %v3930
  %3995 = vst [vmem:[%s4 + $0x48] sm:$0xff] %v3931
  %3996 = vst [vmem:[%s4 + $0x50] sm:$0xff] %v3932
  %3997 = vst [vmem:[%s4 + $0x58] sm:$0xff] %v3933
  %3998 = vst [vmem:[%s4 + $0x60] sm:$0xff] %v3934
  %3999 = vst [vmem:[%s4 + $0x68] sm:$0xff] %v3935
  %4000 = vst [vmem:[%s4 + $0x70] sm:$0xff] %v3936
  %4001 = vst [vmem:[%s4 + $0x78] sm:$0xff] %v3937
  %4002 = vst [vmem:[%s4 + $0x80] sm:$0xff] %v3938
  %4003 = vst [vmem:[%s4 + $0x88] sm:$0xff] %v3939
  %4004 = vst [vmem:[%s4 + $0x90] sm:$0xff] %v3940
  %4005 = vst [vmem:[%s4 + $0x98] sm:$0xff] %v3941
  %4006 = vst [vmem:[%s4 + $0xa0] sm:$0xff] %v3942
  %4007 = vst [vmem:[%s4 + $0xa8] sm:$0xff] %v3943
  %4008 = vst [vmem:[%s4 + $0xb0] sm:$0xff] %v3944
  %4009 = vst [vmem:[%s4 + $0xb8] sm:$0xff] %v3945
  %4010 = vst [vmem:[%s4 + $0xc0] sm:$0xff] %v3946
  %4011 = vst [vmem:[%s4 + $0xc8] sm:$0xff] %v3947
  %4012 = vst [vmem:[%s4 + $0xd0] sm:$0xff] %v3948
  %4013 = vst [vmem:[%s4 + $0xd8] sm:$0xff] %v3949
  %4014 = vst [vmem:[%s4 + $0xe0] sm:$0xff] %v3950
  %4015 = vst [vmem:[%s4 + $0xe8] sm:$0xff] %v3951
  %4016 = vst [vmem:[%s4 + $0xf0] sm:$0xff] %v3952
  %4017 = vst [vmem:[%s4 + $0xf8] sm:$0xff] %v3953
  %4018 = vst [vmem:[%s4 + $0x100] sm:$0xff] %v3954
  %4019 = vst [vmem:[%s4 + $0x108] sm:$0xff] %v3955
  %4020 = vst [vmem:[%s4 + $0x110] sm:$0xff] %v3956
  %4021 = vst [vmem:[%s4 + $0x118] sm:$0xff] %v3957
  %4022 = vst [vmem:[%s4 + $0x120] sm:$0xff] %v3958
  %4023 = vst [vmem:[%s4 + $0x128] sm:$0xff] %v3959
  %4024 = vst [vmem:[%s4 + $0x130] sm:$0xff] %v3960
  %4025 = vst [vmem:[%s4 + $0x138] sm:$0xff] %v3961
  %4026 = vst [vmem:[%s4 + $0x140] sm:$0xff] %v3962
  %4027 = vst [vmem:[%s4 + $0x148] sm:$0xff] %v3963
  %4028 = vst [vmem:[%s4 + $0x150] sm:$0xff] %v3964
  %4029 = vst [vmem:[%s4 + $0x158] sm:$0xff] %v3965
  %4030 = vst [vmem:[%s4 + $0x160] sm:$0xff] %v3966
  %4031 = vst [vmem:[%s4 + $0x168] sm:$0xff] %v3967
  %4032 = vst [vmem:[%s4 + $0x170] sm:$0xff] %v3968
  %4033 = vst [vmem:[%s4 + $0x178] sm:$0xff] %v3969
  %4034 = vst [vmem:[%s4 + $0x180] sm:$0xff] %v3970
  %4035 = vst [vmem:[%s4 + $0x188] sm:$0xff] %v3971
  %4036 = vst [vmem:[%s4 + $0x190] sm:$0xff] %v3972
  %4037 = vst [vmem:[%s4 + $0x198] sm:$0xff] %v3973
  %4038 = vst [vmem:[%s4 + $0x1a0] sm:$0xff] %v3974
  %4039 = vst [vmem:[%s4 + $0x1a8] sm:$0xff] %v3975
  %4040 = vst [vmem:[%s4 + $0x1b0] sm:$0xff] %v3976
  %4041 = vst [vmem:[%s4 + $0x1b8] sm:$0xff] %v3977
  %4042 = vst [vmem:[%s4 + $0x1c0] sm:$0xff] %v3978
  %4043 = vst [vmem:[%s4 + $0x1c8] sm:$0xff] %v3979
  %4044 = vst [vmem:[%s4 + $0x1d0] sm:$0xff] %v3980
  %4045 = vst [vmem:[%s4 + $0x1d8] sm:$0xff] %v3981
  %4046 = vst [vmem:[%s4 + $0x1e0] sm:$0xff] %v3982
  %4047 = vst [vmem:[%s4 + $0x1e8] sm:$0xff] %v3983
  %4048 = vst [vmem:[%s4 + $0x1f0] sm:$0xff] %v3984
  %4049 = vst [vmem:[%s4 + $0x1f8] sm:$0xff] %v3985
  // Predicated region
  $region18: #{trainer_forward.4} parent=0 // pred_check
    _
  $region19: #{trainer_forward.4} parent=0 // pred_check_branch
    %4051 = sbr.rel (0) target = $region21
  $region20: #{trainer_forward.4} parent=0 // pred_region
    _
  $region21: #{trainer_forward.4} parent=0 // pred_fallthru
    _
  // Predicated region
  $region22: #{trainer_forward.4} parent=0 // pred_check
    _
  $region23: #{trainer_forward.4} parent=0 // pred_check_branch
    %4053 = sbr.rel (0) target = $region25
  $region24: #{trainer_forward.4} parent=0 // pred_region
    _
  $region25: #{trainer_forward.4} parent=0 // pred_fallthru
    _

// kernel: trainer_forward.6
$region0: #{trainer_forward.6}
  #allocation0 [shape = 'u32[]', space=smem, size = 0x4, offset = 0x4, fixed_abs, tag = 'smem constant byte address 0x4 - core index']
  #allocation1 [shape = 'u32[72,128]{1,0:T(1,128)}', space=vmem, size = 0x9000, scoped, tag = 'internal scratch']
  %s0 = inlined_call_operand.vmem [shape: f32[2,18,18,128], index: 0, kind: input, shape index: {}]
  %s1 = inlined_call_operand.vmem [shape: bf16[9,128,128], index: 1, kind: input, shape index: {}]
  %s2 = inlined_call_operand.vmem [shape: f32[1,128], index: 2, kind: input, shape index: {}]
  %s3 = inlined_call_operand.vmem [shape: f32[1,128], index: 3, kind: input, shape index: {}]
  %s4 = inlined_call_operand.vmem [shape: f32[512,128], index: 4, kind: input, shape index: {}]
  %s5 = inlined_call_operand.vmem [shape: f32[512,128], index: 5, kind: output, shape index: {}]
  %s6 = sld [smem:[#allocation0]]
  $region30: #{trainer_forward.6} parent=0
    _
  %s8 = ssub.s32 1, %s6
  %s9 = scalar_select 0, %s8, %s6
  // Predicated region
  $region2: #{trainer_forward.6} parent=0 // pred_check
    _
  $region3: #{trainer_forward.6} parent=0 // pred_check_branch
    %11 = sbr.rel (0) target = $region5
  $region4: #{trainer_forward.6} parent=0 // pred_region
    _
  $region5: #{trainer_forward.6} parent=0 // pred_fallthru
    _
  // Predicated region
  $region6: #{trainer_forward.6} parent=0 // pred_check
    _
  $region7: #{trainer_forward.6} parent=0 // pred_check_branch
    %13 = sbr.rel (0) target = $region9
  $region8: #{trainer_forward.6} parent=0 // pred_region
    _
  $region9: #{trainer_forward.6} parent=0 // pred_fallthru
    _
  // Predicated region
  $region10: #{trainer_forward.6} parent=0 // pred_check
    _
  $region11: #{trainer_forward.6} parent=0 // pred_check_branch
    %15 = sbr.rel (0) target = $region13
  $region12: #{trainer_forward.6} parent=0 // pred_region
    _
  $region13: #{trainer_forward.6} parent=0 // pred_fallthru
    _
  // Predicated region
  $region14: #{trainer_forward.6} parent=0 // pred_check
    _
  $region15: #{trainer_forward.6} parent=0 // pred_check_branch
    %17 = sbr.rel (0) target = $region17
  $region16: #{trainer_forward.6} parent=0 // pred_region
    _
  $region17: #{trainer_forward.6} parent=0 // pred_fallthru
    _
  // Predicated region
  $region18: #{trainer_forward.6} parent=0 // pred_check
    _
  $region19: #{trainer_forward.6} parent=0 // pred_check_branch
    %19 = sbr.rel (0) target = $region21
  $region20: #{trainer_forward.6} parent=0 // pred_region
    _
  $region21: #{trainer_forward.6} parent=0 // pred_fallthru
    _
  %v20 = vld [vmem:[%s0] sm:$0xff]
  %v21 = vld [vmem:[%s0 + $0x8] sm:$0xff]
  %v22 = vld [vmem:[%s0 + $0x18] sm:$0xff]
  %v23 = vld [vmem:[%s0 + $0x20] sm:$0xff]
  %v24 = vld [vmem:[%s0 + $0x30] sm:$0xff]
  %v25 = vld [vmem:[%s0 + $0x38] sm:$0xff]
  %v26 = vld [vmem:[%s0 + $0x48] sm:$0xff]
  %v27 = vld [vmem:[%s0 + $0x50] sm:$0xff]
  %v28 = vld [vmem:[%s0 + $0x60] sm:$0xff]
  %v29 = vld [vmem:[%s0 + $0x68] sm:$0xff]
  %v30 = vld [vmem:[%s0 + $0x78] sm:$0xff]
  %v31 = vld [vmem:[%s0 + $0x80] sm:$0xff]
  %v32 = vld [vmem:[%s0 + $0x90] sm:$0xff]
  %v33 = vld [vmem:[%s0 + $0x98] sm:$0xff]
  %v34 = vld [vmem:[%s0 + $0xa8] sm:$0xff]
  %v35 = vld [vmem:[%s0 + $0xb0] sm:$0xff]
  %v36 = vld [vmem:[%s0 + $0xc0] sm:$0xff]
  %v37 = vld [vmem:[%s0 + $0xc8] sm:$0xff]
  %v38 = vld [vmem:[%s0 + $0xd8] sm:$0xff]
  %v39 = vld [vmem:[%s0 + $0xe0] sm:$0xff]
  %v40 = vld [vmem:[%s0 + $0xf0] sm:$0xff]
  %v41 = vld [vmem:[%s0 + $0xf8] sm:$0xff]
  %v42 = vld [vmem:[%s0 + $0x108] sm:$0xff]
  %v43 = vld [vmem:[%s0 + $0x110] sm:$0xff]
  %v44 = vld [vmem:[%s0 + $0x120] sm:$0xff]
  %v45 = vld [vmem:[%s0 + $0x128] sm:$0xff]
  %v46 = vld [vmem:[%s0 + $0x138] sm:$0xff]
  %v47 = vld [vmem:[%s0 + $0x140] sm:$0xff]
  %v48 = vld [vmem:[%s0 + $0x150] sm:$0xff]
  %v49 = vld [vmem:[%s0 + $0x158] sm:$0xff]
  %v50 = vld [vmem:[%s0 + $0x168] sm:$0xff]
  %v51 = vld [vmem:[%s0 + $0x170] sm:$0xff]
  %v52 = vld [vmem:[%s0 + $0x1b0] sm:$0xff]
  %v53 = vld [vmem:[%s0 + $0x1b8] sm:$0xff]
  %v54 = vld [vmem:[%s0 + $0x1c8] sm:$0xff]
  %v55 = vld [vmem:[%s0 + $0x1d0] sm:$0xff]
  %v56 = vld [vmem:[%s0 + $0x1e0] sm:$0xff]
  %v57 = vld [vmem:[%s0 + $0x1e8] sm:$0xff]
  %v58 = vld [vmem:[%s0 + $0x1f8] sm:$0xff]
  %v59 = vld [vmem:[%s0 + $0x200] sm:$0xff]
  %v60 = vld [vmem:[%s0 + $0x210] sm:$0xff]
  %v61 = vld [vmem:[%s0 + $0x218] sm:$0xff]
  %v62 = vld [vmem:[%s0 + $0x228] sm:$0xff]
  %v63 = vld [vmem:[%s0 + $0x230] sm:$0xff]
  %v64 = vld [vmem:[%s0 + $0x240] sm:$0xff]
  %v65 = vld [vmem:[%s0 + $0x248] sm:$0xff]
  %v66 = vld [vmem:[%s0 + $0x258] sm:$0xff]
  %v67 = vld [vmem:[%s0 + $0x260] sm:$0xff]
  %v68 = vld [vmem:[%s0 + $0x270] sm:$0xff]
  %v69 = vld [vmem:[%s0 + $0x278] sm:$0xff]
  %v70 = vld [vmem:[%s0 + $0x288] sm:$0xff]
  %v71 = vld [vmem:[%s0 + $0x290] sm:$0xff]
  %v72 = vld [vmem:[%s0 + $0x2a0] sm:$0xff]
  %v73 = vld [vmem:[%s0 + $0x2a8] sm:$0xff]
  %v74 = vld [vmem:[%s0 + $0x2b8] sm:$0xff]
  %v75 = vld [vmem:[%s0 + $0x2c0] sm:$0xff]
  %v76 = vld [vmem:[%s0 + $0x2d0] sm:$0xff]
  %v77 = vld [vmem:[%s0 + $0x2d8] sm:$0xff]
  %v78 = vld [vmem:[%s0 + $0x2e8] sm:$0xff]
  %v79 = vld [vmem:[%s0 + $0x2f0] sm:$0xff]
  %v80 = vld [vmem:[%s0 + $0x300] sm:$0xff]
  %v81 = vld [vmem:[%s0 + $0x308] sm:$0xff]
  %v82 = vld [vmem:[%s0 + $0x318] sm:$0xff]
  %v83 = vld [vmem:[%s0 + $0x320] sm:$0xff]
  %v84 = vpack.c.bf16 %v21, %v20
  %v85 = vpack.c.bf16 %v23, %v22
  %v86 = vpack.c.bf16 %v25, %v24
  %v87 = vpack.c.bf16 %v27, %v26
  %v88 = vpack.c.bf16 %v29, %v28
  %v89 = vpack.c.bf16 %v31, %v30
  %v90 = vpack.c.bf16 %v33, %v32
  %v91 = vpack.c.bf16 %v35, %v34
  %v92 = vpack.c.bf16 %v37, %v36
  %v93 = vpack.c.bf16 %v39, %v38
  %v94 = vpack.c.bf16 %v41, %v40
  %v95 = vpack.c.bf16 %v43, %v42
  %v96 = vpack.c.bf16 %v45, %v44
  %v97 = vpack.c.bf16 %v47, %v46
  %v98 = vpack.c.bf16 %v49, %v48
  %v99 = vpack.c.bf16 %v51, %v50
  %v100 = vpack.c.bf16 %v53, %v52
  %v101 = vpack.c.bf16 %v55, %v54
  %v102 = vpack.c.bf16 %v57, %v56
  %v103 = vpack.c.bf16 %v59, %v58
  %v104 = vpack.c.bf16 %v61, %v60
  %v105 = vpack.c.bf16 %v63, %v62
  %v106 = vpack.c.bf16 %v65, %v64
  %v107 = vpack.c.bf16 %v67, %v66
  %v108 = vpack.c.bf16 %v69, %v68
  %v109 = vpack.c.bf16 %v71, %v70
  %v110 = vpack.c.bf16 %v73, %v72
  %v111 = vpack.c.bf16 %v75, %v74
  %v112 = vpack.c.bf16 %v77, %v76
  %v113 = vpack.c.bf16 %v79, %v78
  %v114 = vpack.c.bf16 %v81, %v80
  %v115 = vpack.c.bf16 %v83, %v82
  %v116 = vld [vmem:[%s1] sm:$0xf]
  %v117 = vld [vmem:[%s1 + $0x4] sm:$0xf]
  %v118 = vld [vmem:[%s1 + $0x8] sm:$0xf]
  %v119 = vld [vmem:[%s1 + $0xc] sm:$0xf]
  %v120 = vld [vmem:[%s1 + $0x10] sm:$0xf]
  %v121 = vld [vmem:[%s1 + $0x14] sm:$0xf]
  %v122 = vld [vmem:[%s1 + $0x18] sm:$0xf]
  %v123 = vld [vmem:[%s1 + $0x1c] sm:$0xf]
  %v124 = vld [vmem:[%s1 + $0x20] sm:$0xf]
  %v125 = vld [vmem:[%s1 + $0x24] sm:$0xf]
  %v126 = vld [vmem:[%s1 + $0x28] sm:$0xf]
  %v127 = vld [vmem:[%s1 + $0x2c] sm:$0xf]
  %v128 = vld [vmem:[%s1 + $0x30] sm:$0xf]
  %v129 = vld [vmem:[%s1 + $0x34] sm:$0xf]
  %v130 = vld [vmem:[%s1 + $0x38] sm:$0xf]
  %v131 = vld [vmem:[%s1 + $0x3c] sm:$0xf]
  %v132 = vld [vmem:[%s0 + $0x1] sm:$0xff]
  %v133 = vld [vmem:[%s0 + $0x9] sm:$0xff]
  %v134 = vld [vmem:[%s0 + $0x19] sm:$0xff]
  %v135 = vld [vmem:[%s0 + $0x21] sm:$0xff]
  %v136 = vld [vmem:[%s0 + $0x31] sm:$0xff]
  %v137 = vld [vmem:[%s0 + $0x39] sm:$0xff]
  %v138 = vld [vmem:[%s0 + $0x49] sm:$0xff]
  %v139 = vld [vmem:[%s0 + $0x51] sm:$0xff]
  %v140 = vld [vmem:[%s0 + $0x61] sm:$0xff]
  %v141 = vld [vmem:[%s0 + $0x69] sm:$0xff]
  %v142 = vld [vmem:[%s0 + $0x79] sm:$0xff]
  %v143 = vld [vmem:[%s0 + $0x81] sm:$0xff]
  %v144 = vld [vmem:[%s0 + $0x91] sm:$0xff]
  %v145 = vld [vmem:[%s0 + $0x99] sm:$0xff]
  %v146 = vld [vmem:[%s0 + $0xa9] sm:$0xff]
  %v147 = vld [vmem:[%s0 + $0xb1] sm:$0xff]
  %v148 = vld [vmem:[%s0 + $0xc1] sm:$0xff]
  %v149 = vld [vmem:[%s0 + $0xc9] sm:$0xff]
  %v150 = vld [vmem:[%s0 + $0xd9] sm:$0xff]
  %v151 = vld [vmem:[%s0 + $0xe1] sm:$0xff]
  %v152 = vld [vmem:[%s0 + $0xf1] sm:$0xff]
  %v153 = vld [vmem:[%s0 + $0xf9] sm:$0xff]
  %v154 = vld [vmem:[%s0 + $0x109] sm:$0xff]
  %v155 = vld [vmem:[%s0 + $0x111] sm:$0xff]
  %v156 = vld [vmem:[%s0 + $0x121] sm:$0xff]
  %v157 = vld [vmem:[%s0 + $0x129] sm:$0xff]
  %v158 = vld [vmem:[%s0 + $0x139] sm:$0xff]
  %v159 = vld [vmem:[%s0 + $0x141] sm:$0xff]
  %v160 = vld [vmem:[%s0 + $0x151] sm:$0xff]
  %v161 = vld [vmem:[%s0 + $0x159] sm:$0xff]
  %v162 = vld [vmem:[%s0 + $0x169] sm:$0xff]
  %v163 = vld [vmem:[%s0 + $0x171] sm:$0xff]
  %v164 = vld [vmem:[%s0 + $0x1b1] sm:$0xff]
  %v165 = vld [vmem:[%s0 + $0x1b9] sm:$0xff]
  %v166 = vld [vmem:[%s0 + $0x1c9] sm:$0xff]
  %v167 = vld [vmem:[%s0 + $0x1d1] sm:$0xff]
  %v168 = vld [vmem:[%s0 + $0x1e1] sm:$0xff]
  %v169 = vld [vmem:[%s0 + $0x1e9] sm:$0xff]
  %v170 = vld [vmem:[%s0 + $0x1f9] sm:$0xff]
  %v171 = vld [vmem:[%s0 + $0x201] sm:$0xff]
  %v172 = vld [vmem:[%s0 + $0x211] sm:$0xff]
  %v173 = vld [vmem:[%s0 + $0x219] sm:$0xff]
  %v174 = vld [vmem:[%s0 + $0x229] sm:$0xff]
  %v175 = vld [vmem:[%s0 + $0x231] sm:$0xff]
  %v176 = vld [vmem:[%s0 + $0x241] sm:$0xff]
  %v177 = vld [vmem:[%s0 + $0x249] sm:$0xff]
  %v178 = vld [vmem:[%s0 + $0x259] sm:$0xff]
  %v179 = vld [vmem:[%s0 + $0x261] sm:$0xff]
  %v180 = vld [vmem:[%s0 + $0x271] sm:$0xff]
  %v181 = vld [vmem:[%s0 + $0x279] sm:$0xff]
  %v182 = vld [vmem:[%s0 + $0x289] sm:$0xff]
  %v183 = vld [vmem:[%s0 + $0x291] sm:$0xff]
  %v184 = vld [vmem:[%s0 + $0x2a1] sm:$0xff]
  %v185 = vld [vmem:[%s0 + $0x2a9] sm:$0xff]
  %v186 = vld [vmem:[%s0 + $0x2b9] sm:$0xff]
  %v187 = vld [vmem:[%s0 + $0x2c1] sm:$0xff]
  %v188 = vld [vmem:[%s0 + $0x2d1] sm:$0xff]
  %v189 = vld [vmem:[%s0 + $0x2d9] sm:$0xff]
  %v190 = vld [vmem:[%s0 + $0x2e9] sm:$0xff]
  %v191 = vld [vmem:[%s0 + $0x2f1] sm:$0xff]
  %v192 = vld [vmem:[%s0 + $0x301] sm:$0xff]
  %v193 = vld [vmem:[%s0 + $0x309] sm:$0xff]
  %v194 = vld [vmem:[%s0 + $0x319] sm:$0xff]
  %v195 = vld [vmem:[%s0 + $0x321] sm:$0xff]
  %v196 = vpack.c.bf16 %v133, %v132
  %v197 = vpack.c.bf16 %v135, %v134
  %v198 = vpack.c.bf16 %v137, %v136
  %v199 = vpack.c.bf16 %v139, %v138
  %v200 = vpack.c.bf16 %v141, %v140
  %v201 = vpack.c.bf16 %v143, %v142
  %v202 = vpack.c.bf16 %v145, %v144
  %v203 = vpack.c.bf16 %v147, %v146
  %v204 = vpack.c.bf16 %v149, %v148
  %v205 = vpack.c.bf16 %v151, %v150
  %v206 = vpack.c.bf16 %v153, %v152
  %v207 = vpack.c.bf16 %v155, %v154
  %v208 = vpack.c.bf16 %v157, %v156
  %v209 = vpack.c.bf16 %v159, %v158
  %v210 = vpack.c.bf16 %v161, %v160
  %v211 = vpack.c.bf16 %v163, %v162
  %v212 = vpack.c.bf16 %v165, %v164
  %v213 = vpack.c.bf16 %v167, %v166
  %v214 = vpack.c.bf16 %v169, %v168
  %v215 = vpack.c.bf16 %v171, %v170
  %v216 = vpack.c.bf16 %v173, %v172
  %v217 = vpack.c.bf16 %v175, %v174
  %v218 = vpack.c.bf16 %v177, %v176
  %v219 = vpack.c.bf16 %v179, %v178
  %v220 = vpack.c.bf16 %v181, %v180
  %v221 = vpack.c.bf16 %v183, %v182
  %v222 = vpack.c.bf16 %v185, %v184
  %v223 = vpack.c.bf16 %v187, %v186
  %v224 = vpack.c.bf16 %v189, %v188
  %v225 = vpack.c.bf16 %v191, %v190
  %v226 = vpack.c.bf16 %v193, %v192
  %v227 = vpack.c.bf16 %v195, %v194
  %s228 = scalar_lea.vmem %s1, 64
  %v229 = vld [vmem:[%s228] sm:$0xf]
  %v230 = vld [vmem:[%s228 + $0x4] sm:$0xf]
  %v231 = vld [vmem:[%s228 + $0x8] sm:$0xf]
  %v232 = vld [vmem:[%s228 + $0xc] sm:$0xf]
  %v233 = vld [vmem:[%s228 + $0x10] sm:$0xf]
  %v234 = vld [vmem:[%s228 + $0x14] sm:$0xf]
  %v235 = vld [vmem:[%s228 + $0x18] sm:$0xf]
  %v236 = vld [vmem:[%s228 + $0x1c] sm:$0xf]
  %v237 = vld [vmem:[%s228 + $0x20] sm:$0xf]
  %v238 = vld [vmem:[%s228 + $0x24] sm:$0xf]
  %v239 = vld [vmem:[%s228 + $0x28] sm:$0xf]
  %v240 = vld [vmem:[%s228 + $0x2c] sm:$0xf]
  %v241 = vld [vmem:[%s228 + $0x30] sm:$0xf]
  %v242 = vld [vmem:[%s228 + $0x34] sm:$0xf]
  %v243 = vld [vmem:[%s228 + $0x38] sm:$0xf]
  %v244 = vld [vmem:[%s228 + $0x3c] sm:$0xf]
  %v261 = vunpack.c.l.b16 %v229
  %v262 = vunpack.c.l.b16 %v230
  %v263 = vunpack.c.l.b16 %v231
  %v264 = vunpack.c.l.b16 %v232
  %v265 = vunpack.c.l.b16 %v233
  %v266 = vunpack.c.l.b16 %v234
  %v267 = vunpack.c.l.b16 %v235
  %v268 = vunpack.c.l.b16 %v236
  %v269 = vunpack.c.l.b16 %v237
  %v270 = vunpack.c.l.b16 %v238
  %v271 = vunpack.c.l.b16 %v239
  %v272 = vunpack.c.l.b16 %v240
  %v273 = vunpack.c.l.b16 %v241
  %v274 = vunpack.c.l.b16 %v242
  %v275 = vunpack.c.l.b16 %v243
  %v276 = vunpack.c.l.b16 %v244
  %v277 = vpack.c.b16 %v262, %v261
  %v278 = vpack.c.b16 %v264, %v263
  %v279 = vpack.c.b16 %v266, %v265
  %v280 = vpack.c.b16 %v268, %v267
  %v281 = vpack.c.b16 %v270, %v269
  %v282 = vpack.c.b16 %v272, %v271
  %v283 = vpack.c.b16 %v274, %v273
  %v284 = vpack.c.b16 %v276, %v275
  %293 = vmatpush.bf16.msra.mxu0 %v284
  %294 = vmatpush.bf16.msra.mxu0 %v283
  %295 = vmatpush.bf16.msra.mxu0 %v282
  %296 = vmatpush.bf16.msra.mxu0 %v281
  %297 = vmatpush.bf16.msra.mxu0 %v280
  %298 = vmatpush.bf16.msra.mxu0 %v279
  %299 = vmatpush.bf16.msra.mxu0 %v278
  %300 = vmatpush.bf16.msra.mxu0 %v277
  %301 = vmatmul.bf16.gmra.mxu0 %v196
  %v302 = vpop.f32.mrf.mxu0
  %v303 = vadd.f32 0.0, %v302
  %v304 = vpop.f32.mrf.mxu0
  %v305 = vadd.f32 0.0, %v304
  %306 = vmatmul.bf16.gmra.mxu0 %v197
  %v307 = vpop.f32.mrf.mxu0
  %v308 = vadd.f32 0.0, %v307
  %v309 = vpop.f32.mrf.mxu0
  %v310 = vadd.f32 0.0, %v309
  %311 = vmatmul.bf16.gmra.mxu0 %v198
  %v312 = vpop.f32.mrf.mxu0
  %v313 = vadd.f32 0.0, %v312
  %v314 = vpop.f32.mrf.mxu0
  %v315 = vadd.f32 0.0, %v314
  %316 = vmatmul.bf16.gmra.mxu0 %v199
  %v317 = vpop.f32.mrf.mxu0
  %v318 = vadd.f32 0.0, %v317
  %v319 = vpop.f32.mrf.mxu0
  %v320 = vadd.f32 0.0, %v319
  %321 = vmatmul.bf16.gmra.mxu0 %v200
  %v322 = vpop.f32.mrf.mxu0
  %v323 = vadd.f32 0.0, %v322
  %v324 = vpop.f32.mrf.mxu0
  %v325 = vadd.f32 0.0, %v324
  %326 = vmatmul.bf16.gmra.mxu0 %v201
  %v327 = vpop.f32.mrf.mxu0
  %v328 = vadd.f32 0.0, %v327
  %v329 = vpop.f32.mrf.mxu0
  %v330 = vadd.f32 0.0, %v329
  %331 = vmatmul.bf16.gmra.mxu0 %v202
  %v332 = vpop.f32.mrf.mxu0
  %v333 = vadd.f32 0.0, %v332
  %v334 = vpop.f32.mrf.mxu0
  %v335 = vadd.f32 0.0, %v334
  %336 = vmatmul.bf16.gmra.mxu0 %v203
  %v337 = vpop.f32.mrf.mxu0
  %v338 = vadd.f32 0.0, %v337
  %v339 = vpop.f32.mrf.mxu0
  %v340 = vadd.f32 0.0, %v339
  %341 = vmatmul.bf16.gmra.mxu0 %v204
  %v342 = vpop.f32.mrf.mxu0
  %v343 = vadd.f32 0.0, %v342
  %v344 = vpop.f32.mrf.mxu0
  %v345 = vadd.f32 0.0, %v344
  %346 = vmatmul.bf16.gmra.mxu0 %v205
  %v347 = vpop.f32.mrf.mxu0
  %v348 = vadd.f32 0.0, %v347
  %v349 = vpop.f32.mrf.mxu0
  %v350 = vadd.f32 0.0, %v349
  %351 = vmatmul.bf16.gmra.mxu0 %v206
  %v352 = vpop.f32.mrf.mxu0
  %v353 = vadd.f32 0.0, %v352
  %v354 = vpop.f32.mrf.mxu0
  %v355 = vadd.f32 0.0, %v354
  %356 = vmatmul.bf16.gmra.mxu0 %v207
  %v357 = vpop.f32.mrf.mxu0
  %v358 = vadd.f32 0.0, %v357
  %v359 = vpop.f32.mrf.mxu0
  %v360 = vadd.f32 0.0, %v359
  %361 = vmatmul.bf16.gmra.mxu0 %v208
  %v362 = vpop.f32.mrf.mxu0
  %v363 = vadd.f32 0.0, %v362
  %v364 = vpop.f32.mrf.mxu0
  %v365 = vadd.f32 0.0, %v364
  %366 = vmatmul.bf16.gmra.mxu0 %v209
  %v367 = vpop.f32.mrf.mxu0
  %v368 = vadd.f32 0.0, %v367
  %v369 = vpop.f32.mrf.mxu0
  %v370 = vadd.f32 0.0, %v369
  %371 = vmatmul.bf16.gmra.mxu0 %v210
  %v372 = vpop.f32.mrf.mxu0
  %v373 = vadd.f32 0.0, %v372
  %v374 = vpop.f32.mrf.mxu0
  %v375 = vadd.f32 0.0, %v374
  %376 = vmatmul.bf16.gmra.mxu0 %v211
  %v377 = vpop.f32.mrf.mxu0
  %v378 = vadd.f32 0.0, %v377
  %v379 = vpop.f32.mrf.mxu0
  %v380 = vadd.f32 0.0, %v379
  %381 = vmatmul.bf16.gmra.mxu0 %v212
  %v382 = vpop.f32.mrf.mxu0
  %v383 = vadd.f32 0.0, %v382
  %v384 = vpop.f32.mrf.mxu0
  %v385 = vadd.f32 0.0, %v384
  %386 = vmatmul.bf16.gmra.mxu0 %v213
  %v387 = vpop.f32.mrf.mxu0
  %v388 = vadd.f32 0.0, %v387
  %v389 = vpop.f32.mrf.mxu0
  %v390 = vadd.f32 0.0, %v389
  %391 = vmatmul.bf16.gmra.mxu0 %v214
  %v392 = vpop.f32.mrf.mxu0
  %v393 = vadd.f32 0.0, %v392
  %v394 = vpop.f32.mrf.mxu0
  %v395 = vadd.f32 0.0, %v394
  %396 = vmatmul.bf16.gmra.mxu0 %v215
  %v397 = vpop.f32.mrf.mxu0
  %v398 = vadd.f32 0.0, %v397
  %v399 = vpop.f32.mrf.mxu0
  %v400 = vadd.f32 0.0, %v399
  %401 = vmatmul.bf16.gmra.mxu0 %v216
  %v402 = vpop.f32.mrf.mxu0
  %v403 = vadd.f32 0.0, %v402
  %v404 = vpop.f32.mrf.mxu0
  %v405 = vadd.f32 0.0, %v404
  %406 = vmatmul.bf16.gmra.mxu0 %v217
  %v407 = vpop.f32.mrf.mxu0
  %v408 = vadd.f32 0.0, %v407
  %v409 = vpop.f32.mrf.mxu0
  %v410 = vadd.f32 0.0, %v409
  %411 = vmatmul.bf16.gmra.mxu0 %v218
  %v412 = vpop.f32.mrf.mxu0
  %v413 = vadd.f32 0.0, %v412
  %v414 = vpop.f32.mrf.mxu0
  %v415 = vadd.f32 0.0, %v414
  %416 = vmatmul.bf16.gmra.mxu0 %v219
  %v417 = vpop.f32.mrf.mxu0
  %v418 = vadd.f32 0.0, %v417
  %v419 = vpop.f32.mrf.mxu0
  %v420 = vadd.f32 0.0, %v419
  %421 = vmatmul.bf16.gmra.mxu0 %v220
  %v422 = vpop.f32.mrf.mxu0
  %v423 = vadd.f32 0.0, %v422
  %v424 = vpop.f32.mrf.mxu0
  %v425 = vadd.f32 0.0, %v424
  %426 = vmatmul.bf16.gmra.mxu0 %v221
  %v427 = vpop.f32.mrf.mxu0
  %v428 = vadd.f32 0.0, %v427
  %v429 = vpop.f32.mrf.mxu0
  %v430 = vadd.f32 0.0, %v429
  %431 = vmatmul.bf16.gmra.mxu0 %v222
  %v432 = vpop.f32.mrf.mxu0
  %v433 = vadd.f32 0.0, %v432
  %v434 = vpop.f32.mrf.mxu0
  %v435 = vadd.f32 0.0, %v434
  %436 = vmatmul.bf16.gmra.mxu0 %v223
  %v437 = vpop.f32.mrf.mxu0
  %v438 = vadd.f32 0.0, %v437
  %v439 = vpop.f32.mrf.mxu0
  %v440 = vadd.f32 0.0, %v439
  %441 = vmatmul.bf16.gmra.mxu0 %v224
  %v442 = vpop.f32.mrf.mxu0
  %v443 = vadd.f32 0.0, %v442
  %v444 = vpop.f32.mrf.mxu0
  %v445 = vadd.f32 0.0, %v444
  %446 = vmatmul.bf16.gmra.mxu0 %v225
  %v447 = vpop.f32.mrf.mxu0
  %v448 = vadd.f32 0.0, %v447
  %v449 = vpop.f32.mrf.mxu0
  %v450 = vadd.f32 0.0, %v449
  %451 = vmatmul.bf16.gmra.mxu0 %v226
  %v452 = vpop.f32.mrf.mxu0
  %v453 = vadd.f32 0.0, %v452
  %v454 = vpop.f32.mrf.mxu0
  %v455 = vadd.f32 0.0, %v454
  %456 = vmatmul.bf16.gmra.mxu0 %v227
  %v457 = vpop.f32.mrf.mxu0
  %v458 = vadd.f32 0.0, %v457
  %v459 = vpop.f32.mrf.mxu0
  %v460 = vadd.f32 0.0, %v459
  %461 = vdwg.mxu0
  %v478 = vunpack.c.l.b16 %v116
  %v479 = vunpack.c.l.b16 %v117
  %v480 = vunpack.c.l.b16 %v118
  %v481 = vunpack.c.l.b16 %v119
  %v482 = vunpack.c.l.b16 %v120
  %v483 = vunpack.c.l.b16 %v121
  %v484 = vunpack.c.l.b16 %v122
  %v485 = vunpack.c.l.b16 %v123
  %v486 = vunpack.c.l.b16 %v124
  %v487 = vunpack.c.l.b16 %v125
  %v488 = vunpack.c.l.b16 %v126
  %v489 = vunpack.c.l.b16 %v127
  %v490 = vunpack.c.l.b16 %v128
  %v491 = vunpack.c.l.b16 %v129
  %v492 = vunpack.c.l.b16 %v130
  %v493 = vunpack.c.l.b16 %v131
  %v494 = vpack.c.b16 %v479, %v478
  %v495 = vpack.c.b16 %v481, %v480
  %v496 = vpack.c.b16 %v483, %v482
  %v497 = vpack.c.b16 %v485, %v484
  %v498 = vpack.c.b16 %v487, %v486
  %v499 = vpack.c.b16 %v489, %v488
  %v500 = vpack.c.b16 %v491, %v490
  %v501 = vpack.c.b16 %v493, %v492
  %510 = vmatpush.bf16.msra.mxu0 %v501
  %511 = vmatpush.bf16.msra.mxu0 %v500
  %512 = vmatpush.bf16.msra.mxu0 %v499
  %513 = vmatpush.bf16.msra.mxu0 %v498
  %514 = vmatpush.bf16.msra.mxu0 %v497
  %515 = vmatpush.bf16.msra.mxu0 %v496
  %516 = vmatpush.bf16.msra.mxu0 %v495
  %517 = vmatpush.bf16.msra.mxu0 %v494
  %518 = vmatmul.bf16.gmra.mxu0 %v84
  %v519 = vpop.f32.mrf.mxu0
  %v520 = vadd.f32 %v303, %v519
  %v521 = vpop.f32.mrf.mxu0
  %v522 = vadd.f32 %v305, %v521
  %523 = vmatmul.bf16.gmra.mxu0 %v85
  %v524 = vpop.f32.mrf.mxu0
  %v525 = vadd.f32 %v308, %v524
  %v526 = vpop.f32.mrf.mxu0
  %v527 = vadd.f32 %v310, %v526
  %528 = vmatmul.bf16.gmra.mxu0 %v86
  %v529 = vpop.f32.mrf.mxu0
  %v530 = vadd.f32 %v313, %v529
  %v531 = vpop.f32.mrf.mxu0
  %v532 = vadd.f32 %v315, %v531
  %533 = vmatmul.bf16.gmra.mxu0 %v87
  %v534 = vpop.f32.mrf.mxu0
  %v535 = vadd.f32 %v318, %v534
  %v536 = vpop.f32.mrf.mxu0
  %v537 = vadd.f32 %v320, %v536
  %538 = vmatmul.bf16.gmra.mxu0 %v88
  %v539 = vpop.f32.mrf.mxu0
  %v540 = vadd.f32 %v323, %v539
  %v541 = vpop.f32.mrf.mxu0
  %v542 = vadd.f32 %v325, %v541
  %543 = vmatmul.bf16.gmra.mxu0 %v89
  %v544 = vpop.f32.mrf.mxu0
  %v545 = vadd.f32 %v328, %v544
  %v546 = vpop.f32.mrf.mxu0
  %v547 = vadd.f32 %v330, %v546
  %548 = vmatmul.bf16.gmra.mxu0 %v90
  %v549 = vpop.f32.mrf.mxu0
  %v550 = vadd.f32 %v333, %v549
  %v551 = vpop.f32.mrf.mxu0
  %v552 = vadd.f32 %v335, %v551
  %553 = vmatmul.bf16.gmra.mxu0 %v91
  %v554 = vpop.f32.mrf.mxu0
  %v555 = vadd.f32 %v338, %v554
  %v556 = vpop.f32.mrf.mxu0
  %v557 = vadd.f32 %v340, %v556
  %558 = vmatmul.bf16.gmra.mxu0 %v92
  %v559 = vpop.f32.mrf.mxu0
  %v560 = vadd.f32 %v343, %v559
  %v561 = vpop.f32.mrf.mxu0
  %v562 = vadd.f32 %v345, %v561
  %563 = vmatmul.bf16.gmra.mxu0 %v93
  %v564 = vpop.f32.mrf.mxu0
  %v565 = vadd.f32 %v348, %v564
  %v566 = vpop.f32.mrf.mxu0
  %v567 = vadd.f32 %v350, %v566
  %568 = vmatmul.bf16.gmra.mxu0 %v94
  %v569 = vpop.f32.mrf.mxu0
  %v570 = vadd.f32 %v353, %v569
  %v571 = vpop.f32.mrf.mxu0
  %v572 = vadd.f32 %v355, %v571
  %573 = vmatmul.bf16.gmra.mxu0 %v95
  %v574 = vpop.f32.mrf.mxu0
  %v575 = vadd.f32 %v358, %v574
  %v576 = vpop.f32.mrf.mxu0
  %v577 = vadd.f32 %v360, %v576
  %578 = vmatmul.bf16.gmra.mxu0 %v96
  %v579 = vpop.f32.mrf.mxu0
  %v580 = vadd.f32 %v363, %v579
  %v581 = vpop.f32.mrf.mxu0
  %v582 = vadd.f32 %v365, %v581
  %583 = vmatmul.bf16.gmra.mxu0 %v97
  %v584 = vpop.f32.mrf.mxu0
  %v585 = vadd.f32 %v368, %v584
  %v586 = vpop.f32.mrf.mxu0
  %v587 = vadd.f32 %v370, %v586
  %588 = vmatmul.bf16.gmra.mxu0 %v98
  %v589 = vpop.f32.mrf.mxu0
  %v590 = vadd.f32 %v373, %v589
  %v591 = vpop.f32.mrf.mxu0
  %v592 = vadd.f32 %v375, %v591
  %593 = vmatmul.bf16.gmra.mxu0 %v99
  %v594 = vpop.f32.mrf.mxu0
  %v595 = vadd.f32 %v378, %v594
  %v596 = vpop.f32.mrf.mxu0
  %v597 = vadd.f32 %v380, %v596
  %598 = vmatmul.bf16.gmra.mxu0 %v100
  %v599 = vpop.f32.mrf.mxu0
  %v600 = vadd.f32 %v383, %v599
  %v601 = vpop.f32.mrf.mxu0
  %v602 = vadd.f32 %v385, %v601
  %603 = vmatmul.bf16.gmra.mxu0 %v101
  %v604 = vpop.f32.mrf.mxu0
  %v605 = vadd.f32 %v388, %v604
  %v606 = vpop.f32.mrf.mxu0
  %v607 = vadd.f32 %v390, %v606
  %608 = vmatmul.bf16.gmra.mxu0 %v102
  %v609 = vpop.f32.mrf.mxu0
  %v610 = vadd.f32 %v393, %v609
  %v611 = vpop.f32.mrf.mxu0
  %v612 = vadd.f32 %v395, %v611
  %613 = vmatmul.bf16.gmra.mxu0 %v103
  %v614 = vpop.f32.mrf.mxu0
  %v615 = vadd.f32 %v398, %v614
  %v616 = vpop.f32.mrf.mxu0
  %v617 = vadd.f32 %v400, %v616
  %618 = vmatmul.bf16.gmra.mxu0 %v104
  %v619 = vpop.f32.mrf.mxu0
  %v620 = vadd.f32 %v403, %v619
  %v621 = vpop.f32.mrf.mxu0
  %v622 = vadd.f32 %v405, %v621
  %623 = vmatmul.bf16.gmra.mxu0 %v105
  %v624 = vpop.f32.mrf.mxu0
  %v625 = vadd.f32 %v408, %v624
  %v626 = vpop.f32.mrf.mxu0
  %v627 = vadd.f32 %v410, %v626
  %628 = vmatmul.bf16.gmra.mxu0 %v106
  %v629 = vpop.f32.mrf.mxu0
  %v630 = vadd.f32 %v413, %v629
  %v631 = vpop.f32.mrf.mxu0
  %v632 = vadd.f32 %v415, %v631
  %633 = vmatmul.bf16.gmra.mxu0 %v107
  %v634 = vpop.f32.mrf.mxu0
  %v635 = vadd.f32 %v418, %v634
  %v636 = vpop.f32.mrf.mxu0
  %v637 = vadd.f32 %v420, %v636
  %638 = vmatmul.bf16.gmra.mxu0 %v108
  %v639 = vpop.f32.mrf.mxu0
  %v640 = vadd.f32 %v423, %v639
  %v641 = vpop.f32.mrf.mxu0
  %v642 = vadd.f32 %v425, %v641
  %643 = vmatmul.bf16.gmra.mxu0 %v109
  %v644 = vpop.f32.mrf.mxu0
  %v645 = vadd.f32 %v428, %v644
  %v646 = vpop.f32.mrf.mxu0
  %v647 = vadd.f32 %v430, %v646
  %648 = vmatmul.bf16.gmra.mxu0 %v110
  %v649 = vpop.f32.mrf.mxu0
  %v650 = vadd.f32 %v433, %v649
  %v651 = vpop.f32.mrf.mxu0
  %v652 = vadd.f32 %v435, %v651
  %653 = vmatmul.bf16.gmra.mxu0 %v111
  %v654 = vpop.f32.mrf.mxu0
  %v655 = vadd.f32 %v438, %v654
  %v656 = vpop.f32.mrf.mxu0
  %v657 = vadd.f32 %v440, %v656
  %658 = vmatmul.bf16.gmra.mxu0 %v112
  %v659 = vpop.f32.mrf.mxu0
  %v660 = vadd.f32 %v443, %v659
  %v661 = vpop.f32.mrf.mxu0
  %v662 = vadd.f32 %v445, %v661
  %663 = vmatmul.bf16.gmra.mxu0 %v113
  %v664 = vpop.f32.mrf.mxu0
  %v665 = vadd.f32 %v448, %v664
  %v666 = vpop.f32.mrf.mxu0
  %v667 = vadd.f32 %v450, %v666
  %668 = vmatmul.bf16.gmra.mxu0 %v114
  %v669 = vpop.f32.mrf.mxu0
  %v670 = vadd.f32 %v453, %v669
  %v671 = vpop.f32.mrf.mxu0
  %v672 = vadd.f32 %v455, %v671
  %673 = vmatmul.bf16.gmra.mxu0 %v115
  %v674 = vpop.f32.mrf.mxu0
  %v675 = vadd.f32 %v458, %v674
  %v676 = vpop.f32.mrf.mxu0
  %v677 = vadd.f32 %v460, %v676
  %678 = vdwg.mxu0
  %v679 = vld [vmem:[%s0 + $0x2] sm:$0xff]
  %v680 = vld [vmem:[%s0 + $0xa] sm:$0xff]
  %v681 = vld [vmem:[%s0 + $0x1a] sm:$0xff]
  %v682 = vld [vmem:[%s0 + $0x22] sm:$0xff]
  %v683 = vld [vmem:[%s0 + $0x32] sm:$0xff]
  %v684 = vld [vmem:[%s0 + $0x3a] sm:$0xff]
  %v685 = vld [vmem:[%s0 + $0x4a] sm:$0xff]
  %v686 = vld [vmem:[%s0 + $0x52] sm:$0xff]
  %v687 = vld [vmem:[%s0 + $0x62] sm:$0xff]
  %v688 = vld [vmem:[%s0 + $0x6a] sm:$0xff]
  %v689 = vld [vmem:[%s0 + $0x7a] sm:$0xff]
  %v690 = vld [vmem:[%s0 + $0x82] sm:$0xff]
  %v691 = vld [vmem:[%s0 + $0x92] sm:$0xff]
  %v692 = vld [vmem:[%s0 + $0x9a] sm:$0xff]
  %v693 = vld [vmem:[%s0 + $0xaa] sm:$0xff]
  %v694 = vld [vmem:[%s0 + $0xb2] sm:$0xff]
  %v695 = vld [vmem:[%s0 + $0xc2] sm:$0xff]
  %v696 = vld [vmem:[%s0 + $0xca] sm:$0xff]
  %v697 = vld [vmem:[%s0 + $0xda] sm:$0xff]
  %v698 = vld [vmem:[%s0 + $0xe2] sm:$0xff]
  %v699 = vld [vmem:[%s0 + $0xf2] sm:$0xff]
  %v700 = vld [vmem:[%s0 + $0xfa] sm:$0xff]
  %v701 = vld [vmem:[%s0 + $0x10a] sm:$0xff]
  %v702 = vld [vmem:[%s0 + $0x112] sm:$0xff]
  %v703 = vld [vmem:[%s0 + $0x122] sm:$0xff]
  %v704 = vld [vmem:[%s0 + $0x12a] sm:$0xff]
  %v705 = vld [vmem:[%s0 + $0x13a] sm:$0xff]
  %v706 = vld [vmem:[%s0 + $0x142] sm:$0xff]
  %v707 = vld [vmem:[%s0 + $0x152] sm:$0xff]
  %v708 = vld [vmem:[%s0 + $0x15a] sm:$0xff]
  %v709 = vld [vmem:[%s0 + $0x16a] sm:$0xff]
  %v710 = vld [vmem:[%s0 + $0x172] sm:$0xff]
  %v711 = vld [vmem:[%s0 + $0x1b2] sm:$0xff]
  %v712 = vld [vmem:[%s0 + $0x1ba] sm:$0xff]
  %v713 = vld [vmem:[%s0 + $0x1ca] sm:$0xff]
  %v714 = vld [vmem:[%s0 + $0x1d2] sm:$0xff]
  %v715 = vld [vmem:[%s0 + $0x1e2] sm:$0xff]
  %v716 = vld [vmem:[%s0 + $0x1ea] sm:$0xff]
  %v717 = vld [vmem:[%s0 + $0x1fa] sm:$0xff]
  %v718 = vld [vmem:[%s0 + $0x202] sm:$0xff]
  %v719 = vld [vmem:[%s0 + $0x212] sm:$0xff]
  %v720 = vld [vmem:[%s0 + $0x21a] sm:$0xff]
  %v721 = vld [vmem:[%s0 + $0x22a] sm:$0xff]
  %v722 = vld [vmem:[%s0 + $0x232] sm:$0xff]
  %v723 = vld [vmem:[%s0 + $0x242] sm:$0xff]
  %v724 = vld [vmem:[%s0 + $0x24a] sm:$0xff]
  %v725 = vld [vmem:[%s0 + $0x25a] sm:$0xff]
  %v726 = vld [vmem:[%s0 + $0x262] sm:$0xff]
  %v727 = vld [vmem:[%s0 + $0x272] sm:$0xff]
  %v728 = vld [vmem:[%s0 + $0x27a] sm:$0xff]
  %v729 = vld [vmem:[%s0 + $0x28a] sm:$0xff]
  %v730 = vld [vmem:[%s0 + $0x292] sm:$0xff]
  %v731 = vld [vmem:[%s0 + $0x2a2] sm:$0xff]
  %v732 = vld [vmem:[%s0 + $0x2aa] sm:$0xff]
  %v733 = vld [vmem:[%s0 + $0x2ba] sm:$0xff]
  %v734 = vld [vmem:[%s0 + $0x2c2] sm:$0xff]
  %v735 = vld [vmem:[%s0 + $0x2d2] sm:$0xff]
  %v736 = vld [vmem:[%s0 + $0x2da] sm:$0xff]
  %v737 = vld [vmem:[%s0 + $0x2ea] sm:$0xff]
  %v738 = vld [vmem:[%s0 + $0x2f2] sm:$0xff]
  %v739 = vld [vmem:[%s0 + $0x302] sm:$0xff]
  %v740 = vld [vmem:[%s0 + $0x30a] sm:$0xff]
  %v741 = vld [vmem:[%s0 + $0x31a] sm:$0xff]
  %v742 = vld [vmem:[%s0 + $0x322] sm:$0xff]
  %v743 = vpack.c.bf16 %v680, %v679
  %v744 = vpack.c.bf16 %v682, %v681
  %v745 = vpack.c.bf16 %v684, %v683
  %v746 = vpack.c.bf16 %v686, %v685
  %v747 = vpack.c.bf16 %v688, %v687
  %v748 = vpack.c.bf16 %v690, %v689
  %v749 = vpack.c.bf16 %v692, %v691
  %v750 = vpack.c.bf16 %v694, %v693
  %v751 = vpack.c.bf16 %v696, %v695
  %v752 = vpack.c.bf16 %v698, %v697
  %v753 = vpack.c.bf16 %v700, %v699
  %v754 = vpack.c.bf16 %v702, %v701
  %v755 = vpack.c.bf16 %v704, %v703
  %v756 = vpack.c.bf16 %v706, %v705
  %v757 = vpack.c.bf16 %v708, %v707
  %v758 = vpack.c.bf16 %v710, %v709
  %v759 = vpack.c.bf16 %v712, %v711
  %v760 = vpack.c.bf16 %v714, %v713
  %v761 = vpack.c.bf16 %v716, %v715
  %v762 = vpack.c.bf16 %v718, %v717
  %v763 = vpack.c.bf16 %v720, %v719
  %v764 = vpack.c.bf16 %v722, %v721
  %v765 = vpack.c.bf16 %v724, %v723
  %v766 = vpack.c.bf16 %v726, %v725
  %v767 = vpack.c.bf16 %v728, %v727
  %v768 = vpack.c.bf16 %v730, %v729
  %v769 = vpack.c.bf16 %v732, %v731
  %v770 = vpack.c.bf16 %v734, %v733
  %v771 = vpack.c.bf16 %v736, %v735
  %v772 = vpack.c.bf16 %v738, %v737
  %v773 = vpack.c.bf16 %v740, %v739
  %v774 = vpack.c.bf16 %v742, %v741
  %s775 = scalar_lea.vmem %s1, 128
  %v776 = vld [vmem:[%s775] sm:$0xf]
  %v777 = vld [vmem:[%s775 + $0x4] sm:$0xf]
  %v778 = vld [vmem:[%s775 + $0x8] sm:$0xf]
  %v779 = vld [vmem:[%s775 + $0xc] sm:$0xf]
  %v780 = vld [vmem:[%s775 + $0x10] sm:$0xf]
  %v781 = vld [vmem:[%s775 + $0x14] sm:$0xf]
  %v782 = vld [vmem:[%s775 + $0x18] sm:$0xf]
  %v783 = vld [vmem:[%s775 + $0x1c] sm:$0xf]
  %v784 = vld [vmem:[%s775 + $0x20] sm:$0xf]
  %v785 = vld [vmem:[%s775 + $0x24] sm:$0xf]
  %v786 = vld [vmem:[%s775 + $0x28] sm:$0xf]
  %v787 = vld [vmem:[%s775 + $0x2c] sm:$0xf]
  %v788 = vld [vmem:[%s775 + $0x30] sm:$0xf]
  %v789 = vld [vmem:[%s775 + $0x34] sm:$0xf]
  %v790 = vld [vmem:[%s775 + $0x38] sm:$0xf]
  %v791 = vld [vmem:[%s775 + $0x3c] sm:$0xf]
  %v808 = vunpack.c.l.b16 %v776
  %v809 = vunpack.c.l.b16 %v777
  %v810 = vunpack.c.l.b16 %v778
  %v811 = vunpack.c.l.b16 %v779
  %v812 = vunpack.c.l.b16 %v780
  %v813 = vunpack.c.l.b16 %v781
  %v814 = vunpack.c.l.b16 %v782
  %v815 = vunpack.c.l.b16 %v783
  %v816 = vunpack.c.l.b16 %v784
  %v817 = vunpack.c.l.b16 %v785
  %v818 = vunpack.c.l.b16 %v786
  %v819 = vunpack.c.l.b16 %v787
  %v820 = vunpack.c.l.b16 %v788
  %v821 = vunpack.c.l.b16 %v789
  %v822 = vunpack.c.l.b16 %v790
  %v823 = vunpack.c.l.b16 %v791
  %v824 = vpack.c.b16 %v809, %v808
  %v825 = vpack.c.b16 %v811, %v810
  %v826 = vpack.c.b16 %v813, %v812
  %v827 = vpack.c.b16 %v815, %v814
  %v828 = vpack.c.b16 %v817, %v816
  %v829 = vpack.c.b16 %v819, %v818
  %v830 = vpack.c.b16 %v821, %v820
  %v831 = vpack.c.b16 %v823, %v822
  %840 = vmatpush.bf16.msra.mxu0 %v831
  %841 = vmatpush.bf16.msra.mxu0 %v830
  %842 = vmatpush.bf16.msra.mxu0 %v829
  %843 = vmatpush.bf16.msra.mxu0 %v828
  %844 = vmatpush.bf16.msra.mxu0 %v827
  %845 = vmatpush.bf16.msra.mxu0 %v826
  %846 = vmatpush.bf16.msra.mxu0 %v825
  %847 = vmatpush.bf16.msra.mxu0 %v824
  %848 = vmatmul.bf16.gmra.mxu0 %v743
  %v849 = vpop.f32.mrf.mxu0
  %v850 = vadd.f32 0.0, %v849
  %v851 = vpop.f32.mrf.mxu0
  %v852 = vadd.f32 0.0, %v851
  %853 = vmatmul.bf16.gmra.mxu0 %v744
  %v854 = vpop.f32.mrf.mxu0
  %v855 = vadd.f32 0.0, %v854
  %v856 = vpop.f32.mrf.mxu0
  %v857 = vadd.f32 0.0, %v856
  %858 = vmatmul.bf16.gmra.mxu0 %v745
  %v859 = vpop.f32.mrf.mxu0
  %v860 = vadd.f32 0.0, %v859
  %v861 = vpop.f32.mrf.mxu0
  %v862 = vadd.f32 0.0, %v861
  %863 = vmatmul.bf16.gmra.mxu0 %v746
  %v864 = vpop.f32.mrf.mxu0
  %v865 = vadd.f32 0.0, %v864
  %v866 = vpop.f32.mrf.mxu0
  %v867 = vadd.f32 0.0, %v866
  %868 = vmatmul.bf16.gmra.mxu0 %v747
  %v869 = vpop.f32.mrf.mxu0
  %v870 = vadd.f32 0.0, %v869
  %v871 = vpop.f32.mrf.mxu0
  %v872 = vadd.f32 0.0, %v871
  %873 = vmatmul.bf16.gmra.mxu0 %v748
  %v874 = vpop.f32.mrf.mxu0
  %v875 = vadd.f32 0.0, %v874
  %v876 = vpop.f32.mrf.mxu0
  %v877 = vadd.f32 0.0, %v876
  %878 = vmatmul.bf16.gmra.mxu0 %v749
  %v879 = vpop.f32.mrf.mxu0
  %v880 = vadd.f32 0.0, %v879
  %v881 = vpop.f32.mrf.mxu0
  %v882 = vadd.f32 0.0, %v881
  %883 = vmatmul.bf16.gmra.mxu0 %v750
  %v884 = vpop.f32.mrf.mxu0
  %v885 = vadd.f32 0.0, %v884
  %v886 = vpop.f32.mrf.mxu0
  %v887 = vadd.f32 0.0, %v886
  %888 = vmatmul.bf16.gmra.mxu0 %v751
  %v889 = vpop.f32.mrf.mxu0
  %v890 = vadd.f32 0.0, %v889
  %v891 = vpop.f32.mrf.mxu0
  %v892 = vadd.f32 0.0, %v891
  %893 = vmatmul.bf16.gmra.mxu0 %v752
  %v894 = vpop.f32.mrf.mxu0
  %v895 = vadd.f32 0.0, %v894
  %v896 = vpop.f32.mrf.mxu0
  %v897 = vadd.f32 0.0, %v896
  %898 = vmatmul.bf16.gmra.mxu0 %v753
  %v899 = vpop.f32.mrf.mxu0
  %v900 = vadd.f32 0.0, %v899
  %v901 = vpop.f32.mrf.mxu0
  %v902 = vadd.f32 0.0, %v901
  %903 = vmatmul.bf16.gmra.mxu0 %v754
  %v904 = vpop.f32.mrf.mxu0
  %v905 = vadd.f32 0.0, %v904
  %v906 = vpop.f32.mrf.mxu0
  %v907 = vadd.f32 0.0, %v906
  %908 = vmatmul.bf16.gmra.mxu0 %v755
  %v909 = vpop.f32.mrf.mxu0
  %v910 = vadd.f32 0.0, %v909
  %v911 = vpop.f32.mrf.mxu0
  %v912 = vadd.f32 0.0, %v911
  %913 = vmatmul.bf16.gmra.mxu0 %v756
  %v914 = vpop.f32.mrf.mxu0
  %v915 = vadd.f32 0.0, %v914
  %v916 = vpop.f32.mrf.mxu0
  %v917 = vadd.f32 0.0, %v916
  %918 = vmatmul.bf16.gmra.mxu0 %v757
  %v919 = vpop.f32.mrf.mxu0
  %v920 = vadd.f32 0.0, %v919
  %v921 = vpop.f32.mrf.mxu0
  %v922 = vadd.f32 0.0, %v921
  %923 = vmatmul.bf16.gmra.mxu0 %v758
  %v924 = vpop.f32.mrf.mxu0
  %v925 = vadd.f32 0.0, %v924
  %v926 = vpop.f32.mrf.mxu0
  %v927 = vadd.f32 0.0, %v926
  %928 = vmatmul.bf16.gmra.mxu0 %v759
  %v929 = vpop.f32.mrf.mxu0
  %v930 = vadd.f32 0.0, %v929
  %v931 = vpop.f32.mrf.mxu0
  %v932 = vadd.f32 0.0, %v931
  %933 = vmatmul.bf16.gmra.mxu0 %v760
  %v934 = vpop.f32.mrf.mxu0
  %v935 = vadd.f32 0.0, %v934
  %v936 = vpop.f32.mrf.mxu0
  %v937 = vadd.f32 0.0, %v936
  %938 = vmatmul.bf16.gmra.mxu0 %v761
  %v939 = vpop.f32.mrf.mxu0
  %v940 = vadd.f32 0.0, %v939
  %v941 = vpop.f32.mrf.mxu0
  %v942 = vadd.f32 0.0, %v941
  %943 = vmatmul.bf16.gmra.mxu0 %v762
  %v944 = vpop.f32.mrf.mxu0
  %v945 = vadd.f32 0.0, %v944
  %v946 = vpop.f32.mrf.mxu0
  %v947 = vadd.f32 0.0, %v946
  %948 = vmatmul.bf16.gmra.mxu0 %v763
  %v949 = vpop.f32.mrf.mxu0
  %v950 = vadd.f32 0.0, %v949
  %v951 = vpop.f32.mrf.mxu0
  %v952 = vadd.f32 0.0, %v951
  %953 = vmatmul.bf16.gmra.mxu0 %v764
  %v954 = vpop.f32.mrf.mxu0
  %v955 = vadd.f32 0.0, %v954
  %v956 = vpop.f32.mrf.mxu0
  %v957 = vadd.f32 0.0, %v956
  %958 = vmatmul.bf16.gmra.mxu0 %v765
  %v959 = vpop.f32.mrf.mxu0
  %v960 = vadd.f32 0.0, %v959
  %v961 = vpop.f32.mrf.mxu0
  %v962 = vadd.f32 0.0, %v961
  %963 = vmatmul.bf16.gmra.mxu0 %v766
  %v964 = vpop.f32.mrf.mxu0
  %v965 = vadd.f32 0.0, %v964
  %v966 = vpop.f32.mrf.mxu0
  %v967 = vadd.f32 0.0, %v966
  %968 = vmatmul.bf16.gmra.mxu0 %v767
  %v969 = vpop.f32.mrf.mxu0
  %v970 = vadd.f32 0.0, %v969
  %v971 = vpop.f32.mrf.mxu0
  %v972 = vadd.f32 0.0, %v971
  %973 = vmatmul.bf16.gmra.mxu0 %v768
  %v974 = vpop.f32.mrf.mxu0
  %v975 = vadd.f32 0.0, %v974
  %v976 = vpop.f32.mrf.mxu0
  %v977 = vadd.f32 0.0, %v976
  %978 = vmatmul.bf16.gmra.mxu0 %v769
  %v979 = vpop.f32.mrf.mxu0
  %v980 = vadd.f32 0.0, %v979
  %v981 = vpop.f32.mrf.mxu0
  %v982 = vadd.f32 0.0, %v981
  %983 = vmatmul.bf16.gmra.mxu0 %v770
  %v984 = vpop.f32.mrf.mxu0
  %v985 = vadd.f32 0.0, %v984
  %v986 = vpop.f32.mrf.mxu0
  %v987 = vadd.f32 0.0, %v986
  %988 = vmatmul.bf16.gmra.mxu0 %v771
  %v989 = vpop.f32.mrf.mxu0
  %v990 = vadd.f32 0.0, %v989
  %v991 = vpop.f32.mrf.mxu0
  %v992 = vadd.f32 0.0, %v991
  %993 = vmatmul.bf16.gmra.mxu0 %v772
  %v994 = vpop.f32.mrf.mxu0
  %v995 = vadd.f32 0.0, %v994
  %v996 = vpop.f32.mrf.mxu0
  %v997 = vadd.f32 0.0, %v996
  %998 = vmatmul.bf16.gmra.mxu0 %v773
  %v999 = vpop.f32.mrf.mxu0
  %v1000 = vadd.f32 0.0, %v999
  %v1001 = vpop.f32.mrf.mxu0
  %v1002 = vadd.f32 0.0, %v1001
  %1003 = vmatmul.bf16.gmra.mxu0 %v774
  %v1004 = vpop.f32.mrf.mxu0
  %v1005 = vadd.f32 0.0, %v1004
  %v1006 = vpop.f32.mrf.mxu0
  %v1007 = vadd.f32 0.0, %v1006
  %1008 = vdwg.mxu0
  %v1009 = vadd.f32 %v520, %v850
  %v1010 = vadd.f32 %v522, %v852
  %v1011 = vadd.f32 %v525, %v855
  %v1012 = vadd.f32 %v527, %v857
  %v1013 = vadd.f32 %v530, %v860
  %v1014 = vadd.f32 %v532, %v862
  %v1015 = vadd.f32 %v535, %v865
  %v1016 = vadd.f32 %v537, %v867
  %v1017 = vadd.f32 %v540, %v870
  %v1018 = vadd.f32 %v542, %v872
  %v1019 = vadd.f32 %v545, %v875
  %v1020 = vadd.f32 %v547, %v877
  %v1021 = vadd.f32 %v550, %v880
  %v1022 = vadd.f32 %v552, %v882
  %v1023 = vadd.f32 %v555, %v885
  %v1024 = vadd.f32 %v557, %v887
  %v1025 = vadd.f32 %v560, %v890
  %v1026 = vadd.f32 %v562, %v892
  %v1027 = vadd.f32 %v565, %v895
  %v1028 = vadd.f32 %v567, %v897
  %v1029 = vadd.f32 %v570, %v900
  %v1030 = vadd.f32 %v572, %v902
  %v1031 = vadd.f32 %v575, %v905
  %v1032 = vadd.f32 %v577, %v907
  %v1033 = vadd.f32 %v580, %v910
  %v1034 = vadd.f32 %v582, %v912
  %v1035 = vadd.f32 %v585, %v915
  %v1036 = vadd.f32 %v587, %v917
  %v1037 = vadd.f32 %v590, %v920
  %v1038 = vadd.f32 %v592, %v922
  %v1039 = vadd.f32 %v595, %v925
  %v1040 = vadd.f32 %v597, %v927
  %v1041 = vadd.f32 %v600, %v930
  %v1042 = vadd.f32 %v602, %v932
  %v1043 = vadd.f32 %v605, %v935
  %v1044 = vadd.f32 %v607, %v937
  %v1045 = vadd.f32 %v610, %v940
  %v1046 = vadd.f32 %v612, %v942
  %v1047 = vadd.f32 %v615, %v945
  %v1048 = vadd.f32 %v617, %v947
  %v1049 = vadd.f32 %v620, %v950
  %v1050 = vadd.f32 %v622, %v952
  %v1051 = vadd.f32 %v625, %v955
  %v1052 = vadd.f32 %v627, %v957
  %v1053 = vadd.f32 %v630, %v960
  %v1054 = vadd.f32 %v632, %v962
  %v1055 = vadd.f32 %v635, %v965
  %v1056 = vadd.f32 %v637, %v967
  %v1057 = vadd.f32 %v640, %v970
  %v1058 = vadd.f32 %v642, %v972
  %v1059 = vadd.f32 %v645, %v975
  %v1060 = vadd.f32 %v647, %v977
  %v1061 = vadd.f32 %v650, %v980
  %v1062 = vadd.f32 %v652, %v982
  %v1063 = vadd.f32 %v655, %v985
  %v1064 = vadd.f32 %v657, %v987
  %v1065 = vadd.f32 %v660, %v990
  %v1066 = vadd.f32 %v662, %v992
  %v1067 = vadd.f32 %v665, %v995
  %v1068 = vadd.f32 %v667, %v997
  %v1069 = vadd.f32 %v670, %v1000
  %v1070 = vadd.f32 %v672, %v1002
  %v1071 = vadd.f32 %v675, %v1005
  %v1072 = vadd.f32 %v677, %v1007
  %s1073 = scalar_lea.vmem %s0, 24
  %v1074 = vld [vmem:[%s1073] sm:$0xff]
  %v1075 = vld [vmem:[%s1073 + $0x8] sm:$0xff]
  %v1076 = vld [vmem:[%s1073 + $0x18] sm:$0xff]
  %v1077 = vld [vmem:[%s1073 + $0x20] sm:$0xff]
  %v1078 = vld [vmem:[%s1073 + $0x30] sm:$0xff]
  %v1079 = vld [vmem:[%s1073 + $0x38] sm:$0xff]
  %v1080 = vld [vmem:[%s1073 + $0x48] sm:$0xff]
  %v1081 = vld [vmem:[%s1073 + $0x50] sm:$0xff]
  %v1082 = vld [vmem:[%s1073 + $0x60] sm:$0xff]
  %v1083 = vld [vmem:[%s1073 + $0x68] sm:$0xff]
  %v1084 = vld [vmem:[%s1073 + $0x78] sm:$0xff]
  %v1085 = vld [vmem:[%s1073 + $0x80] sm:$0xff]
  %v1086 = vld [vmem:[%s1073 + $0x90] sm:$0xff]
  %v1087 = vld [vmem:[%s1073 + $0x98] sm:$0xff]
  %v1088 = vld [vmem:[%s1073 + $0xa8] sm:$0xff]
  %v1089 = vld [vmem:[%s1073 + $0xb0] sm:$0xff]
  %v1090 = vld [vmem:[%s1073 + $0xc0] sm:$0xff]
  %v1091 = vld [vmem:[%s1073 + $0xc8] sm:$0xff]
  %v1092 = vld [vmem:[%s1073 + $0xd8] sm:$0xff]
  %v1093 = vld [vmem:[%s1073 + $0xe0] sm:$0xff]
  %v1094 = vld [vmem:[%s1073 + $0xf0] sm:$0xff]
  %v1095 = vld [vmem:[%s1073 + $0xf8] sm:$0xff]
  %v1096 = vld [vmem:[%s1073 + $0x108] sm:$0xff]
  %v1097 = vld [vmem:[%s1073 + $0x110] sm:$0xff]
  %v1098 = vld [vmem:[%s1073 + $0x120] sm:$0xff]
  %v1099 = vld [vmem:[%s1073 + $0x128] sm:$0xff]
  %v1100 = vld [vmem:[%s1073 + $0x138] sm:$0xff]
  %v1101 = vld [vmem:[%s1073 + $0x140] sm:$0xff]
  %v1102 = vld [vmem:[%s1073 + $0x150] sm:$0xff]
  %v1103 = vld [vmem:[%s1073 + $0x158] sm:$0xff]
  %v1104 = vld [vmem:[%s1073 + $0x168] sm:$0xff]
  %v1105 = vld [vmem:[%s1073 + $0x170] sm:$0xff]
  %v1106 = vld [vmem:[%s1073 + $0x1b0] sm:$0xff]
  %v1107 = vld [vmem:[%s1073 + $0x1b8] sm:$0xff]
  %v1108 = vld [vmem:[%s1073 + $0x1c8] sm:$0xff]
  %v1109 = vld [vmem:[%s1073 + $0x1d0] sm:$0xff]
  %v1110 = vld [vmem:[%s1073 + $0x1e0] sm:$0xff]
  %v1111 = vld [vmem:[%s1073 + $0x1e8] sm:$0xff]
  %v1112 = vld [vmem:[%s1073 + $0x1f8] sm:$0xff]
  %v1113 = vld [vmem:[%s1073 + $0x200] sm:$0xff]
  %v1114 = vld [vmem:[%s1073 + $0x210] sm:$0xff]
  %v1115 = vld [vmem:[%s1073 + $0x218] sm:$0xff]
  %v1116 = vld [vmem:[%s1073 + $0x228] sm:$0xff]
  %v1117 = vld [vmem:[%s1073 + $0x230] sm:$0xff]
  %v1118 = vld [vmem:[%s1073 + $0x240] sm:$0xff]
  %v1119 = vld [vmem:[%s1073 + $0x248] sm:$0xff]
  %v1120 = vld [vmem:[%s1073 + $0x258] sm:$0xff]
  %v1121 = vld [vmem:[%s1073 + $0x260] sm:$0xff]
  %v1122 = vld [vmem:[%s1073 + $0x270] sm:$0xff]
  %v1123 = vld [vmem:[%s1073 + $0x278] sm:$0xff]
  %v1124 = vld [vmem:[%s1073 + $0x288] sm:$0xff]
  %v1125 = vld [vmem:[%s1073 + $0x290] sm:$0xff]
  %v1126 = vld [vmem:[%s1073 + $0x2a0] sm:$0xff]
  %v1127 = vld [vmem:[%s1073 + $0x2a8] sm:$0xff]
  %v1128 = vld [vmem:[%s1073 + $0x2b8] sm:$0xff]
  %v1129 = vld [vmem:[%s1073 + $0x2c0] sm:$0xff]
  %v1130 = vld [vmem:[%s1073 + $0x2d0] sm:$0xff]
  %v1131 = vld [vmem:[%s1073 + $0x2d8] sm:$0xff]
  %v1132 = vld [vmem:[%s1073 + $0x2e8] sm:$0xff]
  %v1133 = vld [vmem:[%s1073 + $0x2f0] sm:$0xff]
  %v1134 = vld [vmem:[%s1073 + $0x300] sm:$0xff]
  %v1135 = vld [vmem:[%s1073 + $0x308] sm:$0xff]
  %v1136 = vld [vmem:[%s1073 + $0x318] sm:$0xff]
  %v1137 = vld [vmem:[%s1073 + $0x320] sm:$0xff]
  %v1138 = vpack.c.bf16 %v1075, %v1074
  %v1139 = vpack.c.bf16 %v1077, %v1076
  %v1140 = vpack.c.bf16 %v1079, %v1078
  %v1141 = vpack.c.bf16 %v1081, %v1080
  %v1142 = vpack.c.bf16 %v1083, %v1082
  %v1143 = vpack.c.bf16 %v1085, %v1084
  %v1144 = vpack.c.bf16 %v1087, %v1086
  %v1145 = vpack.c.bf16 %v1089, %v1088
  %v1146 = vpack.c.bf16 %v1091, %v1090
  %v1147 = vpack.c.bf16 %v1093, %v1092
  %v1148 = vpack.c.bf16 %v1095, %v1094
  %v1149 = vpack.c.bf16 %v1097, %v1096
  %v1150 = vpack.c.bf16 %v1099, %v1098
  %v1151 = vpack.c.bf16 %v1101, %v1100
  %v1152 = vpack.c.bf16 %v1103, %v1102
  %v1153 = vpack.c.bf16 %v1105, %v1104
  %v1154 = vpack.c.bf16 %v1107, %v1106
  %v1155 = vpack.c.bf16 %v1109, %v1108
  %v1156 = vpack.c.bf16 %v1111, %v1110
  %v1157 = vpack.c.bf16 %v1113, %v1112
  %v1158 = vpack.c.bf16 %v1115, %v1114
  %v1159 = vpack.c.bf16 %v1117, %v1116
  %v1160 = vpack.c.bf16 %v1119, %v1118
  %v1161 = vpack.c.bf16 %v1121, %v1120
  %v1162 = vpack.c.bf16 %v1123, %v1122
  %v1163 = vpack.c.bf16 %v1125, %v1124
  %v1164 = vpack.c.bf16 %v1127, %v1126
  %v1165 = vpack.c.bf16 %v1129, %v1128
  %v1166 = vpack.c.bf16 %v1131, %v1130
  %v1167 = vpack.c.bf16 %v1133, %v1132
  %v1168 = vpack.c.bf16 %v1135, %v1134
  %v1169 = vpack.c.bf16 %v1137, %v1136
  %s1170 = scalar_lea.vmem %s1, 192
  %v1171 = vld [vmem:[%s1170] sm:$0xf]
  %v1172 = vld [vmem:[%s1170 + $0x4] sm:$0xf]
  %v1173 = vld [vmem:[%s1170 + $0x8] sm:$0xf]
  %v1174 = vld [vmem:[%s1170 + $0xc] sm:$0xf]
  %v1175 = vld [vmem:[%s1170 + $0x10] sm:$0xf]
  %v1176 = vld [vmem:[%s1170 + $0x14] sm:$0xf]
  %v1177 = vld [vmem:[%s1170 + $0x18] sm:$0xf]
  %v1178 = vld [vmem:[%s1170 + $0x1c] sm:$0xf]
  %v1179 = vld [vmem:[%s1170 + $0x20] sm:$0xf]
  %v1180 = vld [vmem:[%s1170 + $0x24] sm:$0xf]
  %v1181 = vld [vmem:[%s1170 + $0x28] sm:$0xf]
  %v1182 = vld [vmem:[%s1170 + $0x2c] sm:$0xf]
  %v1183 = vld [vmem:[%s1170 + $0x30] sm:$0xf]
  %v1184 = vld [vmem:[%s1170 + $0x34] sm:$0xf]
  %v1185 = vld [vmem:[%s1170 + $0x38] sm:$0xf]
  %v1186 = vld [vmem:[%s1170 + $0x3c] sm:$0xf]
  %v1203 = vunpack.c.l.b16 %v1171
  %v1204 = vunpack.c.l.b16 %v1172
  %v1205 = vunpack.c.l.b16 %v1173
  %v1206 = vunpack.c.l.b16 %v1174
  %v1207 = vunpack.c.l.b16 %v1175
  %v1208 = vunpack.c.l.b16 %v1176
  %v1209 = vunpack.c.l.b16 %v1177
  %v1210 = vunpack.c.l.b16 %v1178
  %v1211 = vunpack.c.l.b16 %v1179
  %v1212 = vunpack.c.l.b16 %v1180
  %v1213 = vunpack.c.l.b16 %v1181
  %v1214 = vunpack.c.l.b16 %v1182
  %v1215 = vunpack.c.l.b16 %v1183
  %v1216 = vunpack.c.l.b16 %v1184
  %v1217 = vunpack.c.l.b16 %v1185
  %v1218 = vunpack.c.l.b16 %v1186
  %v1219 = vpack.c.b16 %v1204, %v1203
  %v1220 = vpack.c.b16 %v1206, %v1205
  %v1221 = vpack.c.b16 %v1208, %v1207
  %v1222 = vpack.c.b16 %v1210, %v1209
  %v1223 = vpack.c.b16 %v1212, %v1211
  %v1224 = vpack.c.b16 %v1214, %v1213
  %v1225 = vpack.c.b16 %v1216, %v1215
  %v1226 = vpack.c.b16 %v1218, %v1217
  %1235 = vmatpush.bf16.msra.mxu0 %v1226
  %1236 = vmatpush.bf16.msra.mxu0 %v1225
  %1237 = vmatpush.bf16.msra.mxu0 %v1224
  %1238 = vmatpush.bf16.msra.mxu0 %v1223
  %1239 = vmatpush.bf16.msra.mxu0 %v1222
  %1240 = vmatpush.bf16.msra.mxu0 %v1221
  %1241 = vmatpush.bf16.msra.mxu0 %v1220
  %1242 = vmatpush.bf16.msra.mxu0 %v1219
  %1243 = vmatmul.bf16.gmra.mxu0 %v1138
  %v1244 = vpop.f32.mrf.mxu0
  %v1245 = vadd.f32 0.0, %v1244
  %v1246 = vpop.f32.mrf.mxu0
  %v1247 = vadd.f32 0.0, %v1246
  %1248 = vmatmul.bf16.gmra.mxu0 %v1139
  %v1249 = vpop.f32.mrf.mxu0
  %v1250 = vadd.f32 0.0, %v1249
  %v1251 = vpop.f32.mrf.mxu0
  %v1252 = vadd.f32 0.0, %v1251
  %1253 = vmatmul.bf16.gmra.mxu0 %v1140
  %v1254 = vpop.f32.mrf.mxu0
  %v1255 = vadd.f32 0.0, %v1254
  %v1256 = vpop.f32.mrf.mxu0
  %v1257 = vadd.f32 0.0, %v1256
  %1258 = vmatmul.bf16.gmra.mxu0 %v1141
  %v1259 = vpop.f32.mrf.mxu0
  %v1260 = vadd.f32 0.0, %v1259
  %v1261 = vpop.f32.mrf.mxu0
  %v1262 = vadd.f32 0.0, %v1261
  %1263 = vmatmul.bf16.gmra.mxu0 %v1142
  %v1264 = vpop.f32.mrf.mxu0
  %v1265 = vadd.f32 0.0, %v1264
  %v1266 = vpop.f32.mrf.mxu0
  %v1267 = vadd.f32 0.0, %v1266
  %1268 = vmatmul.bf16.gmra.mxu0 %v1143
  %v1269 = vpop.f32.mrf.mxu0
  %v1270 = vadd.f32 0.0, %v1269
  %v1271 = vpop.f32.mrf.mxu0
  %v1272 = vadd.f32 0.0, %v1271
  %1273 = vmatmul.bf16.gmra.mxu0 %v1144
  %v1274 = vpop.f32.mrf.mxu0
  %v1275 = vadd.f32 0.0, %v1274
  %v1276 = vpop.f32.mrf.mxu0
  %v1277 = vadd.f32 0.0, %v1276
  %1278 = vmatmul.bf16.gmra.mxu0 %v1145
  %v1279 = vpop.f32.mrf.mxu0
  %v1280 = vadd.f32 0.0, %v1279
  %v1281 = vpop.f32.mrf.mxu0
  %v1282 = vadd.f32 0.0, %v1281
  %1283 = vmatmul.bf16.gmra.mxu0 %v1146
  %v1284 = vpop.f32.mrf.mxu0
  %v1285 = vadd.f32 0.0, %v1284
  %v1286 = vpop.f32.mrf.mxu0
  %v1287 = vadd.f32 0.0, %v1286
  %1288 = vmatmul.bf16.gmra.mxu0 %v1147
  %v1289 = vpop.f32.mrf.mxu0
  %v1290 = vadd.f32 0.0, %v1289
  %v1291 = vpop.f32.mrf.mxu0
  %v1292 = vadd.f32 0.0, %v1291
  %1293 = vmatmul.bf16.gmra.mxu0 %v1148
  %v1294 = vpop.f32.mrf.mxu0
  %v1295 = vadd.f32 0.0, %v1294
  %v1296 = vpop.f32.mrf.mxu0
  %v1297 = vadd.f32 0.0, %v1296
  %1298 = vmatmul.bf16.gmra.mxu0 %v1149
  %v1299 = vpop.f32.mrf.mxu0
  %v1300 = vadd.f32 0.0, %v1299
  %v1301 = vpop.f32.mrf.mxu0
  %v1302 = vadd.f32 0.0, %v1301
  %1303 = vmatmul.bf16.gmra.mxu0 %v1150
  %v1304 = vpop.f32.mrf.mxu0
  %v1305 = vadd.f32 0.0, %v1304
  %v1306 = vpop.f32.mrf.mxu0
  %v1307 = vadd.f32 0.0, %v1306
  %1308 = vmatmul.bf16.gmra.mxu0 %v1151
  %v1309 = vpop.f32.mrf.mxu0
  %v1310 = vadd.f32 0.0, %v1309
  %v1311 = vpop.f32.mrf.mxu0
  %v1312 = vadd.f32 0.0, %v1311
  %1313 = vmatmul.bf16.gmra.mxu0 %v1152
  %v1314 = vpop.f32.mrf.mxu0
  %v1315 = vadd.f32 0.0, %v1314
  %v1316 = vpop.f32.mrf.mxu0
  %v1317 = vadd.f32 0.0, %v1316
  %1318 = vmatmul.bf16.gmra.mxu0 %v1153
  %v1319 = vpop.f32.mrf.mxu0
  %v1320 = vadd.f32 0.0, %v1319
  %v1321 = vpop.f32.mrf.mxu0
  %v1322 = vadd.f32 0.0, %v1321
  %1323 = vmatmul.bf16.gmra.mxu0 %v1154
  %v1324 = vpop.f32.mrf.mxu0
  %v1325 = vadd.f32 0.0, %v1324
  %v1326 = vpop.f32.mrf.mxu0
  %v1327 = vadd.f32 0.0, %v1326
  %1328 = vmatmul.bf16.gmra.mxu0 %v1155
  %v1329 = vpop.f32.mrf.mxu0
  %v1330 = vadd.f32 0.0, %v1329
  %v1331 = vpop.f32.mrf.mxu0
  %v1332 = vadd.f32 0.0, %v1331
  %1333 = vmatmul.bf16.gmra.mxu0 %v1156
  %v1334 = vpop.f32.mrf.mxu0
  %v1335 = vadd.f32 0.0, %v1334
  %v1336 = vpop.f32.mrf.mxu0
  %v1337 = vadd.f32 0.0, %v1336
  %1338 = vmatmul.bf16.gmra.mxu0 %v1157
  %v1339 = vpop.f32.mrf.mxu0
  %v1340 = vadd.f32 0.0, %v1339
  %v1341 = vpop.f32.mrf.mxu0
  %v1342 = vadd.f32 0.0, %v1341
  %1343 = vmatmul.bf16.gmra.mxu0 %v1158
  %v1344 = vpop.f32.mrf.mxu0
  %v1345 = vadd.f32 0.0, %v1344
  %v1346 = vpop.f32.mrf.mxu0
  %v1347 = vadd.f32 0.0, %v1346
  %1348 = vmatmul.bf16.gmra.mxu0 %v1159
  %v1349 = vpop.f32.mrf.mxu0
  %v1350 = vadd.f32 0.0, %v1349
  %v1351 = vpop.f32.mrf.mxu0
  %v1352 = vadd.f32 0.0, %v1351
  %1353 = vmatmul.bf16.gmra.mxu0 %v1160
  %v1354 = vpop.f32.mrf.mxu0
  %v1355 = vadd.f32 0.0, %v1354
  %v1356 = vpop.f32.mrf.mxu0
  %v1357 = vadd.f32 0.0, %v1356
  %1358 = vmatmul.bf16.gmra.mxu0 %v1161
  %v1359 = vpop.f32.mrf.mxu0
  %v1360 = vadd.f32 0.0, %v1359
  %v1361 = vpop.f32.mrf.mxu0
  %v1362 = vadd.f32 0.0, %v1361
  %1363 = vmatmul.bf16.gmra.mxu0 %v1162
  %v1364 = vpop.f32.mrf.mxu0
  %v1365 = vadd.f32 0.0, %v1364
  %v1366 = vpop.f32.mrf.mxu0
  %v1367 = vadd.f32 0.0, %v1366
  %1368 = vmatmul.bf16.gmra.mxu0 %v1163
  %v1369 = vpop.f32.mrf.mxu0
  %v1370 = vadd.f32 0.0, %v1369
  %v1371 = vpop.f32.mrf.mxu0
  %v1372 = vadd.f32 0.0, %v1371
  %1373 = vmatmul.bf16.gmra.mxu0 %v1164
  %v1374 = vpop.f32.mrf.mxu0
  %v1375 = vadd.f32 0.0, %v1374
  %v1376 = vpop.f32.mrf.mxu0
  %v1377 = vadd.f32 0.0, %v1376
  %1378 = vmatmul.bf16.gmra.mxu0 %v1165
  %v1379 = vpop.f32.mrf.mxu0
  %v1380 = vadd.f32 0.0, %v1379
  %v1381 = vpop.f32.mrf.mxu0
  %v1382 = vadd.f32 0.0, %v1381
  %1383 = vmatmul.bf16.gmra.mxu0 %v1166
  %v1384 = vpop.f32.mrf.mxu0
  %v1385 = vadd.f32 0.0, %v1384
  %v1386 = vpop.f32.mrf.mxu0
  %v1387 = vadd.f32 0.0, %v1386
  %1388 = vmatmul.bf16.gmra.mxu0 %v1167
  %v1389 = vpop.f32.mrf.mxu0
  %v1390 = vadd.f32 0.0, %v1389
  %v1391 = vpop.f32.mrf.mxu0
  %v1392 = vadd.f32 0.0, %v1391
  %1393 = vmatmul.bf16.gmra.mxu0 %v1168
  %v1394 = vpop.f32.mrf.mxu0
  %v1395 = vadd.f32 0.0, %v1394
  %v1396 = vpop.f32.mrf.mxu0
  %v1397 = vadd.f32 0.0, %v1396
  %1398 = vmatmul.bf16.gmra.mxu0 %v1169
  %v1399 = vpop.f32.mrf.mxu0
  %v1400 = vadd.f32 0.0, %v1399
  %v1401 = vpop.f32.mrf.mxu0
  %v1402 = vadd.f32 0.0, %v1401
  %1403 = vdwg.mxu0
  %v1404 = vadd.f32 %v1009, %v1245
  %v1405 = vadd.f32 %v1010, %v1247
  %v1406 = vadd.f32 %v1011, %v1250
  %v1407 = vadd.f32 %v1012, %v1252
  %v1408 = vadd.f32 %v1013, %v1255
  %v1409 = vadd.f32 %v1014, %v1257
  %v1410 = vadd.f32 %v1015, %v1260
  %v1411 = vadd.f32 %v1016, %v1262
  %v1412 = vadd.f32 %v1017, %v1265
  %v1413 = vadd.f32 %v1018, %v1267
  %v1414 = vadd.f32 %v1019, %v1270
  %v1415 = vadd.f32 %v1020, %v1272
  %v1416 = vadd.f32 %v1021, %v1275
  %v1417 = vadd.f32 %v1022, %v1277
  %v1418 = vadd.f32 %v1023, %v1280
  %v1419 = vadd.f32 %v1024, %v1282
  %v1420 = vadd.f32 %v1025, %v1285
  %v1421 = vadd.f32 %v1026, %v1287
  %v1422 = vadd.f32 %v1027, %v1290
  %v1423 = vadd.f32 %v1028, %v1292
  %v1424 = vadd.f32 %v1029, %v1295
  %v1425 = vadd.f32 %v1030, %v1297
  %v1426 = vadd.f32 %v1031, %v1300
  %v1427 = vadd.f32 %v1032, %v1302
  %v1428 = vadd.f32 %v1033, %v1305
  %v1429 = vadd.f32 %v1034, %v1307
  %v1430 = vadd.f32 %v1035, %v1310
  %v1431 = vadd.f32 %v1036, %v1312
  %v1432 = vadd.f32 %v1037, %v1315
  %v1433 = vadd.f32 %v1038, %v1317
  %v1434 = vadd.f32 %v1039, %v1320
  %v1435 = vadd.f32 %v1040, %v1322
  %v1436 = vadd.f32 %v1041, %v1325
  %v1437 = vadd.f32 %v1042, %v1327
  %v1438 = vadd.f32 %v1043, %v1330
  %v1439 = vadd.f32 %v1044, %v1332
  %v1440 = vadd.f32 %v1045, %v1335
  %v1441 = vadd.f32 %v1046, %v1337
  %v1442 = vadd.f32 %v1047, %v1340
  %v1443 = vadd.f32 %v1048, %v1342
  %v1444 = vadd.f32 %v1049, %v1345
  %v1445 = vadd.f32 %v1050, %v1347
  %v1446 = vadd.f32 %v1051, %v1350
  %v1447 = vadd.f32 %v1052, %v1352
  %v1448 = vadd.f32 %v1053, %v1355
  %v1449 = vadd.f32 %v1054, %v1357
  %v1450 = vadd.f32 %v1055, %v1360
  %v1451 = vadd.f32 %v1056, %v1362
  %v1452 = vadd.f32 %v1057, %v1365
  %v1453 = vadd.f32 %v1058, %v1367
  %v1454 = vadd.f32 %v1059, %v1370
  %v1455 = vadd.f32 %v1060, %v1372
  %v1456 = vadd.f32 %v1061, %v1375
  %v1457 = vadd.f32 %v1062, %v1377
  %v1458 = vadd.f32 %v1063, %v1380
  %v1459 = vadd.f32 %v1064, %v1382
  %v1460 = vadd.f32 %v1065, %v1385
  %v1461 = vadd.f32 %v1066, %v1387
  %v1462 = vadd.f32 %v1067, %v1390
  %v1463 = vadd.f32 %v1068, %v1392
  %v1464 = vadd.f32 %v1069, %v1395
  %v1465 = vadd.f32 %v1070, %v1397
  %v1466 = vadd.f32 %v1071, %v1400
  %v1467 = vadd.f32 %v1072, %v1402
  %v1468 = vld [vmem:[%s1073 + $0x1] sm:$0xff]
  %v1469 = vld [vmem:[%s1073 + $0x9] sm:$0xff]
  %v1470 = vld [vmem:[%s1073 + $0x19] sm:$0xff]
  %v1471 = vld [vmem:[%s1073 + $0x21] sm:$0xff]
  %v1472 = vld [vmem:[%s1073 + $0x31] sm:$0xff]
  %v1473 = vld [vmem:[%s1073 + $0x39] sm:$0xff]
  %v1474 = vld [vmem:[%s1073 + $0x49] sm:$0xff]
  %v1475 = vld [vmem:[%s1073 + $0x51] sm:$0xff]
  %v1476 = vld [vmem:[%s1073 + $0x61] sm:$0xff]
  %v1477 = vld [vmem:[%s1073 + $0x69] sm:$0xff]
  %v1478 = vld [vmem:[%s1073 + $0x79] sm:$0xff]
  %v1479 = vld [vmem:[%s1073 + $0x81] sm:$0xff]
  %v1480 = vld [vmem:[%s1073 + $0x91] sm:$0xff]
  %v1481 = vld [vmem:[%s1073 + $0x99] sm:$0xff]
  %v1482 = vld [vmem:[%s1073 + $0xa9] sm:$0xff]
  %v1483 = vld [vmem:[%s1073 + $0xb1] sm:$0xff]
  %v1484 = vld [vmem:[%s1073 + $0xc1] sm:$0xff]
  %v1485 = vld [vmem:[%s1073 + $0xc9] sm:$0xff]
  %v1486 = vld [vmem:[%s1073 + $0xd9] sm:$0xff]
  %v1487 = vld [vmem:[%s1073 + $0xe1] sm:$0xff]
  %v1488 = vld [vmem:[%s1073 + $0xf1] sm:$0xff]
  %v1489 = vld [vmem:[%s1073 + $0xf9] sm:$0xff]
  %v1490 = vld [vmem:[%s1073 + $0x109] sm:$0xff]
  %v1491 = vld [vmem:[%s1073 + $0x111] sm:$0xff]
  %v1492 = vld [vmem:[%s1073 + $0x121] sm:$0xff]
  %v1493 = vld [vmem:[%s1073 + $0x129] sm:$0xff]
  %v1494 = vld [vmem:[%s1073 + $0x139] sm:$0xff]
  %v1495 = vld [vmem:[%s1073 + $0x141] sm:$0xff]
  %v1496 = vld [vmem:[%s1073 + $0x151] sm:$0xff]
  %v1497 = vld [vmem:[%s1073 + $0x159] sm:$0xff]
  %v1498 = vld [vmem:[%s1073 + $0x169] sm:$0xff]
  %v1499 = vld [vmem:[%s1073 + $0x171] sm:$0xff]
  %v1500 = vld [vmem:[%s1073 + $0x1b1] sm:$0xff]
  %v1501 = vld [vmem:[%s1073 + $0x1b9] sm:$0xff]
  %v1502 = vld [vmem:[%s1073 + $0x1c9] sm:$0xff]
  %v1503 = vld [vmem:[%s1073 + $0x1d1] sm:$0xff]
  %v1504 = vld [vmem:[%s1073 + $0x1e1] sm:$0xff]
  %v1505 = vld [vmem:[%s1073 + $0x1e9] sm:$0xff]
  %v1506 = vld [vmem:[%s1073 + $0x1f9] sm:$0xff]
  %v1507 = vld [vmem:[%s1073 + $0x201] sm:$0xff]
  %v1508 = vld [vmem:[%s1073 + $0x211] sm:$0xff]
  %v1509 = vld [vmem:[%s1073 + $0x219] sm:$0xff]
  %v1510 = vld [vmem:[%s1073 + $0x229] sm:$0xff]
  %v1511 = vld [vmem:[%s1073 + $0x231] sm:$0xff]
  %v1512 = vld [vmem:[%s1073 + $0x241] sm:$0xff]
  %v1513 = vld [vmem:[%s1073 + $0x249] sm:$0xff]
  %v1514 = vld [vmem:[%s1073 + $0x259] sm:$0xff]
  %v1515 = vld [vmem:[%s1073 + $0x261] sm:$0xff]
  %v1516 = vld [vmem:[%s1073 + $0x271] sm:$0xff]
  %v1517 = vld [vmem:[%s1073 + $0x279] sm:$0xff]
  %v1518 = vld [vmem:[%s1073 + $0x289] sm:$0xff]
  %v1519 = vld [vmem:[%s1073 + $0x291] sm:$0xff]
  %v1520 = vld [vmem:[%s1073 + $0x2a1] sm:$0xff]
  %v1521 = vld [vmem:[%s1073 + $0x2a9] sm:$0xff]
  %v1522 = vld [vmem:[%s1073 + $0x2b9] sm:$0xff]
  %v1523 = vld [vmem:[%s1073 + $0x2c1] sm:$0xff]
  %v1524 = vld [vmem:[%s1073 + $0x2d1] sm:$0xff]
  %v1525 = vld [vmem:[%s1073 + $0x2d9] sm:$0xff]
  %v1526 = vld [vmem:[%s1073 + $0x2e9] sm:$0xff]
  %v1527 = vld [vmem:[%s1073 + $0x2f1] sm:$0xff]
  %v1528 = vld [vmem:[%s1073 + $0x301] sm:$0xff]
  %v1529 = vld [vmem:[%s1073 + $0x309] sm:$0xff]
  %v1530 = vld [vmem:[%s1073 + $0x319] sm:$0xff]
  %v1531 = vld [vmem:[%s1073 + $0x321] sm:$0xff]
  %v1532 = vpack.c.bf16 %v1469, %v1468
  %v1533 = vpack.c.bf16 %v1471, %v1470
  %v1534 = vpack.c.bf16 %v1473, %v1472
  %v1535 = vpack.c.bf16 %v1475, %v1474
  %v1536 = vpack.c.bf16 %v1477, %v1476
  %v1537 = vpack.c.bf16 %v1479, %v1478
  %v1538 = vpack.c.bf16 %v1481, %v1480
  %v1539 = vpack.c.bf16 %v1483, %v1482
  %v1540 = vpack.c.bf16 %v1485, %v1484
  %v1541 = vpack.c.bf16 %v1487, %v1486
  %v1542 = vpack.c.bf16 %v1489, %v1488
  %v1543 = vpack.c.bf16 %v1491, %v1490
  %v1544 = vpack.c.bf16 %v1493, %v1492
  %v1545 = vpack.c.bf16 %v1495, %v1494
  %v1546 = vpack.c.bf16 %v1497, %v1496
  %v1547 = vpack.c.bf16 %v1499, %v1498
  %v1548 = vpack.c.bf16 %v1501, %v1500
  %v1549 = vpack.c.bf16 %v1503, %v1502
  %v1550 = vpack.c.bf16 %v1505, %v1504
  %v1551 = vpack.c.bf16 %v1507, %v1506
  %v1552 = vpack.c.bf16 %v1509, %v1508
  %v1553 = vpack.c.bf16 %v1511, %v1510
  %v1554 = vpack.c.bf16 %v1513, %v1512
  %v1555 = vpack.c.bf16 %v1515, %v1514
  %v1556 = vpack.c.bf16 %v1517, %v1516
  %v1557 = vpack.c.bf16 %v1519, %v1518
  %v1558 = vpack.c.bf16 %v1521, %v1520
  %v1559 = vpack.c.bf16 %v1523, %v1522
  %v1560 = vpack.c.bf16 %v1525, %v1524
  %v1561 = vpack.c.bf16 %v1527, %v1526
  %v1562 = vpack.c.bf16 %v1529, %v1528
  %v1563 = vpack.c.bf16 %v1531, %v1530
  %s1564 = scalar_lea.vmem %s1, 256
  %v1565 = vld [vmem:[%s1564] sm:$0xf]
  %v1566 = vld [vmem:[%s1564 + $0x4] sm:$0xf]
  %v1567 = vld [vmem:[%s1564 + $0x8] sm:$0xf]
  %v1568 = vld [vmem:[%s1564 + $0xc] sm:$0xf]
  %v1569 = vld [vmem:[%s1564 + $0x10] sm:$0xf]
  %v1570 = vld [vmem:[%s1564 + $0x14] sm:$0xf]
  %v1571 = vld [vmem:[%s1564 + $0x18] sm:$0xf]
  %v1572 = vld [vmem:[%s1564 + $0x1c] sm:$0xf]
  %v1573 = vld [vmem:[%s1564 + $0x20] sm:$0xf]
  %v1574 = vld [vmem:[%s1564 + $0x24] sm:$0xf]
  %v1575 = vld [vmem:[%s1564 + $0x28] sm:$0xf]
  %v1576 = vld [vmem:[%s1564 + $0x2c] sm:$0xf]
  %v1577 = vld [vmem:[%s1564 + $0x30] sm:$0xf]
  %v1578 = vld [vmem:[%s1564 + $0x34] sm:$0xf]
  %v1579 = vld [vmem:[%s1564 + $0x38] sm:$0xf]
  %v1580 = vld [vmem:[%s1564 + $0x3c] sm:$0xf]
  %v1597 = vunpack.c.l.b16 %v1565
  %v1598 = vunpack.c.l.b16 %v1566
  %v1599 = vunpack.c.l.b16 %v1567
  %v1600 = vunpack.c.l.b16 %v1568
  %v1601 = vunpack.c.l.b16 %v1569
  %v1602 = vunpack.c.l.b16 %v1570
  %v1603 = vunpack.c.l.b16 %v1571
  %v1604 = vunpack.c.l.b16 %v1572
  %v1605 = vunpack.c.l.b16 %v1573
  %v1606 = vunpack.c.l.b16 %v1574
  %v1607 = vunpack.c.l.b16 %v1575
  %v1608 = vunpack.c.l.b16 %v1576
  %v1609 = vunpack.c.l.b16 %v1577
  %v1610 = vunpack.c.l.b16 %v1578
  %v1611 = vunpack.c.l.b16 %v1579
  %v1612 = vunpack.c.l.b16 %v1580
  %v1613 = vpack.c.b16 %v1598, %v1597
  %v1614 = vpack.c.b16 %v1600, %v1599
  %v1615 = vpack.c.b16 %v1602, %v1601
  %v1616 = vpack.c.b16 %v1604, %v1603
  %v1617 = vpack.c.b16 %v1606, %v1605
  %v1618 = vpack.c.b16 %v1608, %v1607
  %v1619 = vpack.c.b16 %v1610, %v1609
  %v1620 = vpack.c.b16 %v1612, %v1611
  %1629 = vmatpush.bf16.msra.mxu0 %v1620
  %1630 = vmatpush.bf16.msra.mxu0 %v1619
  %1631 = vmatpush.bf16.msra.mxu0 %v1618
  %1632 = vmatpush.bf16.msra.mxu0 %v1617
  %1633 = vmatpush.bf16.msra.mxu0 %v1616
  %1634 = vmatpush.bf16.msra.mxu0 %v1615
  %1635 = vmatpush.bf16.msra.mxu0 %v1614
  %1636 = vmatpush.bf16.msra.mxu0 %v1613
  %1637 = vmatmul.bf16.gmra.mxu0 %v1532
  %v1638 = vpop.f32.mrf.mxu0
  %v1639 = vadd.f32 0.0, %v1638
  %v1640 = vpop.f32.mrf.mxu0
  %v1641 = vadd.f32 0.0, %v1640
  %1642 = vmatmul.bf16.gmra.mxu0 %v1533
  %v1643 = vpop.f32.mrf.mxu0
  %v1644 = vadd.f32 0.0, %v1643
  %v1645 = vpop.f32.mrf.mxu0
  %v1646 = vadd.f32 0.0, %v1645
  %1647 = vmatmul.bf16.gmra.mxu0 %v1534
  %v1648 = vpop.f32.mrf.mxu0
  %v1649 = vadd.f32 0.0, %v1648
  %v1650 = vpop.f32.mrf.mxu0
  %v1651 = vadd.f32 0.0, %v1650
  %1652 = vmatmul.bf16.gmra.mxu0 %v1535
  %v1653 = vpop.f32.mrf.mxu0
  %v1654 = vadd.f32 0.0, %v1653
  %v1655 = vpop.f32.mrf.mxu0
  %v1656 = vadd.f32 0.0, %v1655
  %1657 = vmatmul.bf16.gmra.mxu0 %v1536
  %v1658 = vpop.f32.mrf.mxu0
  %v1659 = vadd.f32 0.0, %v1658
  %v1660 = vpop.f32.mrf.mxu0
  %v1661 = vadd.f32 0.0, %v1660
  %1662 = vmatmul.bf16.gmra.mxu0 %v1537
  %v1663 = vpop.f32.mrf.mxu0
  %v1664 = vadd.f32 0.0, %v1663
  %v1665 = vpop.f32.mrf.mxu0
  %v1666 = vadd.f32 0.0, %v1665
  %1667 = vmatmul.bf16.gmra.mxu0 %v1538
  %v1668 = vpop.f32.mrf.mxu0
  %v1669 = vadd.f32 0.0, %v1668
  %v1670 = vpop.f32.mrf.mxu0
  %v1671 = vadd.f32 0.0, %v1670
  %1672 = vmatmul.bf16.gmra.mxu0 %v1539
  %v1673 = vpop.f32.mrf.mxu0
  %v1674 = vadd.f32 0.0, %v1673
  %v1675 = vpop.f32.mrf.mxu0
  %v1676 = vadd.f32 0.0, %v1675
  %1677 = vmatmul.bf16.gmra.mxu0 %v1540
  %v1678 = vpop.f32.mrf.mxu0
  %v1679 = vadd.f32 0.0, %v1678
  %v1680 = vpop.f32.mrf.mxu0
  %v1681 = vadd.f32 0.0, %v1680
  %1682 = vmatmul.bf16.gmra.mxu0 %v1541
  %v1683 = vpop.f32.mrf.mxu0
  %v1684 = vadd.f32 0.0, %v1683
  %v1685 = vpop.f32.mrf.mxu0
  %v1686 = vadd.f32 0.0, %v1685
  %1687 = vmatmul.bf16.gmra.mxu0 %v1542
  %v1688 = vpop.f32.mrf.mxu0
  %v1689 = vadd.f32 0.0, %v1688
  %v1690 = vpop.f32.mrf.mxu0
  %v1691 = vadd.f32 0.0, %v1690
  %1692 = vmatmul.bf16.gmra.mxu0 %v1543
  %v1693 = vpop.f32.mrf.mxu0
  %v1694 = vadd.f32 0.0, %v1693
  %v1695 = vpop.f32.mrf.mxu0
  %v1696 = vadd.f32 0.0, %v1695
  %1697 = vmatmul.bf16.gmra.mxu0 %v1544
  %v1698 = vpop.f32.mrf.mxu0
  %v1699 = vadd.f32 0.0, %v1698
  %v1700 = vpop.f32.mrf.mxu0
  %v1701 = vadd.f32 0.0, %v1700
  %1702 = vmatmul.bf16.gmra.mxu0 %v1545
  %v1703 = vpop.f32.mrf.mxu0
  %v1704 = vadd.f32 0.0, %v1703
  %v1705 = vpop.f32.mrf.mxu0
  %v1706 = vadd.f32 0.0, %v1705
  %1707 = vmatmul.bf16.gmra.mxu0 %v1546
  %v1708 = vpop.f32.mrf.mxu0
  %v1709 = vadd.f32 0.0, %v1708
  %v1710 = vpop.f32.mrf.mxu0
  %v1711 = vadd.f32 0.0, %v1710
  %1712 = vmatmul.bf16.gmra.mxu0 %v1547
  %v1713 = vpop.f32.mrf.mxu0
  %v1714 = vadd.f32 0.0, %v1713
  %v1715 = vpop.f32.mrf.mxu0
  %v1716 = vadd.f32 0.0, %v1715
  %1717 = vmatmul.bf16.gmra.mxu0 %v1548
  %v1718 = vpop.f32.mrf.mxu0
  %v1719 = vadd.f32 0.0, %v1718
  %v1720 = vpop.f32.mrf.mxu0
  %v1721 = vadd.f32 0.0, %v1720
  %1722 = vmatmul.bf16.gmra.mxu0 %v1549
  %v1723 = vpop.f32.mrf.mxu0
  %v1724 = vadd.f32 0.0, %v1723
  %v1725 = vpop.f32.mrf.mxu0
  %v1726 = vadd.f32 0.0, %v1725
  %1727 = vmatmul.bf16.gmra.mxu0 %v1550
  %v1728 = vpop.f32.mrf.mxu0
  %v1729 = vadd.f32 0.0, %v1728
  %v1730 = vpop.f32.mrf.mxu0
  %v1731 = vadd.f32 0.0, %v1730
  %1732 = vmatmul.bf16.gmra.mxu0 %v1551
  %v1733 = vpop.f32.mrf.mxu0
  %v1734 = vadd.f32 0.0, %v1733
  %v1735 = vpop.f32.mrf.mxu0
  %v1736 = vadd.f32 0.0, %v1735
  %1737 = vmatmul.bf16.gmra.mxu0 %v1552
  %v1738 = vpop.f32.mrf.mxu0
  %v1739 = vadd.f32 0.0, %v1738
  %v1740 = vpop.f32.mrf.mxu0
  %v1741 = vadd.f32 0.0, %v1740
  %1742 = vmatmul.bf16.gmra.mxu0 %v1553
  %v1743 = vpop.f32.mrf.mxu0
  %v1744 = vadd.f32 0.0, %v1743
  %v1745 = vpop.f32.mrf.mxu0
  %v1746 = vadd.f32 0.0, %v1745
  %1747 = vmatmul.bf16.gmra.mxu0 %v1554
  %v1748 = vpop.f32.mrf.mxu0
  %v1749 = vadd.f32 0.0, %v1748
  %v1750 = vpop.f32.mrf.mxu0
  %v1751 = vadd.f32 0.0, %v1750
  %1752 = vmatmul.bf16.gmra.mxu0 %v1555
  %v1753 = vpop.f32.mrf.mxu0
  %v1754 = vadd.f32 0.0, %v1753
  %v1755 = vpop.f32.mrf.mxu0
  %v1756 = vadd.f32 0.0, %v1755
  %1757 = vmatmul.bf16.gmra.mxu0 %v1556
  %v1758 = vpop.f32.mrf.mxu0
  %v1759 = vadd.f32 0.0, %v1758
  %v1760 = vpop.f32.mrf.mxu0
  %v1761 = vadd.f32 0.0, %v1760
  %1762 = vmatmul.bf16.gmra.mxu0 %v1557
  %v1763 = vpop.f32.mrf.mxu0
  %v1764 = vadd.f32 0.0, %v1763
  %v1765 = vpop.f32.mrf.mxu0
  %v1766 = vadd.f32 0.0, %v1765
  %1767 = vmatmul.bf16.gmra.mxu0 %v1558
  %v1768 = vpop.f32.mrf.mxu0
  %v1769 = vadd.f32 0.0, %v1768
  %v1770 = vpop.f32.mrf.mxu0
  %v1771 = vadd.f32 0.0, %v1770
  %1772 = vmatmul.bf16.gmra.mxu0 %v1559
  %v1773 = vpop.f32.mrf.mxu0
  %v1774 = vadd.f32 0.0, %v1773
  %v1775 = vpop.f32.mrf.mxu0
  %v1776 = vadd.f32 0.0, %v1775
  %1777 = vmatmul.bf16.gmra.mxu0 %v1560
  %v1778 = vpop.f32.mrf.mxu0
  %v1779 = vadd.f32 0.0, %v1778
  %v1780 = vpop.f32.mrf.mxu0
  %v1781 = vadd.f32 0.0, %v1780
  %1782 = vmatmul.bf16.gmra.mxu0 %v1561
  %v1783 = vpop.f32.mrf.mxu0
  %v1784 = vadd.f32 0.0, %v1783
  %v1785 = vpop.f32.mrf.mxu0
  %v1786 = vadd.f32 0.0, %v1785
  %1787 = vmatmul.bf16.gmra.mxu0 %v1562
  %v1788 = vpop.f32.mrf.mxu0
  %v1789 = vadd.f32 0.0, %v1788
  %v1790 = vpop.f32.mrf.mxu0
  %v1791 = vadd.f32 0.0, %v1790
  %1792 = vmatmul.bf16.gmra.mxu0 %v1563
  %v1793 = vpop.f32.mrf.mxu0
  %v1794 = vadd.f32 0.0, %v1793
  %v1795 = vpop.f32.mrf.mxu0
  %v1796 = vadd.f32 0.0, %v1795
  %1797 = vdwg.mxu0
  %v1798 = vadd.f32 %v1404, %v1639
  %v1799 = vadd.f32 %v1405, %v1641
  %v1800 = vadd.f32 %v1406, %v1644
  %v1801 = vadd.f32 %v1407, %v1646
  %v1802 = vadd.f32 %v1408, %v1649
  %v1803 = vadd.f32 %v1409, %v1651
  %v1804 = vadd.f32 %v1410, %v1654
  %v1805 = vadd.f32 %v1411, %v1656
  %v1806 = vadd.f32 %v1412, %v1659
  %v1807 = vadd.f32 %v1413, %v1661
  %v1808 = vadd.f32 %v1414, %v1664
  %v1809 = vadd.f32 %v1415, %v1666
  %v1810 = vadd.f32 %v1416, %v1669
  %v1811 = vadd.f32 %v1417, %v1671
  %v1812 = vadd.f32 %v1418, %v1674
  %v1813 = vadd.f32 %v1419, %v1676
  %v1814 = vadd.f32 %v1420, %v1679
  %v1815 = vadd.f32 %v1421, %v1681
  %v1816 = vadd.f32 %v1422, %v1684
  %v1817 = vadd.f32 %v1423, %v1686
  %v1818 = vadd.f32 %v1424, %v1689
  %v1819 = vadd.f32 %v1425, %v1691
  %v1820 = vadd.f32 %v1426, %v1694
  %v1821 = vadd.f32 %v1427, %v1696
  %v1822 = vadd.f32 %v1428, %v1699
  %v1823 = vadd.f32 %v1429, %v1701
  %v1824 = vadd.f32 %v1430, %v1704
  %v1825 = vadd.f32 %v1431, %v1706
  %v1826 = vadd.f32 %v1432, %v1709
  %v1827 = vadd.f32 %v1433, %v1711
  %v1828 = vadd.f32 %v1434, %v1714
  %v1829 = vadd.f32 %v1435, %v1716
  %v1830 = vadd.f32 %v1436, %v1719
  %v1831 = vadd.f32 %v1437, %v1721
  %v1832 = vadd.f32 %v1438, %v1724
  %v1833 = vadd.f32 %v1439, %v1726
  %v1834 = vadd.f32 %v1440, %v1729
  %v1835 = vadd.f32 %v1441, %v1731
  %v1836 = vadd.f32 %v1442, %v1734
  %v1837 = vadd.f32 %v1443, %v1736
  %v1838 = vadd.f32 %v1444, %v1739
  %v1839 = vadd.f32 %v1445, %v1741
  %v1840 = vadd.f32 %v1446, %v1744
  %v1841 = vadd.f32 %v1447, %v1746
  %v1842 = vadd.f32 %v1448, %v1749
  %v1843 = vadd.f32 %v1449, %v1751
  %v1844 = vadd.f32 %v1450, %v1754
  %v1845 = vadd.f32 %v1451, %v1756
  %v1846 = vadd.f32 %v1452, %v1759
  %v1847 = vadd.f32 %v1453, %v1761
  %v1848 = vadd.f32 %v1454, %v1764
  %v1849 = vadd.f32 %v1455, %v1766
  %v1850 = vadd.f32 %v1456, %v1769
  %v1851 = vadd.f32 %v1457, %v1771
  %v1852 = vadd.f32 %v1458, %v1774
  %v1853 = vadd.f32 %v1459, %v1776
  %v1854 = vadd.f32 %v1460, %v1779
  %v1855 = vadd.f32 %v1461, %v1781
  %v1856 = vadd.f32 %v1462, %v1784
  %v1857 = vadd.f32 %v1463, %v1786
  %v1858 = vadd.f32 %v1464, %v1789
  %v1859 = vadd.f32 %v1465, %v1791
  %v1860 = vadd.f32 %v1466, %v1794
  %v1861 = vadd.f32 %v1467, %v1796
  %v1862 = vld [vmem:[%s1073 + $0x2] sm:$0xff]
  %v1863 = vld [vmem:[%s1073 + $0xa] sm:$0xff]
  %v1864 = vld [vmem:[%s1073 + $0x1a] sm:$0xff]
  %v1865 = vld [vmem:[%s1073 + $0x22] sm:$0xff]
  %v1866 = vld [vmem:[%s1073 + $0x32] sm:$0xff]
  %v1867 = vld [vmem:[%s1073 + $0x3a] sm:$0xff]
  %v1868 = vld [vmem:[%s1073 + $0x4a] sm:$0xff]
  %v1869 = vld [vmem:[%s1073 + $0x52] sm:$0xff]
  %v1870 = vld [vmem:[%s1073 + $0x62] sm:$0xff]
  %v1871 = vld [vmem:[%s1073 + $0x6a] sm:$0xff]
  %v1872 = vld [vmem:[%s1073 + $0x7a] sm:$0xff]
  %v1873 = vld [vmem:[%s1073 + $0x82] sm:$0xff]
  %v1874 = vld [vmem:[%s1073 + $0x92] sm:$0xff]
  %v1875 = vld [vmem:[%s1073 + $0x9a] sm:$0xff]
  %v1876 = vld [vmem:[%s1073 + $0xaa] sm:$0xff]
  %v1877 = vld [vmem:[%s1073 + $0xb2] sm:$0xff]
  %v1878 = vld [vmem:[%s1073 + $0xc2] sm:$0xff]
  %v1879 = vld [vmem:[%s1073 + $0xca] sm:$0xff]
  %v1880 = vld [vmem:[%s1073 + $0xda] sm:$0xff]
  %v1881 = vld [vmem:[%s1073 + $0xe2] sm:$0xff]
  %v1882 = vld [vmem:[%s1073 + $0xf2] sm:$0xff]
  %v1883 = vld [vmem:[%s1073 + $0xfa] sm:$0xff]
  %v1884 = vld [vmem:[%s1073 + $0x10a] sm:$0xff]
  %v1885 = vld [vmem:[%s1073 + $0x112] sm:$0xff]
  %v1886 = vld [vmem:[%s1073 + $0x122] sm:$0xff]
  %v1887 = vld [vmem:[%s1073 + $0x12a] sm:$0xff]
  %v1888 = vld [vmem:[%s1073 + $0x13a] sm:$0xff]
  %v1889 = vld [vmem:[%s1073 + $0x142] sm:$0xff]
  %v1890 = vld [vmem:[%s1073 + $0x152] sm:$0xff]
  %v1891 = vld [vmem:[%s1073 + $0x15a] sm:$0xff]
  %v1892 = vld [vmem:[%s1073 + $0x16a] sm:$0xff]
  %v1893 = vld [vmem:[%s1073 + $0x172] sm:$0xff]
  %v1894 = vld [vmem:[%s1073 + $0x1b2] sm:$0xff]
  %v1895 = vld [vmem:[%s1073 + $0x1ba] sm:$0xff]
  %v1896 = vld [vmem:[%s1073 + $0x1ca] sm:$0xff]
  %v1897 = vld [vmem:[%s1073 + $0x1d2] sm:$0xff]
  %v1898 = vld [vmem:[%s1073 + $0x1e2] sm:$0xff]
  %v1899 = vld [vmem:[%s1073 + $0x1ea] sm:$0xff]
  %v1900 = vld [vmem:[%s1073 + $0x1fa] sm:$0xff]
  %v1901 = vld [vmem:[%s1073 + $0x202] sm:$0xff]
  %v1902 = vld [vmem:[%s1073 + $0x212] sm:$0xff]
  %v1903 = vld [vmem:[%s1073 + $0x21a] sm:$0xff]
  %v1904 = vld [vmem:[%s1073 + $0x22a] sm:$0xff]
  %v1905 = vld [vmem:[%s1073 + $0x232] sm:$0xff]
  %v1906 = vld [vmem:[%s1073 + $0x242] sm:$0xff]
  %v1907 = vld [vmem:[%s1073 + $0x24a] sm:$0xff]
  %v1908 = vld [vmem:[%s1073 + $0x25a] sm:$0xff]
  %v1909 = vld [vmem:[%s1073 + $0x262] sm:$0xff]
  %v1910 = vld [vmem:[%s1073 + $0x272] sm:$0xff]
  %v1911 = vld [vmem:[%s1073 + $0x27a] sm:$0xff]
  %v1912 = vld [vmem:[%s1073 + $0x28a] sm:$0xff]
  %v1913 = vld [vmem:[%s1073 + $0x292] sm:$0xff]
  %v1914 = vld [vmem:[%s1073 + $0x2a2] sm:$0xff]
  %v1915 = vld [vmem:[%s1073 + $0x2aa] sm:$0xff]
  %v1916 = vld [vmem:[%s1073 + $0x2ba] sm:$0xff]
  %v1917 = vld [vmem:[%s1073 + $0x2c2] sm:$0xff]
  %v1918 = vld [vmem:[%s1073 + $0x2d2] sm:$0xff]
  %v1919 = vld [vmem:[%s1073 + $0x2da] sm:$0xff]
  %v1920 = vld [vmem:[%s1073 + $0x2ea] sm:$0xff]
  %v1921 = vld [vmem:[%s1073 + $0x2f2] sm:$0xff]
  %v1922 = vld [vmem:[%s1073 + $0x302] sm:$0xff]
  %v1923 = vld [vmem:[%s1073 + $0x30a] sm:$0xff]
  %v1924 = vld [vmem:[%s1073 + $0x31a] sm:$0xff]
  %v1925 = vld [vmem:[%s1073 + $0x322] sm:$0xff]
  %v1926 = vpack.c.bf16 %v1863, %v1862
  %v1927 = vpack.c.bf16 %v1865, %v1864
  %v1928 = vpack.c.bf16 %v1867, %v1866
  %v1929 = vpack.c.bf16 %v1869, %v1868
  %v1930 = vpack.c.bf16 %v1871, %v1870
  %v1931 = vpack.c.bf16 %v1873, %v1872
  %v1932 = vpack.c.bf16 %v1875, %v1874
  %v1933 = vpack.c.bf16 %v1877, %v1876
  %v1934 = vpack.c.bf16 %v1879, %v1878
  %v1935 = vpack.c.bf16 %v1881, %v1880
  %v1936 = vpack.c.bf16 %v1883, %v1882
  %v1937 = vpack.c.bf16 %v1885, %v1884
  %v1938 = vpack.c.bf16 %v1887, %v1886
  %v1939 = vpack.c.bf16 %v1889, %v1888
  %v1940 = vpack.c.bf16 %v1891, %v1890
  %v1941 = vpack.c.bf16 %v1893, %v1892
  %v1942 = vpack.c.bf16 %v1895, %v1894
  %v1943 = vpack.c.bf16 %v1897, %v1896
  %v1944 = vpack.c.bf16 %v1899, %v1898
  %v1945 = vpack.c.bf16 %v1901, %v1900
  %v1946 = vpack.c.bf16 %v1903, %v1902
  %v1947 = vpack.c.bf16 %v1905, %v1904
  %v1948 = vpack.c.bf16 %v1907, %v1906
  %v1949 = vpack.c.bf16 %v1909, %v1908
  %v1950 = vpack.c.bf16 %v1911, %v1910
  %v1951 = vpack.c.bf16 %v1913, %v1912
  %v1952 = vpack.c.bf16 %v1915, %v1914
  %v1953 = vpack.c.bf16 %v1917, %v1916
  %v1954 = vpack.c.bf16 %v1919, %v1918
  %v1955 = vpack.c.bf16 %v1921, %v1920
  %v1956 = vpack.c.bf16 %v1923, %v1922
  %v1957 = vpack.c.bf16 %v1925, %v1924
  %s1958 = scalar_lea.vmem %s1, 320
  %v1959 = vld [vmem:[%s1958] sm:$0xf]
  %v1960 = vld [vmem:[%s1958 + $0x4] sm:$0xf]
  %v1961 = vld [vmem:[%s1958 + $0x8] sm:$0xf]
  %v1962 = vld [vmem:[%s1958 + $0xc] sm:$0xf]
  %v1963 = vld [vmem:[%s1958 + $0x10] sm:$0xf]
  %v1964 = vld [vmem:[%s1958 + $0x14] sm:$0xf]
  %v1965 = vld [vmem:[%s1958 + $0x18] sm:$0xf]
  %v1966 = vld [vmem:[%s1958 + $0x1c] sm:$0xf]
  %v1967 = vld [vmem:[%s1958 + $0x20] sm:$0xf]
  %v1968 = vld [vmem:[%s1958 + $0x24] sm:$0xf]
  %v1969 = vld [vmem:[%s1958 + $0x28] sm:$0xf]
  %v1970 = vld [vmem:[%s1958 + $0x2c] sm:$0xf]
  %v1971 = vld [vmem:[%s1958 + $0x30] sm:$0xf]
  %v1972 = vld [vmem:[%s1958 + $0x34] sm:$0xf]
  %v1973 = vld [vmem:[%s1958 + $0x38] sm:$0xf]
  %v1974 = vld [vmem:[%s1958 + $0x3c] sm:$0xf]
  %v1991 = vunpack.c.l.b16 %v1959
  %v1992 = vunpack.c.l.b16 %v1960
  %v1993 = vunpack.c.l.b16 %v1961
  %v1994 = vunpack.c.l.b16 %v1962
  %v1995 = vunpack.c.l.b16 %v1963
  %v1996 = vunpack.c.l.b16 %v1964
  %v1997 = vunpack.c.l.b16 %v1965
  %v1998 = vunpack.c.l.b16 %v1966
  %v1999 = vunpack.c.l.b16 %v1967
  %v2000 = vunpack.c.l.b16 %v1968
  %v2001 = vunpack.c.l.b16 %v1969
  %v2002 = vunpack.c.l.b16 %v1970
  %v2003 = vunpack.c.l.b16 %v1971
  %v2004 = vunpack.c.l.b16 %v1972
  %v2005 = vunpack.c.l.b16 %v1973
  %v2006 = vunpack.c.l.b16 %v1974
  %v2007 = vpack.c.b16 %v1992, %v1991
  %v2008 = vpack.c.b16 %v1994, %v1993
  %v2009 = vpack.c.b16 %v1996, %v1995
  %v2010 = vpack.c.b16 %v1998, %v1997
  %v2011 = vpack.c.b16 %v2000, %v1999
  %v2012 = vpack.c.b16 %v2002, %v2001
  %v2013 = vpack.c.b16 %v2004, %v2003
  %v2014 = vpack.c.b16 %v2006, %v2005
  %2023 = vmatpush.bf16.msra.mxu0 %v2014
  %2024 = vmatpush.bf16.msra.mxu0 %v2013
  %2025 = vmatpush.bf16.msra.mxu0 %v2012
  %2026 = vmatpush.bf16.msra.mxu0 %v2011
  %2027 = vmatpush.bf16.msra.mxu0 %v2010
  %2028 = vmatpush.bf16.msra.mxu0 %v2009
  %2029 = vmatpush.bf16.msra.mxu0 %v2008
  %2030 = vmatpush.bf16.msra.mxu0 %v2007
  %2031 = vmatmul.bf16.gmra.mxu0 %v1926
  %v2032 = vpop.f32.mrf.mxu0
  %v2033 = vadd.f32 0.0, %v2032
  %v2034 = vpop.f32.mrf.mxu0
  %v2035 = vadd.f32 0.0, %v2034
  %2036 = vmatmul.bf16.gmra.mxu0 %v1927
  %v2037 = vpop.f32.mrf.mxu0
  %v2038 = vadd.f32 0.0, %v2037
  %v2039 = vpop.f32.mrf.mxu0
  %v2040 = vadd.f32 0.0, %v2039
  %2041 = vmatmul.bf16.gmra.mxu0 %v1928
  %v2042 = vpop.f32.mrf.mxu0
  %v2043 = vadd.f32 0.0, %v2042
  %v2044 = vpop.f32.mrf.mxu0
  %v2045 = vadd.f32 0.0, %v2044
  %2046 = vmatmul.bf16.gmra.mxu0 %v1929
  %v2047 = vpop.f32.mrf.mxu0
  %v2048 = vadd.f32 0.0, %v2047
  %v2049 = vpop.f32.mrf.mxu0
  %v2050 = vadd.f32 0.0, %v2049
  %2051 = vmatmul.bf16.gmra.mxu0 %v1930
  %v2052 = vpop.f32.mrf.mxu0
  %v2053 = vadd.f32 0.0, %v2052
  %v2054 = vpop.f32.mrf.mxu0
  %v2055 = vadd.f32 0.0, %v2054
  %2056 = vmatmul.bf16.gmra.mxu0 %v1931
  %v2057 = vpop.f32.mrf.mxu0
  %v2058 = vadd.f32 0.0, %v2057
  %v2059 = vpop.f32.mrf.mxu0
  %v2060 = vadd.f32 0.0, %v2059
  %2061 = vmatmul.bf16.gmra.mxu0 %v1932
  %v2062 = vpop.f32.mrf.mxu0
  %v2063 = vadd.f32 0.0, %v2062
  %v2064 = vpop.f32.mrf.mxu0
  %v2065 = vadd.f32 0.0, %v2064
  %2066 = vmatmul.bf16.gmra.mxu0 %v1933
  %v2067 = vpop.f32.mrf.mxu0
  %v2068 = vadd.f32 0.0, %v2067
  %v2069 = vpop.f32.mrf.mxu0
  %v2070 = vadd.f32 0.0, %v2069
  %2071 = vmatmul.bf16.gmra.mxu0 %v1934
  %v2072 = vpop.f32.mrf.mxu0
  %v2073 = vadd.f32 0.0, %v2072
  %v2074 = vpop.f32.mrf.mxu0
  %v2075 = vadd.f32 0.0, %v2074
  %2076 = vmatmul.bf16.gmra.mxu0 %v1935
  %v2077 = vpop.f32.mrf.mxu0
  %v2078 = vadd.f32 0.0, %v2077
  %v2079 = vpop.f32.mrf.mxu0
  %v2080 = vadd.f32 0.0, %v2079
  %2081 = vmatmul.bf16.gmra.mxu0 %v1936
  %v2082 = vpop.f32.mrf.mxu0
  %v2083 = vadd.f32 0.0, %v2082
  %v2084 = vpop.f32.mrf.mxu0
  %v2085 = vadd.f32 0.0, %v2084
  %2086 = vmatmul.bf16.gmra.mxu0 %v1937
  %v2087 = vpop.f32.mrf.mxu0
  %v2088 = vadd.f32 0.0, %v2087
  %v2089 = vpop.f32.mrf.mxu0
  %v2090 = vadd.f32 0.0, %v2089
  %2091 = vmatmul.bf16.gmra.mxu0 %v1938
  %v2092 = vpop.f32.mrf.mxu0
  %v2093 = vadd.f32 0.0, %v2092
  %v2094 = vpop.f32.mrf.mxu0
  %v2095 = vadd.f32 0.0, %v2094
  %2096 = vmatmul.bf16.gmra.mxu0 %v1939
  %v2097 = vpop.f32.mrf.mxu0
  %v2098 = vadd.f32 0.0, %v2097
  %v2099 = vpop.f32.mrf.mxu0
  %v2100 = vadd.f32 0.0, %v2099
  %2101 = vmatmul.bf16.gmra.mxu0 %v1940
  %v2102 = vpop.f32.mrf.mxu0
  %v2103 = vadd.f32 0.0, %v2102
  %v2104 = vpop.f32.mrf.mxu0
  %v2105 = vadd.f32 0.0, %v2104
  %2106 = vmatmul.bf16.gmra.mxu0 %v1941
  %v2107 = vpop.f32.mrf.mxu0
  %v2108 = vadd.f32 0.0, %v2107
  %v2109 = vpop.f32.mrf.mxu0
  %v2110 = vadd.f32 0.0, %v2109
  %2111 = vmatmul.bf16.gmra.mxu0 %v1942
  %v2112 = vpop.f32.mrf.mxu0
  %v2113 = vadd.f32 0.0, %v2112
  %v2114 = vpop.f32.mrf.mxu0
  %v2115 = vadd.f32 0.0, %v2114
  %2116 = vmatmul.bf16.gmra.mxu0 %v1943
  %v2117 = vpop.f32.mrf.mxu0
  %v2118 = vadd.f32 0.0, %v2117
  %v2119 = vpop.f32.mrf.mxu0
  %v2120 = vadd.f32 0.0, %v2119
  %2121 = vmatmul.bf16.gmra.mxu0 %v1944
  %v2122 = vpop.f32.mrf.mxu0
  %v2123 = vadd.f32 0.0, %v2122
  %v2124 = vpop.f32.mrf.mxu0
  %v2125 = vadd.f32 0.0, %v2124
  %2126 = vmatmul.bf16.gmra.mxu0 %v1945
  %v2127 = vpop.f32.mrf.mxu0
  %v2128 = vadd.f32 0.0, %v2127
  %v2129 = vpop.f32.mrf.mxu0
  %v2130 = vadd.f32 0.0, %v2129
  %2131 = vmatmul.bf16.gmra.mxu0 %v1946
  %v2132 = vpop.f32.mrf.mxu0
  %v2133 = vadd.f32 0.0, %v2132
  %v2134 = vpop.f32.mrf.mxu0
  %v2135 = vadd.f32 0.0, %v2134
  %2136 = vmatmul.bf16.gmra.mxu0 %v1947
  %v2137 = vpop.f32.mrf.mxu0
  %v2138 = vadd.f32 0.0, %v2137
  %v2139 = vpop.f32.mrf.mxu0
  %v2140 = vadd.f32 0.0, %v2139
  %2141 = vmatmul.bf16.gmra.mxu0 %v1948
  %v2142 = vpop.f32.mrf.mxu0
  %v2143 = vadd.f32 0.0, %v2142
  %v2144 = vpop.f32.mrf.mxu0
  %v2145 = vadd.f32 0.0, %v2144
  %2146 = vmatmul.bf16.gmra.mxu0 %v1949
  %v2147 = vpop.f32.mrf.mxu0
  %v2148 = vadd.f32 0.0, %v2147
  %v2149 = vpop.f32.mrf.mxu0
  %v2150 = vadd.f32 0.0, %v2149
  %2151 = vmatmul.bf16.gmra.mxu0 %v1950
  %v2152 = vpop.f32.mrf.mxu0
  %v2153 = vadd.f32 0.0, %v2152
  %v2154 = vpop.f32.mrf.mxu0
  %v2155 = vadd.f32 0.0, %v2154
  %2156 = vmatmul.bf16.gmra.mxu0 %v1951
  %v2157 = vpop.f32.mrf.mxu0
  %v2158 = vadd.f32 0.0, %v2157
  %v2159 = vpop.f32.mrf.mxu0
  %v2160 = vadd.f32 0.0, %v2159
  %2161 = vmatmul.bf16.gmra.mxu0 %v1952
  %v2162 = vpop.f32.mrf.mxu0
  %v2163 = vadd.f32 0.0, %v2162
  %v2164 = vpop.f32.mrf.mxu0
  %v2165 = vadd.f32 0.0, %v2164
  %2166 = vmatmul.bf16.gmra.mxu0 %v1953
  %v2167 = vpop.f32.mrf.mxu0
  %v2168 = vadd.f32 0.0, %v2167
  %v2169 = vpop.f32.mrf.mxu0
  %v2170 = vadd.f32 0.0, %v2169
  %2171 = vmatmul.bf16.gmra.mxu0 %v1954
  %v2172 = vpop.f32.mrf.mxu0
  %v2173 = vadd.f32 0.0, %v2172
  %v2174 = vpop.f32.mrf.mxu0
  %v2175 = vadd.f32 0.0, %v2174
  %2176 = vmatmul.bf16.gmra.mxu0 %v1955
  %v2177 = vpop.f32.mrf.mxu0
  %v2178 = vadd.f32 0.0, %v2177
  %v2179 = vpop.f32.mrf.mxu0
  %v2180 = vadd.f32 0.0, %v2179
  %2181 = vmatmul.bf16.gmra.mxu0 %v1956
  %v2182 = vpop.f32.mrf.mxu0
  %v2183 = vadd.f32 0.0, %v2182
  %v2184 = vpop.f32.mrf.mxu0
  %v2185 = vadd.f32 0.0, %v2184
  %2186 = vmatmul.bf16.gmra.mxu0 %v1957
  %v2187 = vpop.f32.mrf.mxu0
  %v2188 = vadd.f32 0.0, %v2187
  %v2189 = vpop.f32.mrf.mxu0
  %v2190 = vadd.f32 0.0, %v2189
  %2191 = vdwg.mxu0
  %v2192 = vadd.f32 %v1798, %v2033
  %v2193 = vadd.f32 %v1799, %v2035
  %v2194 = vadd.f32 %v1800, %v2038
  %v2195 = vadd.f32 %v1801, %v2040
  %v2196 = vadd.f32 %v1802, %v2043
  %v2197 = vadd.f32 %v1803, %v2045
  %v2198 = vadd.f32 %v1804, %v2048
  %v2199 = vadd.f32 %v1805, %v2050
  %v2200 = vadd.f32 %v1806, %v2053
  %v2201 = vadd.f32 %v1807, %v2055
  %v2202 = vadd.f32 %v1808, %v2058
  %v2203 = vadd.f32 %v1809, %v2060
  %v2204 = vadd.f32 %v1810, %v2063
  %v2205 = vadd.f32 %v1811, %v2065
  %v2206 = vadd.f32 %v1812, %v2068
  %v2207 = vadd.f32 %v1813, %v2070
  %v2208 = vadd.f32 %v1814, %v2073
  %v2209 = vadd.f32 %v1815, %v2075
  %v2210 = vadd.f32 %v1816, %v2078
  %v2211 = vadd.f32 %v1817, %v2080
  %v2212 = vadd.f32 %v1818, %v2083
  %v2213 = vadd.f32 %v1819, %v2085
  %v2214 = vadd.f32 %v1820, %v2088
  %v2215 = vadd.f32 %v1821, %v2090
  %v2216 = vadd.f32 %v1822, %v2093
  %v2217 = vadd.f32 %v1823, %v2095
  %v2218 = vadd.f32 %v1824, %v2098
  %v2219 = vadd.f32 %v1825, %v2100
  %v2220 = vadd.f32 %v1826, %v2103
  %v2221 = vadd.f32 %v1827, %v2105
  %v2222 = vadd.f32 %v1828, %v2108
  %v2223 = vadd.f32 %v1829, %v2110
  %v2224 = vadd.f32 %v1830, %v2113
  %v2225 = vadd.f32 %v1831, %v2115
  %v2226 = vadd.f32 %v1832, %v2118
  %v2227 = vadd.f32 %v1833, %v2120
  %v2228 = vadd.f32 %v1834, %v2123
  %v2229 = vadd.f32 %v1835, %v2125
  %v2230 = vadd.f32 %v1836, %v2128
  %v2231 = vadd.f32 %v1837, %v2130
  %v2232 = vadd.f32 %v1838, %v2133
  %v2233 = vadd.f32 %v1839, %v2135
  %v2234 = vadd.f32 %v1840, %v2138
  %v2235 = vadd.f32 %v1841, %v2140
  %v2236 = vadd.f32 %v1842, %v2143
  %v2237 = vadd.f32 %v1843, %v2145
  %v2238 = vadd.f32 %v1844, %v2148
  %v2239 = vadd.f32 %v1845, %v2150
  %v2240 = vadd.f32 %v1846, %v2153
  %v2241 = vadd.f32 %v1847, %v2155
  %v2242 = vadd.f32 %v1848, %v2158
  %v2243 = vadd.f32 %v1849, %v2160
  %v2244 = vadd.f32 %v1850, %v2163
  %v2245 = vadd.f32 %v1851, %v2165
  %v2246 = vadd.f32 %v1852, %v2168
  %v2247 = vadd.f32 %v1853, %v2170
  %v2248 = vadd.f32 %v1854, %v2173
  %v2249 = vadd.f32 %v1855, %v2175
  %v2250 = vadd.f32 %v1856, %v2178
  %v2251 = vadd.f32 %v1857, %v2180
  %v2252 = vadd.f32 %v1858, %v2183
  %v2253 = vadd.f32 %v1859, %v2185
  %v2254 = vadd.f32 %v1860, %v2188
  %v2255 = vadd.f32 %v1861, %v2190
  %s2256 = scalar_lea.vmem %s0, 48
  %v2257 = vld [vmem:[%s2256] sm:$0xff]
  %v2258 = vld [vmem:[%s2256 + $0x8] sm:$0xff]
  %v2259 = vld [vmem:[%s2256 + $0x18] sm:$0xff]
  %v2260 = vld [vmem:[%s2256 + $0x20] sm:$0xff]
  %v2261 = vld [vmem:[%s2256 + $0x30] sm:$0xff]
  %v2262 = vld [vmem:[%s2256 + $0x38] sm:$0xff]
  %v2263 = vld [vmem:[%s2256 + $0x48] sm:$0xff]
  %v2264 = vld [vmem:[%s2256 + $0x50] sm:$0xff]
  %v2265 = vld [vmem:[%s2256 + $0x60] sm:$0xff]
  %v2266 = vld [vmem:[%s2256 + $0x68] sm:$0xff]
  %v2267 = vld [vmem:[%s2256 + $0x78] sm:$0xff]
  %v2268 = vld [vmem:[%s2256 + $0x80] sm:$0xff]
  %v2269 = vld [vmem:[%s2256 + $0x90] sm:$0xff]
  %v2270 = vld [vmem:[%s2256 + $0x98] sm:$0xff]
  %v2271 = vld [vmem:[%s2256 + $0xa8] sm:$0xff]
  %v2272 = vld [vmem:[%s2256 + $0xb0] sm:$0xff]
  %v2273 = vld [vmem:[%s2256 + $0xc0] sm:$0xff]
  %v2274 = vld [vmem:[%s2256 + $0xc8] sm:$0xff]
  %v2275 = vld [vmem:[%s2256 + $0xd8] sm:$0xff]
  %v2276 = vld [vmem:[%s2256 + $0xe0] sm:$0xff]
  %v2277 = vld [vmem:[%s2256 + $0xf0] sm:$0xff]
  %v2278 = vld [vmem:[%s2256 + $0xf8] sm:$0xff]
  %v2279 = vld [vmem:[%s2256 + $0x108] sm:$0xff]
  %v2280 = vld [vmem:[%s2256 + $0x110] sm:$0xff]
  %v2281 = vld [vmem:[%s2256 + $0x120] sm:$0xff]
  %v2282 = vld [vmem:[%s2256 + $0x128] sm:$0xff]
  %v2283 = vld [vmem:[%s2256 + $0x138] sm:$0xff]
  %v2284 = vld [vmem:[%s2256 + $0x140] sm:$0xff]
  %v2285 = vld [vmem:[%s2256 + $0x150] sm:$0xff]
  %v2286 = vld [vmem:[%s2256 + $0x158] sm:$0xff]
  %v2287 = vld [vmem:[%s2256 + $0x168] sm:$0xff]
  %v2288 = vld [vmem:[%s2256 + $0x170] sm:$0xff]
  %v2289 = vld [vmem:[%s2256 + $0x1b0] sm:$0xff]
  %v2290 = vld [vmem:[%s2256 + $0x1b8] sm:$0xff]
  %v2291 = vld [vmem:[%s2256 + $0x1c8] sm:$0xff]
  %v2292 = vld [vmem:[%s2256 + $0x1d0] sm:$0xff]
  %v2293 = vld [vmem:[%s2256 + $0x1e0] sm:$0xff]
  %v2294 = vld [vmem:[%s2256 + $0x1e8] sm:$0xff]
  %v2295 = vld [vmem:[%s2256 + $0x1f8] sm:$0xff]
  %v2296 = vld [vmem:[%s2256 + $0x200] sm:$0xff]
  %v2297 = vld [vmem:[%s2256 + $0x210] sm:$0xff]
  %v2298 = vld [vmem:[%s2256 + $0x218] sm:$0xff]
  %v2299 = vld [vmem:[%s2256 + $0x228] sm:$0xff]
  %v2300 = vld [vmem:[%s2256 + $0x230] sm:$0xff]
  %v2301 = vld [vmem:[%s2256 + $0x240] sm:$0xff]
  %v2302 = vld [vmem:[%s2256 + $0x248] sm:$0xff]
  %v2303 = vld [vmem:[%s2256 + $0x258] sm:$0xff]
  %v2304 = vld [vmem:[%s2256 + $0x260] sm:$0xff]
  %v2305 = vld [vmem:[%s2256 + $0x270] sm:$0xff]
  %v2306 = vld [vmem:[%s2256 + $0x278] sm:$0xff]
  %v2307 = vld [vmem:[%s2256 + $0x288] sm:$0xff]
  %v2308 = vld [vmem:[%s2256 + $0x290] sm:$0xff]
  %v2309 = vld [vmem:[%s2256 + $0x2a0] sm:$0xff]
  %v2310 = vld [vmem:[%s2256 + $0x2a8] sm:$0xff]
  %v2311 = vld [vmem:[%s2256 + $0x2b8] sm:$0xff]
  %v2312 = vld [vmem:[%s2256 + $0x2c0] sm:$0xff]
  %v2313 = vld [vmem:[%s2256 + $0x2d0] sm:$0xff]
  %v2314 = vld [vmem:[%s2256 + $0x2d8] sm:$0xff]
  %v2315 = vld [vmem:[%s2256 + $0x2e8] sm:$0xff]
  %v2316 = vld [vmem:[%s2256 + $0x2f0] sm:$0xff]
  %v2317 = vld [vmem:[%s2256 + $0x300] sm:$0xff]
  %v2318 = vld [vmem:[%s2256 + $0x308] sm:$0xff]
  %v2319 = vld [vmem:[%s2256 + $0x318] sm:$0xff]
  %v2320 = vld [vmem:[%s2256 + $0x320] sm:$0xff]
  %v2321 = vpack.c.bf16 %v2258, %v2257
  %v2322 = vpack.c.bf16 %v2260, %v2259
  %v2323 = vpack.c.bf16 %v2262, %v2261
  %v2324 = vpack.c.bf16 %v2264, %v2263
  %v2325 = vpack.c.bf16 %v2266, %v2265
  %v2326 = vpack.c.bf16 %v2268, %v2267
  %v2327 = vpack.c.bf16 %v2270, %v2269
  %v2328 = vpack.c.bf16 %v2272, %v2271
  %v2329 = vpack.c.bf16 %v2274, %v2273
  %v2330 = vpack.c.bf16 %v2276, %v2275
  %v2331 = vpack.c.bf16 %v2278, %v2277
  %v2332 = vpack.c.bf16 %v2280, %v2279
  %v2333 = vpack.c.bf16 %v2282, %v2281
  %v2334 = vpack.c.bf16 %v2284, %v2283
  %v2335 = vpack.c.bf16 %v2286, %v2285
  %v2336 = vpack.c.bf16 %v2288, %v2287
  %v2337 = vpack.c.bf16 %v2290, %v2289
  %v2338 = vpack.c.bf16 %v2292, %v2291
  %v2339 = vpack.c.bf16 %v2294, %v2293
  %v2340 = vpack.c.bf16 %v2296, %v2295
  %v2341 = vpack.c.bf16 %v2298, %v2297
  %v2342 = vpack.c.bf16 %v2300, %v2299
  %v2343 = vpack.c.bf16 %v2302, %v2301
  %v2344 = vpack.c.bf16 %v2304, %v2303
  %v2345 = vpack.c.bf16 %v2306, %v2305
  %v2346 = vpack.c.bf16 %v2308, %v2307
  %v2347 = vpack.c.bf16 %v2310, %v2309
  %v2348 = vpack.c.bf16 %v2312, %v2311
  %v2349 = vpack.c.bf16 %v2314, %v2313
  %v2350 = vpack.c.bf16 %v2316, %v2315
  %v2351 = vpack.c.bf16 %v2318, %v2317
  %v2352 = vpack.c.bf16 %v2320, %v2319
  %s2353 = scalar_lea.vmem %s1, 384
  %v2354 = vld [vmem:[%s2353] sm:$0xf]
  %v2355 = vld [vmem:[%s2353 + $0x4] sm:$0xf]
  %v2356 = vld [vmem:[%s2353 + $0x8] sm:$0xf]
  %v2357 = vld [vmem:[%s2353 + $0xc] sm:$0xf]
  %v2358 = vld [vmem:[%s2353 + $0x10] sm:$0xf]
  %v2359 = vld [vmem:[%s2353 + $0x14] sm:$0xf]
  %v2360 = vld [vmem:[%s2353 + $0x18] sm:$0xf]
  %v2361 = vld [vmem:[%s2353 + $0x1c] sm:$0xf]
  %v2362 = vld [vmem:[%s2353 + $0x20] sm:$0xf]
  %v2363 = vld [vmem:[%s2353 + $0x24] sm:$0xf]
  %v2364 = vld [vmem:[%s2353 + $0x28] sm:$0xf]
  %v2365 = vld [vmem:[%s2353 + $0x2c] sm:$0xf]
  %v2366 = vld [vmem:[%s2353 + $0x30] sm:$0xf]
  %v2367 = vld [vmem:[%s2353 + $0x34] sm:$0xf]
  %v2368 = vld [vmem:[%s2353 + $0x38] sm:$0xf]
  %v2369 = vld [vmem:[%s2353 + $0x3c] sm:$0xf]
  %v2386 = vunpack.c.l.b16 %v2354
  %v2387 = vunpack.c.l.b16 %v2355
  %v2388 = vunpack.c.l.b16 %v2356
  %v2389 = vunpack.c.l.b16 %v2357
  %v2390 = vunpack.c.l.b16 %v2358
  %v2391 = vunpack.c.l.b16 %v2359
  %v2392 = vunpack.c.l.b16 %v2360
  %v2393 = vunpack.c.l.b16 %v2361
  %v2394 = vunpack.c.l.b16 %v2362
  %v2395 = vunpack.c.l.b16 %v2363
  %v2396 = vunpack.c.l.b16 %v2364
  %v2397 = vunpack.c.l.b16 %v2365
  %v2398 = vunpack.c.l.b16 %v2366
  %v2399 = vunpack.c.l.b16 %v2367
  %v2400 = vunpack.c.l.b16 %v2368
  %v2401 = vunpack.c.l.b16 %v2369
  %v2402 = vpack.c.b16 %v2387, %v2386
  %v2403 = vpack.c.b16 %v2389, %v2388
  %v2404 = vpack.c.b16 %v2391, %v2390
  %v2405 = vpack.c.b16 %v2393, %v2392
  %v2406 = vpack.c.b16 %v2395, %v2394
  %v2407 = vpack.c.b16 %v2397, %v2396
  %v2408 = vpack.c.b16 %v2399, %v2398
  %v2409 = vpack.c.b16 %v2401, %v2400
  %2418 = vmatpush.bf16.msra.mxu0 %v2409
  %2419 = vmatpush.bf16.msra.mxu0 %v2408
  %2420 = vmatpush.bf16.msra.mxu0 %v2407
  %2421 = vmatpush.bf16.msra.mxu0 %v2406
  %2422 = vmatpush.bf16.msra.mxu0 %v2405
  %2423 = vmatpush.bf16.msra.mxu0 %v2404
  %2424 = vmatpush.bf16.msra.mxu0 %v2403
  %2425 = vmatpush.bf16.msra.mxu0 %v2402
  %2426 = vmatmul.bf16.gmra.mxu0 %v2321
  %v2427 = vpop.f32.mrf.mxu0
  %v2428 = vadd.f32 0.0, %v2427
  %v2429 = vpop.f32.mrf.mxu0
  %v2430 = vadd.f32 0.0, %v2429
  %2431 = vmatmul.bf16.gmra.mxu0 %v2322
  %v2432 = vpop.f32.mrf.mxu0
  %v2433 = vadd.f32 0.0, %v2432
  %v2434 = vpop.f32.mrf.mxu0
  %v2435 = vadd.f32 0.0, %v2434
  %2436 = vmatmul.bf16.gmra.mxu0 %v2323
  %v2437 = vpop.f32.mrf.mxu0
  %v2438 = vadd.f32 0.0, %v2437
  %v2439 = vpop.f32.mrf.mxu0
  %v2440 = vadd.f32 0.0, %v2439
  %2441 = vmatmul.bf16.gmra.mxu0 %v2324
  %v2442 = vpop.f32.mrf.mxu0
  %v2443 = vadd.f32 0.0, %v2442
  %v2444 = vpop.f32.mrf.mxu0
  %v2445 = vadd.f32 0.0, %v2444
  %2446 = vmatmul.bf16.gmra.mxu0 %v2325
  %v2447 = vpop.f32.mrf.mxu0
  %v2448 = vadd.f32 0.0, %v2447
  %v2449 = vpop.f32.mrf.mxu0
  %v2450 = vadd.f32 0.0, %v2449
  %2451 = vmatmul.bf16.gmra.mxu0 %v2326
  %v2452 = vpop.f32.mrf.mxu0
  %v2453 = vadd.f32 0.0, %v2452
  %v2454 = vpop.f32.mrf.mxu0
  %v2455 = vadd.f32 0.0, %v2454
  %2456 = vmatmul.bf16.gmra.mxu0 %v2327
  %v2457 = vpop.f32.mrf.mxu0
  %v2458 = vadd.f32 0.0, %v2457
  %v2459 = vpop.f32.mrf.mxu0
  %v2460 = vadd.f32 0.0, %v2459
  %2461 = vmatmul.bf16.gmra.mxu0 %v2328
  %v2462 = vpop.f32.mrf.mxu0
  %v2463 = vadd.f32 0.0, %v2462
  %v2464 = vpop.f32.mrf.mxu0
  %v2465 = vadd.f32 0.0, %v2464
  %2466 = vmatmul.bf16.gmra.mxu0 %v2329
  %v2467 = vpop.f32.mrf.mxu0
  %v2468 = vadd.f32 0.0, %v2467
  %v2469 = vpop.f32.mrf.mxu0
  %v2470 = vadd.f32 0.0, %v2469
  %2471 = vmatmul.bf16.gmra.mxu0 %v2330
  %v2472 = vpop.f32.mrf.mxu0
  %v2473 = vadd.f32 0.0, %v2472
  %v2474 = vpop.f32.mrf.mxu0
  %v2475 = vadd.f32 0.0, %v2474
  %2476 = vmatmul.bf16.gmra.mxu0 %v2331
  %v2477 = vpop.f32.mrf.mxu0
  %v2478 = vadd.f32 0.0, %v2477
  %v2479 = vpop.f32.mrf.mxu0
  %v2480 = vadd.f32 0.0, %v2479
  %2481 = vmatmul.bf16.gmra.mxu0 %v2332
  %v2482 = vpop.f32.mrf.mxu0
  %v2483 = vadd.f32 0.0, %v2482
  %v2484 = vpop.f32.mrf.mxu0
  %v2485 = vadd.f32 0.0, %v2484
  %2486 = vmatmul.bf16.gmra.mxu0 %v2333
  %v2487 = vpop.f32.mrf.mxu0
  %v2488 = vadd.f32 0.0, %v2487
  %v2489 = vpop.f32.mrf.mxu0
  %v2490 = vadd.f32 0.0, %v2489
  %2491 = vmatmul.bf16.gmra.mxu0 %v2334
  %v2492 = vpop.f32.mrf.mxu0
  %v2493 = vadd.f32 0.0, %v2492
  %v2494 = vpop.f32.mrf.mxu0
  %v2495 = vadd.f32 0.0, %v2494
  %2496 = vmatmul.bf16.gmra.mxu0 %v2335
  %v2497 = vpop.f32.mrf.mxu0
  %v2498 = vadd.f32 0.0, %v2497
  %v2499 = vpop.f32.mrf.mxu0
  %v2500 = vadd.f32 0.0, %v2499
  %2501 = vmatmul.bf16.gmra.mxu0 %v2336
  %v2502 = vpop.f32.mrf.mxu0
  %v2503 = vadd.f32 0.0, %v2502
  %v2504 = vpop.f32.mrf.mxu0
  %v2505 = vadd.f32 0.0, %v2504
  %2506 = vmatmul.bf16.gmra.mxu0 %v2337
  %v2507 = vpop.f32.mrf.mxu0
  %v2508 = vadd.f32 0.0, %v2507
  %v2509 = vpop.f32.mrf.mxu0
  %v2510 = vadd.f32 0.0, %v2509
  %2511 = vmatmul.bf16.gmra.mxu0 %v2338
  %v2512 = vpop.f32.mrf.mxu0
  %v2513 = vadd.f32 0.0, %v2512
  %v2514 = vpop.f32.mrf.mxu0
  %v2515 = vadd.f32 0.0, %v2514
  %2516 = vmatmul.bf16.gmra.mxu0 %v2339
  %v2517 = vpop.f32.mrf.mxu0
  %v2518 = vadd.f32 0.0, %v2517
  %v2519 = vpop.f32.mrf.mxu0
  %v2520 = vadd.f32 0.0, %v2519
  %2521 = vmatmul.bf16.gmra.mxu0 %v2340
  %v2522 = vpop.f32.mrf.mxu0
  %v2523 = vadd.f32 0.0, %v2522
  %v2524 = vpop.f32.mrf.mxu0
  %v2525 = vadd.f32 0.0, %v2524
  %2526 = vmatmul.bf16.gmra.mxu0 %v2341
  %v2527 = vpop.f32.mrf.mxu0
  %v2528 = vadd.f32 0.0, %v2527
  %v2529 = vpop.f32.mrf.mxu0
  %v2530 = vadd.f32 0.0, %v2529
  %2531 = vmatmul.bf16.gmra.mxu0 %v2342
  %v2532 = vpop.f32.mrf.mxu0
  %v2533 = vadd.f32 0.0, %v2532
  %v2534 = vpop.f32.mrf.mxu0
  %v2535 = vadd.f32 0.0, %v2534
  %2536 = vmatmul.bf16.gmra.mxu0 %v2343
  %v2537 = vpop.f32.mrf.mxu0
  %v2538 = vadd.f32 0.0, %v2537
  %v2539 = vpop.f32.mrf.mxu0
  %v2540 = vadd.f32 0.0, %v2539
  %2541 = vmatmul.bf16.gmra.mxu0 %v2344
  %v2542 = vpop.f32.mrf.mxu0
  %v2543 = vadd.f32 0.0, %v2542
  %v2544 = vpop.f32.mrf.mxu0
  %v2545 = vadd.f32 0.0, %v2544
  %2546 = vmatmul.bf16.gmra.mxu0 %v2345
  %v2547 = vpop.f32.mrf.mxu0
  %v2548 = vadd.f32 0.0, %v2547
  %v2549 = vpop.f32.mrf.mxu0
  %v2550 = vadd.f32 0.0, %v2549
  %2551 = vmatmul.bf16.gmra.mxu0 %v2346
  %v2552 = vpop.f32.mrf.mxu0
  %v2553 = vadd.f32 0.0, %v2552
  %v2554 = vpop.f32.mrf.mxu0
  %v2555 = vadd.f32 0.0, %v2554
  %2556 = vmatmul.bf16.gmra.mxu0 %v2347
  %v2557 = vpop.f32.mrf.mxu0
  %v2558 = vadd.f32 0.0, %v2557
  %v2559 = vpop.f32.mrf.mxu0
  %v2560 = vadd.f32 0.0, %v2559
  %2561 = vmatmul.bf16.gmra.mxu0 %v2348
  %v2562 = vpop.f32.mrf.mxu0
  %v2563 = vadd.f32 0.0, %v2562
  %v2564 = vpop.f32.mrf.mxu0
  %v2565 = vadd.f32 0.0, %v2564
  %2566 = vmatmul.bf16.gmra.mxu0 %v2349
  %v2567 = vpop.f32.mrf.mxu0
  %v2568 = vadd.f32 0.0, %v2567
  %v2569 = vpop.f32.mrf.mxu0
  %v2570 = vadd.f32 0.0, %v2569
  %2571 = vmatmul.bf16.gmra.mxu0 %v2350
  %v2572 = vpop.f32.mrf.mxu0
  %v2573 = vadd.f32 0.0, %v2572
  %v2574 = vpop.f32.mrf.mxu0
  %v2575 = vadd.f32 0.0, %v2574
  %2576 = vmatmul.bf16.gmra.mxu0 %v2351
  %v2577 = vpop.f32.mrf.mxu0
  %v2578 = vadd.f32 0.0, %v2577
  %v2579 = vpop.f32.mrf.mxu0
  %v2580 = vadd.f32 0.0, %v2579
  %2581 = vmatmul.bf16.gmra.mxu0 %v2352
  %v2582 = vpop.f32.mrf.mxu0
  %v2583 = vadd.f32 0.0, %v2582
  %v2584 = vpop.f32.mrf.mxu0
  %v2585 = vadd.f32 0.0, %v2584
  %2586 = vdwg.mxu0
  %v2587 = vadd.f32 %v2192, %v2428
  %v2588 = vadd.f32 %v2193, %v2430
  %v2589 = vadd.f32 %v2194, %v2433
  %v2590 = vadd.f32 %v2195, %v2435
  %v2591 = vadd.f32 %v2196, %v2438
  %v2592 = vadd.f32 %v2197, %v2440
  %v2593 = vadd.f32 %v2198, %v2443
  %v2594 = vadd.f32 %v2199, %v2445
  %v2595 = vadd.f32 %v2200, %v2448
  %v2596 = vadd.f32 %v2201, %v2450
  %v2597 = vadd.f32 %v2202, %v2453
  %v2598 = vadd.f32 %v2203, %v2455
  %v2599 = vadd.f32 %v2204, %v2458
  %v2600 = vadd.f32 %v2205, %v2460
  %v2601 = vadd.f32 %v2206, %v2463
  %v2602 = vadd.f32 %v2207, %v2465
  %v2603 = vadd.f32 %v2208, %v2468
  %v2604 = vadd.f32 %v2209, %v2470
  %v2605 = vadd.f32 %v2210, %v2473
  %v2606 = vadd.f32 %v2211, %v2475
  %v2607 = vadd.f32 %v2212, %v2478
  %v2608 = vadd.f32 %v2213, %v2480
  %v2609 = vadd.f32 %v2214, %v2483
  %v2610 = vadd.f32 %v2215, %v2485
  %v2611 = vadd.f32 %v2216, %v2488
  %v2612 = vadd.f32 %v2217, %v2490
  %v2613 = vadd.f32 %v2218, %v2493
  %v2614 = vadd.f32 %v2219, %v2495
  %v2615 = vadd.f32 %v2220, %v2498
  %v2616 = vadd.f32 %v2221, %v2500
  %v2617 = vadd.f32 %v2222, %v2503
  %v2618 = vadd.f32 %v2223, %v2505
  %v2619 = vadd.f32 %v2224, %v2508
  %v2620 = vadd.f32 %v2225, %v2510
  %v2621 = vadd.f32 %v2226, %v2513
  %v2622 = vadd.f32 %v2227, %v2515
  %v2623 = vadd.f32 %v2228, %v2518
  %v2624 = vadd.f32 %v2229, %v2520
  %v2625 = vadd.f32 %v2230, %v2523
  %v2626 = vadd.f32 %v2231, %v2525
  %v2627 = vadd.f32 %v2232, %v2528
  %v2628 = vadd.f32 %v2233, %v2530
  %v2629 = vadd.f32 %v2234, %v2533
  %v2630 = vadd.f32 %v2235, %v2535
  %v2631 = vadd.f32 %v2236, %v2538
  %v2632 = vadd.f32 %v2237, %v2540
  %v2633 = vadd.f32 %v2238, %v2543
  %v2634 = vadd.f32 %v2239, %v2545
  %v2635 = vadd.f32 %v2240, %v2548
  %v2636 = vadd.f32 %v2241, %v2550
  %v2637 = vadd.f32 %v2242, %v2553
  %v2638 = vadd.f32 %v2243, %v2555
  %v2639 = vadd.f32 %v2244, %v2558
  %v2640 = vadd.f32 %v2245, %v2560
  %v2641 = vadd.f32 %v2246, %v2563
  %v2642 = vadd.f32 %v2247, %v2565
  %v2643 = vadd.f32 %v2248, %v2568
  %v2644 = vadd.f32 %v2249, %v2570
  %v2645 = vadd.f32 %v2250, %v2573
  %v2646 = vadd.f32 %v2251, %v2575
  %v2647 = vadd.f32 %v2252, %v2578
  %v2648 = vadd.f32 %v2253, %v2580
  %v2649 = vadd.f32 %v2254, %v2583
  %v2650 = vadd.f32 %v2255, %v2585
  %v2651 = vld [vmem:[%s2256 + $0x1] sm:$0xff]
  %v2652 = vld [vmem:[%s2256 + $0x9] sm:$0xff]
  %v2653 = vld [vmem:[%s2256 + $0x19] sm:$0xff]
  %v2654 = vld [vmem:[%s2256 + $0x21] sm:$0xff]
  %v2655 = vld [vmem:[%s2256 + $0x31] sm:$0xff]
  %v2656 = vld [vmem:[%s2256 + $0x39] sm:$0xff]
  %v2657 = vld [vmem:[%s2256 + $0x49] sm:$0xff]
  %v2658 = vld [vmem:[%s2256 + $0x51] sm:$0xff]
  %v2659 = vld [vmem:[%s2256 + $0x61] sm:$0xff]
  %v2660 = vld [vmem:[%s2256 + $0x69] sm:$0xff]
  %v2661 = vld [vmem:[%s2256 + $0x79] sm:$0xff]
  %v2662 = vld [vmem:[%s2256 + $0x81] sm:$0xff]
  %v2663 = vld [vmem:[%s2256 + $0x91] sm:$0xff]
  %v2664 = vld [vmem:[%s2256 + $0x99] sm:$0xff]
  %v2665 = vld [vmem:[%s2256 + $0xa9] sm:$0xff]
  %v2666 = vld [vmem:[%s2256 + $0xb1] sm:$0xff]
  %v2667 = vld [vmem:[%s2256 + $0xc1] sm:$0xff]
  %v2668 = vld [vmem:[%s2256 + $0xc9] sm:$0xff]
  %v2669 = vld [vmem:[%s2256 + $0xd9] sm:$0xff]
  %v2670 = vld [vmem:[%s2256 + $0xe1] sm:$0xff]
  %v2671 = vld [vmem:[%s2256 + $0xf1] sm:$0xff]
  %v2672 = vld [vmem:[%s2256 + $0xf9] sm:$0xff]
  %v2673 = vld [vmem:[%s2256 + $0x109] sm:$0xff]
  %v2674 = vld [vmem:[%s2256 + $0x111] sm:$0xff]
  %v2675 = vld [vmem:[%s2256 + $0x121] sm:$0xff]
  %v2676 = vld [vmem:[%s2256 + $0x129] sm:$0xff]
  %v2677 = vld [vmem:[%s2256 + $0x139] sm:$0xff]
  %v2678 = vld [vmem:[%s2256 + $0x141] sm:$0xff]
  %v2679 = vld [vmem:[%s2256 + $0x151] sm:$0xff]
  %v2680 = vld [vmem:[%s2256 + $0x159] sm:$0xff]
  %v2681 = vld [vmem:[%s2256 + $0x169] sm:$0xff]
  %v2682 = vld [vmem:[%s2256 + $0x171] sm:$0xff]
  %v2683 = vld [vmem:[%s2256 + $0x1b1] sm:$0xff]
  %v2684 = vld [vmem:[%s2256 + $0x1b9] sm:$0xff]
  %v2685 = vld [vmem:[%s2256 + $0x1c9] sm:$0xff]
  %v2686 = vld [vmem:[%s2256 + $0x1d1] sm:$0xff]
  %v2687 = vld [vmem:[%s2256 + $0x1e1] sm:$0xff]
  %v2688 = vld [vmem:[%s2256 + $0x1e9] sm:$0xff]
  %v2689 = vld [vmem:[%s2256 + $0x1f9] sm:$0xff]
  %v2690 = vld [vmem:[%s2256 + $0x201] sm:$0xff]
  %v2691 = vld [vmem:[%s2256 + $0x211] sm:$0xff]
  %v2692 = vld [vmem:[%s2256 + $0x219] sm:$0xff]
  %v2693 = vld [vmem:[%s2256 + $0x229] sm:$0xff]
  %v2694 = vld [vmem:[%s2256 + $0x231] sm:$0xff]
  %v2695 = vld [vmem:[%s2256 + $0x241] sm:$0xff]
  %v2696 = vld [vmem:[%s2256 + $0x249] sm:$0xff]
  %v2697 = vld [vmem:[%s2256 + $0x259] sm:$0xff]
  %v2698 = vld [vmem:[%s2256 + $0x261] sm:$0xff]
  %v2699 = vld [vmem:[%s2256 + $0x271] sm:$0xff]
  %v2700 = vld [vmem:[%s2256 + $0x279] sm:$0xff]
  %v2701 = vld [vmem:[%s2256 + $0x289] sm:$0xff]
  %v2702 = vld [vmem:[%s2256 + $0x291] sm:$0xff]
  %v2703 = vld [vmem:[%s2256 + $0x2a1] sm:$0xff]
  %v2704 = vld [vmem:[%s2256 + $0x2a9] sm:$0xff]
  %v2705 = vld [vmem:[%s2256 + $0x2b9] sm:$0xff]
  %v2706 = vld [vmem:[%s2256 + $0x2c1] sm:$0xff]
  %v2707 = vld [vmem:[%s2256 + $0x2d1] sm:$0xff]
  %v2708 = vld [vmem:[%s2256 + $0x2d9] sm:$0xff]
  %v2709 = vld [vmem:[%s2256 + $0x2e9] sm:$0xff]
  %v2710 = vld [vmem:[%s2256 + $0x2f1] sm:$0xff]
  %v2711 = vld [vmem:[%s2256 + $0x301] sm:$0xff]
  %v2712 = vld [vmem:[%s2256 + $0x309] sm:$0xff]
  %v2713 = vld [vmem:[%s2256 + $0x319] sm:$0xff]
  %v2714 = vld [vmem:[%s2256 + $0x321] sm:$0xff]
  %v2715 = vpack.c.bf16 %v2652, %v2651
  %v2716 = vpack.c.bf16 %v2654, %v2653
  %v2717 = vpack.c.bf16 %v2656, %v2655
  %v2718 = vpack.c.bf16 %v2658, %v2657
  %v2719 = vpack.c.bf16 %v2660, %v2659
  %v2720 = vpack.c.bf16 %v2662, %v2661
  %v2721 = vpack.c.bf16 %v2664, %v2663
  %v2722 = vpack.c.bf16 %v2666, %v2665
  %v2723 = vpack.c.bf16 %v2668, %v2667
  %v2724 = vpack.c.bf16 %v2670, %v2669
  %v2725 = vpack.c.bf16 %v2672, %v2671
  %v2726 = vpack.c.bf16 %v2674, %v2673
  %v2727 = vpack.c.bf16 %v2676, %v2675
  %v2728 = vpack.c.bf16 %v2678, %v2677
  %v2729 = vpack.c.bf16 %v2680, %v2679
  %v2730 = vpack.c.bf16 %v2682, %v2681
  %v2731 = vpack.c.bf16 %v2684, %v2683
  %v2732 = vpack.c.bf16 %v2686, %v2685
  %v2733 = vpack.c.bf16 %v2688, %v2687
  %v2734 = vpack.c.bf16 %v2690, %v2689
  %v2735 = vpack.c.bf16 %v2692, %v2691
  %v2736 = vpack.c.bf16 %v2694, %v2693
  %v2737 = vpack.c.bf16 %v2696, %v2695
  %v2738 = vpack.c.bf16 %v2698, %v2697
  %v2739 = vpack.c.bf16 %v2700, %v2699
  %v2740 = vpack.c.bf16 %v2702, %v2701
  %v2741 = vpack.c.bf16 %v2704, %v2703
  %v2742 = vpack.c.bf16 %v2706, %v2705
  %v2743 = vpack.c.bf16 %v2708, %v2707
  %v2744 = vpack.c.bf16 %v2710, %v2709
  %v2745 = vpack.c.bf16 %v2712, %v2711
  %v2746 = vpack.c.bf16 %v2714, %v2713
  %s2747 = scalar_lea.vmem %s1, 448
  %v2748 = vld [vmem:[%s2747] sm:$0xf]
  %v2749 = vld [vmem:[%s2747 + $0x4] sm:$0xf]
  %v2750 = vld [vmem:[%s2747 + $0x8] sm:$0xf]
  %v2751 = vld [vmem:[%s2747 + $0xc] sm:$0xf]
  %v2752 = vld [vmem:[%s2747 + $0x10] sm:$0xf]
  %v2753 = vld [vmem:[%s2747 + $0x14] sm:$0xf]
  %v2754 = vld [vmem:[%s2747 + $0x18] sm:$0xf]
  %v2755 = vld [vmem:[%s2747 + $0x1c] sm:$0xf]
  %v2756 = vld [vmem:[%s2747 + $0x20] sm:$0xf]
  %v2757 = vld [vmem:[%s2747 + $0x24] sm:$0xf]
  %v2758 = vld [vmem:[%s2747 + $0x28] sm:$0xf]
  %v2759 = vld [vmem:[%s2747 + $0x2c] sm:$0xf]
  %v2760 = vld [vmem:[%s2747 + $0x30] sm:$0xf]
  %v2761 = vld [vmem:[%s2747 + $0x34] sm:$0xf]
  %v2762 = vld [vmem:[%s2747 + $0x38] sm:$0xf]
  %v2763 = vld [vmem:[%s2747 + $0x3c] sm:$0xf]
  %v2780 = vunpack.c.l.b16 %v2748
  %v2781 = vunpack.c.l.b16 %v2749
  %v2782 = vunpack.c.l.b16 %v2750
  %v2783 = vunpack.c.l.b16 %v2751
  %v2784 = vunpack.c.l.b16 %v2752
  %v2785 = vunpack.c.l.b16 %v2753
  %v2786 = vunpack.c.l.b16 %v2754
  %v2787 = vunpack.c.l.b16 %v2755
  %v2788 = vunpack.c.l.b16 %v2756
  %v2789 = vunpack.c.l.b16 %v2757
  %v2790 = vunpack.c.l.b16 %v2758
  %v2791 = vunpack.c.l.b16 %v2759
  %v2792 = vunpack.c.l.b16 %v2760
  %v2793 = vunpack.c.l.b16 %v2761
  %v2794 = vunpack.c.l.b16 %v2762
  %v2795 = vunpack.c.l.b16 %v2763
  %v2796 = vpack.c.b16 %v2781, %v2780
  %v2797 = vpack.c.b16 %v2783, %v2782
  %v2798 = vpack.c.b16 %v2785, %v2784
  %v2799 = vpack.c.b16 %v2787, %v2786
  %v2800 = vpack.c.b16 %v2789, %v2788
  %v2801 = vpack.c.b16 %v2791, %v2790
  %v2802 = vpack.c.b16 %v2793, %v2792
  %v2803 = vpack.c.b16 %v2795, %v2794
  %2812 = vmatpush.bf16.msra.mxu0 %v2803
  %2813 = vmatpush.bf16.msra.mxu0 %v2802
  %2814 = vmatpush.bf16.msra.mxu0 %v2801
  %2815 = vmatpush.bf16.msra.mxu0 %v2800
  %2816 = vmatpush.bf16.msra.mxu0 %v2799
  %2817 = vmatpush.bf16.msra.mxu0 %v2798
  %2818 = vmatpush.bf16.msra.mxu0 %v2797
  %2819 = vmatpush.bf16.msra.mxu0 %v2796
  %2820 = vmatmul.bf16.gmra.mxu0 %v2715
  %v2821 = vpop.f32.mrf.mxu0
  %v2822 = vadd.f32 0.0, %v2821
  %v2823 = vpop.f32.mrf.mxu0
  %v2824 = vadd.f32 0.0, %v2823
  %2825 = vmatmul.bf16.gmra.mxu0 %v2716
  %v2826 = vpop.f32.mrf.mxu0
  %v2827 = vadd.f32 0.0, %v2826
  %v2828 = vpop.f32.mrf.mxu0
  %v2829 = vadd.f32 0.0, %v2828
  %2830 = vmatmul.bf16.gmra.mxu0 %v2717
  %v2831 = vpop.f32.mrf.mxu0
  %v2832 = vadd.f32 0.0, %v2831
  %v2833 = vpop.f32.mrf.mxu0
  %v2834 = vadd.f32 0.0, %v2833
  %2835 = vmatmul.bf16.gmra.mxu0 %v2718
  %v2836 = vpop.f32.mrf.mxu0
  %v2837 = vadd.f32 0.0, %v2836
  %v2838 = vpop.f32.mrf.mxu0
  %v2839 = vadd.f32 0.0, %v2838
  %2840 = vmatmul.bf16.gmra.mxu0 %v2719
  %v2841 = vpop.f32.mrf.mxu0
  %v2842 = vadd.f32 0.0, %v2841
  %v2843 = vpop.f32.mrf.mxu0
  %v2844 = vadd.f32 0.0, %v2843
  %2845 = vmatmul.bf16.gmra.mxu0 %v2720
  %v2846 = vpop.f32.mrf.mxu0
  %v2847 = vadd.f32 0.0, %v2846
  %v2848 = vpop.f32.mrf.mxu0
  %v2849 = vadd.f32 0.0, %v2848
  %2850 = vmatmul.bf16.gmra.mxu0 %v2721
  %v2851 = vpop.f32.mrf.mxu0
  %v2852 = vadd.f32 0.0, %v2851
  %v2853 = vpop.f32.mrf.mxu0
  %v2854 = vadd.f32 0.0, %v2853
  %2855 = vmatmul.bf16.gmra.mxu0 %v2722
  %v2856 = vpop.f32.mrf.mxu0
  %v2857 = vadd.f32 0.0, %v2856
  %v2858 = vpop.f32.mrf.mxu0
  %v2859 = vadd.f32 0.0, %v2858
  %2860 = vmatmul.bf16.gmra.mxu0 %v2723
  %v2861 = vpop.f32.mrf.mxu0
  %v2862 = vadd.f32 0.0, %v2861
  %v2863 = vpop.f32.mrf.mxu0
  %v2864 = vadd.f32 0.0, %v2863
  %2865 = vmatmul.bf16.gmra.mxu0 %v2724
  %v2866 = vpop.f32.mrf.mxu0
  %v2867 = vadd.f32 0.0, %v2866
  %v2868 = vpop.f32.mrf.mxu0
  %v2869 = vadd.f32 0.0, %v2868
  %2870 = vmatmul.bf16.gmra.mxu0 %v2725
  %v2871 = vpop.f32.mrf.mxu0
  %v2872 = vadd.f32 0.0, %v2871
  %v2873 = vpop.f32.mrf.mxu0
  %v2874 = vadd.f32 0.0, %v2873
  %2875 = vmatmul.bf16.gmra.mxu0 %v2726
  %v2876 = vpop.f32.mrf.mxu0
  %v2877 = vadd.f32 0.0, %v2876
  %v2878 = vpop.f32.mrf.mxu0
  %v2879 = vadd.f32 0.0, %v2878
  %2880 = vmatmul.bf16.gmra.mxu0 %v2727
  %v2881 = vpop.f32.mrf.mxu0
  %v2882 = vadd.f32 0.0, %v2881
  %v2883 = vpop.f32.mrf.mxu0
  %v2884 = vadd.f32 0.0, %v2883
  %2885 = vmatmul.bf16.gmra.mxu0 %v2728
  %v2886 = vpop.f32.mrf.mxu0
  %v2887 = vadd.f32 0.0, %v2886
  %v2888 = vpop.f32.mrf.mxu0
  %v2889 = vadd.f32 0.0, %v2888
  %2890 = vmatmul.bf16.gmra.mxu0 %v2729
  %v2891 = vpop.f32.mrf.mxu0
  %v2892 = vadd.f32 0.0, %v2891
  %v2893 = vpop.f32.mrf.mxu0
  %v2894 = vadd.f32 0.0, %v2893
  %2895 = vmatmul.bf16.gmra.mxu0 %v2730
  %v2896 = vpop.f32.mrf.mxu0
  %v2897 = vadd.f32 0.0, %v2896
  %v2898 = vpop.f32.mrf.mxu0
  %v2899 = vadd.f32 0.0, %v2898
  %2900 = vmatmul.bf16.gmra.mxu0 %v2731
  %v2901 = vpop.f32.mrf.mxu0
  %v2902 = vadd.f32 0.0, %v2901
  %v2903 = vpop.f32.mrf.mxu0
  %v2904 = vadd.f32 0.0, %v2903
  %2905 = vmatmul.bf16.gmra.mxu0 %v2732
  %v2906 = vpop.f32.mrf.mxu0
  %v2907 = vadd.f32 0.0, %v2906
  %v2908 = vpop.f32.mrf.mxu0
  %v2909 = vadd.f32 0.0, %v2908
  %2910 = vmatmul.bf16.gmra.mxu0 %v2733
  %v2911 = vpop.f32.mrf.mxu0
  %v2912 = vadd.f32 0.0, %v2911
  %v2913 = vpop.f32.mrf.mxu0
  %v2914 = vadd.f32 0.0, %v2913
  %2915 = vmatmul.bf16.gmra.mxu0 %v2734
  %v2916 = vpop.f32.mrf.mxu0
  %v2917 = vadd.f32 0.0, %v2916
  %v2918 = vpop.f32.mrf.mxu0
  %v2919 = vadd.f32 0.0, %v2918
  %2920 = vmatmul.bf16.gmra.mxu0 %v2735
  %v2921 = vpop.f32.mrf.mxu0
  %v2922 = vadd.f32 0.0, %v2921
  %v2923 = vpop.f32.mrf.mxu0
  %v2924 = vadd.f32 0.0, %v2923
  %2925 = vmatmul.bf16.gmra.mxu0 %v2736
  %v2926 = vpop.f32.mrf.mxu0
  %v2927 = vadd.f32 0.0, %v2926
  %v2928 = vpop.f32.mrf.mxu0
  %v2929 = vadd.f32 0.0, %v2928
  %2930 = vmatmul.bf16.gmra.mxu0 %v2737
  %v2931 = vpop.f32.mrf.mxu0
  %v2932 = vadd.f32 0.0, %v2931
  %v2933 = vpop.f32.mrf.mxu0
  %v2934 = vadd.f32 0.0, %v2933
  %2935 = vmatmul.bf16.gmra.mxu0 %v2738
  %v2936 = vpop.f32.mrf.mxu0
  %v2937 = vadd.f32 0.0, %v2936
  %v2938 = vpop.f32.mrf.mxu0
  %v2939 = vadd.f32 0.0, %v2938
  %2940 = vmatmul.bf16.gmra.mxu0 %v2739
  %v2941 = vpop.f32.mrf.mxu0
  %v2942 = vadd.f32 0.0, %v2941
  %v2943 = vpop.f32.mrf.mxu0
  %v2944 = vadd.f32 0.0, %v2943
  %2945 = vmatmul.bf16.gmra.mxu0 %v2740
  %v2946 = vpop.f32.mrf.mxu0
  %v2947 = vadd.f32 0.0, %v2946
  %v2948 = vpop.f32.mrf.mxu0
  %v2949 = vadd.f32 0.0, %v2948
  %2950 = vmatmul.bf16.gmra.mxu0 %v2741
  %v2951 = vpop.f32.mrf.mxu0
  %v2952 = vadd.f32 0.0, %v2951
  %v2953 = vpop.f32.mrf.mxu0
  %v2954 = vadd.f32 0.0, %v2953
  %2955 = vmatmul.bf16.gmra.mxu0 %v2742
  %v2956 = vpop.f32.mrf.mxu0
  %v2957 = vadd.f32 0.0, %v2956
  %v2958 = vpop.f32.mrf.mxu0
  %v2959 = vadd.f32 0.0, %v2958
  %2960 = vmatmul.bf16.gmra.mxu0 %v2743
  %v2961 = vpop.f32.mrf.mxu0
  %v2962 = vadd.f32 0.0, %v2961
  %v2963 = vpop.f32.mrf.mxu0
  %v2964 = vadd.f32 0.0, %v2963
  %2965 = vmatmul.bf16.gmra.mxu0 %v2744
  %v2966 = vpop.f32.mrf.mxu0
  %v2967 = vadd.f32 0.0, %v2966
  %v2968 = vpop.f32.mrf.mxu0
  %v2969 = vadd.f32 0.0, %v2968
  %2970 = vmatmul.bf16.gmra.mxu0 %v2745
  %v2971 = vpop.f32.mrf.mxu0
  %v2972 = vadd.f32 0.0, %v2971
  %v2973 = vpop.f32.mrf.mxu0
  %v2974 = vadd.f32 0.0, %v2973
  %2975 = vmatmul.bf16.gmra.mxu0 %v2746
  %v2976 = vpop.f32.mrf.mxu0
  %v2977 = vadd.f32 0.0, %v2976
  %v2978 = vpop.f32.mrf.mxu0
  %v2979 = vadd.f32 0.0, %v2978
  %2980 = vdwg.mxu0
  %v2981 = vadd.f32 %v2587, %v2822
  %v2982 = vadd.f32 %v2588, %v2824
  %v2983 = vadd.f32 %v2589, %v2827
  %v2984 = vadd.f32 %v2590, %v2829
  %v2985 = vadd.f32 %v2591, %v2832
  %v2986 = vadd.f32 %v2592, %v2834
  %v2987 = vadd.f32 %v2593, %v2837
  %v2988 = vadd.f32 %v2594, %v2839
  %v2989 = vadd.f32 %v2595, %v2842
  %v2990 = vadd.f32 %v2596, %v2844
  %v2991 = vadd.f32 %v2597, %v2847
  %v2992 = vadd.f32 %v2598, %v2849
  %v2993 = vadd.f32 %v2599, %v2852
  %v2994 = vadd.f32 %v2600, %v2854
  %v2995 = vadd.f32 %v2601, %v2857
  %v2996 = vadd.f32 %v2602, %v2859
  %v2997 = vadd.f32 %v2603, %v2862
  %v2998 = vadd.f32 %v2604, %v2864
  %v2999 = vadd.f32 %v2605, %v2867
  %v3000 = vadd.f32 %v2606, %v2869
  %v3001 = vadd.f32 %v2607, %v2872
  %v3002 = vadd.f32 %v2608, %v2874
  %v3003 = vadd.f32 %v2609, %v2877
  %v3004 = vadd.f32 %v2610, %v2879
  %v3005 = vadd.f32 %v2611, %v2882
  %v3006 = vadd.f32 %v2612, %v2884
  %v3007 = vadd.f32 %v2613, %v2887
  %v3008 = vadd.f32 %v2614, %v2889
  %v3009 = vadd.f32 %v2615, %v2892
  %v3010 = vadd.f32 %v2616, %v2894
  %v3011 = vadd.f32 %v2617, %v2897
  %v3012 = vadd.f32 %v2618, %v2899
  %v3013 = vadd.f32 %v2619, %v2902
  %v3014 = vadd.f32 %v2620, %v2904
  %v3015 = vadd.f32 %v2621, %v2907
  %v3016 = vadd.f32 %v2622, %v2909
  %v3017 = vadd.f32 %v2623, %v2912
  %v3018 = vadd.f32 %v2624, %v2914
  %v3019 = vadd.f32 %v2625, %v2917
  %v3020 = vadd.f32 %v2626, %v2919
  %v3021 = vadd.f32 %v2627, %v2922
  %v3022 = vadd.f32 %v2628, %v2924
  %v3023 = vadd.f32 %v2629, %v2927
  %v3024 = vadd.f32 %v2630, %v2929
  %v3025 = vadd.f32 %v2631, %v2932
  %v3026 = vadd.f32 %v2632, %v2934
  %v3027 = vadd.f32 %v2633, %v2937
  %v3028 = vadd.f32 %v2634, %v2939
  %v3029 = vadd.f32 %v2635, %v2942
  %v3030 = vadd.f32 %v2636, %v2944
  %v3031 = vadd.f32 %v2637, %v2947
  %v3032 = vadd.f32 %v2638, %v2949
  %v3033 = vadd.f32 %v2639, %v2952
  %v3034 = vadd.f32 %v2640, %v2954
  %v3035 = vadd.f32 %v2641, %v2957
  %v3036 = vadd.f32 %v2642, %v2959
  %v3037 = vadd.f32 %v2643, %v2962
  %v3038 = vadd.f32 %v2644, %v2964
  %v3039 = vadd.f32 %v2645, %v2967
  %v3040 = vadd.f32 %v2646, %v2969
  %v3041 = vadd.f32 %v2647, %v2972
  %v3042 = vadd.f32 %v2648, %v2974
  %v3043 = vadd.f32 %v2649, %v2977
  %v3044 = vadd.f32 %v2650, %v2979
  %v3045 = vld [vmem:[%s2256 + $0x2] sm:$0xff]
  %v3046 = vld [vmem:[%s2256 + $0xa] sm:$0xff]
  %v3047 = vld [vmem:[%s2256 + $0x1a] sm:$0xff]
  %v3048 = vld [vmem:[%s2256 + $0x22] sm:$0xff]
  %v3049 = vld [vmem:[%s2256 + $0x32] sm:$0xff]
  %v3050 = vld [vmem:[%s2256 + $0x3a] sm:$0xff]
  %v3051 = vld [vmem:[%s2256 + $0x4a] sm:$0xff]
  %v3052 = vld [vmem:[%s2256 + $0x52] sm:$0xff]
  %v3053 = vld [vmem:[%s2256 + $0x62] sm:$0xff]
  %v3054 = vld [vmem:[%s2256 + $0x6a] sm:$0xff]
  %v3055 = vld [vmem:[%s2256 + $0x7a] sm:$0xff]
  %v3056 = vld [vmem:[%s2256 + $0x82] sm:$0xff]
  %v3057 = vld [vmem:[%s2256 + $0x92] sm:$0xff]
  %v3058 = vld [vmem:[%s2256 + $0x9a] sm:$0xff]
  %v3059 = vld [vmem:[%s2256 + $0xaa] sm:$0xff]
  %v3060 = vld [vmem:[%s2256 + $0xb2] sm:$0xff]
  %v3061 = vld [vmem:[%s2256 + $0xc2] sm:$0xff]
  %v3062 = vld [vmem:[%s2256 + $0xca] sm:$0xff]
  %v3063 = vld [vmem:[%s2256 + $0xda] sm:$0xff]
  %v3064 = vld [vmem:[%s2256 + $0xe2] sm:$0xff]
  %v3065 = vld [vmem:[%s2256 + $0xf2] sm:$0xff]
  %v3066 = vld [vmem:[%s2256 + $0xfa] sm:$0xff]
  %v3067 = vld [vmem:[%s2256 + $0x10a] sm:$0xff]
  %v3068 = vld [vmem:[%s2256 + $0x112] sm:$0xff]
  %v3069 = vld [vmem:[%s2256 + $0x122] sm:$0xff]
  %v3070 = vld [vmem:[%s2256 + $0x12a] sm:$0xff]
  %v3071 = vld [vmem:[%s2256 + $0x13a] sm:$0xff]
  %v3072 = vld [vmem:[%s2256 + $0x142] sm:$0xff]
  %v3073 = vld [vmem:[%s2256 + $0x152] sm:$0xff]
  %v3074 = vld [vmem:[%s2256 + $0x15a] sm:$0xff]
  %v3075 = vld [vmem:[%s2256 + $0x16a] sm:$0xff]
  %v3076 = vld [vmem:[%s2256 + $0x172] sm:$0xff]
  %v3077 = vld [vmem:[%s2256 + $0x1b2] sm:$0xff]
  %v3078 = vld [vmem:[%s2256 + $0x1ba] sm:$0xff]
  %v3079 = vld [vmem:[%s2256 + $0x1ca] sm:$0xff]
  %v3080 = vld [vmem:[%s2256 + $0x1d2] sm:$0xff]
  %v3081 = vld [vmem:[%s2256 + $0x1e2] sm:$0xff]
  %v3082 = vld [vmem:[%s2256 + $0x1ea] sm:$0xff]
  %v3083 = vld [vmem:[%s2256 + $0x1fa] sm:$0xff]
  %v3084 = vld [vmem:[%s2256 + $0x202] sm:$0xff]
  %v3085 = vld [vmem:[%s2256 + $0x212] sm:$0xff]
  %v3086 = vld [vmem:[%s2256 + $0x21a] sm:$0xff]
  %v3087 = vld [vmem:[%s2256 + $0x22a] sm:$0xff]
  %v3088 = vld [vmem:[%s2256 + $0x232] sm:$0xff]
  %v3089 = vld [vmem:[%s2256 + $0x242] sm:$0xff]
  %v3090 = vld [vmem:[%s2256 + $0x24a] sm:$0xff]
  %v3091 = vld [vmem:[%s2256 + $0x25a] sm:$0xff]
  %v3092 = vld [vmem:[%s2256 + $0x262] sm:$0xff]
  %v3093 = vld [vmem:[%s2256 + $0x272] sm:$0xff]
  %v3094 = vld [vmem:[%s2256 + $0x27a] sm:$0xff]
  %v3095 = vld [vmem:[%s2256 + $0x28a] sm:$0xff]
  %v3096 = vld [vmem:[%s2256 + $0x292] sm:$0xff]
  %v3097 = vld [vmem:[%s2256 + $0x2a2] sm:$0xff]
  %v3098 = vld [vmem:[%s2256 + $0x2aa] sm:$0xff]
  %v3099 = vld [vmem:[%s2256 + $0x2ba] sm:$0xff]
  %v3100 = vld [vmem:[%s2256 + $0x2c2] sm:$0xff]
  %v3101 = vld [vmem:[%s2256 + $0x2d2] sm:$0xff]
  %v3102 = vld [vmem:[%s2256 + $0x2da] sm:$0xff]
  %v3103 = vld [vmem:[%s2256 + $0x2ea] sm:$0xff]
  %v3104 = vld [vmem:[%s2256 + $0x2f2] sm:$0xff]
  %v3105 = vld [vmem:[%s2256 + $0x302] sm:$0xff]
  %v3106 = vld [vmem:[%s2256 + $0x30a] sm:$0xff]
  %v3107 = vld [vmem:[%s2256 + $0x31a] sm:$0xff]
  %v3108 = vld [vmem:[%s2256 + $0x322] sm:$0xff]
  %v3109 = vpack.c.bf16 %v3046, %v3045
  %v3110 = vpack.c.bf16 %v3048, %v3047
  %v3111 = vpack.c.bf16 %v3050, %v3049
  %v3112 = vpack.c.bf16 %v3052, %v3051
  %v3113 = vpack.c.bf16 %v3054, %v3053
  %v3114 = vpack.c.bf16 %v3056, %v3055
  %v3115 = vpack.c.bf16 %v3058, %v3057
  %v3116 = vpack.c.bf16 %v3060, %v3059
  %v3117 = vpack.c.bf16 %v3062, %v3061
  %v3118 = vpack.c.bf16 %v3064, %v3063
  %v3119 = vpack.c.bf16 %v3066, %v3065
  %v3120 = vpack.c.bf16 %v3068, %v3067
  %v3121 = vpack.c.bf16 %v3070, %v3069
  %v3122 = vpack.c.bf16 %v3072, %v3071
  %v3123 = vpack.c.bf16 %v3074, %v3073
  %v3124 = vpack.c.bf16 %v3076, %v3075
  %v3125 = vpack.c.bf16 %v3078, %v3077
  %v3126 = vpack.c.bf16 %v3080, %v3079
  %v3127 = vpack.c.bf16 %v3082, %v3081
  %v3128 = vpack.c.bf16 %v3084, %v3083
  %v3129 = vpack.c.bf16 %v3086, %v3085
  %v3130 = vpack.c.bf16 %v3088, %v3087
  %v3131 = vpack.c.bf16 %v3090, %v3089
  %v3132 = vpack.c.bf16 %v3092, %v3091
  %v3133 = vpack.c.bf16 %v3094, %v3093
  %v3134 = vpack.c.bf16 %v3096, %v3095
  %v3135 = vpack.c.bf16 %v3098, %v3097
  %v3136 = vpack.c.bf16 %v3100, %v3099
  %v3137 = vpack.c.bf16 %v3102, %v3101
  %v3138 = vpack.c.bf16 %v3104, %v3103
  %v3139 = vpack.c.bf16 %v3106, %v3105
  %v3140 = vpack.c.bf16 %v3108, %v3107
  %s3141 = scalar_lea.vmem %s1, 512
  %v3142 = vld [vmem:[%s3141] sm:$0xf]
  %v3143 = vld [vmem:[%s3141 + $0x4] sm:$0xf]
  %v3144 = vld [vmem:[%s3141 + $0x8] sm:$0xf]
  %v3145 = vld [vmem:[%s3141 + $0xc] sm:$0xf]
  %v3146 = vld [vmem:[%s3141 + $0x10] sm:$0xf]
  %v3147 = vld [vmem:[%s3141 + $0x14] sm:$0xf]
  %v3148 = vld [vmem:[%s3141 + $0x18] sm:$0xf]
  %v3149 = vld [vmem:[%s3141 + $0x1c] sm:$0xf]
  %v3150 = vld [vmem:[%s3141 + $0x20] sm:$0xf]
  %v3151 = vld [vmem:[%s3141 + $0x24] sm:$0xf]
  %v3152 = vld [vmem:[%s3141 + $0x28] sm:$0xf]
  %v3153 = vld [vmem:[%s3141 + $0x2c] sm:$0xf]
  %v3154 = vld [vmem:[%s3141 + $0x30] sm:$0xf]
  %v3155 = vld [vmem:[%s3141 + $0x34] sm:$0xf]
  %v3156 = vld [vmem:[%s3141 + $0x38] sm:$0xf]
  %v3157 = vld [vmem:[%s3141 + $0x3c] sm:$0xf]
  %v3174 = vunpack.c.l.b16 %v3142
  %v3175 = vunpack.c.l.b16 %v3143
  %v3176 = vunpack.c.l.b16 %v3144
  %v3177 = vunpack.c.l.b16 %v3145
  %v3178 = vunpack.c.l.b16 %v3146
  %v3179 = vunpack.c.l.b16 %v3147
  %v3180 = vunpack.c.l.b16 %v3148
  %v3181 = vunpack.c.l.b16 %v3149
  %v3182 = vunpack.c.l.b16 %v3150
  %v3183 = vunpack.c.l.b16 %v3151
  %v3184 = vunpack.c.l.b16 %v3152
  %v3185 = vunpack.c.l.b16 %v3153
  %v3186 = vunpack.c.l.b16 %v3154
  %v3187 = vunpack.c.l.b16 %v3155
  %v3188 = vunpack.c.l.b16 %v3156
  %v3189 = vunpack.c.l.b16 %v3157
  %v3190 = vpack.c.b16 %v3175, %v3174
  %v3191 = vpack.c.b16 %v3177, %v3176
  %v3192 = vpack.c.b16 %v3179, %v3178
  %v3193 = vpack.c.b16 %v3181, %v3180
  %v3194 = vpack.c.b16 %v3183, %v3182
  %v3195 = vpack.c.b16 %v3185, %v3184
  %v3196 = vpack.c.b16 %v3187, %v3186
  %v3197 = vpack.c.b16 %v3189, %v3188
  %3206 = vmatpush.bf16.msra.mxu0 %v3197
  %3207 = vmatpush.bf16.msra.mxu0 %v3196
  %3208 = vmatpush.bf16.msra.mxu0 %v3195
  %3209 = vmatpush.bf16.msra.mxu0 %v3194
  %3210 = vmatpush.bf16.msra.mxu0 %v3193
  %3211 = vmatpush.bf16.msra.mxu0 %v3192
  %3212 = vmatpush.bf16.msra.mxu0 %v3191
  %3213 = vmatpush.bf16.msra.mxu0 %v3190
  %3214 = vmatmul.bf16.gmra.mxu0 %v3109
  %v3215 = vpop.f32.mrf.mxu0
  %v3216 = vadd.f32 0.0, %v3215
  %v3217 = vpop.f32.mrf.mxu0
  %v3218 = vadd.f32 0.0, %v3217
  %3219 = vmatmul.bf16.gmra.mxu0 %v3110
  %v3220 = vpop.f32.mrf.mxu0
  %v3221 = vadd.f32 0.0, %v3220
  %v3222 = vpop.f32.mrf.mxu0
  %v3223 = vadd.f32 0.0, %v3222
  %3224 = vmatmul.bf16.gmra.mxu0 %v3111
  %v3225 = vpop.f32.mrf.mxu0
  %v3226 = vadd.f32 0.0, %v3225
  %v3227 = vpop.f32.mrf.mxu0
  %v3228 = vadd.f32 0.0, %v3227
  %3229 = vmatmul.bf16.gmra.mxu0 %v3112
  %v3230 = vpop.f32.mrf.mxu0
  %v3231 = vadd.f32 0.0, %v3230
  %v3232 = vpop.f32.mrf.mxu0
  %v3233 = vadd.f32 0.0, %v3232
  %3234 = vmatmul.bf16.gmra.mxu0 %v3113
  %v3235 = vpop.f32.mrf.mxu0
  %v3236 = vadd.f32 0.0, %v3235
  %v3237 = vpop.f32.mrf.mxu0
  %v3238 = vadd.f32 0.0, %v3237
  %3239 = vmatmul.bf16.gmra.mxu0 %v3114
  %v3240 = vpop.f32.mrf.mxu0
  %v3241 = vadd.f32 0.0, %v3240
  %v3242 = vpop.f32.mrf.mxu0
  %v3243 = vadd.f32 0.0, %v3242
  %3244 = vmatmul.bf16.gmra.mxu0 %v3115
  %v3245 = vpop.f32.mrf.mxu0
  %v3246 = vadd.f32 0.0, %v3245
  %v3247 = vpop.f32.mrf.mxu0
  %v3248 = vadd.f32 0.0, %v3247
  %3249 = vmatmul.bf16.gmra.mxu0 %v3116
  %v3250 = vpop.f32.mrf.mxu0
  %v3251 = vadd.f32 0.0, %v3250
  %v3252 = vpop.f32.mrf.mxu0
  %v3253 = vadd.f32 0.0, %v3252
  %3254 = vmatmul.bf16.gmra.mxu0 %v3117
  %v3255 = vpop.f32.mrf.mxu0
  %v3256 = vadd.f32 0.0, %v3255
  %v3257 = vpop.f32.mrf.mxu0
  %v3258 = vadd.f32 0.0, %v3257
  %3259 = vmatmul.bf16.gmra.mxu0 %v3118
  %v3260 = vpop.f32.mrf.mxu0
  %v3261 = vadd.f32 0.0, %v3260
  %v3262 = vpop.f32.mrf.mxu0
  %v3263 = vadd.f32 0.0, %v3262
  %3264 = vmatmul.bf16.gmra.mxu0 %v3119
  %v3265 = vpop.f32.mrf.mxu0
  %v3266 = vadd.f32 0.0, %v3265
  %v3267 = vpop.f32.mrf.mxu0
  %v3268 = vadd.f32 0.0, %v3267
  %3269 = vmatmul.bf16.gmra.mxu0 %v3120
  %v3270 = vpop.f32.mrf.mxu0
  %v3271 = vadd.f32 0.0, %v3270
  %v3272 = vpop.f32.mrf.mxu0
  %v3273 = vadd.f32 0.0, %v3272
  %3274 = vmatmul.bf16.gmra.mxu0 %v3121
  %v3275 = vpop.f32.mrf.mxu0
  %v3276 = vadd.f32 0.0, %v3275
  %v3277 = vpop.f32.mrf.mxu0
  %v3278 = vadd.f32 0.0, %v3277
  %3279 = vmatmul.bf16.gmra.mxu0 %v3122
  %v3280 = vpop.f32.mrf.mxu0
  %v3281 = vadd.f32 0.0, %v3280
  %v3282 = vpop.f32.mrf.mxu0
  %v3283 = vadd.f32 0.0, %v3282
  %3284 = vmatmul.bf16.gmra.mxu0 %v3123
  %v3285 = vpop.f32.mrf.mxu0
  %v3286 = vadd.f32 0.0, %v3285
  %v3287 = vpop.f32.mrf.mxu0
  %v3288 = vadd.f32 0.0, %v3287
  %3289 = vmatmul.bf16.gmra.mxu0 %v3124
  %v3290 = vpop.f32.mrf.mxu0
  %v3291 = vadd.f32 0.0, %v3290
  %v3292 = vpop.f32.mrf.mxu0
  %v3293 = vadd.f32 0.0, %v3292
  %3294 = vmatmul.bf16.gmra.mxu0 %v3125
  %v3295 = vpop.f32.mrf.mxu0
  %v3296 = vadd.f32 0.0, %v3295
  %v3297 = vpop.f32.mrf.mxu0
  %v3298 = vadd.f32 0.0, %v3297
  %3299 = vmatmul.bf16.gmra.mxu0 %v3126
  %v3300 = vpop.f32.mrf.mxu0
  %v3301 = vadd.f32 0.0, %v3300
  %v3302 = vpop.f32.mrf.mxu0
  %v3303 = vadd.f32 0.0, %v3302
  %3304 = vmatmul.bf16.gmra.mxu0 %v3127
  %v3305 = vpop.f32.mrf.mxu0
  %v3306 = vadd.f32 0.0, %v3305
  %v3307 = vpop.f32.mrf.mxu0
  %v3308 = vadd.f32 0.0, %v3307
  %3309 = vmatmul.bf16.gmra.mxu0 %v3128
  %v3310 = vpop.f32.mrf.mxu0
  %v3311 = vadd.f32 0.0, %v3310
  %v3312 = vpop.f32.mrf.mxu0
  %v3313 = vadd.f32 0.0, %v3312
  %3314 = vmatmul.bf16.gmra.mxu0 %v3129
  %v3315 = vpop.f32.mrf.mxu0
  %v3316 = vadd.f32 0.0, %v3315
  %v3317 = vpop.f32.mrf.mxu0
  %v3318 = vadd.f32 0.0, %v3317
  %3319 = vmatmul.bf16.gmra.mxu0 %v3130
  %v3320 = vpop.f32.mrf.mxu0
  %v3321 = vadd.f32 0.0, %v3320
  %v3322 = vpop.f32.mrf.mxu0
  %v3323 = vadd.f32 0.0, %v3322
  %3324 = vmatmul.bf16.gmra.mxu0 %v3131
  %v3325 = vpop.f32.mrf.mxu0
  %v3326 = vadd.f32 0.0, %v3325
  %v3327 = vpop.f32.mrf.mxu0
  %v3328 = vadd.f32 0.0, %v3327
  %3329 = vmatmul.bf16.gmra.mxu0 %v3132
  %v3330 = vpop.f32.mrf.mxu0
  %v3331 = vadd.f32 0.0, %v3330
  %v3332 = vpop.f32.mrf.mxu0
  %v3333 = vadd.f32 0.0, %v3332
  %3334 = vmatmul.bf16.gmra.mxu0 %v3133
  %v3335 = vpop.f32.mrf.mxu0
  %v3336 = vadd.f32 0.0, %v3335
  %v3337 = vpop.f32.mrf.mxu0
  %v3338 = vadd.f32 0.0, %v3337
  %3339 = vmatmul.bf16.gmra.mxu0 %v3134
  %v3340 = vpop.f32.mrf.mxu0
  %v3341 = vadd.f32 0.0, %v3340
  %v3342 = vpop.f32.mrf.mxu0
  %v3343 = vadd.f32 0.0, %v3342
  %3344 = vmatmul.bf16.gmra.mxu0 %v3135
  %v3345 = vpop.f32.mrf.mxu0
  %v3346 = vadd.f32 0.0, %v3345
  %v3347 = vpop.f32.mrf.mxu0
  %v3348 = vadd.f32 0.0, %v3347
  %3349 = vmatmul.bf16.gmra.mxu0 %v3136
  %v3350 = vpop.f32.mrf.mxu0
  %v3351 = vadd.f32 0.0, %v3350
  %v3352 = vpop.f32.mrf.mxu0
  %v3353 = vadd.f32 0.0, %v3352
  %3354 = vmatmul.bf16.gmra.mxu0 %v3137
  %v3355 = vpop.f32.mrf.mxu0
  %v3356 = vadd.f32 0.0, %v3355
  %v3357 = vpop.f32.mrf.mxu0
  %v3358 = vadd.f32 0.0, %v3357
  %3359 = vmatmul.bf16.gmra.mxu0 %v3138
  %v3360 = vpop.f32.mrf.mxu0
  %v3361 = vadd.f32 0.0, %v3360
  %v3362 = vpop.f32.mrf.mxu0
  %v3363 = vadd.f32 0.0, %v3362
  %3364 = vmatmul.bf16.gmra.mxu0 %v3139
  %v3365 = vpop.f32.mrf.mxu0
  %v3366 = vadd.f32 0.0, %v3365
  %v3367 = vpop.f32.mrf.mxu0
  %v3368 = vadd.f32 0.0, %v3367
  %3369 = vmatmul.bf16.gmra.mxu0 %v3140
  %v3370 = vpop.f32.mrf.mxu0
  %v3371 = vadd.f32 0.0, %v3370
  %v3372 = vpop.f32.mrf.mxu0
  %v3373 = vadd.f32 0.0, %v3372
  %3374 = vdwg.mxu0
  %v3375 = vadd.f32 %v2981, %v3216
  %v3376 = vadd.f32 %v2982, %v3218
  %v3377 = vadd.f32 %v2983, %v3221
  %v3378 = vadd.f32 %v2984, %v3223
  %v3379 = vadd.f32 %v2985, %v3226
  %v3380 = vadd.f32 %v2986, %v3228
  %v3381 = vadd.f32 %v2987, %v3231
  %v3382 = vadd.f32 %v2988, %v3233
  %v3383 = vadd.f32 %v2989, %v3236
  %v3384 = vadd.f32 %v2990, %v3238
  %v3385 = vadd.f32 %v2991, %v3241
  %v3386 = vadd.f32 %v2992, %v3243
  %v3387 = vadd.f32 %v2993, %v3246
  %v3388 = vadd.f32 %v2994, %v3248
  %v3389 = vadd.f32 %v2995, %v3251
  %v3390 = vadd.f32 %v2996, %v3253
  %v3391 = vadd.f32 %v2997, %v3256
  %v3392 = vadd.f32 %v2998, %v3258
  %v3393 = vadd.f32 %v2999, %v3261
  %v3394 = vadd.f32 %v3000, %v3263
  %v3395 = vadd.f32 %v3001, %v3266
  %v3396 = vadd.f32 %v3002, %v3268
  %v3397 = vadd.f32 %v3003, %v3271
  %v3398 = vadd.f32 %v3004, %v3273
  %v3399 = vadd.f32 %v3005, %v3276
  %v3400 = vadd.f32 %v3006, %v3278
  %v3401 = vadd.f32 %v3007, %v3281
  %v3402 = vadd.f32 %v3008, %v3283
  %v3403 = vadd.f32 %v3009, %v3286
  %v3404 = vadd.f32 %v3010, %v3288
  %v3405 = vadd.f32 %v3011, %v3291
  %v3406 = vadd.f32 %v3012, %v3293
  %v3407 = vadd.f32 %v3013, %v3296
  %v3408 = vadd.f32 %v3014, %v3298
  %v3409 = vadd.f32 %v3015, %v3301
  %v3410 = vadd.f32 %v3016, %v3303
  %v3411 = vadd.f32 %v3017, %v3306
  %v3412 = vadd.f32 %v3018, %v3308
  %v3413 = vadd.f32 %v3019, %v3311
  %v3414 = vadd.f32 %v3020, %v3313
  %v3415 = vadd.f32 %v3021, %v3316
  %v3416 = vadd.f32 %v3022, %v3318
  %v3417 = vadd.f32 %v3023, %v3321
  %v3418 = vadd.f32 %v3024, %v3323
  %v3419 = vadd.f32 %v3025, %v3326
  %v3420 = vadd.f32 %v3026, %v3328
  %v3421 = vadd.f32 %v3027, %v3331
  %v3422 = vadd.f32 %v3028, %v3333
  %v3423 = vadd.f32 %v3029, %v3336
  %v3424 = vadd.f32 %v3030, %v3338
  %v3425 = vadd.f32 %v3031, %v3341
  %v3426 = vadd.f32 %v3032, %v3343
  %v3427 = vadd.f32 %v3033, %v3346
  %v3428 = vadd.f32 %v3034, %v3348
  %v3429 = vadd.f32 %v3035, %v3351
  %v3430 = vadd.f32 %v3036, %v3353
  %v3431 = vadd.f32 %v3037, %v3356
  %v3432 = vadd.f32 %v3038, %v3358
  %v3433 = vadd.f32 %v3039, %v3361
  %v3434 = vadd.f32 %v3040, %v3363
  %v3435 = vadd.f32 %v3041, %v3366
  %v3436 = vadd.f32 %v3042, %v3368
  %v3437 = vadd.f32 %v3043, %v3371
  %v3438 = vadd.f32 %v3044, %v3373
  %v3439 = vadd.f32 %v3375, %v3376
  %v3440 = vadd.f32 %v3439, %v3377
  %v3441 = vadd.f32 %v3440, %v3378
  %v3442 = vadd.f32 %v3441, %v3379
  %v3443 = vadd.f32 %v3442, %v3380
  %v3444 = vadd.f32 %v3443, %v3381
  %v3445 = vadd.f32 %v3444, %v3382
  %v3446 = vadd.f32 %v3445, %v3383
  %v3447 = vadd.f32 %v3446, %v3384
  %v3448 = vadd.f32 %v3447, %v3385
  %v3449 = vadd.f32 %v3448, %v3386
  %v3450 = vadd.f32 %v3449, %v3387
  %v3451 = vadd.f32 %v3450, %v3388
  %v3452 = vadd.f32 %v3451, %v3389
  %v3453 = vadd.f32 %v3452, %v3390
  %v3454 = vadd.f32 %v3453, %v3391
  %v3455 = vadd.f32 %v3454, %v3392
  %v3456 = vadd.f32 %v3455, %v3393
  %v3457 = vadd.f32 %v3456, %v3394
  %v3458 = vadd.f32 %v3457, %v3395
  %v3459 = vadd.f32 %v3458, %v3396
  %v3460 = vadd.f32 %v3459, %v3397
  %v3461 = vadd.f32 %v3460, %v3398
  %v3462 = vadd.f32 %v3461, %v3399
  %v3463 = vadd.f32 %v3462, %v3400
  %v3464 = vadd.f32 %v3463, %v3401
  %v3465 = vadd.f32 %v3464, %v3402
  %v3466 = vadd.f32 %v3465, %v3403
  %v3467 = vadd.f32 %v3466, %v3404
  %v3468 = vadd.f32 %v3467, %v3405
  %v3469 = vadd.f32 %v3468, %v3406
  %v3470 = vadd.f32 %v3469, %v3407
  %v3471 = vadd.f32 %v3470, %v3408
  %v3472 = vadd.f32 %v3471, %v3409
  %v3473 = vadd.f32 %v3472, %v3410
  %v3474 = vadd.f32 %v3473, %v3411
  %v3475 = vadd.f32 %v3474, %v3412
  %v3476 = vadd.f32 %v3475, %v3413
  %v3477 = vadd.f32 %v3476, %v3414
  %v3478 = vadd.f32 %v3477, %v3415
  %v3479 = vadd.f32 %v3478, %v3416
  %v3480 = vadd.f32 %v3479, %v3417
  %v3481 = vadd.f32 %v3480, %v3418
  %v3482 = vadd.f32 %v3481, %v3419
  %v3483 = vadd.f32 %v3482, %v3420
  %v3484 = vadd.f32 %v3483, %v3421
  %v3485 = vadd.f32 %v3484, %v3422
  %v3486 = vadd.f32 %v3485, %v3423
  %v3487 = vadd.f32 %v3486, %v3424
  %v3488 = vadd.f32 %v3487, %v3425
  %v3489 = vadd.f32 %v3488, %v3426
  %v3490 = vadd.f32 %v3489, %v3427
  %v3491 = vadd.f32 %v3490, %v3428
  %v3492 = vadd.f32 %v3491, %v3429
  %v3493 = vadd.f32 %v3492, %v3430
  %v3494 = vadd.f32 %v3493, %v3431
  %v3495 = vadd.f32 %v3494, %v3432
  %v3496 = vadd.f32 %v3495, %v3433
  %v3497 = vadd.f32 %v3496, %v3434
  %v3498 = vadd.f32 %v3497, %v3435
  %v3499 = vadd.f32 %v3498, %v3436
  %v3500 = vadd.f32 %v3499, %v3437
  %v3501 = vadd.f32 %v3500, %v3438
  %v3502 = vrot.slane %v3501, 4
  %v3503 = vadd.f32 %v3501, %v3502
  %v3504 = vrot.slane %v3503, 2
  %v3505 = vadd.f32 %v3503, %v3504
  %v3506 = vrot.slane %v3505, 1
  %v3507 = vadd.f32 %v3505, %v3506
  %v3508 = vrcp.pop 512.0
  %v3509 = vmul.f32 512.0, %v3508
  %v3510 = vsub.f32 1.0, %v3509
  %v3511 = vmul.f32 %v3508, %v3510
  %v3512 = vadd.f32 %v3508, %v3511
  %vm3513 = vweird.f32 %v3508
  %v3514 = vsel %vm3513, %v3508, %v3512
  %v3515 = vmul.f32 %v3507, %v3514
  %v3516 = vsub.f32 %v3375, %v3515
  %v3517 = vsub.f32 %v3376, %v3515
  %v3518 = vsub.f32 %v3377, %v3515
  %v3519 = vsub.f32 %v3378, %v3515
  %v3520 = vsub.f32 %v3379, %v3515
  %v3521 = vsub.f32 %v3380, %v3515
  %v3522 = vsub.f32 %v3381, %v3515
  %v3523 = vsub.f32 %v3382, %v3515
  %v3524 = vsub.f32 %v3383, %v3515
  %v3525 = vsub.f32 %v3384, %v3515
  %v3526 = vsub.f32 %v3385, %v3515
  %v3527 = vsub.f32 %v3386, %v3515
  %v3528 = vsub.f32 %v3387, %v3515
  %v3529 = vsub.f32 %v3388, %v3515
  %v3530 = vsub.f32 %v3389, %v3515
  %v3531 = vsub.f32 %v3390, %v3515
  %v3532 = vsub.f32 %v3391, %v3515
  %v3533 = vsub.f32 %v3392, %v3515
  %v3534 = vsub.f32 %v3393, %v3515
  %v3535 = vsub.f32 %v3394, %v3515
  %v3536 = vsub.f32 %v3395, %v3515
  %v3537 = vsub.f32 %v3396, %v3515
  %v3538 = vsub.f32 %v3397, %v3515
  %v3539 = vsub.f32 %v3398, %v3515
  %v3540 = vsub.f32 %v3399, %v3515
  %v3541 = vsub.f32 %v3400, %v3515
  %v3542 = vsub.f32 %v3401, %v3515
  %v3543 = vsub.f32 %v3402, %v3515
  %v3544 = vsub.f32 %v3403, %v3515
  %v3545 = vsub.f32 %v3404, %v3515
  %v3546 = vsub.f32 %v3405, %v3515
  %v3547 = vsub.f32 %v3406, %v3515
  %v3548 = vsub.f32 %v3407, %v3515
  %v3549 = vsub.f32 %v3408, %v3515
  %v3550 = vsub.f32 %v3409, %v3515
  %v3551 = vsub.f32 %v3410, %v3515
  %v3552 = vsub.f32 %v3411, %v3515
  %v3553 = vsub.f32 %v3412, %v3515
  %v3554 = vsub.f32 %v3413, %v3515
  %v3555 = vsub.f32 %v3414, %v3515
  %v3556 = vsub.f32 %v3415, %v3515
  %v3557 = vsub.f32 %v3416, %v3515
  %v3558 = vsub.f32 %v3417, %v3515
  %v3559 = vsub.f32 %v3418, %v3515
  %v3560 = vsub.f32 %v3419, %v3515
  %v3561 = vsub.f32 %v3420, %v3515
  %v3562 = vsub.f32 %v3421, %v3515
  %v3563 = vsub.f32 %v3422, %v3515
  %v3564 = vsub.f32 %v3423, %v3515
  %v3565 = vsub.f32 %v3424, %v3515
  %v3566 = vsub.f32 %v3425, %v3515
  %v3567 = vsub.f32 %v3426, %v3515
  %v3568 = vsub.f32 %v3427, %v3515
  %v3569 = vsub.f32 %v3428, %v3515
  %v3570 = vsub.f32 %v3429, %v3515
  %v3571 = vsub.f32 %v3430, %v3515
  %v3572 = vsub.f32 %v3431, %v3515
  %v3573 = vsub.f32 %v3432, %v3515
  %v3574 = vsub.f32 %v3433, %v3515
  %v3575 = vsub.f32 %v3434, %v3515
  %v3576 = vsub.f32 %v3435, %v3515
  %v3577 = vsub.f32 %v3436, %v3515
  %v3578 = vsub.f32 %v3437, %v3515
  %v3579 = vsub.f32 %v3438, %v3515
  %v3580 = vmul.f32 %v3516, %v3516
  %v3581 = vmul.f32 %v3517, %v3517
  %v3582 = vmul.f32 %v3518, %v3518
  %v3583 = vmul.f32 %v3519, %v3519
  %v3584 = vmul.f32 %v3520, %v3520
  %v3585 = vmul.f32 %v3521, %v3521
  %v3586 = vmul.f32 %v3522, %v3522
  %v3587 = vmul.f32 %v3523, %v3523
  %v3588 = vmul.f32 %v3524, %v3524
  %v3589 = vmul.f32 %v3525, %v3525
  %v3590 = vmul.f32 %v3526, %v3526
  %v3591 = vmul.f32 %v3527, %v3527
  %v3592 = vmul.f32 %v3528, %v3528
  %v3593 = vmul.f32 %v3529, %v3529
  %v3594 = vmul.f32 %v3530, %v3530
  %v3595 = vmul.f32 %v3531, %v3531
  %v3596 = vmul.f32 %v3532, %v3532
  %v3597 = vmul.f32 %v3533, %v3533
  %v3598 = vmul.f32 %v3534, %v3534
  %v3599 = vmul.f32 %v3535, %v3535
  %v3600 = vmul.f32 %v3536, %v3536
  %v3601 = vmul.f32 %v3537, %v3537
  %v3602 = vmul.f32 %v3538, %v3538
  %v3603 = vmul.f32 %v3539, %v3539
  %v3604 = vmul.f32 %v3540, %v3540
  %v3605 = vmul.f32 %v3541, %v3541
  %v3606 = vmul.f32 %v3542, %v3542
  %v3607 = vmul.f32 %v3543, %v3543
  %v3608 = vmul.f32 %v3544, %v3544
  %v3609 = vmul.f32 %v3545, %v3545
  %v3610 = vmul.f32 %v3546, %v3546
  %v3611 = vmul.f32 %v3547, %v3547
  %v3612 = vmul.f32 %v3548, %v3548
  %v3613 = vmul.f32 %v3549, %v3549
  %v3614 = vmul.f32 %v3550, %v3550
  %v3615 = vmul.f32 %v3551, %v3551
  %v3616 = vmul.f32 %v3552, %v3552
  %v3617 = vmul.f32 %v3553, %v3553
  %v3618 = vmul.f32 %v3554, %v3554
  %v3619 = vmul.f32 %v3555, %v3555
  %v3620 = vmul.f32 %v3556, %v3556
  %v3621 = vmul.f32 %v3557, %v3557
  %v3622 = vmul.f32 %v3558, %v3558
  %v3623 = vmul.f32 %v3559, %v3559
  %v3624 = vmul.f32 %v3560, %v3560
  %v3625 = vmul.f32 %v3561, %v3561
  %v3626 = vmul.f32 %v3562, %v3562
  %v3627 = vmul.f32 %v3563, %v3563
  %v3628 = vmul.f32 %v3564, %v3564
  %v3629 = vmul.f32 %v3565, %v3565
  %v3630 = vmul.f32 %v3566, %v3566
  %v3631 = vmul.f32 %v3567, %v3567
  %v3632 = vmul.f32 %v3568, %v3568
  %v3633 = vmul.f32 %v3569, %v3569
  %v3634 = vmul.f32 %v3570, %v3570
  %v3635 = vmul.f32 %v3571, %v3571
  %v3636 = vmul.f32 %v3572, %v3572
  %v3637 = vmul.f32 %v3573, %v3573
  %v3638 = vmul.f32 %v3574, %v3574
  %v3639 = vmul.f32 %v3575, %v3575
  %v3640 = vmul.f32 %v3576, %v3576
  %v3641 = vmul.f32 %v3577, %v3577
  %v3642 = vmul.f32 %v3578, %v3578
  %v3643 = vmul.f32 %v3579, %v3579
  %v3644 = vadd.f32 %v3580, %v3581
  %v3645 = vadd.f32 %v3644, %v3582
  %v3646 = vadd.f32 %v3645, %v3583
  %v3647 = vadd.f32 %v3646, %v3584
  %v3648 = vadd.f32 %v3647, %v3585
  %v3649 = vadd.f32 %v3648, %v3586
  %v3650 = vadd.f32 %v3649, %v3587
  %v3651 = vadd.f32 %v3650, %v3588
  %v3652 = vadd.f32 %v3651, %v3589
  %v3653 = vadd.f32 %v3652, %v3590
  %v3654 = vadd.f32 %v3653, %v3591
  %v3655 = vadd.f32 %v3654, %v3592
  %v3656 = vadd.f32 %v3655, %v3593
  %v3657 = vadd.f32 %v3656, %v3594
  %v3658 = vadd.f32 %v3657, %v3595
  %v3659 = vadd.f32 %v3658, %v3596
  %v3660 = vadd.f32 %v3659, %v3597
  %v3661 = vadd.f32 %v3660, %v3598
  %v3662 = vadd.f32 %v3661, %v3599
  %v3663 = vadd.f32 %v3662, %v3600
  %v3664 = vadd.f32 %v3663, %v3601
  %v3665 = vadd.f32 %v3664, %v3602
  %v3666 = vadd.f32 %v3665, %v3603
  %v3667 = vadd.f32 %v3666, %v3604
  %v3668 = vadd.f32 %v3667, %v3605
  %v3669 = vadd.f32 %v3668, %v3606
  %v3670 = vadd.f32 %v3669, %v3607
  %v3671 = vadd.f32 %v3670, %v3608
  %v3672 = vadd.f32 %v3671, %v3609
  %v3673 = vadd.f32 %v3672, %v3610
  %v3674 = vadd.f32 %v3673, %v3611
  %v3675 = vadd.f32 %v3674, %v3612
  %v3676 = vadd.f32 %v3675, %v3613
  %v3677 = vadd.f32 %v3676, %v3614
  %v3678 = vadd.f32 %v3677, %v3615
  %v3679 = vadd.f32 %v3678, %v3616
  %v3680 = vadd.f32 %v3679, %v3617
  %v3681 = vadd.f32 %v3680, %v3618
  %v3682 = vadd.f32 %v3681, %v3619
  %v3683 = vadd.f32 %v3682, %v3620
  %v3684 = vadd.f32 %v3683, %v3621
  %v3685 = vadd.f32 %v3684, %v3622
  %v3686 = vadd.f32 %v3685, %v3623
  %v3687 = vadd.f32 %v3686, %v3624
  %v3688 = vadd.f32 %v3687, %v3625
  %v3689 = vadd.f32 %v3688, %v3626
  %v3690 = vadd.f32 %v3689, %v3627
  %v3691 = vadd.f32 %v3690, %v3628
  %v3692 = vadd.f32 %v3691, %v3629
  %v3693 = vadd.f32 %v3692, %v3630
  %v3694 = vadd.f32 %v3693, %v3631
  %v3695 = vadd.f32 %v3694, %v3632
  %v3696 = vadd.f32 %v3695, %v3633
  %v3697 = vadd.f32 %v3696, %v3634
  %v3698 = vadd.f32 %v3697, %v3635
  %v3699 = vadd.f32 %v3698, %v3636
  %v3700 = vadd.f32 %v3699, %v3637
  %v3701 = vadd.f32 %v3700, %v3638
  %v3702 = vadd.f32 %v3701, %v3639
  %v3703 = vadd.f32 %v3702, %v3640
  %v3704 = vadd.f32 %v3703, %v3641
  %v3705 = vadd.f32 %v3704, %v3642
  %v3706 = vadd.f32 %v3705, %v3643
  %v3707 = vrot.slane %v3706, 4
  %v3708 = vadd.f32 %v3706, %v3707
  %v3709 = vrot.slane %v3708, 2
  %v3710 = vadd.f32 %v3708, %v3709
  %v3711 = vrot.slane %v3710, 1
  %v3712 = vadd.f32 %v3710, %v3711
  %v3713 = vmul.f32 %v3712, %v3514
  %v3714 = vadd.f32 %v3713, 1e-05
  %v3715 = vrsqrt.pop %v3714
  %v3716 = vmul.f32 %v3715, %v3714
  %v3717 = vmul.f32 %v3716, %v3715
  %v3718 = vmul.f32 0.5, %v3717
  %v3719 = vsub.f32 1.5, %v3718
  %v3720 = vmul.f32 %v3715, %v3719
  %vm3721 = vweird.f32 %v3714
  %vm3722 = vweird.f32 %v3715
  %vm3723 = vmor %vm3721, %vm3722
  %v3724 = vsel %vm3723, %v3715, %v3720
  %v3725 = vmul.f32 %v3516, %v3724
  %v3726 = vmul.f32 %v3517, %v3724
  %v3727 = vmul.f32 %v3518, %v3724
  %v3728 = vmul.f32 %v3519, %v3724
  %v3729 = vmul.f32 %v3520, %v3724
  %v3730 = vmul.f32 %v3521, %v3724
  %v3731 = vmul.f32 %v3522, %v3724
  %v3732 = vmul.f32 %v3523, %v3724
  %v3733 = vmul.f32 %v3524, %v3724
  %v3734 = vmul.f32 %v3525, %v3724
  %v3735 = vmul.f32 %v3526, %v3724
  %v3736 = vmul.f32 %v3527, %v3724
  %v3737 = vmul.f32 %v3528, %v3724
  %v3738 = vmul.f32 %v3529, %v3724
  %v3739 = vmul.f32 %v3530, %v3724
  %v3740 = vmul.f32 %v3531, %v3724
  %v3741 = vmul.f32 %v3532, %v3724
  %v3742 = vmul.f32 %v3533, %v3724
  %v3743 = vmul.f32 %v3534, %v3724
  %v3744 = vmul.f32 %v3535, %v3724
  %v3745 = vmul.f32 %v3536, %v3724
  %v3746 = vmul.f32 %v3537, %v3724
  %v3747 = vmul.f32 %v3538, %v3724
  %v3748 = vmul.f32 %v3539, %v3724
  %v3749 = vmul.f32 %v3540, %v3724
  %v3750 = vmul.f32 %v3541, %v3724
  %v3751 = vmul.f32 %v3542, %v3724
  %v3752 = vmul.f32 %v3543, %v3724
  %v3753 = vmul.f32 %v3544, %v3724
  %v3754 = vmul.f32 %v3545, %v3724
  %v3755 = vmul.f32 %v3546, %v3724
  %v3756 = vmul.f32 %v3547, %v3724
  %v3757 = vmul.f32 %v3548, %v3724
  %v3758 = vmul.f32 %v3549, %v3724
  %v3759 = vmul.f32 %v3550, %v3724
  %v3760 = vmul.f32 %v3551, %v3724
  %v3761 = vmul.f32 %v3552, %v3724
  %v3762 = vmul.f32 %v3553, %v3724
  %v3763 = vmul.f32 %v3554, %v3724
  %v3764 = vmul.f32 %v3555, %v3724
  %v3765 = vmul.f32 %v3556, %v3724
  %v3766 = vmul.f32 %v3557, %v3724
  %v3767 = vmul.f32 %v3558, %v3724
  %v3768 = vmul.f32 %v3559, %v3724
  %v3769 = vmul.f32 %v3560, %v3724
  %v3770 = vmul.f32 %v3561, %v3724
  %v3771 = vmul.f32 %v3562, %v3724
  %v3772 = vmul.f32 %v3563, %v3724
  %v3773 = vmul.f32 %v3564, %v3724
  %v3774 = vmul.f32 %v3565, %v3724
  %v3775 = vmul.f32 %v3566, %v3724
  %v3776 = vmul.f32 %v3567, %v3724
  %v3777 = vmul.f32 %v3568, %v3724
  %v3778 = vmul.f32 %v3569, %v3724
  %v3779 = vmul.f32 %v3570, %v3724
  %v3780 = vmul.f32 %v3571, %v3724
  %v3781 = vmul.f32 %v3572, %v3724
  %v3782 = vmul.f32 %v3573, %v3724
  %v3783 = vmul.f32 %v3574, %v3724
  %v3784 = vmul.f32 %v3575, %v3724
  %v3785 = vmul.f32 %v3576, %v3724
  %v3786 = vmul.f32 %v3577, %v3724
  %v3787 = vmul.f32 %v3578, %v3724
  %v3788 = vmul.f32 %v3579, %v3724
  %v3789 = vld [vmem:[%s2] sm:$0x1]
  %v3791 = vperm.slane %v3789, 0
  %v3793 = vmul.f32 %v3725, %v3791
  %v3794 = vmul.f32 %v3726, %v3791
  %v3795 = vmul.f32 %v3727, %v3791
  %v3796 = vmul.f32 %v3728, %v3791
  %v3797 = vmul.f32 %v3729, %v3791
  %v3798 = vmul.f32 %v3730, %v3791
  %v3799 = vmul.f32 %v3731, %v3791
  %v3800 = vmul.f32 %v3732, %v3791
  %v3801 = vmul.f32 %v3733, %v3791
  %v3802 = vmul.f32 %v3734, %v3791
  %v3803 = vmul.f32 %v3735, %v3791
  %v3804 = vmul.f32 %v3736, %v3791
  %v3805 = vmul.f32 %v3737, %v3791
  %v3806 = vmul.f32 %v3738, %v3791
  %v3807 = vmul.f32 %v3739, %v3791
  %v3808 = vmul.f32 %v3740, %v3791
  %v3809 = vmul.f32 %v3741, %v3791
  %v3810 = vmul.f32 %v3742, %v3791
  %v3811 = vmul.f32 %v3743, %v3791
  %v3812 = vmul.f32 %v3744, %v3791
  %v3813 = vmul.f32 %v3745, %v3791
  %v3814 = vmul.f32 %v3746, %v3791
  %v3815 = vmul.f32 %v3747, %v3791
  %v3816 = vmul.f32 %v3748, %v3791
  %v3817 = vmul.f32 %v3749, %v3791
  %v3818 = vmul.f32 %v3750, %v3791
  %v3819 = vmul.f32 %v3751, %v3791
  %v3820 = vmul.f32 %v3752, %v3791
  %v3821 = vmul.f32 %v3753, %v3791
  %v3822 = vmul.f32 %v3754, %v3791
  %v3823 = vmul.f32 %v3755, %v3791
  %v3824 = vmul.f32 %v3756, %v3791
  %v3825 = vmul.f32 %v3757, %v3791
  %v3826 = vmul.f32 %v3758, %v3791
  %v3827 = vmul.f32 %v3759, %v3791
  %v3828 = vmul.f32 %v3760, %v3791
  %v3829 = vmul.f32 %v3761, %v3791
  %v3830 = vmul.f32 %v3762, %v3791
  %v3831 = vmul.f32 %v3763, %v3791
  %v3832 = vmul.f32 %v3764, %v3791
  %v3833 = vmul.f32 %v3765, %v3791
  %v3834 = vmul.f32 %v3766, %v3791
  %v3835 = vmul.f32 %v3767, %v3791
  %v3836 = vmul.f32 %v3768, %v3791
  %v3837 = vmul.f32 %v3769, %v3791
  %v3838 = vmul.f32 %v3770, %v3791
  %v3839 = vmul.f32 %v3771, %v3791
  %v3840 = vmul.f32 %v3772, %v3791
  %v3841 = vmul.f32 %v3773, %v3791
  %v3842 = vmul.f32 %v3774, %v3791
  %v3843 = vmul.f32 %v3775, %v3791
  %v3844 = vmul.f32 %v3776, %v3791
  %v3845 = vmul.f32 %v3777, %v3791
  %v3846 = vmul.f32 %v3778, %v3791
  %v3847 = vmul.f32 %v3779, %v3791
  %v3848 = vmul.f32 %v3780, %v3791
  %v3849 = vmul.f32 %v3781, %v3791
  %v3850 = vmul.f32 %v3782, %v3791
  %v3851 = vmul.f32 %v3783, %v3791
  %v3852 = vmul.f32 %v3784, %v3791
  %v3853 = vmul.f32 %v3785, %v3791
  %v3854 = vmul.f32 %v3786, %v3791
  %v3855 = vmul.f32 %v3787, %v3791
  %v3856 = vmul.f32 %v3788, %v3791
  %v3857 = vld [vmem:[%s3] sm:$0x1]
  %v3859 = vperm.slane %v3857, 0
  %v3861 = vadd.f32 %v3793, %v3859
  %v3862 = vadd.f32 %v3794, %v3859
  %v3863 = vadd.f32 %v3795, %v3859
  %v3864 = vadd.f32 %v3796, %v3859
  %v3865 = vadd.f32 %v3797, %v3859
  %v3866 = vadd.f32 %v3798, %v3859
  %v3867 = vadd.f32 %v3799, %v3859
  %v3868 = vadd.f32 %v3800, %v3859
  %v3869 = vadd.f32 %v3801, %v3859
  %v3870 = vadd.f32 %v3802, %v3859
  %v3871 = vadd.f32 %v3803, %v3859
  %v3872 = vadd.f32 %v3804, %v3859
  %v3873 = vadd.f32 %v3805, %v3859
  %v3874 = vadd.f32 %v3806, %v3859
  %v3875 = vadd.f32 %v3807, %v3859
  %v3876 = vadd.f32 %v3808, %v3859
  %v3877 = vadd.f32 %v3809, %v3859
  %v3878 = vadd.f32 %v3810, %v3859
  %v3879 = vadd.f32 %v3811, %v3859
  %v3880 = vadd.f32 %v3812, %v3859
  %v3881 = vadd.f32 %v3813, %v3859
  %v3882 = vadd.f32 %v3814, %v3859
  %v3883 = vadd.f32 %v3815, %v3859
  %v3884 = vadd.f32 %v3816, %v3859
  %v3885 = vadd.f32 %v3817, %v3859
  %v3886 = vadd.f32 %v3818, %v3859
  %v3887 = vadd.f32 %v3819, %v3859
  %v3888 = vadd.f32 %v3820, %v3859
  %v3889 = vadd.f32 %v3821, %v3859
  %v3890 = vadd.f32 %v3822, %v3859
  %v3891 = vadd.f32 %v3823, %v3859
  %v3892 = vadd.f32 %v3824, %v3859
  %v3893 = vadd.f32 %v3825, %v3859
  %v3894 = vadd.f32 %v3826, %v3859
  %v3895 = vadd.f32 %v3827, %v3859
  %v3896 = vadd.f32 %v3828, %v3859
  %v3897 = vadd.f32 %v3829, %v3859
  %v3898 = vadd.f32 %v3830, %v3859
  %v3899 = vadd.f32 %v3831, %v3859
  %v3900 = vadd.f32 %v3832, %v3859
  %v3901 = vadd.f32 %v3833, %v3859
  %v3902 = vadd.f32 %v3834, %v3859
  %v3903 = vadd.f32 %v3835, %v3859
  %v3904 = vadd.f32 %v3836, %v3859
  %v3905 = vadd.f32 %v3837, %v3859
  %v3906 = vadd.f32 %v3838, %v3859
  %v3907 = vadd.f32 %v3839, %v3859
  %v3908 = vadd.f32 %v3840, %v3859
  %v3909 = vadd.f32 %v3841, %v3859
  %v3910 = vadd.f32 %v3842, %v3859
  %v3911 = vadd.f32 %v3843, %v3859
  %v3912 = vadd.f32 %v3844, %v3859
  %v3913 = vadd.f32 %v3845, %v3859
  %v3914 = vadd.f32 %v3846, %v3859
  %v3915 = vadd.f32 %v3847, %v3859
  %v3916 = vadd.f32 %v3848, %v3859
  %v3917 = vadd.f32 %v3849, %v3859
  %v3918 = vadd.f32 %v3850, %v3859
  %v3919 = vadd.f32 %v3851, %v3859
  %v3920 = vadd.f32 %v3852, %v3859
  %v3921 = vadd.f32 %v3853, %v3859
  %v3922 = vadd.f32 %v3854, %v3859
  %v3923 = vadd.f32 %v3855, %v3859
  %v3924 = vadd.f32 %v3856, %v3859
  %v3925 = vld [vmem:[%s4] sm:$0xff]
  %v3926 = vld [vmem:[%s4 + $0x8] sm:$0xff]
  %v3927 = vld [vmem:[%s4 + $0x10] sm:$0xff]
  %v3928 = vld [vmem:[%s4 + $0x18] sm:$0xff]
  %v3929 = vld [vmem:[%s4 + $0x20] sm:$0xff]
  %v3930 = vld [vmem:[%s4 + $0x28] sm:$0xff]
  %v3931 = vld [vmem:[%s4 + $0x30] sm:$0xff]
  %v3932 = vld [vmem:[%s4 + $0x38] sm:$0xff]
  %v3933 = vld [vmem:[%s4 + $0x40] sm:$0xff]
  %v3934 = vld [vmem:[%s4 + $0x48] sm:$0xff]
  %v3935 = vld [vmem:[%s4 + $0x50] sm:$0xff]
  %v3936 = vld [vmem:[%s4 + $0x58] sm:$0xff]
  %v3937 = vld [vmem:[%s4 + $0x60] sm:$0xff]
  %v3938 = vld [vmem:[%s4 + $0x68] sm:$0xff]
  %v3939 = vld [vmem:[%s4 + $0x70] sm:$0xff]
  %v3940 = vld [vmem:[%s4 + $0x78] sm:$0xff]
  %v3941 = vld [vmem:[%s4 + $0x80] sm:$0xff]
  %v3942 = vld [vmem:[%s4 + $0x88] sm:$0xff]
  %v3943 = vld [vmem:[%s4 + $0x90] sm:$0xff]
  %v3944 = vld [vmem:[%s4 + $0x98] sm:$0xff]
  %v3945 = vld [vmem:[%s4 + $0xa0] sm:$0xff]
  %v3946 = vld [vmem:[%s4 + $0xa8] sm:$0xff]
  %v3947 = vld [vmem:[%s4 + $0xb0] sm:$0xff]
  %v3948 = vld [vmem:[%s4 + $0xb8] sm:$0xff]
  %v3949 = vld [vmem:[%s4 + $0xc0] sm:$0xff]
  %v3950 = vld [vmem:[%s4 + $0xc8] sm:$0xff]
  %v3951 = vld [vmem:[%s4 + $0xd0] sm:$0xff]
  %v3952 = vld [vmem:[%s4 + $0xd8] sm:$0xff]
  %v3953 = vld [vmem:[%s4 + $0xe0] sm:$0xff]
  %v3954 = vld [vmem:[%s4 + $0xe8] sm:$0xff]
  %v3955 = vld [vmem:[%s4 + $0xf0] sm:$0xff]
  %v3956 = vld [vmem:[%s4 + $0xf8] sm:$0xff]
  %v3957 = vld [vmem:[%s4 + $0x100] sm:$0xff]
  %v3958 = vld [vmem:[%s4 + $0x108] sm:$0xff]
  %v3959 = vld [vmem:[%s4 + $0x110] sm:$0xff]
  %v3960 = vld [vmem:[%s4 + $0x118] sm:$0xff]
  %v3961 = vld [vmem:[%s4 + $0x120] sm:$0xff]
  %v3962 = vld [vmem:[%s4 + $0x128] sm:$0xff]
  %v3963 = vld [vmem:[%s4 + $0x130] sm:$0xff]
  %v3964 = vld [vmem:[%s4 + $0x138] sm:$0xff]
  %v3965 = vld [vmem:[%s4 + $0x140] sm:$0xff]
  %v3966 = vld [vmem:[%s4 + $0x148] sm:$0xff]
  %v3967 = vld [vmem:[%s4 + $0x150] sm:$0xff]
  %v3968 = vld [vmem:[%s4 + $0x158] sm:$0xff]
  %v3969 = vld [vmem:[%s4 + $0x160] sm:$0xff]
  %v3970 = vld [vmem:[%s4 + $0x168] sm:$0xff]
  %v3971 = vld [vmem:[%s4 + $0x170] sm:$0xff]
  %v3972 = vld [vmem:[%s4 + $0x178] sm:$0xff]
  %v3973 = vld [vmem:[%s4 + $0x180] sm:$0xff]
  %v3974 = vld [vmem:[%s4 + $0x188] sm:$0xff]
  %v3975 = vld [vmem:[%s4 + $0x190] sm:$0xff]
  %v3976 = vld [vmem:[%s4 + $0x198] sm:$0xff]
  %v3977 = vld [vmem:[%s4 + $0x1a0] sm:$0xff]
  %v3978 = vld [vmem:[%s4 + $0x1a8] sm:$0xff]
  %v3979 = vld [vmem:[%s4 + $0x1b0] sm:$0xff]
  %v3980 = vld [vmem:[%s4 + $0x1b8] sm:$0xff]
  %v3981 = vld [vmem:[%s4 + $0x1c0] sm:$0xff]
  %v3982 = vld [vmem:[%s4 + $0x1c8] sm:$0xff]
  %v3983 = vld [vmem:[%s4 + $0x1d0] sm:$0xff]
  %v3984 = vld [vmem:[%s4 + $0x1d8] sm:$0xff]
  %v3985 = vld [vmem:[%s4 + $0x1e0] sm:$0xff]
  %v3986 = vld [vmem:[%s4 + $0x1e8] sm:$0xff]
  %v3987 = vld [vmem:[%s4 + $0x1f0] sm:$0xff]
  %v3988 = vld [vmem:[%s4 + $0x1f8] sm:$0xff]
  %v3989 = vadd.f32 %v3861, %v3925
  %v3990 = vadd.f32 %v3862, %v3926
  %v3991 = vadd.f32 %v3863, %v3927
  %v3992 = vadd.f32 %v3864, %v3928
  %v3993 = vadd.f32 %v3865, %v3929
  %v3994 = vadd.f32 %v3866, %v3930
  %v3995 = vadd.f32 %v3867, %v3931
  %v3996 = vadd.f32 %v3868, %v3932
  %v3997 = vadd.f32 %v3869, %v3933
  %v3998 = vadd.f32 %v3870, %v3934
  %v3999 = vadd.f32 %v3871, %v3935
  %v4000 = vadd.f32 %v3872, %v3936
  %v4001 = vadd.f32 %v3873, %v3937
  %v4002 = vadd.f32 %v3874, %v3938
  %v4003 = vadd.f32 %v3875, %v3939
  %v4004 = vadd.f32 %v3876, %v3940
  %v4005 = vadd.f32 %v3877, %v3941
  %v4006 = vadd.f32 %v3878, %v3942
  %v4007 = vadd.f32 %v3879, %v3943
  %v4008 = vadd.f32 %v3880, %v3944
  %v4009 = vadd.f32 %v3881, %v3945
  %v4010 = vadd.f32 %v3882, %v3946
  %v4011 = vadd.f32 %v3883, %v3947
  %v4012 = vadd.f32 %v3884, %v3948
  %v4013 = vadd.f32 %v3885, %v3949
  %v4014 = vadd.f32 %v3886, %v3950
  %v4015 = vadd.f32 %v3887, %v3951
  %v4016 = vadd.f32 %v3888, %v3952
  %v4017 = vadd.f32 %v3889, %v3953
  %v4018 = vadd.f32 %v3890, %v3954
  %v4019 = vadd.f32 %v3891, %v3955
  %v4020 = vadd.f32 %v3892, %v3956
  %v4021 = vadd.f32 %v3893, %v3957
  %v4022 = vadd.f32 %v3894, %v3958
  %v4023 = vadd.f32 %v3895, %v3959
  %v4024 = vadd.f32 %v3896, %v3960
  %v4025 = vadd.f32 %v3897, %v3961
  %v4026 = vadd.f32 %v3898, %v3962
  %v4027 = vadd.f32 %v3899, %v3963
  %v4028 = vadd.f32 %v3900, %v3964
  %v4029 = vadd.f32 %v3901, %v3965
  %v4030 = vadd.f32 %v3902, %v3966
  %v4031 = vadd.f32 %v3903, %v3967
  %v4032 = vadd.f32 %v3904, %v3968
  %v4033 = vadd.f32 %v3905, %v3969
  %v4034 = vadd.f32 %v3906, %v3970
  %v4035 = vadd.f32 %v3907, %v3971
  %v4036 = vadd.f32 %v3908, %v3972
  %v4037 = vadd.f32 %v3909, %v3973
  %v4038 = vadd.f32 %v3910, %v3974
  %v4039 = vadd.f32 %v3911, %v3975
  %v4040 = vadd.f32 %v3912, %v3976
  %v4041 = vadd.f32 %v3913, %v3977
  %v4042 = vadd.f32 %v3914, %v3978
  %v4043 = vadd.f32 %v3915, %v3979
  %v4044 = vadd.f32 %v3916, %v3980
  %v4045 = vadd.f32 %v3917, %v3981
  %v4046 = vadd.f32 %v3918, %v3982
  %v4047 = vadd.f32 %v3919, %v3983
  %v4048 = vadd.f32 %v3920, %v3984
  %v4049 = vadd.f32 %v3921, %v3985
  %v4050 = vadd.f32 %v3922, %v3986
  %v4051 = vadd.f32 %v3923, %v3987
  %v4052 = vadd.f32 %v3924, %v3988
  %v4053 = vmax.f32 %v3989, 0.0
  %v4054 = vmax.f32 %v3990, 0.0
  %v4055 = vmax.f32 %v3991, 0.0
  %v4056 = vmax.f32 %v3992, 0.0
  %v4057 = vmax.f32 %v3993, 0.0
  %v4058 = vmax.f32 %v3994, 0.0
  %v4059 = vmax.f32 %v3995, 0.0
  %v4060 = vmax.f32 %v3996, 0.0
  %v4061 = vmax.f32 %v3997, 0.0
  %v4062 = vmax.f32 %v3998, 0.0
  %v4063 = vmax.f32 %v3999, 0.0
  %v4064 = vmax.f32 %v4000, 0.0
  %v4065 = vmax.f32 %v4001, 0.0
  %v4066 = vmax.f32 %v4002, 0.0
  %v4067 = vmax.f32 %v4003, 0.0
  %v4068 = vmax.f32 %v4004, 0.0
  %v4069 = vmax.f32 %v4005, 0.0
  %v4070 = vmax.f32 %v4006, 0.0
  %v4071 = vmax.f32 %v4007, 0.0
  %v4072 = vmax.f32 %v4008, 0.0
  %v4073 = vmax.f32 %v4009, 0.0
  %v4074 = vmax.f32 %v4010, 0.0
  %v4075 = vmax.f32 %v4011, 0.0
  %v4076 = vmax.f32 %v4012, 0.0
  %v4077 = vmax.f32 %v4013, 0.0
  %v4078 = vmax.f32 %v4014, 0.0
  %v4079 = vmax.f32 %v4015, 0.0
  %v4080 = vmax.f32 %v4016, 0.0
  %v4081 = vmax.f32 %v4017, 0.0
  %v4082 = vmax.f32 %v4018, 0.0
  %v4083 = vmax.f32 %v4019, 0.0
  %v4084 = vmax.f32 %v4020, 0.0
  %v4085 = vmax.f32 %v4021, 0.0
  %v4086 = vmax.f32 %v4022, 0.0
  %v4087 = vmax.f32 %v4023, 0.0
  %v4088 = vmax.f32 %v4024, 0.0
  %v4089 = vmax.f32 %v4025, 0.0
  %v4090 = vmax.f32 %v4026, 0.0
  %v4091 = vmax.f32 %v4027, 0.0
  %v4092 = vmax.f32 %v4028, 0.0
  %v4093 = vmax.f32 %v4029, 0.0
  %v4094 = vmax.f32 %v4030, 0.0
  %v4095 = vmax.f32 %v4031, 0.0
  %v4096 = vmax.f32 %v4032, 0.0
  %v4097 = vmax.f32 %v4033, 0.0
  %v4098 = vmax.f32 %v4034, 0.0
  %v4099 = vmax.f32 %v4035, 0.0
  %v4100 = vmax.f32 %v4036, 0.0
  %v4101 = vmax.f32 %v4037, 0.0
  %v4102 = vmax.f32 %v4038, 0.0
  %v4103 = vmax.f32 %v4039, 0.0
  %v4104 = vmax.f32 %v4040, 0.0
  %v4105 = vmax.f32 %v4041, 0.0
  %v4106 = vmax.f32 %v4042, 0.0
  %v4107 = vmax.f32 %v4043, 0.0
  %v4108 = vmax.f32 %v4044, 0.0
  %v4109 = vmax.f32 %v4045, 0.0
  %v4110 = vmax.f32 %v4046, 0.0
  %v4111 = vmax.f32 %v4047, 0.0
  %v4112 = vmax.f32 %v4048, 0.0
  %v4113 = vmax.f32 %v4049, 0.0
  %v4114 = vmax.f32 %v4050, 0.0
  %v4115 = vmax.f32 %v4051, 0.0
  %v4116 = vmax.f32 %v4052, 0.0
  %4117 = vst [vmem:[%s5] sm:$0xff] %v4053
  %4118 = vst [vmem:[%s5 + $0x8] sm:$0xff] %v4054
  %4119 = vst [vmem:[%s5 + $0x10] sm:$0xff] %v4055
  %4120 = vst [vmem:[%s5 + $0x18] sm:$0xff] %v4056
  %4121 = vst [vmem:[%s5 + $0x20] sm:$0xff] %v4057
  %4122 = vst [vmem:[%s5 + $0x28] sm:$0xff] %v4058
  %4123 = vst [vmem:[%s5 + $0x30] sm:$0xff] %v4059
  %4124 = vst [vmem:[%s5 + $0x38] sm:$0xff] %v4060
  %4125 = vst [vmem:[%s5 + $0x40] sm:$0xff] %v4061
  %4126 = vst [vmem:[%s5 + $0x48] sm:$0xff] %v4062
  %4127 = vst [vmem:[%s5 + $0x50] sm:$0xff] %v4063
  %4128 = vst [vmem:[%s5 + $0x58] sm:$0xff] %v4064
  %4129 = vst [vmem:[%s5 + $0x60] sm:$0xff] %v4065
  %4130 = vst [vmem:[%s5 + $0x68] sm:$0xff] %v4066
  %4131 = vst [vmem:[%s5 + $0x70] sm:$0xff] %v4067
  %4132 = vst [vmem:[%s5 + $0x78] sm:$0xff] %v4068
  %4133 = vst [vmem:[%s5 + $0x80] sm:$0xff] %v4069
  %4134 = vst [vmem:[%s5 + $0x88] sm:$0xff] %v4070
  %4135 = vst [vmem:[%s5 + $0x90] sm:$0xff] %v4071
  %4136 = vst [vmem:[%s5 + $0x98] sm:$0xff] %v4072
  %4137 = vst [vmem:[%s5 + $0xa0] sm:$0xff] %v4073
  %4138 = vst [vmem:[%s5 + $0xa8] sm:$0xff] %v4074
  %4139 = vst [vmem:[%s5 + $0xb0] sm:$0xff] %v4075
  %4140 = vst [vmem:[%s5 + $0xb8] sm:$0xff] %v4076
  %4141 = vst [vmem:[%s5 + $0xc0] sm:$0xff] %v4077
  %4142 = vst [vmem:[%s5 + $0xc8] sm:$0xff] %v4078
  %4143 = vst [vmem:[%s5 + $0xd0] sm:$0xff] %v4079
  %4144 = vst [vmem:[%s5 + $0xd8] sm:$0xff] %v4080
  %4145 = vst [vmem:[%s5 + $0xe0] sm:$0xff] %v4081
  %4146 = vst [vmem:[%s5 + $0xe8] sm:$0xff] %v4082
  %4147 = vst [vmem:[%s5 + $0xf0] sm:$0xff] %v4083
  %4148 = vst [vmem:[%s5 + $0xf8] sm:$0xff] %v4084
  %4149 = vst [vmem:[%s5 + $0x100] sm:$0xff] %v4085
  %4150 = vst [vmem:[%s5 + $0x108] sm:$0xff] %v4086
  %4151 = vst [vmem:[%s5 + $0x110] sm:$0xff] %v4087
  %4152 = vst [vmem:[%s5 + $0x118] sm:$0xff] %v4088
  %4153 = vst [vmem:[%s5 + $0x120] sm:$0xff] %v4089
  %4154 = vst [vmem:[%s5 + $0x128] sm:$0xff] %v4090
  %4155 = vst [vmem:[%s5 + $0x130] sm:$0xff] %v4091
  %4156 = vst [vmem:[%s5 + $0x138] sm:$0xff] %v4092
  %4157 = vst [vmem:[%s5 + $0x140] sm:$0xff] %v4093
  %4158 = vst [vmem:[%s5 + $0x148] sm:$0xff] %v4094
  %4159 = vst [vmem:[%s5 + $0x150] sm:$0xff] %v4095
  %4160 = vst [vmem:[%s5 + $0x158] sm:$0xff] %v4096
  %4161 = vst [vmem:[%s5 + $0x160] sm:$0xff] %v4097
  %4162 = vst [vmem:[%s5 + $0x168] sm:$0xff] %v4098
  %4163 = vst [vmem:[%s5 + $0x170] sm:$0xff] %v4099
  %4164 = vst [vmem:[%s5 + $0x178] sm:$0xff] %v4100
  %4165 = vst [vmem:[%s5 + $0x180] sm:$0xff] %v4101
  %4166 = vst [vmem:[%s5 + $0x188] sm:$0xff] %v4102
  %4167 = vst [vmem:[%s5 + $0x190] sm:$0xff] %v4103
  %4168 = vst [vmem:[%s5 + $0x198] sm:$0xff] %v4104
  %4169 = vst [vmem:[%s5 + $0x1a0] sm:$0xff] %v4105
  %4170 = vst [vmem:[%s5 + $0x1a8] sm:$0xff] %v4106
  %4171 = vst [vmem:[%s5 + $0x1b0] sm:$0xff] %v4107
  %4172 = vst [vmem:[%s5 + $0x1b8] sm:$0xff] %v4108
  %4173 = vst [vmem:[%s5 + $0x1c0] sm:$0xff] %v4109
  %4174 = vst [vmem:[%s5 + $0x1c8] sm:$0xff] %v4110
  %4175 = vst [vmem:[%s5 + $0x1d0] sm:$0xff] %v4111
  %4176 = vst [vmem:[%s5 + $0x1d8] sm:$0xff] %v4112
  %4177 = vst [vmem:[%s5 + $0x1e0] sm:$0xff] %v4113
  %4178 = vst [vmem:[%s5 + $0x1e8] sm:$0xff] %v4114
  %4179 = vst [vmem:[%s5 + $0x1f0] sm:$0xff] %v4115
  %4180 = vst [vmem:[%s5 + $0x1f8] sm:$0xff] %v4116
  // Predicated region
  $region22: #{trainer_forward.6} parent=0 // pred_check
    _
  $region23: #{trainer_forward.6} parent=0 // pred_check_branch
    %4182 = sbr.rel (0) target = $region25
  $region24: #{trainer_forward.6} parent=0 // pred_region
    _
  $region25: #{trainer_forward.6} parent=0 // pred_fallthru
    _
  // Predicated region
  $region26: #{trainer_forward.6} parent=0 // pred_check
    _
  $region27: #{trainer_forward.6} parent=0 // pred_check_branch
    %4184 = sbr.rel (0) target = $region29
  $region28: #{trainer_forward.6} parent=0 // pred_region
    _
  $region29: #{trainer_forward.6} parent=0 // pred_fallthru
    _

</llo_original>
